<compile_context>
chip_gen: v7x
topology: tpu7x:2x2x1
jax: 0.10.0
libtpu: 0.0.40
codegen_flags: <defaults>
</compile_context>

<pallas_src>
import math
import functools

import jax
import jax.numpy as jnp
from jax.experimental import pallas as pl
from jax.experimental.pallas import tpu as pltpu


# ----------------------------------------------------------------------------
# Pallas fused GEMM: out = act(A @ B * scale + shift), single K/N block
# ----------------------------------------------------------------------------

def _round_up(x, m):
    return (x + m - 1) // m * m


def _make_gemm_kernel(act):
    def kernel(a_ref, b_ref, scale_ref, shift_ref, o_ref):
        acc = jnp.dot(a_ref[...], b_ref[...], preferred_element_type=jnp.float32)
        y = acc * scale_ref[...] + shift_ref[...]
        if act == "leaky":
            y = jnp.where(y > 0, y, 0.1 * y)
        elif act == "sigmoid":
            y = jax.nn.sigmoid(y)
        o_ref[...] = y.astype(o_ref.dtype)
    return kernel


def matmul_fused(a, b, scale, shift, act, out_dtype=jnp.bfloat16, max_tm=512):
    """a: (M, K) bf16, b: (K, N) bf16, scale/shift: (1, N) f32 -> (M, N)."""
    M, K = a.shape
    K2, N = b.shape
    assert K == K2, (K, K2)

    tm = M if M <= max_tm else max_tm
    Mp = _round_up(M, tm)
    if Mp != M:  # not hit for this network's shapes; kept for generality
        a = jnp.zeros((Mp, K), a.dtype).at[:M, :].set(a)

    out = pl.pallas_call(
        _make_gemm_kernel(act),
        out_shape=jax.ShapeDtypeStruct((Mp, N), out_dtype),
        grid_spec=pltpu.PrefetchScalarGridSpec(
            num_scalar_prefetch=0,
            grid=(Mp // tm,),
            in_specs=[
                pl.BlockSpec((tm, K), lambda i: (i, 0)),
                pl.BlockSpec((K, N), lambda i: (0, 0)),
                pl.BlockSpec((1, N), lambda i: (0, 0)),
                pl.BlockSpec((1, N), lambda i: (0, 0)),
            ],
            out_specs=pl.BlockSpec((tm, N), lambda i: (i, 0)),
        ),
        compiler_params=pltpu.CompilerParams(
            dimension_semantics=("parallel",)),
    )(a, b, scale, shift)

    if Mp != M:
        out = out[:M]
    return out


# ----------------------------------------------------------------------------
# Conv2d = im2col (JAX glue) + Pallas fused GEMM
# ----------------------------------------------------------------------------
# TODO(synk): the im2col gather over kernel taps is done in plain JAX; an
# in-kernel tap accumulation would remove the patch materialization, but at
# this model's tiny spatial sizes the patch arrays are <1 MB so it is skipped.

def conv2d_fused(x, p, act, out_dtype=jnp.bfloat16):
    """x: (N, H, W, Cin) bf16 NHWC; p from _make_conv_params. PyTorch semantics."""
    N, H, W, Cin = x.shape
    KH, KW = p["ksize"]
    stride, pad = p["stride"], p["pad"]
    Cout = p["cout"]
    Ho = (H + 2 * pad - KH) // stride + 1
    Wo = (W + 2 * pad - KW) // stride + 1

    if H == 1 and W == 1 and Ho == 1 and Wo == 1 and p["w_center"] is not None:
        # 1x1 spatial input with "same" padding: only the center tap contributes.
        A = x.reshape(N, Cin)
        Cp = p["w_center"].shape[0]
        if Cp != Cin:
            A = jnp.zeros((N, Cp), A.dtype).at[:, :Cin].set(A)
        B = p["w_center"]
    else:
        xp = x if pad == 0 else jnp.pad(
            x, ((0, 0), (pad, pad), (pad, pad), (0, 0)))
        cols = []
        for kh in range(KH):
            for kw in range(KW):
                cols.append(xp[:, kh:kh + stride * Ho:stride,
                               kw:kw + stride * Wo:stride, :])
        K = KH * KW * Cin
        Kp = p["wmat"].shape[0]
        if Kp != K:  # fold K-padding into the same concatenate (no extra copy)
            cols.append(jnp.zeros((N, Ho, Wo, Kp - K), x.dtype))
        patches = jnp.concatenate(cols, axis=-1)       # (N, Ho, Wo, Kp)
        A = patches.reshape(N * Ho * Wo, Kp)
        B = p["wmat"]

    out = matmul_fused(A, B, p["scale"], p["shift"], act, out_dtype=out_dtype)
    return out.reshape(N, Ho, Wo, Cout)


# ----------------------------------------------------------------------------
# Fused prediction heads: 4 heads x 5 layers in one pallas_call
# ----------------------------------------------------------------------------

def _heads_kernel(x_ref, w_ref, b_ref, o_ref, act_ref):
    l = pl.program_id(1)
    nl = pl.num_programs(1)

    @pl.when(l == 0)
    def _():
        act_ref[...] = x_ref[...].astype(jnp.float32)

    a = act_ref[...].astype(jnp.bfloat16)
    y = jnp.dot(a, w_ref[...], preferred_element_type=jnp.float32) + b_ref[...]

    @pl.when(l < nl - 1)
    def _():
        act_ref[...] = jnp.where(y > 0, y, 0.1 * y)       # LeakyReLU(0.1)

    @pl.when(l == nl - 1)
    def _():
        o_ref[...] = jax.nn.sigmoid(y)                     # output activation


def run_heads_fused(x, hp):
    """x: (N, 1, 1, F) bf16. Runs all heads/layers in a single pallas_call."""
    N = x.shape[0]
    nheads, nlayers, _, F = hp["w"].shape
    Mh = _round_up(max(N, 8), 8)
    a = jnp.zeros((Mh, F), jnp.bfloat16).at[:N, :].set(
        x.reshape(N, F).astype(jnp.bfloat16))

    out = pl.pallas_call(
        _heads_kernel,
        out_shape=jax.ShapeDtypeStruct((nheads, Mh, F), jnp.float32),
        grid_spec=pltpu.PrefetchScalarGridSpec(
            num_scalar_prefetch=0,
            grid=(nheads, nlayers),
            in_specs=[
                pl.BlockSpec((Mh, F), lambda h, l: (0, 0)),
                pl.BlockSpec((None, None, F, F), lambda h, l: (h, l, 0, 0)),
                pl.BlockSpec((None, None, 1, F), lambda h, l: (h, l, 0, 0)),
            ],
            out_specs=pl.BlockSpec((None, Mh, F), lambda h, l: (h, 0, 0)),
            scratch_shapes=[pltpu.VMEM((Mh, F), jnp.float32)],
        ),
        compiler_params=pltpu.CompilerParams(
            dimension_semantics=("parallel", "arbitrary")),
    )(a, hp["w"], hp["b"])

    return [out[h, :N, :c].reshape(N, 1, 1, c)
            for h, c in enumerate(hp["couts"])]


# ----------------------------------------------------------------------------
# Deterministic parameter construction (weights prepped for the kernels)
# ----------------------------------------------------------------------------

CONFIG = [(16, 5, 1), (32, 3, 2), ['B', 1], (64, 3, 2), ['B', 2],
          (128, 3, 2), ['B', 2], (128, 3, 2), ['B', 2], (256, 3, 2), ['B', 2]]
HEAD_NAMES = ("cell", "abcell", "multi", "regr")
HEAD_COUTS = (1, 1, 1, 4)
FEATURE = 256


def _make_conv_params(w, scale, shift, stride, pad):
    """w: (KH, KW, Cin, Cout) f32.  Precompute bf16 GEMM weights at init time."""
    KH, KW, Cin, Cout = w.shape
    K = KH * KW * Cin
    Kp = _round_up(K, 128)
    wmat = w.reshape(K, Cout)
    if Kp != K:
        wmat = jnp.zeros((Kp, Cout), jnp.float32).at[:K, :].set(wmat)

    p = dict(
        wmat=wmat.astype(jnp.bfloat16),
        scale=scale.reshape(1, Cout).astype(jnp.float32),
        shift=shift.reshape(1, Cout).astype(jnp.float32),
        stride=stride, pad=pad, ksize=(KH, KW), cout=Cout,
        w_center=None,
    )
    if KH == KW and KH % 2 == 1 and pad == KH // 2:
        wc = w[KH // 2, KW // 2]                           # (Cin, Cout)
        Cp = _round_up(Cin, 128)
        if Cp != Cin:
            wc = jnp.zeros((Cp, Cout), jnp.float32).at[:Cin, :].set(wc)
        p["w_center"] = wc.astype(jnp.bfloat16)
    return p


def _init_w(key, cin, cout, k):
    fan_in = cin * k * k
    return jax.random.normal(key, (k, k, cin, cout), jnp.float32) / math.sqrt(fan_in)


def _init_cnnblock(key, cin, cout, k, stride, pad):
    """Conv (no bias) + folded inference BatchNorm + LeakyReLU(0.1)."""
    kw, kg, kb, km, kv = jax.random.split(key, 5)
    w = _init_w(kw, cin, cout, k)
    gamma = 1.0 + 0.1 * jax.random.normal(kg, (cout,), jnp.float32)
    beta = 0.1 * jax.random.normal(kb, (cout,), jnp.float32)
    mean = 0.1 * jax.random.normal(km, (cout,), jnp.float32)
    var = jnp.abs(jax.random.normal(kv, (cout,), jnp.float32)) + 0.5
    eps = 1e-5
    scale = gamma / jnp.sqrt(var + eps)
    shift = beta - mean * scale
    return _make_conv_params(w, scale, shift, stride, pad)


def _init_head_raw(key, cin, cout_final, feature_size=FEATURE):
    keys = jax.random.split(key, 10)
    spec = [(cin, feature_size, 3, 1),
            (feature_size, feature_size, 3, 1),
            (feature_size, feature_size, 3, 1),
            (feature_size, feature_size, 1, 0),
            (feature_size, cout_final, 1, 0)]
    raw = []
    for i, (ci, co, k, pad) in enumerate(spec):
        w = _init_w(keys[2 * i], ci, co, k)
        b = 0.1 * jax.random.normal(keys[2 * i + 1], (co,), jnp.float32)
        raw.append(dict(w=w, b=b, pad=pad))
    return raw


def init_darknet_params(key, in_channels=3):
    backbone = []
    cin = in_channels
    for module in CONFIG:
        if isinstance(module, tuple):
            cout, k, stride = module
            key, sub = jax.random.split(key)
            pad = 1 if k == 3 else 0
            backbone.append(("conv", _init_cnnblock(sub, cin, cout, k, stride, pad)))
            cin = cout
        else:  # residual block (use_residual=True)
            num_repeats = module[1]
            blocks = []
            for _ in range(num_repeats):
                key, k1, k2 = jax.random.split(key, 3)
                b1 = _init_cnnblock(k1, cin, cin // 2, 1, 1, 0)
                b2 = _init_cnnblock(k2, cin // 2, cin, 3, 1, 1)
                blocks.append((b1, b2))
            backbone.append(("res", blocks))

    # Prediction heads: plain conv + bias, LeakyReLU between, Sigmoid at output.
    heads_generic = {}
    fused_w, fused_b = [], []
    for name, cfinal in zip(HEAD_NAMES, HEAD_COUTS):
        key, sub = jax.random.split(key)
        raw = _init_head_raw(sub, cin, cfinal)
        heads_generic[name] = [
            _make_conv_params(r["w"], jnp.ones((r["w"].shape[-1],), jnp.float32),
                              r["b"], 1, r["pad"])
            for r in raw
        ]
        # Fused form: center-tap weights, padded to (FEATURE, FEATURE) per layer
        # (exact while the head input spatial size is 1x1).
        ws, bs = [], []
        for r in raw:
            w = r["w"]
            KH, KW, ci, co = w.shape
            wc = w[KH // 2, KW // 2]
            ws.append(jnp.zeros((FEATURE, FEATURE), jnp.float32)
                      .at[:ci, :co].set(wc))
            bs.append(jnp.zeros((FEATURE,), jnp.float32).at[:co].set(r["b"]))
        fused_w.append(jnp.stack(ws))        # (5, F, F)
        fused_b.append(jnp.stack(bs))        # (5, F)

    heads_fused = dict(
        w=jnp.stack(fused_w).astype(jnp.bfloat16),                       # (4,5,F,F)
        b=jnp.stack(fused_b).reshape(len(HEAD_NAMES), -1, 1, FEATURE)
          .astype(jnp.float32),                                          # (4,5,1,F)
        couts=HEAD_COUTS,
    )
    return dict(backbone=backbone, heads_generic=heads_generic,
                heads_fused=heads_fused)


# ----------------------------------------------------------------------------
# Forward pass
# ----------------------------------------------------------------------------

def _run_head_generic(x, head_params):
    for p in head_params[:-1]:
        x = conv2d_fused(x, p, "leaky")
    return conv2d_fused(x, head_params[-1], "sigmoid", out_dtype=jnp.float32)


def darknet_forward(x_nchw, params):
    # NCHW -> NHWC, bf16 activations between layers, f32 accumulation in-kernel.
    x = jnp.transpose(x_nchw, (0, 2, 3, 1)).astype(jnp.bfloat16)

    for kind, item in params["backbone"]:
        if kind == "conv":
            x = conv2d_fused(x, item, "leaky")
        else:  # residual block (use_residual=True)
            for b1, b2 in item:
                y = conv2d_fused(x, b1, "leaky")
                y = conv2d_fused(y, b2, "leaky")
                x = (x.astype(jnp.float32) + y.astype(jnp.float32)).astype(jnp.bfloat16)

    N, H, W, C = x.shape
    if H == 1 and W == 1:
        outs = run_heads_fused(x, params["heads_fused"])
    else:
        # The fused-head path assumes a 1x1 backbone output (true for 36x36
        # inputs); otherwise fall back to per-layer convolutions.
        outs = [_run_head_generic(x, params["heads_generic"][n]) for n in HEAD_NAMES]

    to_nchw = lambda t: jnp.transpose(t, (0, 3, 1, 2))
    return tuple(to_nchw(t) for t in outs)


# ----------------------------------------------------------------------------
# Main
# ----------------------------------------------------------------------------

if __name__ == "__main__":
    key = jax.random.PRNGKey(0)
    k_params, k_input = jax.random.split(key)

    params = init_darknet_params(k_params, in_channels=3)

    # PyTorch NCHW input. 36x36 -> (k5,p0): 32 -> five stride-2 convs:
    # 16, 8, 4, 2, 1 spatial at the backbone output (256 channels).
    x = jax.random.normal(k_input, (2, 3, 36, 36), jnp.float32)

    fwd = jax.jit(functools.partial(darknet_forward, params=params))
    x1, x2, x3, x4 = fwd(x)
    jax.block_until_ready((x1, x2, x3, x4))

    assert x1.shape == (2, 1, 1, 1)
    assert x2.shape == (2, 1, 1, 1)
    assert x3.shape == (2, 1, 1, 1)
    assert x4.shape == (2, 4, 1, 1)
    # sigmoid outputs must lie in (0, 1)
    for t in (x1, x2, x3, x4):
        assert bool(jnp.all((t > 0.0) & (t < 1.0)))

    print("KERNEL_OK")
</pallas_src>

<mosaic_0001>
module attributes {stable_mosaic.version = 11 : i64} {
  func.func @kernel(%arg0: i32, %arg1: memref<512x128xbf16, #tpu.memory_space<vmem>>, %arg2: memref<128x16xbf16, #tpu.memory_space<vmem>>, %arg3: memref<1x16xf32, #tpu.memory_space<vmem>>, %arg4: memref<1x16xf32, #tpu.memory_space<vmem>>, %arg5: memref<512x16xbf16, #tpu.memory_space<vmem>>) attributes {dimension_semantics = [#tpu.dimension_semantics<parallel>], iteration_bounds = array<i64: 4>, scalar_prefetch = 0 : i64, scratch_operands = 0 : i64, tpu.core_type = #tpu.core_type<tc>, window_params = [{transform_indices = @transform_0, window_bounds = array<i64: 512, 128>}, {pipeline_mode = #tpu.pipeline_mode<synchronous>, transform_indices = @transform_1, window_bounds = array<i64: 128, 16>}, {pipeline_mode = #tpu.pipeline_mode<synchronous>, transform_indices = @transform_2, window_bounds = array<i64: 1, 16>}, {pipeline_mode = #tpu.pipeline_mode<synchronous>, transform_indices = @transform_3, window_bounds = array<i64: 1, 16>}, {transform_indices = @transform_4, window_bounds = array<i64: 512, 16>}]} {
    %c0 = arith.constant 0 : index
    %c0_0 = arith.constant 0 : index
    %0 = vector.load %arg1[%c0, %c0_0] : memref<512x128xbf16, #tpu.memory_space<vmem>>, vector<512x128xbf16>
    %c0_1 = arith.constant 0 : index
    %c0_2 = arith.constant 0 : index
    %1 = vector.load %arg2[%c0_1, %c0_2] : memref<128x16xbf16, #tpu.memory_space<vmem>>, vector<128x16xbf16>
    %cst = arith.constant dense<0.000000e+00> : vector<512x16xf32>
    %2 = tpu.matmul %0, %1, %cst {dimension_numbers = #tpu.dot_dimension_numbers<[1], [0], [0], [1], [0, 0, 1, 1], [], []>} : vector<512x128xbf16>, vector<128x16xbf16>, vector<512x16xf32> -> vector<512x16xf32>
    %c0_3 = arith.constant 0 : index
    %c0_4 = arith.constant 0 : index
    %3 = vector.load %arg3[%c0_3, %c0_4] : memref<1x16xf32, #tpu.memory_space<vmem>>, vector<1x16xf32>
    %4 = vector.broadcast %3 : vector<1x16xf32> to vector<512x16xf32>
    %5 = arith.mulf %2, %4 : vector<512x16xf32>
    %c0_5 = arith.constant 0 : index
    %c0_6 = arith.constant 0 : index
    %6 = vector.load %arg4[%c0_5, %c0_6] : memref<1x16xf32, #tpu.memory_space<vmem>>, vector<1x16xf32>
    %7 = vector.broadcast %6 : vector<1x16xf32> to vector<512x16xf32>
    %8 = arith.addf %5, %7 : vector<512x16xf32>
    %cst_7 = arith.constant 0.000000e+00 : f32
    %9 = vector.broadcast %cst_7 : f32 to vector<512x16xf32>
    %10 = arith.cmpf ogt, %8, %9 : vector<512x16xf32>
    %cst_8 = arith.constant 1.000000e-01 : f32
    %11 = vector.broadcast %cst_8 : f32 to vector<512x16xf32>
    %12 = arith.mulf %11, %8 : vector<512x16xf32>
    %13 = arith.select %10, %8, %12 : vector<512x16xi1>, vector<512x16xf32>
    %14 = arith.truncf %13 : vector<512x16xf32> to vector<512x16xbf16>
    %c0_9 = arith.constant 0 : index
    %c0_10 = arith.constant 0 : index
    %15 = vector.load %arg5[%c0_9, %c0_10] : memref<512x16xbf16, #tpu.memory_space<vmem>>, vector<512x16xbf16>
    tpu.vector_store %arg5[%c0_9, %c0_10], %14 {strides = array<i32>} : memref<512x16xbf16, #tpu.memory_space<vmem>>, vector<512x16xbf16>,
    return
  }
  func.func @transform_0(%arg0: i32) -> (i32, i32) {
    %c0_i32 = arith.constant 0 : i32
    %c0_i32_0 = arith.constant 0 : i32
    return %arg0, %c0_i32 : i32, i32
  }
  func.func @transform_1(%arg0: i32) -> (i32, i32) {
    %c0_i32 = arith.constant 0 : i32
    %c0_i32_0 = arith.constant 0 : i32
    %c0_i32_1 = arith.constant 0 : i32
    return %c0_i32, %c0_i32_0 : i32, i32
  }
  func.func @transform_2(%arg0: i32) -> (i32, i32) {
    %c0_i32 = arith.constant 0 : i32
    %c0_i32_0 = arith.constant 0 : i32
    %c0_i32_1 = arith.constant 0 : i32
    return %c0_i32, %c0_i32_0 : i32, i32
  }
  func.func @transform_3(%arg0: i32) -> (i32, i32) {
    %c0_i32 = arith.constant 0 : i32
    %c0_i32_0 = arith.constant 0 : i32
    %c0_i32_1 = arith.constant 0 : i32
    return %c0_i32, %c0_i32_0 : i32, i32
  }
  func.func @transform_4(%arg0: i32) -> (i32, i32) {
    %c0_i32 = arith.constant 0 : i32
    %c0_i32_0 = arith.constant 0 : i32
    return %arg0, %c0_i32 : i32, i32
  }
}

module attributes {stable_mosaic.version = 11 : i64} {
  func.func @kernel(%arg0: i32, %arg1: memref<512x256xbf16, #tpu.memory_space<vmem>>, %arg2: memref<256x32xbf16, #tpu.memory_space<vmem>>, %arg3: memref<1x32xf32, #tpu.memory_space<vmem>>, %arg4: memref<1x32xf32, #tpu.memory_space<vmem>>, %arg5: memref<512x32xbf16, #tpu.memory_space<vmem>>) attributes {dimension_semantics = [#tpu.dimension_semantics<parallel>], iteration_bounds = array<i64: 1>, scalar_prefetch = 0 : i64, scratch_operands = 0 : i64, tpu.core_type = #tpu.core_type<tc>, window_params = [{transform_indices = @transform_0, window_bounds = array<i64: 512, 256>}, {pipeline_mode = #tpu.pipeline_mode<synchronous>, transform_indices = @transform_1, window_bounds = array<i64: 256, 32>}, {pipeline_mode = #tpu.pipeline_mode<synchronous>, transform_indices = @transform_2, window_bounds = array<i64: 1, 32>}, {pipeline_mode = #tpu.pipeline_mode<synchronous>, transform_indices = @transform_3, window_bounds = array<i64: 1, 32>}, {transform_indices = @transform_4, window_bounds = array<i64: 512, 32>}]} {
    %c0 = arith.constant 0 : index
    %c0_0 = arith.constant 0 : index
    %0 = vector.load %arg1[%c0, %c0_0] : memref<512x256xbf16, #tpu.memory_space<vmem>>, vector<512x256xbf16>
    %c0_1 = arith.constant 0 : index
    %c0_2 = arith.constant 0 : index
    %1 = vector.load %arg2[%c0_1, %c0_2] : memref<256x32xbf16, #tpu.memory_space<vmem>>, vector<256x32xbf16>
    %cst = arith.constant dense<0.000000e+00> : vector<512x32xf32>
    %2 = tpu.matmul %0, %1, %cst {dimension_numbers = #tpu.dot_dimension_numbers<[1], [0], [0], [1], [0, 0, 1, 1], [], []>} : vector<512x256xbf16>, vector<256x32xbf16>, vector<512x32xf32> -> vector<512x32xf32>
    %c0_3 = arith.constant 0 : index
    %c0_4 = arith.constant 0 : index
    %3 = vector.load %arg3[%c0_3, %c0_4] : memref<1x32xf32, #tpu.memory_space<vmem>>, vector<1x32xf32>
    %4 = vector.broadcast %3 : vector<1x32xf32> to vector<512x32xf32>
    %5 = arith.mulf %2, %4 : vector<512x32xf32>
    %c0_5 = arith.constant 0 : index
    %c0_6 = arith.constant 0 : index
    %6 = vector.load %arg4[%c0_5, %c0_6] : memref<1x32xf32, #tpu.memory_space<vmem>>, vector<1x32xf32>
    %7 = vector.broadcast %6 : vector<1x32xf32> to vector<512x32xf32>
    %8 = arith.addf %5, %7 : vector<512x32xf32>
    %cst_7 = arith.constant 0.000000e+00 : f32
    %9 = vector.broadcast %cst_7 : f32 to vector<512x32xf32>
    %10 = arith.cmpf ogt, %8, %9 : vector<512x32xf32>
    %cst_8 = arith.constant 1.000000e-01 : f32
    %11 = vector.broadcast %cst_8 : f32 to vector<512x32xf32>
    %12 = arith.mulf %11, %8 : vector<512x32xf32>
    %13 = arith.select %10, %8, %12 : vector<512x32xi1>, vector<512x32xf32>
    %14 = arith.truncf %13 : vector<512x32xf32> to vector<512x32xbf16>
    %c0_9 = arith.constant 0 : index
    %c0_10 = arith.constant 0 : index
    %15 = vector.load %arg5[%c0_9, %c0_10] : memref<512x32xbf16, #tpu.memory_space<vmem>>, vector<512x32xbf16>
    tpu.vector_store %arg5[%c0_9, %c0_10], %14 {strides = array<i32>} : memref<512x32xbf16, #tpu.memory_space<vmem>>, vector<512x32xbf16>,
    return
  }
  func.func @transform_0(%arg0: i32) -> (i32, i32) {
    %c0_i32 = arith.constant 0 : i32
    %c0_i32_0 = arith.constant 0 : i32
    return %arg0, %c0_i32 : i32, i32
  }
  func.func @transform_1(%arg0: i32) -> (i32, i32) {
    %c0_i32 = arith.constant 0 : i32
    %c0_i32_0 = arith.constant 0 : i32
    %c0_i32_1 = arith.constant 0 : i32
    return %c0_i32, %c0_i32_0 : i32, i32
  }
  func.func @transform_2(%arg0: i32) -> (i32, i32) {
    %c0_i32 = arith.constant 0 : i32
    %c0_i32_0 = arith.constant 0 : i32
    %c0_i32_1 = arith.constant 0 : i32
    return %c0_i32, %c0_i32_0 : i32, i32
  }
  func.func @transform_3(%arg0: i32) -> (i32, i32) {
    %c0_i32 = arith.constant 0 : i32
    %c0_i32_0 = arith.constant 0 : i32
    %c0_i32_1 = arith.constant 0 : i32
    return %c0_i32, %c0_i32_0 : i32, i32
  }
  func.func @transform_4(%arg0: i32) -> (i32, i32) {
    %c0_i32 = arith.constant 0 : i32
    %c0_i32_0 = arith.constant 0 : i32
    return %arg0, %c0_i32 : i32, i32
  }
}

module attributes {stable_mosaic.version = 11 : i64} {
  func.func @kernel(%arg0: i32, %arg1: memref<512x128xbf16, #tpu.memory_space<vmem>>, %arg2: memref<128x16xbf16, #tpu.memory_space<vmem>>, %arg3: memref<1x16xf32, #tpu.memory_space<vmem>>, %arg4: memref<1x16xf32, #tpu.memory_space<vmem>>, %arg5: memref<512x16xbf16, #tpu.memory_space<vmem>>) attributes {dimension_semantics = [#tpu.dimension_semantics<parallel>], iteration_bounds = array<i64: 1>, scalar_prefetch = 0 : i64, scratch_operands = 0 : i64, tpu.core_type = #tpu.core_type<tc>, window_params = [{transform_indices = @transform_0, window_bounds = array<i64: 512, 128>}, {pipeline_mode = #tpu.pipeline_mode<synchronous>, transform_indices = @transform_1, window_bounds = array<i64: 128, 16>}, {pipeline_mode = #tpu.pipeline_mode<synchronous>, transform_indices = @transform_2, window_bounds = array<i64: 1, 16>}, {pipeline_mode = #tpu.pipeline_mode<synchronous>, transform_indices = @transform_3, window_bounds = array<i64: 1, 16>}, {transform_indices = @transform_4, window_bounds = array<i64: 512, 16>}]} {
    %c0 = arith.constant 0 : index
    %c0_0 = arith.constant 0 : index
    %0 = vector.load %arg1[%c0, %c0_0] : memref<512x128xbf16, #tpu.memory_space<vmem>>, vector<512x128xbf16>
    %c0_1 = arith.constant 0 : index
    %c0_2 = arith.constant 0 : index
    %1 = vector.load %arg2[%c0_1, %c0_2] : memref<128x16xbf16, #tpu.memory_space<vmem>>, vector<128x16xbf16>
    %cst = arith.constant dense<0.000000e+00> : vector<512x16xf32>
    %2 = tpu.matmul %0, %1, %cst {dimension_numbers = #tpu.dot_dimension_numbers<[1], [0], [0], [1], [0, 0, 1, 1], [], []>} : vector<512x128xbf16>, vector<128x16xbf16>, vector<512x16xf32> -> vector<512x16xf32>
    %c0_3 = arith.constant 0 : index
    %c0_4 = arith.constant 0 : index
    %3 = vector.load %arg3[%c0_3, %c0_4] : memref<1x16xf32, #tpu.memory_space<vmem>>, vector<1x16xf32>
    %4 = vector.broadcast %3 : vector<1x16xf32> to vector<512x16xf32>
    %5 = arith.mulf %2, %4 : vector<512x16xf32>
    %c0_5 = arith.constant 0 : index
    %c0_6 = arith.constant 0 : index
    %6 = vector.load %arg4[%c0_5, %c0_6] : memref<1x16xf32, #tpu.memory_space<vmem>>, vector<1x16xf32>
    %7 = vector.broadcast %6 : vector<1x16xf32> to vector<512x16xf32>
    %8 = arith.addf %5, %7 : vector<512x16xf32>
    %cst_7 = arith.constant 0.000000e+00 : f32
    %9 = vector.broadcast %cst_7 : f32 to vector<512x16xf32>
    %10 = arith.cmpf ogt, %8, %9 : vector<512x16xf32>
    %cst_8 = arith.constant 1.000000e-01 : f32
    %11 = vector.broadcast %cst_8 : f32 to vector<512x16xf32>
    %12 = arith.mulf %11, %8 : vector<512x16xf32>
    %13 = arith.select %10, %8, %12 : vector<512x16xi1>, vector<512x16xf32>
    %14 = arith.truncf %13 : vector<512x16xf32> to vector<512x16xbf16>
    %c0_9 = arith.constant 0 : index
    %c0_10 = arith.constant 0 : index
    %15 = vector.load %arg5[%c0_9, %c0_10] : memref<512x16xbf16, #tpu.memory_space<vmem>>, vector<512x16xbf16>
    tpu.vector_store %arg5[%c0_9, %c0_10], %14 {strides = array<i32>} : memref<512x16xbf16, #tpu.memory_space<vmem>>, vector<512x16xbf16>,
    return
  }
  func.func @transform_0(%arg0: i32) -> (i32, i32) {
    %c0_i32 = arith.constant 0 : i32
    %c0_i32_0 = arith.constant 0 : i32
    return %arg0, %c0_i32 : i32, i32
  }
  func.func @transform_1(%arg0: i32) -> (i32, i32) {
    %c0_i32 = arith.constant 0 : i32
    %c0_i32_0 = arith.constant 0 : i32
    %c0_i32_1 = arith.constant 0 : i32
    return %c0_i32, %c0_i32_0 : i32, i32
  }
  func.func @transform_2(%arg0: i32) -> (i32, i32) {
    %c0_i32 = arith.constant 0 : i32
    %c0_i32_0 = arith.constant 0 : i32
    %c0_i32_1 = arith.constant 0 : i32
    return %c0_i32, %c0_i32_0 : i32, i32
  }
  func.func @transform_3(%arg0: i32) -> (i32, i32) {
    %c0_i32 = arith.constant 0 : i32
    %c0_i32_0 = arith.constant 0 : i32
    %c0_i32_1 = arith.constant 0 : i32
    return %c0_i32, %c0_i32_0 : i32, i32
  }
  func.func @transform_4(%arg0: i32) -> (i32, i32) {
    %c0_i32 = arith.constant 0 : i32
    %c0_i32_0 = arith.constant 0 : i32
    return %arg0, %c0_i32 : i32, i32
  }
}

module attributes {stable_mosaic.version = 11 : i64} {
  func.func @kernel(%arg0: i32, %arg1: memref<128x384xbf16, #tpu.memory_space<vmem>>, %arg2: memref<384x64xbf16, #tpu.memory_space<vmem>>, %arg3: memref<1x64xf32, #tpu.memory_space<vmem>>, %arg4: memref<1x64xf32, #tpu.memory_space<vmem>>, %arg5: memref<128x64xbf16, #tpu.memory_space<vmem>>) attributes {dimension_semantics = [#tpu.dimension_semantics<parallel>], iteration_bounds = array<i64: 1>, scalar_prefetch = 0 : i64, scratch_operands = 0 : i64, tpu.core_type = #tpu.core_type<tc>, window_params = [{transform_indices = @transform_0, window_bounds = array<i64: 128, 384>}, {pipeline_mode = #tpu.pipeline_mode<synchronous>, transform_indices = @transform_1, window_bounds = array<i64: 384, 64>}, {pipeline_mode = #tpu.pipeline_mode<synchronous>, transform_indices = @transform_2, window_bounds = array<i64: 1, 64>}, {pipeline_mode = #tpu.pipeline_mode<synchronous>, transform_indices = @transform_3, window_bounds = array<i64: 1, 64>}, {transform_indices = @transform_4, window_bounds = array<i64: 128, 64>}]} {
    %c0 = arith.constant 0 : index
    %c0_0 = arith.constant 0 : index
    %0 = vector.load %arg1[%c0, %c0_0] : memref<128x384xbf16, #tpu.memory_space<vmem>>, vector<128x384xbf16>
    %c0_1 = arith.constant 0 : index
    %c0_2 = arith.constant 0 : index
    %1 = vector.load %arg2[%c0_1, %c0_2] : memref<384x64xbf16, #tpu.memory_space<vmem>>, vector<384x64xbf16>
    %cst = arith.constant dense<0.000000e+00> : vector<128x64xf32>
    %2 = tpu.matmul %0, %1, %cst {dimension_numbers = #tpu.dot_dimension_numbers<[1], [0], [0], [1], [0, 0, 1, 1], [], []>} : vector<128x384xbf16>, vector<384x64xbf16>, vector<128x64xf32> -> vector<128x64xf32>
    %c0_3 = arith.constant 0 : index
    %c0_4 = arith.constant 0 : index
    %3 = vector.load %arg3[%c0_3, %c0_4] : memref<1x64xf32, #tpu.memory_space<vmem>>, vector<1x64xf32>
    %4 = vector.broadcast %3 : vector<1x64xf32> to vector<128x64xf32>
    %5 = arith.mulf %2, %4 : vector<128x64xf32>
    %c0_5 = arith.constant 0 : index
    %c0_6 = arith.constant 0 : index
    %6 = vector.load %arg4[%c0_5, %c0_6] : memref<1x64xf32, #tpu.memory_space<vmem>>, vector<1x64xf32>
    %7 = vector.broadcast %6 : vector<1x64xf32> to vector<128x64xf32>
    %8 = arith.addf %5, %7 : vector<128x64xf32>
    %cst_7 = arith.constant 0.000000e+00 : f32
    %9 = vector.broadcast %cst_7 : f32 to vector<128x64xf32>
    %10 = arith.cmpf ogt, %8, %9 : vector<128x64xf32>
    %cst_8 = arith.constant 1.000000e-01 : f32
    %11 = vector.broadcast %cst_8 : f32 to vector<128x64xf32>
    %12 = arith.mulf %11, %8 : vector<128x64xf32>
    %13 = arith.select %10, %8, %12 : vector<128x64xi1>, vector<128x64xf32>
    %14 = arith.truncf %13 : vector<128x64xf32> to vector<128x64xbf16>
    %c0_9 = arith.constant 0 : index
    %c0_10 = arith.constant 0 : index
    %15 = vector.load %arg5[%c0_9, %c0_10] : memref<128x64xbf16, #tpu.memory_space<vmem>>, vector<128x64xbf16>
    tpu.vector_store %arg5[%c0_9, %c0_10], %14 {strides = array<i32>} : memref<128x64xbf16, #tpu.memory_space<vmem>>, vector<128x64xbf16>,
    return
  }
  func.func @transform_0(%arg0: i32) -> (i32, i32) {
    %c0_i32 = arith.constant 0 : i32
    %c0_i32_0 = arith.constant 0 : i32
    return %arg0, %c0_i32 : i32, i32
  }
  func.func @transform_1(%arg0: i32) -> (i32, i32) {
    %c0_i32 = arith.constant 0 : i32
    %c0_i32_0 = arith.constant 0 : i32
    %c0_i32_1 = arith.constant 0 : i32
    return %c0_i32, %c0_i32_0 : i32, i32
  }
  func.func @transform_2(%arg0: i32) -> (i32, i32) {
    %c0_i32 = arith.constant 0 : i32
    %c0_i32_0 = arith.constant 0 : i32
    %c0_i32_1 = arith.constant 0 : i32
    return %c0_i32, %c0_i32_0 : i32, i32
  }
  func.func @transform_3(%arg0: i32) -> (i32, i32) {
    %c0_i32 = arith.constant 0 : i32
    %c0_i32_0 = arith.constant 0 : i32
    %c0_i32_1 = arith.constant 0 : i32
    return %c0_i32, %c0_i32_0 : i32, i32
  }
  func.func @transform_4(%arg0: i32) -> (i32, i32) {
    %c0_i32 = arith.constant 0 : i32
    %c0_i32_0 = arith.constant 0 : i32
    return %arg0, %c0_i32 : i32, i32
  }
}

module attributes {stable_mosaic.version = 11 : i64} {
  func.func @kernel(%arg0: i32, %arg1: memref<128x128xbf16, #tpu.memory_space<vmem>>, %arg2: memref<128x32xbf16, #tpu.memory_space<vmem>>, %arg3: memref<1x32xf32, #tpu.memory_space<vmem>>, %arg4: memref<1x32xf32, #tpu.memory_space<vmem>>, %arg5: memref<128x32xbf16, #tpu.memory_space<vmem>>) attributes {dimension_semantics = [#tpu.dimension_semantics<parallel>], iteration_bounds = array<i64: 1>, scalar_prefetch = 0 : i64, scratch_operands = 0 : i64, tpu.core_type = #tpu.core_type<tc>, window_params = [{transform_indices = @transform_0, window_bounds = array<i64: 128, 128>}, {pipeline_mode = #tpu.pipeline_mode<synchronous>, transform_indices = @transform_1, window_bounds = array<i64: 128, 32>}, {pipeline_mode = #tpu.pipeline_mode<synchronous>, transform_indices = @transform_2, window_bounds = array<i64: 1, 32>}, {pipeline_mode = #tpu.pipeline_mode<synchronous>, transform_indices = @transform_3, window_bounds = array<i64: 1, 32>}, {transform_indices = @transform_4, window_bounds = array<i64: 128, 32>}]} {
    %c0 = arith.constant 0 : index
    %c0_0 = arith.constant 0 : index
    %0 = vector.load %arg1[%c0, %c0_0] : memref<128x128xbf16, #tpu.memory_space<vmem>>, vector<128x128xbf16>
    %c0_1 = arith.constant 0 : index
    %c0_2 = arith.constant 0 : index
    %1 = vector.load %arg2[%c0_1, %c0_2] : memref<128x32xbf16, #tpu.memory_space<vmem>>, vector<128x32xbf16>
    %cst = arith.constant dense<0.000000e+00> : vector<128x32xf32>
    %2 = tpu.matmul %0, %1, %cst {dimension_numbers = #tpu.dot_dimension_numbers<[1], [0], [0], [1], [0, 0, 1, 1], [], []>} : vector<128x128xbf16>, vector<128x32xbf16>, vector<128x32xf32> -> vector<128x32xf32>
    %c0_3 = arith.constant 0 : index
    %c0_4 = arith.constant 0 : index
    %3 = vector.load %arg3[%c0_3, %c0_4] : memref<1x32xf32, #tpu.memory_space<vmem>>, vector<1x32xf32>
    %4 = vector.broadcast %3 : vector<1x32xf32> to vector<128x32xf32>
    %5 = arith.mulf %2, %4 : vector<128x32xf32>
    %c0_5 = arith.constant 0 : index
    %c0_6 = arith.constant 0 : index
    %6 = vector.load %arg4[%c0_5, %c0_6] : memref<1x32xf32, #tpu.memory_space<vmem>>, vector<1x32xf32>
    %7 = vector.broadcast %6 : vector<1x32xf32> to vector<128x32xf32>
    %8 = arith.addf %5, %7 : vector<128x32xf32>
    %cst_7 = arith.constant 0.000000e+00 : f32
    %9 = vector.broadcast %cst_7 : f32 to vector<128x32xf32>
    %10 = arith.cmpf ogt, %8, %9 : vector<128x32xf32>
    %cst_8 = arith.constant 1.000000e-01 : f32
    %11 = vector.broadcast %cst_8 : f32 to vector<128x32xf32>
    %12 = arith.mulf %11, %8 : vector<128x32xf32>
    %13 = arith.select %10, %8, %12 : vector<128x32xi1>, vector<128x32xf32>
    %14 = arith.truncf %13 : vector<128x32xf32> to vector<128x32xbf16>
    %c0_9 = arith.constant 0 : index
    %c0_10 = arith.constant 0 : index
    %15 = vector.load %arg5[%c0_9, %c0_10] : memref<128x32xbf16, #tpu.memory_space<vmem>>, vector<128x32xbf16>
    tpu.vector_store %arg5[%c0_9, %c0_10], %14 {strides = array<i32>} : memref<128x32xbf16, #tpu.memory_space<vmem>>, vector<128x32xbf16>,
    return
  }
  func.func @transform_0(%arg0: i32) -> (i32, i32) {
    %c0_i32 = arith.constant 0 : i32
    %c0_i32_0 = arith.constant 0 : i32
    return %arg0, %c0_i32 : i32, i32
  }
  func.func @transform_1(%arg0: i32) -> (i32, i32) {
    %c0_i32 = arith.constant 0 : i32
    %c0_i32_0 = arith.constant 0 : i32
    %c0_i32_1 = arith.constant 0 : i32
    return %c0_i32, %c0_i32_0 : i32, i32
  }
  func.func @transform_2(%arg0: i32) -> (i32, i32) {
    %c0_i32 = arith.constant 0 : i32
    %c0_i32_0 = arith.constant 0 : i32
    %c0_i32_1 = arith.constant 0 : i32
    return %c0_i32, %c0_i32_0 : i32, i32
  }
  func.func @transform_3(%arg0: i32) -> (i32, i32) {
    %c0_i32 = arith.constant 0 : i32
    %c0_i32_0 = arith.constant 0 : i32
    %c0_i32_1 = arith.constant 0 : i32
    return %c0_i32, %c0_i32_0 : i32, i32
  }
  func.func @transform_4(%arg0: i32) -> (i32, i32) {
    %c0_i32 = arith.constant 0 : i32
    %c0_i32_0 = arith.constant 0 : i32
    return %arg0, %c0_i32 : i32, i32
  }
}

module attributes {stable_mosaic.version = 11 : i64} {
  func.func @kernel(%arg0: i32, %arg1: memref<32x640xbf16, #tpu.memory_space<vmem>>, %arg2: memref<640x128xbf16, #tpu.memory_space<vmem>>, %arg3: memref<1x128xf32, #tpu.memory_space<vmem>>, %arg4: memref<1x128xf32, #tpu.memory_space<vmem>>, %arg5: memref<32x128xbf16, #tpu.memory_space<vmem>>) attributes {dimension_semantics = [#tpu.dimension_semantics<parallel>], iteration_bounds = array<i64: 1>, scalar_prefetch = 0 : i64, scratch_operands = 0 : i64, tpu.core_type = #tpu.core_type<tc>, window_params = [{transform_indices = @transform_0, window_bounds = array<i64: 32, 640>}, {pipeline_mode = #tpu.pipeline_mode<synchronous>, transform_indices = @transform_1, window_bounds = array<i64: 640, 128>}, {pipeline_mode = #tpu.pipeline_mode<synchronous>, transform_indices = @transform_2, window_bounds = array<i64: 1, 128>}, {pipeline_mode = #tpu.pipeline_mode<synchronous>, transform_indices = @transform_3, window_bounds = array<i64: 1, 128>}, {transform_indices = @transform_4, window_bounds = array<i64: 32, 128>}]} {
    %c0 = arith.constant 0 : index
    %c0_0 = arith.constant 0 : index
    %0 = vector.load %arg1[%c0, %c0_0] : memref<32x640xbf16, #tpu.memory_space<vmem>>, vector<32x640xbf16>
    %c0_1 = arith.constant 0 : index
    %c0_2 = arith.constant 0 : index
    %1 = vector.load %arg2[%c0_1, %c0_2] : memref<640x128xbf16, #tpu.memory_space<vmem>>, vector<640x128xbf16>
    %cst = arith.constant dense<0.000000e+00> : vector<32x128xf32>
    %2 = tpu.matmul %0, %1, %cst {dimension_numbers = #tpu.dot_dimension_numbers<[1], [0], [0], [1], [0, 0, 1, 1], [], []>} : vector<32x640xbf16>, vector<640x128xbf16>, vector<32x128xf32> -> vector<32x128xf32>
    %c0_3 = arith.constant 0 : index
    %c0_4 = arith.constant 0 : index
    %3 = vector.load %arg3[%c0_3, %c0_4] : memref<1x128xf32, #tpu.memory_space<vmem>>, vector<1x128xf32>
    %4 = vector.broadcast %3 : vector<1x128xf32> to vector<32x128xf32>
    %5 = arith.mulf %2, %4 : vector<32x128xf32>
    %c0_5 = arith.constant 0 : index
    %c0_6 = arith.constant 0 : index
    %6 = vector.load %arg4[%c0_5, %c0_6] : memref<1x128xf32, #tpu.memory_space<vmem>>, vector<1x128xf32>
    %7 = vector.broadcast %6 : vector<1x128xf32> to vector<32x128xf32>
    %8 = arith.addf %5, %7 : vector<32x128xf32>
    %cst_7 = arith.constant 0.000000e+00 : f32
    %9 = vector.broadcast %cst_7 : f32 to vector<32x128xf32>
    %10 = arith.cmpf ogt, %8, %9 : vector<32x128xf32>
    %cst_8 = arith.constant 1.000000e-01 : f32
    %11 = vector.broadcast %cst_8 : f32 to vector<32x128xf32>
    %12 = arith.mulf %11, %8 : vector<32x128xf32>
    %13 = arith.select %10, %8, %12 : vector<32x128xi1>, vector<32x128xf32>
    %14 = arith.truncf %13 : vector<32x128xf32> to vector<32x128xbf16>
    %c0_9 = arith.constant 0 : index
    %c0_10 = arith.constant 0 : index
    %15 = vector.load %arg5[%c0_9, %c0_10] : memref<32x128xbf16, #tpu.memory_space<vmem>>, vector<32x128xbf16>
    tpu.vector_store %arg5[%c0_9, %c0_10], %14 {strides = array<i32>} : memref<32x128xbf16, #tpu.memory_space<vmem>>, vector<32x128xbf16>,
    return
  }
  func.func @transform_0(%arg0: i32) -> (i32, i32) {
    %c0_i32 = arith.constant 0 : i32
    %c0_i32_0 = arith.constant 0 : i32
    return %arg0, %c0_i32 : i32, i32
  }
  func.func @transform_1(%arg0: i32) -> (i32, i32) {
    %c0_i32 = arith.constant 0 : i32
    %c0_i32_0 = arith.constant 0 : i32
    %c0_i32_1 = arith.constant 0 : i32
    return %c0_i32, %c0_i32_0 : i32, i32
  }
  func.func @transform_2(%arg0: i32) -> (i32, i32) {
    %c0_i32 = arith.constant 0 : i32
    %c0_i32_0 = arith.constant 0 : i32
    %c0_i32_1 = arith.constant 0 : i32
    return %c0_i32, %c0_i32_0 : i32, i32
  }
  func.func @transform_3(%arg0: i32) -> (i32, i32) {
    %c0_i32 = arith.constant 0 : i32
    %c0_i32_0 = arith.constant 0 : i32
    %c0_i32_1 = arith.constant 0 : i32
    return %c0_i32, %c0_i32_0 : i32, i32
  }
  func.func @transform_4(%arg0: i32) -> (i32, i32) {
    %c0_i32 = arith.constant 0 : i32
    %c0_i32_0 = arith.constant 0 : i32
    return %arg0, %c0_i32 : i32, i32
  }
}

module attributes {stable_mosaic.version = 11 : i64} {
  func.func @kernel(%arg0: i32, %arg1: memref<32x128xbf16, #tpu.memory_space<vmem>>, %arg2: memref<128x64xbf16, #tpu.memory_space<vmem>>, %arg3: memref<1x64xf32, #tpu.memory_space<vmem>>, %arg4: memref<1x64xf32, #tpu.memory_space<vmem>>, %arg5: memref<32x64xbf16, #tpu.memory_space<vmem>>) attributes {dimension_semantics = [#tpu.dimension_semantics<parallel>], iteration_bounds = array<i64: 1>, scalar_prefetch = 0 : i64, scratch_operands = 0 : i64, tpu.core_type = #tpu.core_type<tc>, window_params = [{transform_indices = @transform_0, window_bounds = array<i64: 32, 128>}, {pipeline_mode = #tpu.pipeline_mode<synchronous>, transform_indices = @transform_1, window_bounds = array<i64: 128, 64>}, {pipeline_mode = #tpu.pipeline_mode<synchronous>, transform_indices = @transform_2, window_bounds = array<i64: 1, 64>}, {pipeline_mode = #tpu.pipeline_mode<synchronous>, transform_indices = @transform_3, window_bounds = array<i64: 1, 64>}, {transform_indices = @transform_4, window_bounds = array<i64: 32, 64>}]} {
    %c0 = arith.constant 0 : index
    %c0_0 = arith.constant 0 : index
    %0 = vector.load %arg1[%c0, %c0_0] : memref<32x128xbf16, #tpu.memory_space<vmem>>, vector<32x128xbf16>
    %c0_1 = arith.constant 0 : index
    %c0_2 = arith.constant 0 : index
    %1 = vector.load %arg2[%c0_1, %c0_2] : memref<128x64xbf16, #tpu.memory_space<vmem>>, vector<128x64xbf16>
    %cst = arith.constant dense<0.000000e+00> : vector<32x64xf32>
    %2 = tpu.matmul %0, %1, %cst {dimension_numbers = #tpu.dot_dimension_numbers<[1], [0], [0], [1], [0, 0, 1, 1], [], []>} : vector<32x128xbf16>, vector<128x64xbf16>, vector<32x64xf32> -> vector<32x64xf32>
    %c0_3 = arith.constant 0 : index
    %c0_4 = arith.constant 0 : index
    %3 = vector.load %arg3[%c0_3, %c0_4] : memref<1x64xf32, #tpu.memory_space<vmem>>, vector<1x64xf32>
    %4 = vector.broadcast %3 : vector<1x64xf32> to vector<32x64xf32>
    %5 = arith.mulf %2, %4 : vector<32x64xf32>
    %c0_5 = arith.constant 0 : index
    %c0_6 = arith.constant 0 : index
    %6 = vector.load %arg4[%c0_5, %c0_6] : memref<1x64xf32, #tpu.memory_space<vmem>>, vector<1x64xf32>
    %7 = vector.broadcast %6 : vector<1x64xf32> to vector<32x64xf32>
    %8 = arith.addf %5, %7 : vector<32x64xf32>
    %cst_7 = arith.constant 0.000000e+00 : f32
    %9 = vector.broadcast %cst_7 : f32 to vector<32x64xf32>
    %10 = arith.cmpf ogt, %8, %9 : vector<32x64xf32>
    %cst_8 = arith.constant 1.000000e-01 : f32
    %11 = vector.broadcast %cst_8 : f32 to vector<32x64xf32>
    %12 = arith.mulf %11, %8 : vector<32x64xf32>
    %13 = arith.select %10, %8, %12 : vector<32x64xi1>, vector<32x64xf32>
    %14 = arith.truncf %13 : vector<32x64xf32> to vector<32x64xbf16>
    %c0_9 = arith.constant 0 : index
    %c0_10 = arith.constant 0 : index
    %15 = vector.load %arg5[%c0_9, %c0_10] : memref<32x64xbf16, #tpu.memory_space<vmem>>, vector<32x64xbf16>
    tpu.vector_store %arg5[%c0_9, %c0_10], %14 {strides = array<i32>} : memref<32x64xbf16, #tpu.memory_space<vmem>>, vector<32x64xbf16>,
    return
  }
  func.func @transform_0(%arg0: i32) -> (i32, i32) {
    %c0_i32 = arith.constant 0 : i32
    %c0_i32_0 = arith.constant 0 : i32
    return %arg0, %c0_i32 : i32, i32
  }
  func.func @transform_1(%arg0: i32) -> (i32, i32) {
    %c0_i32 = arith.constant 0 : i32
    %c0_i32_0 = arith.constant 0 : i32
    %c0_i32_1 = arith.constant 0 : i32
    return %c0_i32, %c0_i32_0 : i32, i32
  }
  func.func @transform_2(%arg0: i32) -> (i32, i32) {
    %c0_i32 = arith.constant 0 : i32
    %c0_i32_0 = arith.constant 0 : i32
    %c0_i32_1 = arith.constant 0 : i32
    return %c0_i32, %c0_i32_0 : i32, i32
  }
  func.func @transform_3(%arg0: i32) -> (i32, i32) {
    %c0_i32 = arith.constant 0 : i32
    %c0_i32_0 = arith.constant 0 : i32
    %c0_i32_1 = arith.constant 0 : i32
    return %c0_i32, %c0_i32_0 : i32, i32
  }
  func.func @transform_4(%arg0: i32) -> (i32, i32) {
    %c0_i32 = arith.constant 0 : i32
    %c0_i32_0 = arith.constant 0 : i32
    return %arg0, %c0_i32 : i32, i32
  }
}

module attributes {stable_mosaic.version = 11 : i64} {
  func.func @kernel(%arg0: i32, %arg1: memref<32x640xbf16, #tpu.memory_space<vmem>>, %arg2: memref<640x128xbf16, #tpu.memory_space<vmem>>, %arg3: memref<1x128xf32, #tpu.memory_space<vmem>>, %arg4: memref<1x128xf32, #tpu.memory_space<vmem>>, %arg5: memref<32x128xbf16, #tpu.memory_space<vmem>>) attributes {dimension_semantics = [#tpu.dimension_semantics<parallel>], iteration_bounds = array<i64: 1>, scalar_prefetch = 0 : i64, scratch_operands = 0 : i64, tpu.core_type = #tpu.core_type<tc>, window_params = [{transform_indices = @transform_0, window_bounds = array<i64: 32, 640>}, {pipeline_mode = #tpu.pipeline_mode<synchronous>, transform_indices = @transform_1, window_bounds = array<i64: 640, 128>}, {pipeline_mode = #tpu.pipeline_mode<synchronous>, transform_indices = @transform_2, window_bounds = array<i64: 1, 128>}, {pipeline_mode = #tpu.pipeline_mode<synchronous>, transform_indices = @transform_3, window_bounds = array<i64: 1, 128>}, {transform_indices = @transform_4, window_bounds = array<i64: 32, 128>}]} {
    %c0 = arith.constant 0 : index
    %c0_0 = arith.constant 0 : index
    %0 = vector.load %arg1[%c0, %c0_0] : memref<32x640xbf16, #tpu.memory_space<vmem>>, vector<32x640xbf16>
    %c0_1 = arith.constant 0 : index
    %c0_2 = arith.constant 0 : index
    %1 = vector.load %arg2[%c0_1, %c0_2] : memref<640x128xbf16, #tpu.memory_space<vmem>>, vector<640x128xbf16>
    %cst = arith.constant dense<0.000000e+00> : vector<32x128xf32>
    %2 = tpu.matmul %0, %1, %cst {dimension_numbers = #tpu.dot_dimension_numbers<[1], [0], [0], [1], [0, 0, 1, 1], [], []>} : vector<32x640xbf16>, vector<640x128xbf16>, vector<32x128xf32> -> vector<32x128xf32>
    %c0_3 = arith.constant 0 : index
    %c0_4 = arith.constant 0 : index
    %3 = vector.load %arg3[%c0_3, %c0_4] : memref<1x128xf32, #tpu.memory_space<vmem>>, vector<1x128xf32>
    %4 = vector.broadcast %3 : vector<1x128xf32> to vector<32x128xf32>
    %5 = arith.mulf %2, %4 : vector<32x128xf32>
    %c0_5 = arith.constant 0 : index
    %c0_6 = arith.constant 0 : index
    %6 = vector.load %arg4[%c0_5, %c0_6] : memref<1x128xf32, #tpu.memory_space<vmem>>, vector<1x128xf32>
    %7 = vector.broadcast %6 : vector<1x128xf32> to vector<32x128xf32>
    %8 = arith.addf %5, %7 : vector<32x128xf32>
    %cst_7 = arith.constant 0.000000e+00 : f32
    %9 = vector.broadcast %cst_7 : f32 to vector<32x128xf32>
    %10 = arith.cmpf ogt, %8, %9 : vector<32x128xf32>
    %cst_8 = arith.constant 1.000000e-01 : f32
    %11 = vector.broadcast %cst_8 : f32 to vector<32x128xf32>
    %12 = arith.mulf %11, %8 : vector<32x128xf32>
    %13 = arith.select %10, %8, %12 : vector<32x128xi1>, vector<32x128xf32>
    %14 = arith.truncf %13 : vector<32x128xf32> to vector<32x128xbf16>
    %c0_9 = arith.constant 0 : index
    %c0_10 = arith.constant 0 : index
    %15 = vector.load %arg5[%c0_9, %c0_10] : memref<32x128xbf16, #tpu.memory_space<vmem>>, vector<32x128xbf16>
    tpu.vector_store %arg5[%c0_9, %c0_10], %14 {strides = array<i32>} : memref<32x128xbf16, #tpu.memory_space<vmem>>, vector<32x128xbf16>,
    return
  }
  func.func @transform_0(%arg0: i32) -> (i32, i32) {
    %c0_i32 = arith.constant 0 : i32
    %c0_i32_0 = arith.constant 0 : i32
    return %arg0, %c0_i32 : i32, i32
  }
  func.func @transform_1(%arg0: i32) -> (i32, i32) {
    %c0_i32 = arith.constant 0 : i32
    %c0_i32_0 = arith.constant 0 : i32
    %c0_i32_1 = arith.constant 0 : i32
    return %c0_i32, %c0_i32_0 : i32, i32
  }
  func.func @transform_2(%arg0: i32) -> (i32, i32) {
    %c0_i32 = arith.constant 0 : i32
    %c0_i32_0 = arith.constant 0 : i32
    %c0_i32_1 = arith.constant 0 : i32
    return %c0_i32, %c0_i32_0 : i32, i32
  }
  func.func @transform_3(%arg0: i32) -> (i32, i32) {
    %c0_i32 = arith.constant 0 : i32
    %c0_i32_0 = arith.constant 0 : i32
    %c0_i32_1 = arith.constant 0 : i32
    return %c0_i32, %c0_i32_0 : i32, i32
  }
  func.func @transform_4(%arg0: i32) -> (i32, i32) {
    %c0_i32 = arith.constant 0 : i32
    %c0_i32_0 = arith.constant 0 : i32
    return %arg0, %c0_i32 : i32, i32
  }
}

module attributes {stable_mosaic.version = 11 : i64} {
  func.func @kernel(%arg0: i32, %arg1: memref<8x1152xbf16, #tpu.memory_space<vmem>>, %arg2: memref<1152x128xbf16, #tpu.memory_space<vmem>>, %arg3: memref<1x128xf32, #tpu.memory_space<vmem>>, %arg4: memref<1x128xf32, #tpu.memory_space<vmem>>, %arg5: memref<8x128xbf16, #tpu.memory_space<vmem>>) attributes {dimension_semantics = [#tpu.dimension_semantics<parallel>], iteration_bounds = array<i64: 1>, scalar_prefetch = 0 : i64, scratch_operands = 0 : i64, tpu.core_type = #tpu.core_type<tc>, window_params = [{transform_indices = @transform_0, window_bounds = array<i64: 8, 1152>}, {pipeline_mode = #tpu.pipeline_mode<synchronous>, transform_indices = @transform_1, window_bounds = array<i64: 1152, 128>}, {pipeline_mode = #tpu.pipeline_mode<synchronous>, transform_indices = @transform_2, window_bounds = array<i64: 1, 128>}, {pipeline_mode = #tpu.pipeline_mode<synchronous>, transform_indices = @transform_3, window_bounds = array<i64: 1, 128>}, {transform_indices = @transform_4, window_bounds = array<i64: 8, 128>}]} {
    %c0 = arith.constant 0 : index
    %c0_0 = arith.constant 0 : index
    %0 = vector.load %arg1[%c0, %c0_0] : memref<8x1152xbf16, #tpu.memory_space<vmem>>, vector<8x1152xbf16>
    %c0_1 = arith.constant 0 : index
    %c0_2 = arith.constant 0 : index
    %1 = vector.load %arg2[%c0_1, %c0_2] : memref<1152x128xbf16, #tpu.memory_space<vmem>>, vector<1152x128xbf16>
    %cst = arith.constant dense<0.000000e+00> : vector<8x128xf32>
    %2 = tpu.matmul %0, %1, %cst {dimension_numbers = #tpu.dot_dimension_numbers<[1], [0], [0], [1], [0, 0, 1, 1], [], []>} : vector<8x1152xbf16>, vector<1152x128xbf16>, vector<8x128xf32> -> vector<8x128xf32>
    %c0_3 = arith.constant 0 : index
    %c0_4 = arith.constant 0 : index
    %3 = vector.load %arg3[%c0_3, %c0_4] : memref<1x128xf32, #tpu.memory_space<vmem>>, vector<1x128xf32>
    %4 = vector.broadcast %3 : vector<1x128xf32> to vector<8x128xf32>
    %5 = arith.mulf %2, %4 : vector<8x128xf32>
    %c0_5 = arith.constant 0 : index
    %c0_6 = arith.constant 0 : index
    %6 = vector.load %arg4[%c0_5, %c0_6] : memref<1x128xf32, #tpu.memory_space<vmem>>, vector<1x128xf32>
    %7 = vector.broadcast %6 : vector<1x128xf32> to vector<8x128xf32>
    %8 = arith.addf %5, %7 : vector<8x128xf32>
    %cst_7 = arith.constant 0.000000e+00 : f32
    %9 = vector.broadcast %cst_7 : f32 to vector<8x128xf32>
    %10 = arith.cmpf ogt, %8, %9 : vector<8x128xf32>
    %cst_8 = arith.constant 1.000000e-01 : f32
    %11 = vector.broadcast %cst_8 : f32 to vector<8x128xf32>
    %12 = arith.mulf %11, %8 : vector<8x128xf32>
    %13 = arith.select %10, %8, %12 : vector<8x128xi1>, vector<8x128xf32>
    %14 = arith.truncf %13 : vector<8x128xf32> to vector<8x128xbf16>
    %c0_9 = arith.constant 0 : index
    %c0_10 = arith.constant 0 : index
    %15 = vector.load %arg5[%c0_9, %c0_10] : memref<8x128xbf16, #tpu.memory_space<vmem>>, vector<8x128xbf16>
    tpu.vector_store %arg5[%c0_9, %c0_10], %14 {strides = array<i32>} : memref<8x128xbf16, #tpu.memory_space<vmem>>, vector<8x128xbf16>,
    return
  }
  func.func @transform_0(%arg0: i32) -> (i32, i32) {
    %c0_i32 = arith.constant 0 : i32
    %c0_i32_0 = arith.constant 0 : i32
    return %arg0, %c0_i32 : i32, i32
  }
  func.func @transform_1(%arg0: i32) -> (i32, i32) {
    %c0_i32 = arith.constant 0 : i32
    %c0_i32_0 = arith.constant 0 : i32
    %c0_i32_1 = arith.constant 0 : i32
    return %c0_i32, %c0_i32_0 : i32, i32
  }
  func.func @transform_2(%arg0: i32) -> (i32, i32) {
    %c0_i32 = arith.constant 0 : i32
    %c0_i32_0 = arith.constant 0 : i32
    %c0_i32_1 = arith.constant 0 : i32
    return %c0_i32, %c0_i32_0 : i32, i32
  }
  func.func @transform_3(%arg0: i32) -> (i32, i32) {
    %c0_i32 = arith.constant 0 : i32
    %c0_i32_0 = arith.constant 0 : i32
    %c0_i32_1 = arith.constant 0 : i32
    return %c0_i32, %c0_i32_0 : i32, i32
  }
  func.func @transform_4(%arg0: i32) -> (i32, i32) {
    %c0_i32 = arith.constant 0 : i32
    %c0_i32_0 = arith.constant 0 : i32
    return %arg0, %c0_i32 : i32, i32
  }
}

module attributes {stable_mosaic.version = 11 : i64} {
  func.func @kernel(%arg0: i32, %arg1: memref<8x128xbf16, #tpu.memory_space<vmem>>, %arg2: memref<128x64xbf16, #tpu.memory_space<vmem>>, %arg3: memref<1x64xf32, #tpu.memory_space<vmem>>, %arg4: memref<1x64xf32, #tpu.memory_space<vmem>>, %arg5: memref<8x64xbf16, #tpu.memory_space<vmem>>) attributes {dimension_semantics = [#tpu.dimension_semantics<parallel>], iteration_bounds = array<i64: 1>, scalar_prefetch = 0 : i64, scratch_operands = 0 : i64, tpu.core_type = #tpu.core_type<tc>, window_params = [{transform_indices = @transform_0, window_bounds = array<i64: 8, 128>}, {pipeline_mode = #tpu.pipeline_mode<synchronous>, transform_indices = @transform_1, window_bounds = array<i64: 128, 64>}, {pipeline_mode = #tpu.pipeline_mode<synchronous>, transform_indices = @transform_2, window_bounds = array<i64: 1, 64>}, {pipeline_mode = #tpu.pipeline_mode<synchronous>, transform_indices = @transform_3, window_bounds = array<i64: 1, 64>}, {transform_indices = @transform_4, window_bounds = array<i64: 8, 64>}]} {
    %c0 = arith.constant 0 : index
    %c0_0 = arith.constant 0 : index
    %0 = vector.load %arg1[%c0, %c0_0] : memref<8x128xbf16, #tpu.memory_space<vmem>>, vector<8x128xbf16>
    %c0_1 = arith.constant 0 : index
    %c0_2 = arith.constant 0 : index
    %1 = vector.load %arg2[%c0_1, %c0_2] : memref<128x64xbf16, #tpu.memory_space<vmem>>, vector<128x64xbf16>
    %cst = arith.constant dense<0.000000e+00> : vector<8x64xf32>
    %2 = tpu.matmul %0, %1, %cst {dimension_numbers = #tpu.dot_dimension_numbers<[1], [0], [0], [1], [0, 0, 1, 1], [], []>} : vector<8x128xbf16>, vector<128x64xbf16>, vector<8x64xf32> -> vector<8x64xf32>
    %c0_3 = arith.constant 0 : index
    %c0_4 = arith.constant 0 : index
    %3 = vector.load %arg3[%c0_3, %c0_4] : memref<1x64xf32, #tpu.memory_space<vmem>>, vector<1x64xf32>
    %4 = vector.broadcast %3 : vector<1x64xf32> to vector<8x64xf32>
    %5 = arith.mulf %2, %4 : vector<8x64xf32>
    %c0_5 = arith.constant 0 : index
    %c0_6 = arith.constant 0 : index
    %6 = vector.load %arg4[%c0_5, %c0_6] : memref<1x64xf32, #tpu.memory_space<vmem>>, vector<1x64xf32>
    %7 = vector.broadcast %6 : vector<1x64xf32> to vector<8x64xf32>
    %8 = arith.addf %5, %7 : vector<8x64xf32>
    %cst_7 = arith.constant 0.000000e+00 : f32
    %9 = vector.broadcast %cst_7 : f32 to vector<8x64xf32>
    %10 = arith.cmpf ogt, %8, %9 : vector<8x64xf32>
    %cst_8 = arith.constant 1.000000e-01 : f32
    %11 = vector.broadcast %cst_8 : f32 to vector<8x64xf32>
    %12 = arith.mulf %11, %8 : vector<8x64xf32>
    %13 = arith.select %10, %8, %12 : vector<8x64xi1>, vector<8x64xf32>
    %14 = arith.truncf %13 : vector<8x64xf32> to vector<8x64xbf16>
    %c0_9 = arith.constant 0 : index
    %c0_10 = arith.constant 0 : index
    %15 = vector.load %arg5[%c0_9, %c0_10] : memref<8x64xbf16, #tpu.memory_space<vmem>>, vector<8x64xbf16>
    tpu.vector_store %arg5[%c0_9, %c0_10], %14 {strides = array<i32>} : memref<8x64xbf16, #tpu.memory_space<vmem>>, vector<8x64xbf16>,
    return
  }
  func.func @transform_0(%arg0: i32) -> (i32, i32) {
    %c0_i32 = arith.constant 0 : i32
    %c0_i32_0 = arith.constant 0 : i32
    return %arg0, %c0_i32 : i32, i32
  }
  func.func @transform_1(%arg0: i32) -> (i32, i32) {
    %c0_i32 = arith.constant 0 : i32
    %c0_i32_0 = arith.constant 0 : i32
    %c0_i32_1 = arith.constant 0 : i32
    return %c0_i32, %c0_i32_0 : i32, i32
  }
  func.func @transform_2(%arg0: i32) -> (i32, i32) {
    %c0_i32 = arith.constant 0 : i32
    %c0_i32_0 = arith.constant 0 : i32
    %c0_i32_1 = arith.constant 0 : i32
    return %c0_i32, %c0_i32_0 : i32, i32
  }
  func.func @transform_3(%arg0: i32) -> (i32, i32) {
    %c0_i32 = arith.constant 0 : i32
    %c0_i32_0 = arith.constant 0 : i32
    %c0_i32_1 = arith.constant 0 : i32
    return %c0_i32, %c0_i32_0 : i32, i32
  }
  func.func @transform_4(%arg0: i32) -> (i32, i32) {
    %c0_i32 = arith.constant 0 : i32
    %c0_i32_0 = arith.constant 0 : i32
    return %arg0, %c0_i32 : i32, i32
  }
}

module attributes {stable_mosaic.version = 11 : i64} {
  func.func @kernel(%arg0: i32, %arg1: memref<8x640xbf16, #tpu.memory_space<vmem>>, %arg2: memref<640x128xbf16, #tpu.memory_space<vmem>>, %arg3: memref<1x128xf32, #tpu.memory_space<vmem>>, %arg4: memref<1x128xf32, #tpu.memory_space<vmem>>, %arg5: memref<8x128xbf16, #tpu.memory_space<vmem>>) attributes {dimension_semantics = [#tpu.dimension_semantics<parallel>], iteration_bounds = array<i64: 1>, scalar_prefetch = 0 : i64, scratch_operands = 0 : i64, tpu.core_type = #tpu.core_type<tc>, window_params = [{transform_indices = @transform_0, window_bounds = array<i64: 8, 640>}, {pipeline_mode = #tpu.pipeline_mode<synchronous>, transform_indices = @transform_1, window_bounds = array<i64: 640, 128>}, {pipeline_mode = #tpu.pipeline_mode<synchronous>, transform_indices = @transform_2, window_bounds = array<i64: 1, 128>}, {pipeline_mode = #tpu.pipeline_mode<synchronous>, transform_indices = @transform_3, window_bounds = array<i64: 1, 128>}, {transform_indices = @transform_4, window_bounds = array<i64: 8, 128>}]} {
    %c0 = arith.constant 0 : index
    %c0_0 = arith.constant 0 : index
    %0 = vector.load %arg1[%c0, %c0_0] : memref<8x640xbf16, #tpu.memory_space<vmem>>, vector<8x640xbf16>
    %c0_1 = arith.constant 0 : index
    %c0_2 = arith.constant 0 : index
    %1 = vector.load %arg2[%c0_1, %c0_2] : memref<640x128xbf16, #tpu.memory_space<vmem>>, vector<640x128xbf16>
    %cst = arith.constant dense<0.000000e+00> : vector<8x128xf32>
    %2 = tpu.matmul %0, %1, %cst {dimension_numbers = #tpu.dot_dimension_numbers<[1], [0], [0], [1], [0, 0, 1, 1], [], []>} : vector<8x640xbf16>, vector<640x128xbf16>, vector<8x128xf32> -> vector<8x128xf32>
    %c0_3 = arith.constant 0 : index
    %c0_4 = arith.constant 0 : index
    %3 = vector.load %arg3[%c0_3, %c0_4] : memref<1x128xf32, #tpu.memory_space<vmem>>, vector<1x128xf32>
    %4 = vector.broadcast %3 : vector<1x128xf32> to vector<8x128xf32>
    %5 = arith.mulf %2, %4 : vector<8x128xf32>
    %c0_5 = arith.constant 0 : index
    %c0_6 = arith.constant 0 : index
    %6 = vector.load %arg4[%c0_5, %c0_6] : memref<1x128xf32, #tpu.memory_space<vmem>>, vector<1x128xf32>
    %7 = vector.broadcast %6 : vector<1x128xf32> to vector<8x128xf32>
    %8 = arith.addf %5, %7 : vector<8x128xf32>
    %cst_7 = arith.constant 0.000000e+00 : f32
    %9 = vector.broadcast %cst_7 : f32 to vector<8x128xf32>
    %10 = arith.cmpf ogt, %8, %9 : vector<8x128xf32>
    %cst_8 = arith.constant 1.000000e-01 : f32
    %11 = vector.broadcast %cst_8 : f32 to vector<8x128xf32>
    %12 = arith.mulf %11, %8 : vector<8x128xf32>
    %13 = arith.select %10, %8, %12 : vector<8x128xi1>, vector<8x128xf32>
    %14 = arith.truncf %13 : vector<8x128xf32> to vector<8x128xbf16>
    %c0_9 = arith.constant 0 : index
    %c0_10 = arith.constant 0 : index
    %15 = vector.load %arg5[%c0_9, %c0_10] : memref<8x128xbf16, #tpu.memory_space<vmem>>, vector<8x128xbf16>
    tpu.vector_store %arg5[%c0_9, %c0_10], %14 {strides = array<i32>} : memref<8x128xbf16, #tpu.memory_space<vmem>>, vector<8x128xbf16>,
    return
  }
  func.func @transform_0(%arg0: i32) -> (i32, i32) {
    %c0_i32 = arith.constant 0 : i32
    %c0_i32_0 = arith.constant 0 : i32
    return %arg0, %c0_i32 : i32, i32
  }
  func.func @transform_1(%arg0: i32) -> (i32, i32) {
    %c0_i32 = arith.constant 0 : i32
    %c0_i32_0 = arith.constant 0 : i32
    %c0_i32_1 = arith.constant 0 : i32
    return %c0_i32, %c0_i32_0 : i32, i32
  }
  func.func @transform_2(%arg0: i32) -> (i32, i32) {
    %c0_i32 = arith.constant 0 : i32
    %c0_i32_0 = arith.constant 0 : i32
    %c0_i32_1 = arith.constant 0 : i32
    return %c0_i32, %c0_i32_0 : i32, i32
  }
  func.func @transform_3(%arg0: i32) -> (i32, i32) {
    %c0_i32 = arith.constant 0 : i32
    %c0_i32_0 = arith.constant 0 : i32
    %c0_i32_1 = arith.constant 0 : i32
    return %c0_i32, %c0_i32_0 : i32, i32
  }
  func.func @transform_4(%arg0: i32) -> (i32, i32) {
    %c0_i32 = arith.constant 0 : i32
    %c0_i32_0 = arith.constant 0 : i32
    return %arg0, %c0_i32 : i32, i32
  }
}

module attributes {stable_mosaic.version = 11 : i64} {
  func.func @kernel(%arg0: i32, %arg1: memref<2x1152xbf16, #tpu.memory_space<vmem>>, %arg2: memref<1152x256xbf16, #tpu.memory_space<vmem>>, %arg3: memref<1x256xf32, #tpu.memory_space<vmem>>, %arg4: memref<1x256xf32, #tpu.memory_space<vmem>>, %arg5: memref<2x256xbf16, #tpu.memory_space<vmem>>) attributes {dimension_semantics = [#tpu.dimension_semantics<parallel>], iteration_bounds = array<i64: 1>, scalar_prefetch = 0 : i64, scratch_operands = 0 : i64, tpu.core_type = #tpu.core_type<tc>, window_params = [{transform_indices = @transform_0, window_bounds = array<i64: 2, 1152>}, {pipeline_mode = #tpu.pipeline_mode<synchronous>, transform_indices = @transform_1, window_bounds = array<i64: 1152, 256>}, {pipeline_mode = #tpu.pipeline_mode<synchronous>, transform_indices = @transform_2, window_bounds = array<i64: 1, 256>}, {pipeline_mode = #tpu.pipeline_mode<synchronous>, transform_indices = @transform_3, window_bounds = array<i64: 1, 256>}, {transform_indices = @transform_4, window_bounds = array<i64: 2, 256>}]} {
    %c0 = arith.constant 0 : index
    %c0_0 = arith.constant 0 : index
    %0 = vector.load %arg1[%c0, %c0_0] : memref<2x1152xbf16, #tpu.memory_space<vmem>>, vector<2x1152xbf16>
    %c0_1 = arith.constant 0 : index
    %c0_2 = arith.constant 0 : index
    %1 = vector.load %arg2[%c0_1, %c0_2] : memref<1152x256xbf16, #tpu.memory_space<vmem>>, vector<1152x256xbf16>
    %cst = arith.constant dense<0.000000e+00> : vector<2x256xf32>
    %2 = tpu.matmul %0, %1, %cst {dimension_numbers = #tpu.dot_dimension_numbers<[1], [0], [0], [1], [0, 0, 1, 1], [], []>} : vector<2x1152xbf16>, vector<1152x256xbf16>, vector<2x256xf32> -> vector<2x256xf32>
    %c0_3 = arith.constant 0 : index
    %c0_4 = arith.constant 0 : index
    %3 = vector.load %arg3[%c0_3, %c0_4] : memref<1x256xf32, #tpu.memory_space<vmem>>, vector<1x256xf32>
    %4 = vector.broadcast %3 : vector<1x256xf32> to vector<2x256xf32>
    %5 = arith.mulf %2, %4 : vector<2x256xf32>
    %c0_5 = arith.constant 0 : index
    %c0_6 = arith.constant 0 : index
    %6 = vector.load %arg4[%c0_5, %c0_6] : memref<1x256xf32, #tpu.memory_space<vmem>>, vector<1x256xf32>
    %7 = vector.broadcast %6 : vector<1x256xf32> to vector<2x256xf32>
    %8 = arith.addf %5, %7 : vector<2x256xf32>
    %cst_7 = arith.constant 0.000000e+00 : f32
    %9 = vector.broadcast %cst_7 : f32 to vector<2x256xf32>
    %10 = arith.cmpf ogt, %8, %9 : vector<2x256xf32>
    %cst_8 = arith.constant 1.000000e-01 : f32
    %11 = vector.broadcast %cst_8 : f32 to vector<2x256xf32>
    %12 = arith.mulf %11, %8 : vector<2x256xf32>
    %13 = arith.select %10, %8, %12 : vector<2x256xi1>, vector<2x256xf32>
    %14 = arith.truncf %13 : vector<2x256xf32> to vector<2x256xbf16>
    %c0_9 = arith.constant 0 : index
    %c0_10 = arith.constant 0 : index
    %15 = vector.load %arg5[%c0_9, %c0_10] : memref<2x256xbf16, #tpu.memory_space<vmem>>, vector<2x256xbf16>
    tpu.vector_store %arg5[%c0_9, %c0_10], %14 {strides = array<i32>} : memref<2x256xbf16, #tpu.memory_space<vmem>>, vector<2x256xbf16>,
    return
  }
  func.func @transform_0(%arg0: i32) -> (i32, i32) {
    %c0_i32 = arith.constant 0 : i32
    %c0_i32_0 = arith.constant 0 : i32
    return %arg0, %c0_i32 : i32, i32
  }
  func.func @transform_1(%arg0: i32) -> (i32, i32) {
    %c0_i32 = arith.constant 0 : i32
    %c0_i32_0 = arith.constant 0 : i32
    %c0_i32_1 = arith.constant 0 : i32
    return %c0_i32, %c0_i32_0 : i32, i32
  }
  func.func @transform_2(%arg0: i32) -> (i32, i32) {
    %c0_i32 = arith.constant 0 : i32
    %c0_i32_0 = arith.constant 0 : i32
    %c0_i32_1 = arith.constant 0 : i32
    return %c0_i32, %c0_i32_0 : i32, i32
  }
  func.func @transform_3(%arg0: i32) -> (i32, i32) {
    %c0_i32 = arith.constant 0 : i32
    %c0_i32_0 = arith.constant 0 : i32
    %c0_i32_1 = arith.constant 0 : i32
    return %c0_i32, %c0_i32_0 : i32, i32
  }
  func.func @transform_4(%arg0: i32) -> (i32, i32) {
    %c0_i32 = arith.constant 0 : i32
    %c0_i32_0 = arith.constant 0 : i32
    return %arg0, %c0_i32 : i32, i32
  }
}

module attributes {stable_mosaic.version = 11 : i64} {
  func.func @kernel(%arg0: i32, %arg1: memref<2x256xbf16, #tpu.memory_space<vmem>>, %arg2: memref<256x128xbf16, #tpu.memory_space<vmem>>, %arg3: memref<1x128xf32, #tpu.memory_space<vmem>>, %arg4: memref<1x128xf32, #tpu.memory_space<vmem>>, %arg5: memref<2x128xbf16, #tpu.memory_space<vmem>>) attributes {dimension_semantics = [#tpu.dimension_semantics<parallel>], iteration_bounds = array<i64: 1>, scalar_prefetch = 0 : i64, scratch_operands = 0 : i64, tpu.core_type = #tpu.core_type<tc>, window_params = [{transform_indices = @transform_0, window_bounds = array<i64: 2, 256>}, {pipeline_mode = #tpu.pipeline_mode<synchronous>, transform_indices = @transform_1, window_bounds = array<i64: 256, 128>}, {pipeline_mode = #tpu.pipeline_mode<synchronous>, transform_indices = @transform_2, window_bounds = array<i64: 1, 128>}, {pipeline_mode = #tpu.pipeline_mode<synchronous>, transform_indices = @transform_3, window_bounds = array<i64: 1, 128>}, {transform_indices = @transform_4, window_bounds = array<i64: 2, 128>}]} {
    %c0 = arith.constant 0 : index
    %c0_0 = arith.constant 0 : index
    %0 = vector.load %arg1[%c0, %c0_0] : memref<2x256xbf16, #tpu.memory_space<vmem>>, vector<2x256xbf16>
    %c0_1 = arith.constant 0 : index
    %c0_2 = arith.constant 0 : index
    %1 = vector.load %arg2[%c0_1, %c0_2] : memref<256x128xbf16, #tpu.memory_space<vmem>>, vector<256x128xbf16>
    %cst = arith.constant dense<0.000000e+00> : vector<2x128xf32>
    %2 = tpu.matmul %0, %1, %cst {dimension_numbers = #tpu.dot_dimension_numbers<[1], [0], [0], [1], [0, 0, 1, 1], [], []>} : vector<2x256xbf16>, vector<256x128xbf16>, vector<2x128xf32> -> vector<2x128xf32>
    %c0_3 = arith.constant 0 : index
    %c0_4 = arith.constant 0 : index
    %3 = vector.load %arg3[%c0_3, %c0_4] : memref<1x128xf32, #tpu.memory_space<vmem>>, vector<1x128xf32>
    %4 = vector.broadcast %3 : vector<1x128xf32> to vector<2x128xf32>
    %5 = arith.mulf %2, %4 : vector<2x128xf32>
    %c0_5 = arith.constant 0 : index
    %c0_6 = arith.constant 0 : index
    %6 = vector.load %arg4[%c0_5, %c0_6] : memref<1x128xf32, #tpu.memory_space<vmem>>, vector<1x128xf32>
    %7 = vector.broadcast %6 : vector<1x128xf32> to vector<2x128xf32>
    %8 = arith.addf %5, %7 : vector<2x128xf32>
    %cst_7 = arith.constant 0.000000e+00 : f32
    %9 = vector.broadcast %cst_7 : f32 to vector<2x128xf32>
    %10 = arith.cmpf ogt, %8, %9 : vector<2x128xf32>
    %cst_8 = arith.constant 1.000000e-01 : f32
    %11 = vector.broadcast %cst_8 : f32 to vector<2x128xf32>
    %12 = arith.mulf %11, %8 : vector<2x128xf32>
    %13 = arith.select %10, %8, %12 : vector<2x128xi1>, vector<2x128xf32>
    %14 = arith.truncf %13 : vector<2x128xf32> to vector<2x128xbf16>
    %c0_9 = arith.constant 0 : index
    %c0_10 = arith.constant 0 : index
    %15 = vector.load %arg5[%c0_9, %c0_10] : memref<2x128xbf16, #tpu.memory_space<vmem>>, vector<2x128xbf16>
    tpu.vector_store %arg5[%c0_9, %c0_10], %14 {strides = array<i32>} : memref<2x128xbf16, #tpu.memory_space<vmem>>, vector<2x128xbf16>,
    return
  }
  func.func @transform_0(%arg0: i32) -> (i32, i32) {
    %c0_i32 = arith.constant 0 : i32
    %c0_i32_0 = arith.constant 0 : i32
    return %arg0, %c0_i32 : i32, i32
  }
  func.func @transform_1(%arg0: i32) -> (i32, i32) {
    %c0_i32 = arith.constant 0 : i32
    %c0_i32_0 = arith.constant 0 : i32
    %c0_i32_1 = arith.constant 0 : i32
    return %c0_i32, %c0_i32_0 : i32, i32
  }
  func.func @transform_2(%arg0: i32) -> (i32, i32) {
    %c0_i32 = arith.constant 0 : i32
    %c0_i32_0 = arith.constant 0 : i32
    %c0_i32_1 = arith.constant 0 : i32
    return %c0_i32, %c0_i32_0 : i32, i32
  }
  func.func @transform_3(%arg0: i32) -> (i32, i32) {
    %c0_i32 = arith.constant 0 : i32
    %c0_i32_0 = arith.constant 0 : i32
    %c0_i32_1 = arith.constant 0 : i32
    return %c0_i32, %c0_i32_0 : i32, i32
  }
  func.func @transform_4(%arg0: i32) -> (i32, i32) {
    %c0_i32 = arith.constant 0 : i32
    %c0_i32_0 = arith.constant 0 : i32
    return %arg0, %c0_i32 : i32, i32
  }
}

module attributes {stable_mosaic.version = 11 : i64} {
  func.func @kernel(%arg0: i32, %arg1: memref<2x128xbf16, #tpu.memory_space<vmem>>, %arg2: memref<128x256xbf16, #tpu.memory_space<vmem>>, %arg3: memref<1x256xf32, #tpu.memory_space<vmem>>, %arg4: memref<1x256xf32, #tpu.memory_space<vmem>>, %arg5: memref<2x256xbf16, #tpu.memory_space<vmem>>) attributes {dimension_semantics = [#tpu.dimension_semantics<parallel>], iteration_bounds = array<i64: 1>, scalar_prefetch = 0 : i64, scratch_operands = 0 : i64, tpu.core_type = #tpu.core_type<tc>, window_params = [{transform_indices = @transform_0, window_bounds = array<i64: 2, 128>}, {pipeline_mode = #tpu.pipeline_mode<synchronous>, transform_indices = @transform_1, window_bounds = array<i64: 128, 256>}, {pipeline_mode = #tpu.pipeline_mode<synchronous>, transform_indices = @transform_2, window_bounds = array<i64: 1, 256>}, {pipeline_mode = #tpu.pipeline_mode<synchronous>, transform_indices = @transform_3, window_bounds = array<i64: 1, 256>}, {transform_indices = @transform_4, window_bounds = array<i64: 2, 256>}]} {
    %c0 = arith.constant 0 : index
    %c0_0 = arith.constant 0 : index
    %0 = vector.load %arg1[%c0, %c0_0] : memref<2x128xbf16, #tpu.memory_space<vmem>>, vector<2x128xbf16>
    %c0_1 = arith.constant 0 : index
    %c0_2 = arith.constant 0 : index
    %1 = vector.load %arg2[%c0_1, %c0_2] : memref<128x256xbf16, #tpu.memory_space<vmem>>, vector<128x256xbf16>
    %cst = arith.constant dense<0.000000e+00> : vector<2x256xf32>
    %2 = tpu.matmul %0, %1, %cst {dimension_numbers = #tpu.dot_dimension_numbers<[1], [0], [0], [1], [0, 0, 1, 1], [], []>} : vector<2x128xbf16>, vector<128x256xbf16>, vector<2x256xf32> -> vector<2x256xf32>
    %c0_3 = arith.constant 0 : index
    %c0_4 = arith.constant 0 : index
    %3 = vector.load %arg3[%c0_3, %c0_4] : memref<1x256xf32, #tpu.memory_space<vmem>>, vector<1x256xf32>
    %4 = vector.broadcast %3 : vector<1x256xf32> to vector<2x256xf32>
    %5 = arith.mulf %2, %4 : vector<2x256xf32>
    %c0_5 = arith.constant 0 : index
    %c0_6 = arith.constant 0 : index
    %6 = vector.load %arg4[%c0_5, %c0_6] : memref<1x256xf32, #tpu.memory_space<vmem>>, vector<1x256xf32>
    %7 = vector.broadcast %6 : vector<1x256xf32> to vector<2x256xf32>
    %8 = arith.addf %5, %7 : vector<2x256xf32>
    %cst_7 = arith.constant 0.000000e+00 : f32
    %9 = vector.broadcast %cst_7 : f32 to vector<2x256xf32>
    %10 = arith.cmpf ogt, %8, %9 : vector<2x256xf32>
    %cst_8 = arith.constant 1.000000e-01 : f32
    %11 = vector.broadcast %cst_8 : f32 to vector<2x256xf32>
    %12 = arith.mulf %11, %8 : vector<2x256xf32>
    %13 = arith.select %10, %8, %12 : vector<2x256xi1>, vector<2x256xf32>
    %14 = arith.truncf %13 : vector<2x256xf32> to vector<2x256xbf16>
    %c0_9 = arith.constant 0 : index
    %c0_10 = arith.constant 0 : index
    %15 = vector.load %arg5[%c0_9, %c0_10] : memref<2x256xbf16, #tpu.memory_space<vmem>>, vector<2x256xbf16>
    tpu.vector_store %arg5[%c0_9, %c0_10], %14 {strides = array<i32>} : memref<2x256xbf16, #tpu.memory_space<vmem>>, vector<2x256xbf16>,
    return
  }
  func.func @transform_0(%arg0: i32) -> (i32, i32) {
    %c0_i32 = arith.constant 0 : i32
    %c0_i32_0 = arith.constant 0 : i32
    return %arg0, %c0_i32 : i32, i32
  }
  func.func @transform_1(%arg0: i32) -> (i32, i32) {
    %c0_i32 = arith.constant 0 : i32
    %c0_i32_0 = arith.constant 0 : i32
    %c0_i32_1 = arith.constant 0 : i32
    return %c0_i32, %c0_i32_0 : i32, i32
  }
  func.func @transform_2(%arg0: i32) -> (i32, i32) {
    %c0_i32 = arith.constant 0 : i32
    %c0_i32_0 = arith.constant 0 : i32
    %c0_i32_1 = arith.constant 0 : i32
    return %c0_i32, %c0_i32_0 : i32, i32
  }
  func.func @transform_3(%arg0: i32) -> (i32, i32) {
    %c0_i32 = arith.constant 0 : i32
    %c0_i32_0 = arith.constant 0 : i32
    %c0_i32_1 = arith.constant 0 : i32
    return %c0_i32, %c0_i32_0 : i32, i32
  }
  func.func @transform_4(%arg0: i32) -> (i32, i32) {
    %c0_i32 = arith.constant 0 : i32
    %c0_i32_0 = arith.constant 0 : i32
    return %arg0, %c0_i32 : i32, i32
  }
}

module attributes {stable_mosaic.version = 11 : i64} {
  func.func @_heads_kernel(%arg0: i32, %arg1: i32, %arg2: memref<8x256xbf16, #tpu.memory_space<vmem>>, %arg3: memref<1x1x256x256xbf16, #tpu.memory_space<vmem>>, %arg4: memref<1x1x1x256xf32, #tpu.memory_space<vmem>>, %arg5: memref<1x8x256xf32, #tpu.memory_space<vmem>>, %arg6: memref<8x256xf32, #tpu.memory_space<vmem>>) attributes {dimension_semantics = [#tpu.dimension_semantics<parallel>, #tpu.dimension_semantics<arbitrary>], iteration_bounds = array<i64: 4, 5>, scalar_prefetch = 0 : i64, scratch_operands = 1 : i64, tpu.core_type = #tpu.core_type<tc>, window_params = [{pipeline_mode = #tpu.pipeline_mode<synchronous>, transform_indices = @transform_0, window_bounds = array<i64: 8, 256>}, {transform_indices = @transform_1, window_bounds = array<i64: 1, 1, 256, 256>}, {transform_indices = @transform_2, window_bounds = array<i64: 1, 1, 1, 256>}, {transform_indices = @transform_3, window_bounds = array<i64: 1, 8, 256>}]} {
    %c0_i32 = arith.constant 0 : i32
    %0 = arith.cmpi eq, %arg1, %c0_i32 : i32
    %1 = arith.extui %0 : i1 to i32
    %c0_i32_0 = arith.constant 0 : i32
    %2 = arith.cmpi ne, %1, %c0_i32_0 : i32
    scf.if %2 {
      %c0_13 = arith.constant 0 : index
      %c0_14 = arith.constant 0 : index
      %18 = vector.load %arg2[%c0_13, %c0_14] : memref<8x256xbf16, #tpu.memory_space<vmem>>, vector<8x256xbf16>
      %19 = arith.extf %18 : vector<8x256xbf16> to vector<8x256xf32>
      %c0_15 = arith.constant 0 : index
      %c0_16 = arith.constant 0 : index
      %20 = vector.load %arg6[%c0_15, %c0_16] : memref<8x256xf32, #tpu.memory_space<vmem>>, vector<8x256xf32>
      tpu.vector_store %arg6[%c0_15, %c0_16], %19 {strides = array<i32>} : memref<8x256xf32, #tpu.memory_space<vmem>>, vector<8x256xf32>,
    } else {
    }
    %c0 = arith.constant 0 : index
    %c0_1 = arith.constant 0 : index
    %3 = vector.load %arg6[%c0, %c0_1] : memref<8x256xf32, #tpu.memory_space<vmem>>, vector<8x256xf32>
    %4 = arith.truncf %3 : vector<8x256xf32> to vector<8x256xbf16>
    %c0_2 = arith.constant 0 : index
    %c0_3 = arith.constant 0 : index
    %c0_4 = arith.constant 0 : index
    %c0_5 = arith.constant 0 : index
    %5 = vector.load %arg3[%c0_2, %c0_3, %c0_4, %c0_5] : memref<1x1x256x256xbf16, #tpu.memory_space<vmem>>, vector<1x1x256x256xbf16>
    %6 = vector.shape_cast %5 : vector<1x1x256x256xbf16> to vector<256x256xbf16>
    %cst = arith.constant dense<0.000000e+00> : vector<8x256xf32>
    %7 = tpu.matmul %4, %6, %cst {dimension_numbers = #tpu.dot_dimension_numbers<[1], [0], [0], [1], [0, 0, 1, 1], [], []>} : vector<8x256xbf16>, vector<256x256xbf16>, vector<8x256xf32> -> vector<8x256xf32>
    %c0_6 = arith.constant 0 : index
    %c0_7 = arith.constant 0 : index
    %c0_8 = arith.constant 0 : index
    %c0_9 = arith.constant 0 : index
    %8 = vector.load %arg4[%c0_6, %c0_7, %c0_8, %c0_9] : memref<1x1x1x256xf32, #tpu.memory_space<vmem>>, vector<1x1x1x256xf32>
    %9 = vector.shape_cast %8 : vector<1x1x1x256xf32> to vector<1x256xf32>
    %10 = vector.broadcast %9 : vector<1x256xf32> to vector<8x256xf32>
    %11 = arith.addf %7, %10 : vector<8x256xf32>
    %c4_i32 = arith.constant 4 : i32
    %12 = arith.cmpi slt, %arg1, %c4_i32 : i32
    %13 = arith.extui %12 : i1 to i32
    %c0_i32_10 = arith.constant 0 : i32
    %14 = arith.cmpi ne, %13, %c0_i32_10 : i32
    scf.if %14 {
      %cst_13 = arith.constant 0.000000e+00 : f32
      %18 = vector.broadcast %cst_13 : f32 to vector<8x256xf32>
      %19 = arith.cmpf ogt, %11, %18 : vector<8x256xf32>
      %cst_14 = arith.constant 1.000000e-01 : f32
      %20 = vector.broadcast %cst_14 : f32 to vector<8x256xf32>
      %21 = arith.mulf %20, %11 : vector<8x256xf32>
      %22 = arith.select %19, %11, %21 : vector<8x256xi1>, vector<8x256xf32>
      %c0_15 = arith.constant 0 : index
      %c0_16 = arith.constant 0 : index
      %23 = vector.load %arg6[%c0_15, %c0_16] : memref<8x256xf32, #tpu.memory_space<vmem>>, vector<8x256xf32>
      tpu.vector_store %arg6[%c0_15, %c0_16], %22 {strides = array<i32>} : memref<8x256xf32, #tpu.memory_space<vmem>>, vector<8x256xf32>,
    } else {
    }
    %c4_i32_11 = arith.constant 4 : i32
    %15 = arith.cmpi eq, %arg1, %c4_i32_11 : i32
    %16 = arith.extui %15 : i1 to i32
    %c0_i32_12 = arith.constant 0 : i32
    %17 = arith.cmpi ne, %16, %c0_i32_12 : i32
    scf.if %17 {
      %18 = arith.negf %11 : vector<8x256xf32>
      %19 = math.exp %18 : vector<8x256xf32>
      %cst_13 = arith.constant 1.000000e+00 : f32
      %20 = vector.broadcast %cst_13 : f32 to vector<8x256xf32>
      %21 = arith.addf %20, %19 : vector<8x256xf32>
      %22 = arith.divf %20, %21 : vector<8x256xf32>
      %c0_14 = arith.constant 0 : index
      %c0_15 = arith.constant 0 : index
      %c0_16 = arith.constant 0 : index
      %23 = vector.load %arg5[%c0_14, %c0_15, %c0_16] : memref<1x8x256xf32, #tpu.memory_space<vmem>>, vector<1x8x256xf32>
      %24 = vector.shape_cast %23 : vector<1x8x256xf32> to vector<8x256xf32>
      %25 = vector.shape_cast %22 : vector<8x256xf32> to vector<1x8x256xf32>
      tpu.vector_store %arg5[%c0_14, %c0_15, %c0_16], %25 {strides = array<i32>} : memref<1x8x256xf32, #tpu.memory_space<vmem>>, vector<1x8x256xf32>,
    } else {
    }
    return
  }
  func.func @transform_0(%arg0: i32, %arg1: i32) -> (i32, i32) {
    %c0_i32 = arith.constant 0 : i32
    %c0_i32_0 = arith.constant 0 : i32
    %c0_i32_1 = arith.constant 0 : i32
    return %c0_i32, %c0_i32_0 : i32, i32
  }
  func.func @transform_1(%arg0: i32, %arg1: i32) -> (i32, i32, i32, i32) {
    %c0_i32 = arith.constant 0 : i32
    %c0_i32_0 = arith.constant 0 : i32
    %c0_i32_1 = arith.constant 0 : i32
    return %arg0, %arg1, %c0_i32, %c0_i32_0 : i32, i32, i32, i32
  }
  func.func @transform_2(%arg0: i32, %arg1: i32) -> (i32, i32, i32, i32) {
    %c0_i32 = arith.constant 0 : i32
    %c0_i32_0 = arith.constant 0 : i32
    %c0_i32_1 = arith.constant 0 : i32
    return %arg0, %arg1, %c0_i32, %c0_i32_0 : i32, i32, i32, i32
  }
  func.func @transform_3(%arg0: i32, %arg1: i32) -> (i32, i32, i32) {
    %c0_i32 = arith.constant 0 : i32
    %c0_i32_0 = arith.constant 0 : i32
    %c0_i32_1 = arith.constant 0 : i32
    return %arg0, %c0_i32, %c0_i32_0 : i32, i32, i32
  }
}

</mosaic_0001>

<llo_original>
// kernel: darknet_forward.25
$region0: #{darknet_forward.25}
  #allocation0 [shape = 'u32[]', space=smem, size = 0x4, offset = 0x4, fixed_abs, tag = 'smem constant byte address 0x4 - core index']
  #allocation1 [shape = 'u32[144,128]{1,0:T(1,128)}', space=vmem, size = 0x12000, scoped, tag = 'internal scratch']
  %s0 = inlined_call_operand.vmem [shape: bf16[2048,128], index: 0, kind: input, shape index: {}]
  %s1 = inlined_call_operand.vmem [shape: bf16[128,16], index: 1, kind: input, shape index: {}]
  %s2 = inlined_call_operand.vmem [shape: f32[1,16], index: 2, kind: input, shape index: {}]
  %s3 = inlined_call_operand.vmem [shape: f32[1,16], index: 3, kind: input, shape index: {}]
  %s4 = inlined_call_operand.vmem [shape: bf16[2048,16], index: 4, kind: output, shape index: {}]
  %s5 = sld [smem:[#allocation0]]
  $region49: #{darknet_forward.25} parent=0
    _
  %s7 = ssub.s32 1, %s5
  %s8 = scalar_select 0, %s7, %s5
  loop: start=0, step=1, limit=6
  $region2: #{darknet_forward.25} parent=0 // loop_pre_header
    _
  $region3: #{darknet_forward.25} parent=0 // loop_header
    %s10 = sphi 0, %s14
    %p11 = scmp.ge.s32.totalorder %s10, 6
    %s20 = sphi 0, %s22
    %s23 = sphi 0, %s20
    %s24 = sphi 0, %s23
    %s40 = sphi 0, %s24
    %s44 = sphi 0, %s44
    %s46 = sphi 0, %s44
    %s47 = sphi 0, %s46
    %s61 = sphi 0, %s47
    %s65 = sphi 0, %s65
    %s67 = sphi 0, %s65
    %s68 = sphi 0, %s67
    %s82 = sphi 0, %s68
    %s86 = sphi 0, %s86
    %s88 = sphi 0, %s86
    %s89 = sphi 0, %s88
    %s103 = sphi 0, %s89
    %s109 = sphi 0, %s111
    %s112 = sphi 0, %s109
    %s113 = sphi 0, %s112
    %s129 = sphi 0, %s113
  $region4: #{darknet_forward.25} parent=0 // loop_header_branch
    %13 = sbr.rel (%p11) target = $region8
  $region5: #{darknet_forward.25} parent=0 // loop_body
    %s15 = ssub.s32 %s10, 1
    %s16 = ssub.s32 %s10, 2
    %s17 = sadd.s32 %s10, 1
    %s18 = ssub.s32 %s10, %s17
    %p19 = scmp.eq.s32.totalorder %s18, 0
    %s21 = sadd.s32 %s20, 1
    %s22 = scalar_select %p19, %s20, %s21
    %p25 = pneg %p19
    %p26 = scmp.eq.s32.totalorder %s10, 3
    %p27 = por %p25, %p26
    %p28 = scmp.ne.s32.totalorder %s20, %s23
    %p29 = scmp.eq.s32.totalorder %s10, 0
    %p30 = por %p28, %p29
    %p31 = scmp.ne.s32.totalorder %s20, %s23
    %p32 = scmp.eq.s32.totalorder %s15, 3
    %p33 = por %p31, %p32
    %p34 = scmp.ne.s32.totalorder %s23, %s24
    %p35 = scmp.eq.s32.totalorder %s15, 0
    %p36 = por %p34, %p35
    %p37 = scmp.ne.s32.totalorder %s23, %s24
    %p38 = scmp.eq.s32.totalorder %s16, 3
    %p39 = por %p37, %p38
    %p41 = scmp.ne.s32.totalorder %s24, %s40
    %p42 = scmp.eq.s32.totalorder %s16, 0
    %p43 = por %p41, %p42
    %s45 = sadd.s32 %s44, 1
    %p48 = scmp.eq.s32.totalorder %s10, 3
    %p49 = scmp.ne.s32.totalorder %s44, %s46
    %p50 = scmp.eq.s32.totalorder %s10, 0
    %p51 = por %p49, %p50
    %p52 = scmp.ne.s32.totalorder %s44, %s46
    %p53 = scmp.eq.s32.totalorder %s15, 3
    %p54 = por %p52, %p53
    %p55 = scmp.ne.s32.totalorder %s46, %s47
    %p56 = scmp.eq.s32.totalorder %s15, 0
    %p57 = por %p55, %p56
    %p58 = scmp.ne.s32.totalorder %s46, %s47
    %p59 = scmp.eq.s32.totalorder %s16, 3
    %p60 = por %p58, %p59
    %p62 = scmp.ne.s32.totalorder %s47, %s61
    %p63 = scmp.eq.s32.totalorder %s16, 0
    %p64 = por %p62, %p63
    %s66 = sadd.s32 %s65, 1
    %p69 = scmp.eq.s32.totalorder %s10, 3
    %p70 = scmp.ne.s32.totalorder %s65, %s67
    %p71 = scmp.eq.s32.totalorder %s10, 0
    %p72 = por %p70, %p71
    %p73 = scmp.ne.s32.totalorder %s65, %s67
    %p74 = scmp.eq.s32.totalorder %s15, 3
    %p75 = por %p73, %p74
    %p76 = scmp.ne.s32.totalorder %s67, %s68
    %p77 = scmp.eq.s32.totalorder %s15, 0
    %p78 = por %p76, %p77
    %p79 = scmp.ne.s32.totalorder %s67, %s68
    %p80 = scmp.eq.s32.totalorder %s16, 3
    %p81 = por %p79, %p80
    %p83 = scmp.ne.s32.totalorder %s68, %s82
    %p84 = scmp.eq.s32.totalorder %s16, 0
    %p85 = por %p83, %p84
    %s87 = sadd.s32 %s86, 1
    %p90 = scmp.eq.s32.totalorder %s10, 3
    %p91 = scmp.ne.s32.totalorder %s86, %s88
    %p92 = scmp.eq.s32.totalorder %s10, 0
    %p93 = por %p91, %p92
    %p94 = scmp.ne.s32.totalorder %s86, %s88
    %p95 = scmp.eq.s32.totalorder %s15, 3
    %p96 = por %p94, %p95
    %p97 = scmp.ne.s32.totalorder %s88, %s89
    %p98 = scmp.eq.s32.totalorder %s15, 0
    %p99 = por %p97, %p98
    %p100 = scmp.ne.s32.totalorder %s88, %s89
    %p101 = scmp.eq.s32.totalorder %s16, 3
    %p102 = por %p100, %p101
    %p104 = scmp.ne.s32.totalorder %s89, %s103
    %p105 = scmp.eq.s32.totalorder %s16, 0
    %p106 = por %p104, %p105
    %s107 = ssub.s32 %s10, %s17
    %p108 = scmp.eq.s32.totalorder %s107, 0
    %s110 = sadd.s32 %s109, 1
    %s111 = scalar_select %p108, %s109, %s110
    %p114 = pneg %p108
    %p115 = scmp.eq.s32.totalorder %s10, 3
    %p116 = por %p114, %p115
    %p117 = scmp.ne.s32.totalorder %s109, %s112
    %p118 = scmp.eq.s32.totalorder %s10, 0
    %p119 = por %p117, %p118
    %p120 = scmp.ne.s32.totalorder %s109, %s112
    %p121 = scmp.eq.s32.totalorder %s15, 3
    %p122 = por %p120, %p121
    %p123 = scmp.ne.s32.totalorder %s112, %s113
    %p124 = scmp.eq.s32.totalorder %s15, 0
    %p125 = por %p123, %p124
    %p126 = scmp.ne.s32.totalorder %s112, %s113
    %p127 = scmp.eq.s32.totalorder %s16, 3
    %p128 = por %p126, %p127
    %p130 = scmp.ne.s32.totalorder %s113, %s129
    %p131 = scmp.eq.s32.totalorder %s16, 0
    %p132 = por %p130, %p131
    %p133 = scmp.le.s32.totalorder 1, %s10
    %p134 = scmp.lt.s32.totalorder %s10, 5
    %p135 = pnand %p133, %p134
    %p136 = pneg %p135
    // Predicated region
    $region9: #{darknet_forward.25} parent=5 // pred_check
      _
    $region10: #{darknet_forward.25} parent=5 // pred_check_branch
      %138 = sbr.rel (%p135) target = $region12
    $region11: #{darknet_forward.25} parent=5 // pred_region
      %s139 = ssub.s32 %s10, 1
      // Predicated region
      $region13: #{darknet_forward.25} parent=11 // pred_check
        %p140 = pneg %p57
      $region14: #{darknet_forward.25} parent=11 // pred_check_branch
        %142 = sbr.rel (%p140) target = $region16
      $region15: #{darknet_forward.25} parent=11 // pred_region
        _
      $region16: #{darknet_forward.25} parent=11 // pred_fallthru
        _
      // Predicated region
      $region17: #{darknet_forward.25} parent=11 // pred_check
        %p143 = pneg %p78
      $region18: #{darknet_forward.25} parent=11 // pred_check_branch
        %145 = sbr.rel (%p143) target = $region20
      $region19: #{darknet_forward.25} parent=11 // pred_region
        _
      $region20: #{darknet_forward.25} parent=11 // pred_fallthru
        _
      // Predicated region
      $region21: #{darknet_forward.25} parent=11 // pred_check
        %p146 = pneg %p99
      $region22: #{darknet_forward.25} parent=11 // pred_check_branch
        %148 = sbr.rel (%p146) target = $region24
      $region23: #{darknet_forward.25} parent=11 // pred_region
        _
      $region24: #{darknet_forward.25} parent=11 // pred_fallthru
        _
    $region12: #{darknet_forward.25} parent=5 // pred_fallthru
      _
    %p149 = scmp.lt.s32.totalorder %s10, 4
    // Predicated region
    $region25: #{darknet_forward.25} parent=5 // pred_check
      %p150 = pneg %p149
    $region26: #{darknet_forward.25} parent=5 // pred_check_branch
      %152 = sbr.rel (%p150) target = $region28
    $region27: #{darknet_forward.25} parent=5 // pred_region
      // Predicated region
      $region29: #{darknet_forward.25} parent=27 // pred_check
        %p153 = pneg %p30
      $region30: #{darknet_forward.25} parent=27 // pred_check_branch
        %155 = sbr.rel (%p153) target = $region32
      $region31: #{darknet_forward.25} parent=27 // pred_region
        %s156 = smul.u32 64, %s10
        %p157 = scmp.lt.s32.totalorder %s156, 255
        %s158 = scalar_select %p157, %s156, 255
        %s159 = smul.addr %s158, 4
        %s160 = scalar_lea.vmem %s0, %s159
        %s161 = smul.u32 64, %s10
      $region32: #{darknet_forward.25} parent=27 // pred_fallthru
        _
    $region28: #{darknet_forward.25} parent=5 // pred_fallthru
      _
    %p162 = scmp.le.s32.totalorder 1, %s10
    %p163 = scmp.lt.s32.totalorder %s10, 5
    %p164 = pnand %p162, %p163
    %p165 = pneg %p164
    // Predicated region
    $region33: #{darknet_forward.25} parent=5 // pred_check
      _
    $region34: #{darknet_forward.25} parent=5 // pred_check_branch
      %167 = sbr.rel (%p164) target = $region36
    $region35: #{darknet_forward.25} parent=5 // pred_region
      %s168 = ssub.s32 %s10, 1
      %s169 = smul.u32 64, %s15
      %p170 = scmp.lt.s32.totalorder %s169, 255
      %s171 = scalar_select %p170, %s169, 255
      %s172 = smul.addr %s171, 4
      %s173 = scalar_lea.vmem %s0, %s172
      %p174 = pneg %p36
      %p175 = pneg %p33
      %p176 = pneg %p57
      %p177 = pneg %p54
      %p178 = pneg %p78
      %p179 = pneg %p75
      %p180 = pneg %p99
      %p181 = pneg %p96
      %p182 = pneg %p125
      %p183 = pneg %p122
      %s184 = smul.u32 64, %s15
      %p185 = scmp.lt.s32.totalorder %s184, 255
      %s186 = scalar_select %p185, %s184, 255
      %s187 = smul.addr %s186, 4
      %s188 = scalar_lea.vmem %s4, %s187
      %s189 = smul.u32 64, %s15
      %p190 = scmp.lt.s32.totalorder %s189, 255
      %s191 = scalar_select %p190, %s189, 255
      %s192 = smul.addr %s191, 4
      %s193 = scalar_lea.vmem %s0, %s192
      %s194 = smul.u32 64, %s15
      %s195 = smul.u32 64, %s15
      %p196 = scmp.lt.s32.totalorder %s195, 255
      %s197 = scalar_select %p196, %s195, 255
      %s198 = smul.addr %s197, 4
      %s199 = scalar_lea.vmem %s4, %s198
      %s200 = smul.u32 64, %s15
      %v202 = vld [vmem:[%s193] sm:$0xf]
      %v203 = vld [vmem:[%s193 + $0x4] sm:$0xf]
      %v204 = vld [vmem:[%s193 + $0x8] sm:$0xf]
      %v205 = vld [vmem:[%s193 + $0xc] sm:$0xf]
      %v206 = vld [vmem:[%s193 + $0x10] sm:$0xf]
      %v207 = vld [vmem:[%s193 + $0x14] sm:$0xf]
      %v208 = vld [vmem:[%s193 + $0x18] sm:$0xf]
      %v209 = vld [vmem:[%s193 + $0x1c] sm:$0xf]
      %v210 = vld [vmem:[%s193 + $0x20] sm:$0xf]
      %v211 = vld [vmem:[%s193 + $0x24] sm:$0xf]
      %v212 = vld [vmem:[%s193 + $0x28] sm:$0xf]
      %v213 = vld [vmem:[%s193 + $0x2c] sm:$0xf]
      %v214 = vld [vmem:[%s193 + $0x30] sm:$0xf]
      %v215 = vld [vmem:[%s193 + $0x34] sm:$0xf]
      %v216 = vld [vmem:[%s193 + $0x38] sm:$0xf]
      %v217 = vld [vmem:[%s193 + $0x3c] sm:$0xf]
      %v218 = vld [vmem:[%s193 + $0x40] sm:$0xf]
      %v219 = vld [vmem:[%s193 + $0x44] sm:$0xf]
      %v220 = vld [vmem:[%s193 + $0x48] sm:$0xf]
      %v221 = vld [vmem:[%s193 + $0x4c] sm:$0xf]
      %v222 = vld [vmem:[%s193 + $0x50] sm:$0xf]
      %v223 = vld [vmem:[%s193 + $0x54] sm:$0xf]
      %v224 = vld [vmem:[%s193 + $0x58] sm:$0xf]
      %v225 = vld [vmem:[%s193 + $0x5c] sm:$0xf]
      %v226 = vld [vmem:[%s193 + $0x60] sm:$0xf]
      %v227 = vld [vmem:[%s193 + $0x64] sm:$0xf]
      %v228 = vld [vmem:[%s193 + $0x68] sm:$0xf]
      %v229 = vld [vmem:[%s193 + $0x6c] sm:$0xf]
      %v230 = vld [vmem:[%s193 + $0x70] sm:$0xf]
      %v231 = vld [vmem:[%s193 + $0x74] sm:$0xf]
      %v232 = vld [vmem:[%s193 + $0x78] sm:$0xf]
      %v233 = vld [vmem:[%s193 + $0x7c] sm:$0xf]
      %v234 = vld [vmem:[%s193 + $0x80] sm:$0xf]
      %v235 = vld [vmem:[%s193 + $0x84] sm:$0xf]
      %v236 = vld [vmem:[%s193 + $0x88] sm:$0xf]
      %v237 = vld [vmem:[%s193 + $0x8c] sm:$0xf]
      %v238 = vld [vmem:[%s193 + $0x90] sm:$0xf]
      %v239 = vld [vmem:[%s193 + $0x94] sm:$0xf]
      %v240 = vld [vmem:[%s193 + $0x98] sm:$0xf]
      %v241 = vld [vmem:[%s193 + $0x9c] sm:$0xf]
      %v242 = vld [vmem:[%s193 + $0xa0] sm:$0xf]
      %v243 = vld [vmem:[%s193 + $0xa4] sm:$0xf]
      %v244 = vld [vmem:[%s193 + $0xa8] sm:$0xf]
      %v245 = vld [vmem:[%s193 + $0xac] sm:$0xf]
      %v246 = vld [vmem:[%s193 + $0xb0] sm:$0xf]
      %v247 = vld [vmem:[%s193 + $0xb4] sm:$0xf]
      %v248 = vld [vmem:[%s193 + $0xb8] sm:$0xf]
      %v249 = vld [vmem:[%s193 + $0xbc] sm:$0xf]
      %v250 = vld [vmem:[%s193 + $0xc0] sm:$0xf]
      %v251 = vld [vmem:[%s193 + $0xc4] sm:$0xf]
      %v252 = vld [vmem:[%s193 + $0xc8] sm:$0xf]
      %v253 = vld [vmem:[%s193 + $0xcc] sm:$0xf]
      %v254 = vld [vmem:[%s193 + $0xd0] sm:$0xf]
      %v255 = vld [vmem:[%s193 + $0xd4] sm:$0xf]
      %v256 = vld [vmem:[%s193 + $0xd8] sm:$0xf]
      %v257 = vld [vmem:[%s193 + $0xdc] sm:$0xf]
      %v258 = vld [vmem:[%s193 + $0xe0] sm:$0xf]
      %v259 = vld [vmem:[%s193 + $0xe4] sm:$0xf]
      %v260 = vld [vmem:[%s193 + $0xe8] sm:$0xf]
      %v261 = vld [vmem:[%s193 + $0xec] sm:$0xf]
      %v262 = vld [vmem:[%s193 + $0xf0] sm:$0xf]
      %v263 = vld [vmem:[%s193 + $0xf4] sm:$0xf]
      %v264 = vld [vmem:[%s193 + $0xf8] sm:$0xf]
      %v265 = vld [vmem:[%s193 + $0xfc] sm:$0xf]
      %v266 = vld [vmem:[%s1] sm:$0xf]
      %v267 = vld [vmem:[%s1 + $0x4] sm:$0xf]
      %v268 = vld [vmem:[%s1 + $0x8] sm:$0xf]
      %v269 = vld [vmem:[%s1 + $0xc] sm:$0xf]
      %v270 = vld [vmem:[%s1 + $0x10] sm:$0xf]
      %v271 = vld [vmem:[%s1 + $0x14] sm:$0xf]
      %v272 = vld [vmem:[%s1 + $0x18] sm:$0xf]
      %v273 = vld [vmem:[%s1 + $0x1c] sm:$0xf]
      %v274 = vld [vmem:[%s1 + $0x20] sm:$0xf]
      %v275 = vld [vmem:[%s1 + $0x24] sm:$0xf]
      %v276 = vld [vmem:[%s1 + $0x28] sm:$0xf]
      %v277 = vld [vmem:[%s1 + $0x2c] sm:$0xf]
      %v278 = vld [vmem:[%s1 + $0x30] sm:$0xf]
      %v279 = vld [vmem:[%s1 + $0x34] sm:$0xf]
      %v280 = vld [vmem:[%s1 + $0x38] sm:$0xf]
      %v281 = vld [vmem:[%s1 + $0x3c] sm:$0xf]
      %v346 = vunpack.c.l.b16 %v202
      %v347 = vunpack.c.l.b16 %v203
      %v348 = vunpack.c.l.b16 %v204
      %v349 = vunpack.c.l.b16 %v205
      %v350 = vunpack.c.l.b16 %v206
      %v351 = vunpack.c.l.b16 %v207
      %v352 = vunpack.c.l.b16 %v208
      %v353 = vunpack.c.l.b16 %v209
      %v354 = vunpack.c.l.b16 %v210
      %v355 = vunpack.c.l.b16 %v211
      %v356 = vunpack.c.l.b16 %v212
      %v357 = vunpack.c.l.b16 %v213
      %v358 = vunpack.c.l.b16 %v214
      %v359 = vunpack.c.l.b16 %v215
      %v360 = vunpack.c.l.b16 %v216
      %v361 = vunpack.c.l.b16 %v217
      %v362 = vunpack.c.l.b16 %v218
      %v363 = vunpack.c.l.b16 %v219
      %v364 = vunpack.c.l.b16 %v220
      %v365 = vunpack.c.l.b16 %v221
      %v366 = vunpack.c.l.b16 %v222
      %v367 = vunpack.c.l.b16 %v223
      %v368 = vunpack.c.l.b16 %v224
      %v369 = vunpack.c.l.b16 %v225
      %v370 = vunpack.c.l.b16 %v226
      %v371 = vunpack.c.l.b16 %v227
      %v372 = vunpack.c.l.b16 %v228
      %v373 = vunpack.c.l.b16 %v229
      %v374 = vunpack.c.l.b16 %v230
      %v375 = vunpack.c.l.b16 %v231
      %v376 = vunpack.c.l.b16 %v232
      %v377 = vunpack.c.l.b16 %v233
      %v378 = vunpack.c.l.b16 %v234
      %v379 = vunpack.c.l.b16 %v235
      %v380 = vunpack.c.l.b16 %v236
      %v381 = vunpack.c.l.b16 %v237
      %v382 = vunpack.c.l.b16 %v238
      %v383 = vunpack.c.l.b16 %v239
      %v384 = vunpack.c.l.b16 %v240
      %v385 = vunpack.c.l.b16 %v241
      %v386 = vunpack.c.l.b16 %v242
      %v387 = vunpack.c.l.b16 %v243
      %v388 = vunpack.c.l.b16 %v244
      %v389 = vunpack.c.l.b16 %v245
      %v390 = vunpack.c.l.b16 %v246
      %v391 = vunpack.c.l.b16 %v247
      %v392 = vunpack.c.l.b16 %v248
      %v393 = vunpack.c.l.b16 %v249
      %v394 = vunpack.c.l.b16 %v250
      %v395 = vunpack.c.l.b16 %v251
      %v396 = vunpack.c.l.b16 %v252
      %v397 = vunpack.c.l.b16 %v253
      %v398 = vunpack.c.l.b16 %v254
      %v399 = vunpack.c.l.b16 %v255
      %v400 = vunpack.c.l.b16 %v256
      %v401 = vunpack.c.l.b16 %v257
      %v402 = vunpack.c.l.b16 %v258
      %v403 = vunpack.c.l.b16 %v259
      %v404 = vunpack.c.l.b16 %v260
      %v405 = vunpack.c.l.b16 %v261
      %v406 = vunpack.c.l.b16 %v262
      %v407 = vunpack.c.l.b16 %v263
      %v408 = vunpack.c.l.b16 %v264
      %v409 = vunpack.c.l.b16 %v265
      %v410 = vpack.c.b16 %v347, %v346
      %v411 = vpack.c.b16 %v349, %v348
      %v412 = vpack.c.b16 %v351, %v350
      %v413 = vpack.c.b16 %v353, %v352
      %v414 = vpack.c.b16 %v355, %v354
      %v415 = vpack.c.b16 %v357, %v356
      %v416 = vpack.c.b16 %v359, %v358
      %v417 = vpack.c.b16 %v361, %v360
      %v418 = vpack.c.b16 %v363, %v362
      %v419 = vpack.c.b16 %v365, %v364
      %v420 = vpack.c.b16 %v367, %v366
      %v421 = vpack.c.b16 %v369, %v368
      %v422 = vpack.c.b16 %v371, %v370
      %v423 = vpack.c.b16 %v373, %v372
      %v424 = vpack.c.b16 %v375, %v374
      %v425 = vpack.c.b16 %v377, %v376
      %v426 = vpack.c.b16 %v379, %v378
      %v427 = vpack.c.b16 %v381, %v380
      %v428 = vpack.c.b16 %v383, %v382
      %v429 = vpack.c.b16 %v385, %v384
      %v430 = vpack.c.b16 %v387, %v386
      %v431 = vpack.c.b16 %v389, %v388
      %v432 = vpack.c.b16 %v391, %v390
      %v433 = vpack.c.b16 %v393, %v392
      %v434 = vpack.c.b16 %v395, %v394
      %v435 = vpack.c.b16 %v397, %v396
      %v436 = vpack.c.b16 %v399, %v398
      %v437 = vpack.c.b16 %v401, %v400
      %v438 = vpack.c.b16 %v403, %v402
      %v439 = vpack.c.b16 %v405, %v404
      %v440 = vpack.c.b16 %v407, %v406
      %v441 = vpack.c.b16 %v409, %v408
      %v490 = vunpack.c.l.b16 %v266
      %v491 = vunpack.c.l.b16 %v267
      %v492 = vunpack.c.l.b16 %v268
      %v493 = vunpack.c.l.b16 %v269
      %v494 = vunpack.c.l.b16 %v270
      %v495 = vunpack.c.l.b16 %v271
      %v496 = vunpack.c.l.b16 %v272
      %v497 = vunpack.c.l.b16 %v273
      %v498 = vunpack.c.l.b16 %v274
      %v499 = vunpack.c.l.b16 %v275
      %v500 = vunpack.c.l.b16 %v276
      %v501 = vunpack.c.l.b16 %v277
      %v502 = vunpack.c.l.b16 %v278
      %v503 = vunpack.c.l.b16 %v279
      %v504 = vunpack.c.l.b16 %v280
      %v505 = vunpack.c.l.b16 %v281
      %v506 = vpack.c.b16 %v491, %v490
      %v507 = vpack.c.b16 %v493, %v492
      %v508 = vpack.c.b16 %v495, %v494
      %v509 = vpack.c.b16 %v497, %v496
      %v510 = vpack.c.b16 %v499, %v498
      %v511 = vpack.c.b16 %v501, %v500
      %v512 = vpack.c.b16 %v503, %v502
      %v513 = vpack.c.b16 %v505, %v504
      %522 = vmatprep.subr.bf16.mxu0 0
      %523 = vmatpush1.bf16.msra.mxu0 %v506
      %524 = vmatprep.subr.bf16.mxu0 0
      %525 = vmatpush1.bf16.msra.mxu0 %v507
      %526 = vmatprep.subr.bf16.mxu0 0
      %527 = vmatpush1.bf16.msra.mxu0 %v508
      %528 = vmatprep.subr.bf16.mxu0 0
      %529 = vmatpush1.bf16.msra.mxu0 %v509
      %530 = vmatprep.subr.bf16.mxu0 0
      %531 = vmatpush1.bf16.msra.mxu0 %v510
      %532 = vmatprep.subr.bf16.mxu0 0
      %533 = vmatpush1.bf16.msra.mxu0 %v511
      %534 = vmatprep.subr.bf16.mxu0 0
      %535 = vmatpush1.bf16.msra.mxu0 %v512
      %536 = vmatprep.subr.bf16.mxu0 0
      %537 = vmatpush1.bf16.msra.mxu0 %v513
      %538 = vmatprep.subr.bf16.mxu0 0
      %539 = vmatpush1.bf16.msra.mxu0 0
      %540 = vmatprep.subr.bf16.mxu0 0
      %541 = vmatpush1.bf16.msra.mxu0 0
      %542 = vmatprep.subr.bf16.mxu0 0
      %543 = vmatpush1.bf16.msra.mxu0 0
      %544 = vmatprep.subr.bf16.mxu0 0
      %545 = vmatpush1.bf16.msra.mxu0 0
      %546 = vmatprep.subr.bf16.mxu0 0
      %547 = vmatpush1.bf16.msra.mxu0 0
      %548 = vmatprep.subr.bf16.mxu0 0
      %549 = vmatpush1.bf16.msra.mxu0 0
      %550 = vmatprep.subr.bf16.mxu0 0
      %551 = vmatpush1.bf16.msra.mxu0 0
      %552 = vmatprep.subr.bf16.mxu0 0
      %553 = vmatpush1.bf16.msra.mxu0 0
      %554 = vmatprep.mubr.bf16.mxu0 0
      %555 = vmatmul.mubr.bf16.gmra.mrb[0].mxu0 %v410
      %v556 = vpop.f32.mrb[0].mxu0
      %v557 = vadd.f32 0.0, %v556
      %v558 = vpop.f32.mrb[0].mxu0
      %v559 = vpop.f32.mrb[0].mxu0
      %v560 = vadd.f32 0.0, %v559
      %v561 = vpop.f32.mrb[0].mxu0
      %562 = vmatprep.mubr.bf16.mxu0 0
      %563 = vmatmul.mubr.bf16.gmra.mrb[0].mxu0 %v411
      %v564 = vpop.f32.mrb[0].mxu0
      %v565 = vadd.f32 0.0, %v564
      %v566 = vpop.f32.mrb[0].mxu0
      %v567 = vpop.f32.mrb[0].mxu0
      %v568 = vadd.f32 0.0, %v567
      %v569 = vpop.f32.mrb[0].mxu0
      %570 = vmatprep.mubr.bf16.mxu0 0
      %571 = vmatmul.mubr.bf16.gmra.mrb[0].mxu0 %v412
      %v572 = vpop.f32.mrb[0].mxu0
      %v573 = vadd.f32 0.0, %v572
      %v574 = vpop.f32.mrb[0].mxu0
      %v575 = vpop.f32.mrb[0].mxu0
      %v576 = vadd.f32 0.0, %v575
      %v577 = vpop.f32.mrb[0].mxu0
      %578 = vmatprep.mubr.bf16.mxu0 0
      %579 = vmatmul.mubr.bf16.gmra.mrb[0].mxu0 %v413
      %v580 = vpop.f32.mrb[0].mxu0
      %v581 = vadd.f32 0.0, %v580
      %v582 = vpop.f32.mrb[0].mxu0
      %v583 = vpop.f32.mrb[0].mxu0
      %v584 = vadd.f32 0.0, %v583
      %v585 = vpop.f32.mrb[0].mxu0
      %586 = vmatprep.mubr.bf16.mxu0 0
      %587 = vmatmul.mubr.bf16.gmra.mrb[0].mxu0 %v414
      %v588 = vpop.f32.mrb[0].mxu0
      %v589 = vadd.f32 0.0, %v588
      %v590 = vpop.f32.mrb[0].mxu0
      %v591 = vpop.f32.mrb[0].mxu0
      %v592 = vadd.f32 0.0, %v591
      %v593 = vpop.f32.mrb[0].mxu0
      %594 = vmatprep.mubr.bf16.mxu0 0
      %595 = vmatmul.mubr.bf16.gmra.mrb[0].mxu0 %v415
      %v596 = vpop.f32.mrb[0].mxu0
      %v597 = vadd.f32 0.0, %v596
      %v598 = vpop.f32.mrb[0].mxu0
      %v599 = vpop.f32.mrb[0].mxu0
      %v600 = vadd.f32 0.0, %v599
      %v601 = vpop.f32.mrb[0].mxu0
      %602 = vmatprep.mubr.bf16.mxu0 0
      %603 = vmatmul.mubr.bf16.gmra.mrb[0].mxu0 %v416
      %v604 = vpop.f32.mrb[0].mxu0
      %v605 = vadd.f32 0.0, %v604
      %v606 = vpop.f32.mrb[0].mxu0
      %v607 = vpop.f32.mrb[0].mxu0
      %v608 = vadd.f32 0.0, %v607
      %v609 = vpop.f32.mrb[0].mxu0
      %610 = vmatprep.mubr.bf16.mxu0 0
      %611 = vmatmul.mubr.bf16.gmra.mrb[0].mxu0 %v417
      %v612 = vpop.f32.mrb[0].mxu0
      %v613 = vadd.f32 0.0, %v612
      %v614 = vpop.f32.mrb[0].mxu0
      %v615 = vpop.f32.mrb[0].mxu0
      %v616 = vadd.f32 0.0, %v615
      %v617 = vpop.f32.mrb[0].mxu0
      %618 = vmatprep.mubr.bf16.mxu0 0
      %619 = vmatmul.mubr.bf16.gmra.mrb[0].mxu0 %v418
      %v620 = vpop.f32.mrb[0].mxu0
      %v621 = vadd.f32 0.0, %v620
      %v622 = vpop.f32.mrb[0].mxu0
      %v623 = vpop.f32.mrb[0].mxu0
      %v624 = vadd.f32 0.0, %v623
      %v625 = vpop.f32.mrb[0].mxu0
      %626 = vmatprep.mubr.bf16.mxu0 0
      %627 = vmatmul.mubr.bf16.gmra.mrb[0].mxu0 %v419
      %v628 = vpop.f32.mrb[0].mxu0
      %v629 = vadd.f32 0.0, %v628
      %v630 = vpop.f32.mrb[0].mxu0
      %v631 = vpop.f32.mrb[0].mxu0
      %v632 = vadd.f32 0.0, %v631
      %v633 = vpop.f32.mrb[0].mxu0
      %634 = vmatprep.mubr.bf16.mxu0 0
      %635 = vmatmul.mubr.bf16.gmra.mrb[0].mxu0 %v420
      %v636 = vpop.f32.mrb[0].mxu0
      %v637 = vadd.f32 0.0, %v636
      %v638 = vpop.f32.mrb[0].mxu0
      %v639 = vpop.f32.mrb[0].mxu0
      %v640 = vadd.f32 0.0, %v639
      %v641 = vpop.f32.mrb[0].mxu0
      %642 = vmatprep.mubr.bf16.mxu0 0
      %643 = vmatmul.mubr.bf16.gmra.mrb[0].mxu0 %v421
      %v644 = vpop.f32.mrb[0].mxu0
      %v645 = vadd.f32 0.0, %v644
      %v646 = vpop.f32.mrb[0].mxu0
      %v647 = vpop.f32.mrb[0].mxu0
      %v648 = vadd.f32 0.0, %v647
      %v649 = vpop.f32.mrb[0].mxu0
      %650 = vmatprep.mubr.bf16.mxu0 0
      %651 = vmatmul.mubr.bf16.gmra.mrb[0].mxu0 %v422
      %v652 = vpop.f32.mrb[0].mxu0
      %v653 = vadd.f32 0.0, %v652
      %v654 = vpop.f32.mrb[0].mxu0
      %v655 = vpop.f32.mrb[0].mxu0
      %v656 = vadd.f32 0.0, %v655
      %v657 = vpop.f32.mrb[0].mxu0
      %658 = vmatprep.mubr.bf16.mxu0 0
      %659 = vmatmul.mubr.bf16.gmra.mrb[0].mxu0 %v423
      %v660 = vpop.f32.mrb[0].mxu0
      %v661 = vadd.f32 0.0, %v660
      %v662 = vpop.f32.mrb[0].mxu0
      %v663 = vpop.f32.mrb[0].mxu0
      %v664 = vadd.f32 0.0, %v663
      %v665 = vpop.f32.mrb[0].mxu0
      %666 = vmatprep.mubr.bf16.mxu0 0
      %667 = vmatmul.mubr.bf16.gmra.mrb[0].mxu0 %v424
      %v668 = vpop.f32.mrb[0].mxu0
      %v669 = vadd.f32 0.0, %v668
      %v670 = vpop.f32.mrb[0].mxu0
      %v671 = vpop.f32.mrb[0].mxu0
      %v672 = vadd.f32 0.0, %v671
      %v673 = vpop.f32.mrb[0].mxu0
      %674 = vmatprep.mubr.bf16.mxu0 0
      %675 = vmatmul.mubr.bf16.gmra.mrb[0].mxu0 %v425
      %v676 = vpop.f32.mrb[0].mxu0
      %v677 = vadd.f32 0.0, %v676
      %v678 = vpop.f32.mrb[0].mxu0
      %v679 = vpop.f32.mrb[0].mxu0
      %v680 = vadd.f32 0.0, %v679
      %v681 = vpop.f32.mrb[0].mxu0
      %682 = vmatprep.mubr.bf16.mxu0 0
      %683 = vmatmul.mubr.bf16.gmra.mrb[0].mxu0 %v426
      %v684 = vpop.f32.mrb[0].mxu0
      %v685 = vadd.f32 0.0, %v684
      %v686 = vpop.f32.mrb[0].mxu0
      %v687 = vpop.f32.mrb[0].mxu0
      %v688 = vadd.f32 0.0, %v687
      %v689 = vpop.f32.mrb[0].mxu0
      %690 = vmatprep.mubr.bf16.mxu0 0
      %691 = vmatmul.mubr.bf16.gmra.mrb[0].mxu0 %v427
      %v692 = vpop.f32.mrb[0].mxu0
      %v693 = vadd.f32 0.0, %v692
      %v694 = vpop.f32.mrb[0].mxu0
      %v695 = vpop.f32.mrb[0].mxu0
      %v696 = vadd.f32 0.0, %v695
      %v697 = vpop.f32.mrb[0].mxu0
      %698 = vmatprep.mubr.bf16.mxu0 0
      %699 = vmatmul.mubr.bf16.gmra.mrb[0].mxu0 %v428
      %v700 = vpop.f32.mrb[0].mxu0
      %v701 = vadd.f32 0.0, %v700
      %v702 = vpop.f32.mrb[0].mxu0
      %v703 = vpop.f32.mrb[0].mxu0
      %v704 = vadd.f32 0.0, %v703
      %v705 = vpop.f32.mrb[0].mxu0
      %706 = vmatprep.mubr.bf16.mxu0 0
      %707 = vmatmul.mubr.bf16.gmra.mrb[0].mxu0 %v429
      %v708 = vpop.f32.mrb[0].mxu0
      %v709 = vadd.f32 0.0, %v708
      %v710 = vpop.f32.mrb[0].mxu0
      %v711 = vpop.f32.mrb[0].mxu0
      %v712 = vadd.f32 0.0, %v711
      %v713 = vpop.f32.mrb[0].mxu0
      %714 = vmatprep.mubr.bf16.mxu0 0
      %715 = vmatmul.mubr.bf16.gmra.mrb[0].mxu0 %v430
      %v716 = vpop.f32.mrb[0].mxu0
      %v717 = vadd.f32 0.0, %v716
      %v718 = vpop.f32.mrb[0].mxu0
      %v719 = vpop.f32.mrb[0].mxu0
      %v720 = vadd.f32 0.0, %v719
      %v721 = vpop.f32.mrb[0].mxu0
      %722 = vmatprep.mubr.bf16.mxu0 0
      %723 = vmatmul.mubr.bf16.gmra.mrb[0].mxu0 %v431
      %v724 = vpop.f32.mrb[0].mxu0
      %v725 = vadd.f32 0.0, %v724
      %v726 = vpop.f32.mrb[0].mxu0
      %v727 = vpop.f32.mrb[0].mxu0
      %v728 = vadd.f32 0.0, %v727
      %v729 = vpop.f32.mrb[0].mxu0
      %730 = vmatprep.mubr.bf16.mxu0 0
      %731 = vmatmul.mubr.bf16.gmra.mrb[0].mxu0 %v432
      %v732 = vpop.f32.mrb[0].mxu0
      %v733 = vadd.f32 0.0, %v732
      %v734 = vpop.f32.mrb[0].mxu0
      %v735 = vpop.f32.mrb[0].mxu0
      %v736 = vadd.f32 0.0, %v735
      %v737 = vpop.f32.mrb[0].mxu0
      %738 = vmatprep.mubr.bf16.mxu0 0
      %739 = vmatmul.mubr.bf16.gmra.mrb[0].mxu0 %v433
      %v740 = vpop.f32.mrb[0].mxu0
      %v741 = vadd.f32 0.0, %v740
      %v742 = vpop.f32.mrb[0].mxu0
      %v743 = vpop.f32.mrb[0].mxu0
      %v744 = vadd.f32 0.0, %v743
      %v745 = vpop.f32.mrb[0].mxu0
      %746 = vmatprep.mubr.bf16.mxu0 0
      %747 = vmatmul.mubr.bf16.gmra.mrb[0].mxu0 %v434
      %v748 = vpop.f32.mrb[0].mxu0
      %v749 = vadd.f32 0.0, %v748
      %v750 = vpop.f32.mrb[0].mxu0
      %v751 = vpop.f32.mrb[0].mxu0
      %v752 = vadd.f32 0.0, %v751
      %v753 = vpop.f32.mrb[0].mxu0
      %754 = vmatprep.mubr.bf16.mxu0 0
      %755 = vmatmul.mubr.bf16.gmra.mrb[0].mxu0 %v435
      %v756 = vpop.f32.mrb[0].mxu0
      %v757 = vadd.f32 0.0, %v756
      %v758 = vpop.f32.mrb[0].mxu0
      %v759 = vpop.f32.mrb[0].mxu0
      %v760 = vadd.f32 0.0, %v759
      %v761 = vpop.f32.mrb[0].mxu0
      %762 = vmatprep.mubr.bf16.mxu0 0
      %763 = vmatmul.mubr.bf16.gmra.mrb[0].mxu0 %v436
      %v764 = vpop.f32.mrb[0].mxu0
      %v765 = vadd.f32 0.0, %v764
      %v766 = vpop.f32.mrb[0].mxu0
      %v767 = vpop.f32.mrb[0].mxu0
      %v768 = vadd.f32 0.0, %v767
      %v769 = vpop.f32.mrb[0].mxu0
      %770 = vmatprep.mubr.bf16.mxu0 0
      %771 = vmatmul.mubr.bf16.gmra.mrb[0].mxu0 %v437
      %v772 = vpop.f32.mrb[0].mxu0
      %v773 = vadd.f32 0.0, %v772
      %v774 = vpop.f32.mrb[0].mxu0
      %v775 = vpop.f32.mrb[0].mxu0
      %v776 = vadd.f32 0.0, %v775
      %v777 = vpop.f32.mrb[0].mxu0
      %778 = vmatprep.mubr.bf16.mxu0 0
      %779 = vmatmul.mubr.bf16.gmra.mrb[0].mxu0 %v438
      %v780 = vpop.f32.mrb[0].mxu0
      %v781 = vadd.f32 0.0, %v780
      %v782 = vpop.f32.mrb[0].mxu0
      %v783 = vpop.f32.mrb[0].mxu0
      %v784 = vadd.f32 0.0, %v783
      %v785 = vpop.f32.mrb[0].mxu0
      %786 = vmatprep.mubr.bf16.mxu0 0
      %787 = vmatmul.mubr.bf16.gmra.mrb[0].mxu0 %v439
      %v788 = vpop.f32.mrb[0].mxu0
      %v789 = vadd.f32 0.0, %v788
      %v790 = vpop.f32.mrb[0].mxu0
      %v791 = vpop.f32.mrb[0].mxu0
      %v792 = vadd.f32 0.0, %v791
      %v793 = vpop.f32.mrb[0].mxu0
      %794 = vmatprep.mubr.bf16.mxu0 0
      %795 = vmatmul.mubr.bf16.gmra.mrb[0].mxu0 %v440
      %v796 = vpop.f32.mrb[0].mxu0
      %v797 = vadd.f32 0.0, %v796
      %v798 = vpop.f32.mrb[0].mxu0
      %v799 = vpop.f32.mrb[0].mxu0
      %v800 = vadd.f32 0.0, %v799
      %v801 = vpop.f32.mrb[0].mxu0
      %802 = vmatprep.mubr.bf16.mxu0 0
      %803 = vmatmul.mubr.bf16.gmra.mrb[0].mxu0 %v441
      %v804 = vpop.f32.mrb[0].mxu0
      %v805 = vadd.f32 0.0, %v804
      %v806 = vpop.f32.mrb[0].mxu0
      %v807 = vpop.f32.mrb[0].mxu0
      %v808 = vadd.f32 0.0, %v807
      %v809 = vpop.f32.mrb[0].mxu0
      %810 = vdwg.mxu0
      %v811 = vld [vmem:[%s2] sm:$0x1]
      %v813 = vlaneseq
      %v814 = vshrl.u32 %v813, 7
      %v815 = vsub.s32 0, %v814
      %v816 = vrot.slane %v811, %v815
      %v818 = vmul.f32 %v557, %v816
      %v819 = vmul.f32 %v560, %v816
      %v820 = vmul.f32 %v565, %v816
      %v821 = vmul.f32 %v568, %v816
      %v822 = vmul.f32 %v573, %v816
      %v823 = vmul.f32 %v576, %v816
      %v824 = vmul.f32 %v581, %v816
      %v825 = vmul.f32 %v584, %v816
      %v826 = vmul.f32 %v589, %v816
      %v827 = vmul.f32 %v592, %v816
      %v828 = vmul.f32 %v597, %v816
      %v829 = vmul.f32 %v600, %v816
      %v830 = vmul.f32 %v605, %v816
      %v831 = vmul.f32 %v608, %v816
      %v832 = vmul.f32 %v613, %v816
      %v833 = vmul.f32 %v616, %v816
      %v834 = vmul.f32 %v621, %v816
      %v835 = vmul.f32 %v624, %v816
      %v836 = vmul.f32 %v629, %v816
      %v837 = vmul.f32 %v632, %v816
      %v838 = vmul.f32 %v637, %v816
      %v839 = vmul.f32 %v640, %v816
      %v840 = vmul.f32 %v645, %v816
      %v841 = vmul.f32 %v648, %v816
      %v842 = vmul.f32 %v653, %v816
      %v843 = vmul.f32 %v656, %v816
      %v844 = vmul.f32 %v661, %v816
      %v845 = vmul.f32 %v664, %v816
      %v846 = vmul.f32 %v669, %v816
      %v847 = vmul.f32 %v672, %v816
      %v848 = vmul.f32 %v677, %v816
      %v849 = vmul.f32 %v680, %v816
      %v850 = vmul.f32 %v685, %v816
      %v851 = vmul.f32 %v688, %v816
      %v852 = vmul.f32 %v693, %v816
      %v853 = vmul.f32 %v696, %v816
      %v854 = vmul.f32 %v701, %v816
      %v855 = vmul.f32 %v704, %v816
      %v856 = vmul.f32 %v709, %v816
      %v857 = vmul.f32 %v712, %v816
      %v858 = vmul.f32 %v717, %v816
      %v859 = vmul.f32 %v720, %v816
      %v860 = vmul.f32 %v725, %v816
      %v861 = vmul.f32 %v728, %v816
      %v862 = vmul.f32 %v733, %v816
      %v863 = vmul.f32 %v736, %v816
      %v864 = vmul.f32 %v741, %v816
      %v865 = vmul.f32 %v744, %v816
      %v866 = vmul.f32 %v749, %v816
      %v867 = vmul.f32 %v752, %v816
      %v868 = vmul.f32 %v757, %v816
      %v869 = vmul.f32 %v760, %v816
      %v870 = vmul.f32 %v765, %v816
      %v871 = vmul.f32 %v768, %v816
      %v872 = vmul.f32 %v773, %v816
      %v873 = vmul.f32 %v776, %v816
      %v874 = vmul.f32 %v781, %v816
      %v875 = vmul.f32 %v784, %v816
      %v876 = vmul.f32 %v789, %v816
      %v877 = vmul.f32 %v792, %v816
      %v878 = vmul.f32 %v797, %v816
      %v879 = vmul.f32 %v800, %v816
      %v880 = vmul.f32 %v805, %v816
      %v881 = vmul.f32 %v808, %v816
      %v882 = vld [vmem:[%s3] sm:$0x1]
      %v884 = vlaneseq
      %v885 = vshrl.u32 %v884, 7
      %v886 = vsub.s32 0, %v885
      %v887 = vrot.slane %v882, %v886
      %v889 = vadd.f32 %v818, %v887
      %v890 = vadd.f32 %v819, %v887
      %v891 = vadd.f32 %v820, %v887
      %v892 = vadd.f32 %v821, %v887
      %v893 = vadd.f32 %v822, %v887
      %v894 = vadd.f32 %v823, %v887
      %v895 = vadd.f32 %v824, %v887
      %v896 = vadd.f32 %v825, %v887
      %v897 = vadd.f32 %v826, %v887
      %v898 = vadd.f32 %v827, %v887
      %v899 = vadd.f32 %v828, %v887
      %v900 = vadd.f32 %v829, %v887
      %v901 = vadd.f32 %v830, %v887
      %v902 = vadd.f32 %v831, %v887
      %v903 = vadd.f32 %v832, %v887
      %v904 = vadd.f32 %v833, %v887
      %v905 = vadd.f32 %v834, %v887
      %v906 = vadd.f32 %v835, %v887
      %v907 = vadd.f32 %v836, %v887
      %v908 = vadd.f32 %v837, %v887
      %v909 = vadd.f32 %v838, %v887
      %v910 = vadd.f32 %v839, %v887
      %v911 = vadd.f32 %v840, %v887
      %v912 = vadd.f32 %v841, %v887
      %v913 = vadd.f32 %v842, %v887
      %v914 = vadd.f32 %v843, %v887
      %v915 = vadd.f32 %v844, %v887
      %v916 = vadd.f32 %v845, %v887
      %v917 = vadd.f32 %v846, %v887
      %v918 = vadd.f32 %v847, %v887
      %v919 = vadd.f32 %v848, %v887
      %v920 = vadd.f32 %v849, %v887
      %v921 = vadd.f32 %v850, %v887
      %v922 = vadd.f32 %v851, %v887
      %v923 = vadd.f32 %v852, %v887
      %v924 = vadd.f32 %v853, %v887
      %v925 = vadd.f32 %v854, %v887
      %v926 = vadd.f32 %v855, %v887
      %v927 = vadd.f32 %v856, %v887
      %v928 = vadd.f32 %v857, %v887
      %v929 = vadd.f32 %v858, %v887
      %v930 = vadd.f32 %v859, %v887
      %v931 = vadd.f32 %v860, %v887
      %v932 = vadd.f32 %v861, %v887
      %v933 = vadd.f32 %v862, %v887
      %v934 = vadd.f32 %v863, %v887
      %v935 = vadd.f32 %v864, %v887
      %v936 = vadd.f32 %v865, %v887
      %v937 = vadd.f32 %v866, %v887
      %v938 = vadd.f32 %v867, %v887
      %v939 = vadd.f32 %v868, %v887
      %v940 = vadd.f32 %v869, %v887
      %v941 = vadd.f32 %v870, %v887
      %v942 = vadd.f32 %v871, %v887
      %v943 = vadd.f32 %v872, %v887
      %v944 = vadd.f32 %v873, %v887
      %v945 = vadd.f32 %v874, %v887
      %v946 = vadd.f32 %v875, %v887
      %v947 = vadd.f32 %v876, %v887
      %v948 = vadd.f32 %v877, %v887
      %v949 = vadd.f32 %v878, %v887
      %v950 = vadd.f32 %v879, %v887
      %v951 = vadd.f32 %v880, %v887
      %v952 = vadd.f32 %v881, %v887
      %vm953 = vcmp.gt.f32.partialorder %v889, 0.0
      %vm954 = vcmp.gt.f32.partialorder %v890, 0.0
      %vm955 = vcmp.gt.f32.partialorder %v891, 0.0
      %vm956 = vcmp.gt.f32.partialorder %v892, 0.0
      %vm957 = vcmp.gt.f32.partialorder %v893, 0.0
      %vm958 = vcmp.gt.f32.partialorder %v894, 0.0
      %vm959 = vcmp.gt.f32.partialorder %v895, 0.0
      %vm960 = vcmp.gt.f32.partialorder %v896, 0.0
      %vm961 = vcmp.gt.f32.partialorder %v897, 0.0
      %vm962 = vcmp.gt.f32.partialorder %v898, 0.0
      %vm963 = vcmp.gt.f32.partialorder %v899, 0.0
      %vm964 = vcmp.gt.f32.partialorder %v900, 0.0
      %vm965 = vcmp.gt.f32.partialorder %v901, 0.0
      %vm966 = vcmp.gt.f32.partialorder %v902, 0.0
      %vm967 = vcmp.gt.f32.partialorder %v903, 0.0
      %vm968 = vcmp.gt.f32.partialorder %v904, 0.0
      %vm969 = vcmp.gt.f32.partialorder %v905, 0.0
      %vm970 = vcmp.gt.f32.partialorder %v906, 0.0
      %vm971 = vcmp.gt.f32.partialorder %v907, 0.0
      %vm972 = vcmp.gt.f32.partialorder %v908, 0.0
      %vm973 = vcmp.gt.f32.partialorder %v909, 0.0
      %vm974 = vcmp.gt.f32.partialorder %v910, 0.0
      %vm975 = vcmp.gt.f32.partialorder %v911, 0.0
      %vm976 = vcmp.gt.f32.partialorder %v912, 0.0
      %vm977 = vcmp.gt.f32.partialorder %v913, 0.0
      %vm978 = vcmp.gt.f32.partialorder %v914, 0.0
      %vm979 = vcmp.gt.f32.partialorder %v915, 0.0
      %vm980 = vcmp.gt.f32.partialorder %v916, 0.0
      %vm981 = vcmp.gt.f32.partialorder %v917, 0.0
      %vm982 = vcmp.gt.f32.partialorder %v918, 0.0
      %vm983 = vcmp.gt.f32.partialorder %v919, 0.0
      %vm984 = vcmp.gt.f32.partialorder %v920, 0.0
      %vm985 = vcmp.gt.f32.partialorder %v921, 0.0
      %vm986 = vcmp.gt.f32.partialorder %v922, 0.0
      %vm987 = vcmp.gt.f32.partialorder %v923, 0.0
      %vm988 = vcmp.gt.f32.partialorder %v924, 0.0
      %vm989 = vcmp.gt.f32.partialorder %v925, 0.0
      %vm990 = vcmp.gt.f32.partialorder %v926, 0.0
      %vm991 = vcmp.gt.f32.partialorder %v927, 0.0
      %vm992 = vcmp.gt.f32.partialorder %v928, 0.0
      %vm993 = vcmp.gt.f32.partialorder %v929, 0.0
      %vm994 = vcmp.gt.f32.partialorder %v930, 0.0
      %vm995 = vcmp.gt.f32.partialorder %v931, 0.0
      %vm996 = vcmp.gt.f32.partialorder %v932, 0.0
      %vm997 = vcmp.gt.f32.partialorder %v933, 0.0
      %vm998 = vcmp.gt.f32.partialorder %v934, 0.0
      %vm999 = vcmp.gt.f32.partialorder %v935, 0.0
      %vm1000 = vcmp.gt.f32.partialorder %v936, 0.0
      %vm1001 = vcmp.gt.f32.partialorder %v937, 0.0
      %vm1002 = vcmp.gt.f32.partialorder %v938, 0.0
      %vm1003 = vcmp.gt.f32.partialorder %v939, 0.0
      %vm1004 = vcmp.gt.f32.partialorder %v940, 0.0
      %vm1005 = vcmp.gt.f32.partialorder %v941, 0.0
      %vm1006 = vcmp.gt.f32.partialorder %v942, 0.0
      %vm1007 = vcmp.gt.f32.partialorder %v943, 0.0
      %vm1008 = vcmp.gt.f32.partialorder %v944, 0.0
      %vm1009 = vcmp.gt.f32.partialorder %v945, 0.0
      %vm1010 = vcmp.gt.f32.partialorder %v946, 0.0
      %vm1011 = vcmp.gt.f32.partialorder %v947, 0.0
      %vm1012 = vcmp.gt.f32.partialorder %v948, 0.0
      %vm1013 = vcmp.gt.f32.partialorder %v949, 0.0
      %vm1014 = vcmp.gt.f32.partialorder %v950, 0.0
      %vm1015 = vcmp.gt.f32.partialorder %v951, 0.0
      %vm1016 = vcmp.gt.f32.partialorder %v952, 0.0
      %v1017 = vmul.f32 %v889, 0.1
      %v1018 = vmul.f32 %v890, 0.1
      %v1019 = vmul.f32 %v891, 0.1
      %v1020 = vmul.f32 %v892, 0.1
      %v1021 = vmul.f32 %v893, 0.1
      %v1022 = vmul.f32 %v894, 0.1
      %v1023 = vmul.f32 %v895, 0.1
      %v1024 = vmul.f32 %v896, 0.1
      %v1025 = vmul.f32 %v897, 0.1
      %v1026 = vmul.f32 %v898, 0.1
      %v1027 = vmul.f32 %v899, 0.1
      %v1028 = vmul.f32 %v900, 0.1
      %v1029 = vmul.f32 %v901, 0.1
      %v1030 = vmul.f32 %v902, 0.1
      %v1031 = vmul.f32 %v903, 0.1
      %v1032 = vmul.f32 %v904, 0.1
      %v1033 = vmul.f32 %v905, 0.1
      %v1034 = vmul.f32 %v906, 0.1
      %v1035 = vmul.f32 %v907, 0.1
      %v1036 = vmul.f32 %v908, 0.1
      %v1037 = vmul.f32 %v909, 0.1
      %v1038 = vmul.f32 %v910, 0.1
      %v1039 = vmul.f32 %v911, 0.1
      %v1040 = vmul.f32 %v912, 0.1
      %v1041 = vmul.f32 %v913, 0.1
      %v1042 = vmul.f32 %v914, 0.1
      %v1043 = vmul.f32 %v915, 0.1
      %v1044 = vmul.f32 %v916, 0.1
      %v1045 = vmul.f32 %v917, 0.1
      %v1046 = vmul.f32 %v918, 0.1
      %v1047 = vmul.f32 %v919, 0.1
      %v1048 = vmul.f32 %v920, 0.1
      %v1049 = vmul.f32 %v921, 0.1
      %v1050 = vmul.f32 %v922, 0.1
      %v1051 = vmul.f32 %v923, 0.1
      %v1052 = vmul.f32 %v924, 0.1
      %v1053 = vmul.f32 %v925, 0.1
      %v1054 = vmul.f32 %v926, 0.1
      %v1055 = vmul.f32 %v927, 0.1
      %v1056 = vmul.f32 %v928, 0.1
      %v1057 = vmul.f32 %v929, 0.1
      %v1058 = vmul.f32 %v930, 0.1
      %v1059 = vmul.f32 %v931, 0.1
      %v1060 = vmul.f32 %v932, 0.1
      %v1061 = vmul.f32 %v933, 0.1
      %v1062 = vmul.f32 %v934, 0.1
      %v1063 = vmul.f32 %v935, 0.1
      %v1064 = vmul.f32 %v936, 0.1
      %v1065 = vmul.f32 %v937, 0.1
      %v1066 = vmul.f32 %v938, 0.1
      %v1067 = vmul.f32 %v939, 0.1
      %v1068 = vmul.f32 %v940, 0.1
      %v1069 = vmul.f32 %v941, 0.1
      %v1070 = vmul.f32 %v942, 0.1
      %v1071 = vmul.f32 %v943, 0.1
      %v1072 = vmul.f32 %v944, 0.1
      %v1073 = vmul.f32 %v945, 0.1
      %v1074 = vmul.f32 %v946, 0.1
      %v1075 = vmul.f32 %v947, 0.1
      %v1076 = vmul.f32 %v948, 0.1
      %v1077 = vmul.f32 %v949, 0.1
      %v1078 = vmul.f32 %v950, 0.1
      %v1079 = vmul.f32 %v951, 0.1
      %v1080 = vmul.f32 %v952, 0.1
      %v1081 = vsel %vm953, %v889, %v1017
      %v1082 = vsel %vm954, %v890, %v1018
      %v1083 = vsel %vm955, %v891, %v1019
      %v1084 = vsel %vm956, %v892, %v1020
      %v1085 = vsel %vm957, %v893, %v1021
      %v1086 = vsel %vm958, %v894, %v1022
      %v1087 = vsel %vm959, %v895, %v1023
      %v1088 = vsel %vm960, %v896, %v1024
      %v1089 = vsel %vm961, %v897, %v1025
      %v1090 = vsel %vm962, %v898, %v1026
      %v1091 = vsel %vm963, %v899, %v1027
      %v1092 = vsel %vm964, %v900, %v1028
      %v1093 = vsel %vm965, %v901, %v1029
      %v1094 = vsel %vm966, %v902, %v1030
      %v1095 = vsel %vm967, %v903, %v1031
      %v1096 = vsel %vm968, %v904, %v1032
      %v1097 = vsel %vm969, %v905, %v1033
      %v1098 = vsel %vm970, %v906, %v1034
      %v1099 = vsel %vm971, %v907, %v1035
      %v1100 = vsel %vm972, %v908, %v1036
      %v1101 = vsel %vm973, %v909, %v1037
      %v1102 = vsel %vm974, %v910, %v1038
      %v1103 = vsel %vm975, %v911, %v1039
      %v1104 = vsel %vm976, %v912, %v1040
      %v1105 = vsel %vm977, %v913, %v1041
      %v1106 = vsel %vm978, %v914, %v1042
      %v1107 = vsel %vm979, %v915, %v1043
      %v1108 = vsel %vm980, %v916, %v1044
      %v1109 = vsel %vm981, %v917, %v1045
      %v1110 = vsel %vm982, %v918, %v1046
      %v1111 = vsel %vm983, %v919, %v1047
      %v1112 = vsel %vm984, %v920, %v1048
      %v1113 = vsel %vm985, %v921, %v1049
      %v1114 = vsel %vm986, %v922, %v1050
      %v1115 = vsel %vm987, %v923, %v1051
      %v1116 = vsel %vm988, %v924, %v1052
      %v1117 = vsel %vm989, %v925, %v1053
      %v1118 = vsel %vm990, %v926, %v1054
      %v1119 = vsel %vm991, %v927, %v1055
      %v1120 = vsel %vm992, %v928, %v1056
      %v1121 = vsel %vm993, %v929, %v1057
      %v1122 = vsel %vm994, %v930, %v1058
      %v1123 = vsel %vm995, %v931, %v1059
      %v1124 = vsel %vm996, %v932, %v1060
      %v1125 = vsel %vm997, %v933, %v1061
      %v1126 = vsel %vm998, %v934, %v1062
      %v1127 = vsel %vm999, %v935, %v1063
      %v1128 = vsel %vm1000, %v936, %v1064
      %v1129 = vsel %vm1001, %v937, %v1065
      %v1130 = vsel %vm1002, %v938, %v1066
      %v1131 = vsel %vm1003, %v939, %v1067
      %v1132 = vsel %vm1004, %v940, %v1068
      %v1133 = vsel %vm1005, %v941, %v1069
      %v1134 = vsel %vm1006, %v942, %v1070
      %v1135 = vsel %vm1007, %v943, %v1071
      %v1136 = vsel %vm1008, %v944, %v1072
      %v1137 = vsel %vm1009, %v945, %v1073
      %v1138 = vsel %vm1010, %v946, %v1074
      %v1139 = vsel %vm1011, %v947, %v1075
      %v1140 = vsel %vm1012, %v948, %v1076
      %v1141 = vsel %vm1013, %v949, %v1077
      %v1142 = vsel %vm1014, %v950, %v1078
      %v1143 = vsel %vm1015, %v951, %v1079
      %v1144 = vsel %vm1016, %v952, %v1080
      %v1145 = vpack.c.bf16 %v1082, %v1081
      %v1146 = vpack.c.bf16 %v1084, %v1083
      %v1147 = vpack.c.bf16 %v1086, %v1085
      %v1148 = vpack.c.bf16 %v1088, %v1087
      %v1149 = vpack.c.bf16 %v1090, %v1089
      %v1150 = vpack.c.bf16 %v1092, %v1091
      %v1151 = vpack.c.bf16 %v1094, %v1093
      %v1152 = vpack.c.bf16 %v1096, %v1095
      %v1153 = vpack.c.bf16 %v1098, %v1097
      %v1154 = vpack.c.bf16 %v1100, %v1099
      %v1155 = vpack.c.bf16 %v1102, %v1101
      %v1156 = vpack.c.bf16 %v1104, %v1103
      %v1157 = vpack.c.bf16 %v1106, %v1105
      %v1158 = vpack.c.bf16 %v1108, %v1107
      %v1159 = vpack.c.bf16 %v1110, %v1109
      %v1160 = vpack.c.bf16 %v1112, %v1111
      %v1161 = vpack.c.bf16 %v1114, %v1113
      %v1162 = vpack.c.bf16 %v1116, %v1115
      %v1163 = vpack.c.bf16 %v1118, %v1117
      %v1164 = vpack.c.bf16 %v1120, %v1119
      %v1165 = vpack.c.bf16 %v1122, %v1121
      %v1166 = vpack.c.bf16 %v1124, %v1123
      %v1167 = vpack.c.bf16 %v1126, %v1125
      %v1168 = vpack.c.bf16 %v1128, %v1127
      %v1169 = vpack.c.bf16 %v1130, %v1129
      %v1170 = vpack.c.bf16 %v1132, %v1131
      %v1171 = vpack.c.bf16 %v1134, %v1133
      %v1172 = vpack.c.bf16 %v1136, %v1135
      %v1173 = vpack.c.bf16 %v1138, %v1137
      %v1174 = vpack.c.bf16 %v1140, %v1139
      %v1175 = vpack.c.bf16 %v1142, %v1141
      %v1176 = vpack.c.bf16 %v1144, %v1143
      %v1209 = vunpack.c.l.b16 %v1145
      %v1210 = vunpack.c.h.b16 %v1145
      %v1211 = vunpack.c.l.b16 %v1146
      %v1212 = vunpack.c.h.b16 %v1146
      %v1213 = vunpack.c.l.b16 %v1147
      %v1214 = vunpack.c.h.b16 %v1147
      %v1215 = vunpack.c.l.b16 %v1148
      %v1216 = vunpack.c.h.b16 %v1148
      %v1217 = vunpack.c.l.b16 %v1149
      %v1218 = vunpack.c.h.b16 %v1149
      %v1219 = vunpack.c.l.b16 %v1150
      %v1220 = vunpack.c.h.b16 %v1150
      %v1221 = vunpack.c.l.b16 %v1151
      %v1222 = vunpack.c.h.b16 %v1151
      %v1223 = vunpack.c.l.b16 %v1152
      %v1224 = vunpack.c.h.b16 %v1152
      %v1225 = vunpack.c.l.b16 %v1153
      %v1226 = vunpack.c.h.b16 %v1153
      %v1227 = vunpack.c.l.b16 %v1154
      %v1228 = vunpack.c.h.b16 %v1154
      %v1229 = vunpack.c.l.b16 %v1155
      %v1230 = vunpack.c.h.b16 %v1155
      %v1231 = vunpack.c.l.b16 %v1156
      %v1232 = vunpack.c.h.b16 %v1156
      %v1233 = vunpack.c.l.b16 %v1157
      %v1234 = vunpack.c.h.b16 %v1157
      %v1235 = vunpack.c.l.b16 %v1158
      %v1236 = vunpack.c.h.b16 %v1158
      %v1237 = vunpack.c.l.b16 %v1159
      %v1238 = vunpack.c.h.b16 %v1159
      %v1239 = vunpack.c.l.b16 %v1160
      %v1240 = vunpack.c.h.b16 %v1160
      %v1241 = vunpack.c.l.b16 %v1161
      %v1242 = vunpack.c.h.b16 %v1161
      %v1243 = vunpack.c.l.b16 %v1162
      %v1244 = vunpack.c.h.b16 %v1162
      %v1245 = vunpack.c.l.b16 %v1163
      %v1246 = vunpack.c.h.b16 %v1163
      %v1247 = vunpack.c.l.b16 %v1164
      %v1248 = vunpack.c.h.b16 %v1164
      %v1249 = vunpack.c.l.b16 %v1165
      %v1250 = vunpack.c.h.b16 %v1165
      %v1251 = vunpack.c.l.b16 %v1166
      %v1252 = vunpack.c.h.b16 %v1166
      %v1253 = vunpack.c.l.b16 %v1167
      %v1254 = vunpack.c.h.b16 %v1167
      %v1255 = vunpack.c.l.b16 %v1168
      %v1256 = vunpack.c.h.b16 %v1168
      %v1257 = vunpack.c.l.b16 %v1169
      %v1258 = vunpack.c.h.b16 %v1169
      %v1259 = vunpack.c.l.b16 %v1170
      %v1260 = vunpack.c.h.b16 %v1170
      %v1261 = vunpack.c.l.b16 %v1171
      %v1262 = vunpack.c.h.b16 %v1171
      %v1263 = vunpack.c.l.b16 %v1172
      %v1264 = vunpack.c.h.b16 %v1172
      %v1265 = vunpack.c.l.b16 %v1173
      %v1266 = vunpack.c.h.b16 %v1173
      %v1267 = vunpack.c.l.b16 %v1174
      %v1268 = vunpack.c.h.b16 %v1174
      %v1269 = vunpack.c.l.b16 %v1175
      %v1270 = vunpack.c.h.b16 %v1175
      %v1271 = vunpack.c.l.b16 %v1176
      %v1272 = vunpack.c.h.b16 %v1176
      %v1273 = vpack.c.b16 %v1209, %v1209
      %v1274 = vpack.c.b16 %v1210, %v1210
      %v1275 = vpack.c.b16 %v1211, %v1211
      %v1276 = vpack.c.b16 %v1212, %v1212
      %v1277 = vpack.c.b16 %v1213, %v1213
      %v1278 = vpack.c.b16 %v1214, %v1214
      %v1279 = vpack.c.b16 %v1215, %v1215
      %v1280 = vpack.c.b16 %v1216, %v1216
      %v1281 = vpack.c.b16 %v1217, %v1217
      %v1282 = vpack.c.b16 %v1218, %v1218
      %v1283 = vpack.c.b16 %v1219, %v1219
      %v1284 = vpack.c.b16 %v1220, %v1220
      %v1285 = vpack.c.b16 %v1221, %v1221
      %v1286 = vpack.c.b16 %v1222, %v1222
      %v1287 = vpack.c.b16 %v1223, %v1223
      %v1288 = vpack.c.b16 %v1224, %v1224
      %v1289 = vpack.c.b16 %v1225, %v1225
      %v1290 = vpack.c.b16 %v1226, %v1226
      %v1291 = vpack.c.b16 %v1227, %v1227
      %v1292 = vpack.c.b16 %v1228, %v1228
      %v1293 = vpack.c.b16 %v1229, %v1229
      %v1294 = vpack.c.b16 %v1230, %v1230
      %v1295 = vpack.c.b16 %v1231, %v1231
      %v1296 = vpack.c.b16 %v1232, %v1232
      %v1297 = vpack.c.b16 %v1233, %v1233
      %v1298 = vpack.c.b16 %v1234, %v1234
      %v1299 = vpack.c.b16 %v1235, %v1235
      %v1300 = vpack.c.b16 %v1236, %v1236
      %v1301 = vpack.c.b16 %v1237, %v1237
      %v1302 = vpack.c.b16 %v1238, %v1238
      %v1303 = vpack.c.b16 %v1239, %v1239
      %v1304 = vpack.c.b16 %v1240, %v1240
      %v1305 = vpack.c.b16 %v1241, %v1241
      %v1306 = vpack.c.b16 %v1242, %v1242
      %v1307 = vpack.c.b16 %v1243, %v1243
      %v1308 = vpack.c.b16 %v1244, %v1244
      %v1309 = vpack.c.b16 %v1245, %v1245
      %v1310 = vpack.c.b16 %v1246, %v1246
      %v1311 = vpack.c.b16 %v1247, %v1247
      %v1312 = vpack.c.b16 %v1248, %v1248
      %v1313 = vpack.c.b16 %v1249, %v1249
      %v1314 = vpack.c.b16 %v1250, %v1250
      %v1315 = vpack.c.b16 %v1251, %v1251
      %v1316 = vpack.c.b16 %v1252, %v1252
      %v1317 = vpack.c.b16 %v1253, %v1253
      %v1318 = vpack.c.b16 %v1254, %v1254
      %v1319 = vpack.c.b16 %v1255, %v1255
      %v1320 = vpack.c.b16 %v1256, %v1256
      %v1321 = vpack.c.b16 %v1257, %v1257
      %v1322 = vpack.c.b16 %v1258, %v1258
      %v1323 = vpack.c.b16 %v1259, %v1259
      %v1324 = vpack.c.b16 %v1260, %v1260
      %v1325 = vpack.c.b16 %v1261, %v1261
      %v1326 = vpack.c.b16 %v1262, %v1262
      %v1327 = vpack.c.b16 %v1263, %v1263
      %v1328 = vpack.c.b16 %v1264, %v1264
      %v1329 = vpack.c.b16 %v1265, %v1265
      %v1330 = vpack.c.b16 %v1266, %v1266
      %v1331 = vpack.c.b16 %v1267, %v1267
      %v1332 = vpack.c.b16 %v1268, %v1268
      %v1333 = vpack.c.b16 %v1269, %v1269
      %v1334 = vpack.c.b16 %v1270, %v1270
      %v1335 = vpack.c.b16 %v1271, %v1271
      %v1336 = vpack.c.b16 %v1272, %v1272
      %vm1401 = vcmask 125952
      %1402 = vst.msk [vmem:[%s199] sm:$0xf] %vm1401, %v1273
      %1403 = vst.msk [vmem:[%s199 + $0x4] sm:$0xf] %vm1401, %v1274
      %1404 = vst.msk [vmem:[%s199 + $0x8] sm:$0xf] %vm1401, %v1275
      %1405 = vst.msk [vmem:[%s199 + $0xc] sm:$0xf] %vm1401, %v1276
      %1406 = vst.msk [vmem:[%s199 + $0x10] sm:$0xf] %vm1401, %v1277
      %1407 = vst.msk [vmem:[%s199 + $0x14] sm:$0xf] %vm1401, %v1278
      %1408 = vst.msk [vmem:[%s199 + $0x18] sm:$0xf] %vm1401, %v1279
      %1409 = vst.msk [vmem:[%s199 + $0x1c] sm:$0xf] %vm1401, %v1280
      %1410 = vst.msk [vmem:[%s199 + $0x20] sm:$0xf] %vm1401, %v1281
      %1411 = vst.msk [vmem:[%s199 + $0x24] sm:$0xf] %vm1401, %v1282
      %1412 = vst.msk [vmem:[%s199 + $0x28] sm:$0xf] %vm1401, %v1283
      %1413 = vst.msk [vmem:[%s199 + $0x2c] sm:$0xf] %vm1401, %v1284
      %1414 = vst.msk [vmem:[%s199 + $0x30] sm:$0xf] %vm1401, %v1285
      %1415 = vst.msk [vmem:[%s199 + $0x34] sm:$0xf] %vm1401, %v1286
      %1416 = vst.msk [vmem:[%s199 + $0x38] sm:$0xf] %vm1401, %v1287
      %1417 = vst.msk [vmem:[%s199 + $0x3c] sm:$0xf] %vm1401, %v1288
      %1418 = vst.msk [vmem:[%s199 + $0x40] sm:$0xf] %vm1401, %v1289
      %1419 = vst.msk [vmem:[%s199 + $0x44] sm:$0xf] %vm1401, %v1290
      %1420 = vst.msk [vmem:[%s199 + $0x48] sm:$0xf] %vm1401, %v1291
      %1421 = vst.msk [vmem:[%s199 + $0x4c] sm:$0xf] %vm1401, %v1292
      %1422 = vst.msk [vmem:[%s199 + $0x50] sm:$0xf] %vm1401, %v1293
      %1423 = vst.msk [vmem:[%s199 + $0x54] sm:$0xf] %vm1401, %v1294
      %1424 = vst.msk [vmem:[%s199 + $0x58] sm:$0xf] %vm1401, %v1295
      %1425 = vst.msk [vmem:[%s199 + $0x5c] sm:$0xf] %vm1401, %v1296
      %1426 = vst.msk [vmem:[%s199 + $0x60] sm:$0xf] %vm1401, %v1297
      %1427 = vst.msk [vmem:[%s199 + $0x64] sm:$0xf] %vm1401, %v1298
      %1428 = vst.msk [vmem:[%s199 + $0x68] sm:$0xf] %vm1401, %v1299
      %1429 = vst.msk [vmem:[%s199 + $0x6c] sm:$0xf] %vm1401, %v1300
      %1430 = vst.msk [vmem:[%s199 + $0x70] sm:$0xf] %vm1401, %v1301
      %1431 = vst.msk [vmem:[%s199 + $0x74] sm:$0xf] %vm1401, %v1302
      %1432 = vst.msk [vmem:[%s199 + $0x78] sm:$0xf] %vm1401, %v1303
      %1433 = vst.msk [vmem:[%s199 + $0x7c] sm:$0xf] %vm1401, %v1304
      %1434 = vst.msk [vmem:[%s199 + $0x80] sm:$0xf] %vm1401, %v1305
      %1435 = vst.msk [vmem:[%s199 + $0x84] sm:$0xf] %vm1401, %v1306
      %1436 = vst.msk [vmem:[%s199 + $0x88] sm:$0xf] %vm1401, %v1307
      %1437 = vst.msk [vmem:[%s199 + $0x8c] sm:$0xf] %vm1401, %v1308
      %1438 = vst.msk [vmem:[%s199 + $0x90] sm:$0xf] %vm1401, %v1309
      %1439 = vst.msk [vmem:[%s199 + $0x94] sm:$0xf] %vm1401, %v1310
      %1440 = vst.msk [vmem:[%s199 + $0x98] sm:$0xf] %vm1401, %v1311
      %1441 = vst.msk [vmem:[%s199 + $0x9c] sm:$0xf] %vm1401, %v1312
      %1442 = vst.msk [vmem:[%s199 + $0xa0] sm:$0xf] %vm1401, %v1313
      %1443 = vst.msk [vmem:[%s199 + $0xa4] sm:$0xf] %vm1401, %v1314
      %1444 = vst.msk [vmem:[%s199 + $0xa8] sm:$0xf] %vm1401, %v1315
      %1445 = vst.msk [vmem:[%s199 + $0xac] sm:$0xf] %vm1401, %v1316
      %1446 = vst.msk [vmem:[%s199 + $0xb0] sm:$0xf] %vm1401, %v1317
      %1447 = vst.msk [vmem:[%s199 + $0xb4] sm:$0xf] %vm1401, %v1318
      %1448 = vst.msk [vmem:[%s199 + $0xb8] sm:$0xf] %vm1401, %v1319
      %1449 = vst.msk [vmem:[%s199 + $0xbc] sm:$0xf] %vm1401, %v1320
      %1450 = vst.msk [vmem:[%s199 + $0xc0] sm:$0xf] %vm1401, %v1321
      %1451 = vst.msk [vmem:[%s199 + $0xc4] sm:$0xf] %vm1401, %v1322
      %1452 = vst.msk [vmem:[%s199 + $0xc8] sm:$0xf] %vm1401, %v1323
      %1453 = vst.msk [vmem:[%s199 + $0xcc] sm:$0xf] %vm1401, %v1324
      %1454 = vst.msk [vmem:[%s199 + $0xd0] sm:$0xf] %vm1401, %v1325
      %1455 = vst.msk [vmem:[%s199 + $0xd4] sm:$0xf] %vm1401, %v1326
      %1456 = vst.msk [vmem:[%s199 + $0xd8] sm:$0xf] %vm1401, %v1327
      %1457 = vst.msk [vmem:[%s199 + $0xdc] sm:$0xf] %vm1401, %v1328
      %1458 = vst.msk [vmem:[%s199 + $0xe0] sm:$0xf] %vm1401, %v1329
      %1459 = vst.msk [vmem:[%s199 + $0xe4] sm:$0xf] %vm1401, %v1330
      %1460 = vst.msk [vmem:[%s199 + $0xe8] sm:$0xf] %vm1401, %v1331
      %1461 = vst.msk [vmem:[%s199 + $0xec] sm:$0xf] %vm1401, %v1332
      %1462 = vst.msk [vmem:[%s199 + $0xf0] sm:$0xf] %vm1401, %v1333
      %1463 = vst.msk [vmem:[%s199 + $0xf4] sm:$0xf] %vm1401, %v1334
      %1464 = vst.msk [vmem:[%s199 + $0xf8] sm:$0xf] %vm1401, %v1335
      %1465 = vst.msk [vmem:[%s199 + $0xfc] sm:$0xf] %vm1401, %v1336
      %s1466 = smul.u32 64, %s15
      %p1467 = scmp.lt.s32.totalorder %s1466, 255
      %s1468 = scalar_select %p1467, %s1466, 255
      %s1469 = smul.addr %s1468, 4
      %s1470 = scalar_lea.vmem %s4, %s1469
      // Predicated region
      $region37: #{darknet_forward.25} parent=35 // pred_check
        %p1471 = pneg %p122
      $region38: #{darknet_forward.25} parent=35 // pred_check_branch
        %1473 = sbr.rel (%p1471) target = $region40
      $region39: #{darknet_forward.25} parent=35 // pred_region
        %s1474 = smul.u32 64, %s15
      $region40: #{darknet_forward.25} parent=35 // pred_fallthru
        _
    $region36: #{darknet_forward.25} parent=5 // pred_fallthru
      _
    %p1475 = scmp.le.s32.totalorder 2, %s10
    // Predicated region
    $region41: #{darknet_forward.25} parent=5 // pred_check
      %p1476 = pneg %p1475
    $region42: #{darknet_forward.25} parent=5 // pred_check_branch
      %1478 = sbr.rel (%p1476) target = $region44
    $region43: #{darknet_forward.25} parent=5 // pred_region
      %s1479 = ssub.s32 %s10, 2
      // Predicated region
      $region45: #{darknet_forward.25} parent=43 // pred_check
        %p1480 = pneg %p128
      $region46: #{darknet_forward.25} parent=43 // pred_check_branch
        %1482 = sbr.rel (%p1480) target = $region48
      $region47: #{darknet_forward.25} parent=43 // pred_region
        %s1483 = smul.u32 64, %s16
        %p1484 = scmp.lt.s32.totalorder %s1483, 255
        %s1485 = scalar_select %p1484, %s1483, 255
        %s1486 = smul.addr %s1485, 4
        %s1487 = scalar_lea.vmem %s4, %s1486
      $region48: #{darknet_forward.25} parent=43 // pred_fallthru
        _
    $region44: #{darknet_forward.25} parent=5 // pred_fallthru
      _
  $region6: #{darknet_forward.25} parent=0 // loop_footer
    %s14 = sadd.s32 1, %s10
  $region7: #{darknet_forward.25} parent=0 // loop_footer_branch
    %9 = sbr.rel target = $region3
  $region8: #{darknet_forward.25} parent=0 // loop_exit
    _

// kernel: darknet_forward.26
$region0: #{darknet_forward.26}
  #allocation0 [shape = 'u32[]', space=smem, size = 0x4, offset = 0x4, fixed_abs, tag = 'smem constant byte address 0x4 - core index']
  #allocation1 [shape = 'u32[144,128]{1,0:T(1,128)}', space=vmem, size = 0x12000, scoped, tag = 'internal scratch']
  %s0 = inlined_call_operand.vmem [shape: bf16[512,256], index: 0, kind: input, shape index: {}]
  %s1 = inlined_call_operand.vmem [shape: bf16[256,32], index: 1, kind: input, shape index: {}]
  %s2 = inlined_call_operand.vmem [shape: f32[1,32], index: 2, kind: input, shape index: {}]
  %s3 = inlined_call_operand.vmem [shape: f32[1,32], index: 3, kind: input, shape index: {}]
  %s4 = inlined_call_operand.vmem [shape: bf16[512,32], index: 4, kind: output, shape index: {}]
  %s5 = sld [smem:[#allocation0]]
  $region26: #{darknet_forward.26} parent=0
    _
  %s7 = ssub.s32 1, %s5
  %s8 = scalar_select 0, %s7, %s5
  // Predicated region
  $region2: #{darknet_forward.26} parent=0 // pred_check
    _
  $region3: #{darknet_forward.26} parent=0 // pred_check_branch
    %10 = sbr.rel (0) target = $region5
  $region4: #{darknet_forward.26} parent=0 // pred_region
    _
  $region5: #{darknet_forward.26} parent=0 // pred_fallthru
    _
  // Predicated region
  $region6: #{darknet_forward.26} parent=0 // pred_check
    _
  $region7: #{darknet_forward.26} parent=0 // pred_check_branch
    %12 = sbr.rel (0) target = $region9
  $region8: #{darknet_forward.26} parent=0 // pred_region
    _
  $region9: #{darknet_forward.26} parent=0 // pred_fallthru
    _
  // Predicated region
  $region10: #{darknet_forward.26} parent=0 // pred_check
    _
  $region11: #{darknet_forward.26} parent=0 // pred_check_branch
    %14 = sbr.rel (0) target = $region13
  $region12: #{darknet_forward.26} parent=0 // pred_region
    _
  $region13: #{darknet_forward.26} parent=0 // pred_fallthru
    _
  // Predicated region
  $region14: #{darknet_forward.26} parent=0 // pred_check
    _
  $region15: #{darknet_forward.26} parent=0 // pred_check_branch
    %16 = sbr.rel (0) target = $region17
  $region16: #{darknet_forward.26} parent=0 // pred_region
    _
  $region17: #{darknet_forward.26} parent=0 // pred_fallthru
    _
  %v18 = vld [vmem:[%s0] sm:$0xff]
  %v19 = vld [vmem:[%s0 + $0x8] sm:$0xff]
  %v20 = vld [vmem:[%s0 + $0x10] sm:$0xff]
  %v21 = vld [vmem:[%s0 + $0x18] sm:$0xff]
  %v22 = vld [vmem:[%s0 + $0x20] sm:$0xff]
  %v23 = vld [vmem:[%s0 + $0x28] sm:$0xff]
  %v24 = vld [vmem:[%s0 + $0x30] sm:$0xff]
  %v25 = vld [vmem:[%s0 + $0x38] sm:$0xff]
  %v26 = vld [vmem:[%s0 + $0x40] sm:$0xff]
  %v27 = vld [vmem:[%s0 + $0x48] sm:$0xff]
  %v28 = vld [vmem:[%s0 + $0x50] sm:$0xff]
  %v29 = vld [vmem:[%s0 + $0x58] sm:$0xff]
  %v30 = vld [vmem:[%s0 + $0x60] sm:$0xff]
  %v31 = vld [vmem:[%s0 + $0x68] sm:$0xff]
  %v32 = vld [vmem:[%s0 + $0x70] sm:$0xff]
  %v33 = vld [vmem:[%s0 + $0x78] sm:$0xff]
  %v34 = vld [vmem:[%s0 + $0x80] sm:$0xff]
  %v35 = vld [vmem:[%s0 + $0x88] sm:$0xff]
  %v36 = vld [vmem:[%s0 + $0x90] sm:$0xff]
  %v37 = vld [vmem:[%s0 + $0x98] sm:$0xff]
  %v38 = vld [vmem:[%s0 + $0xa0] sm:$0xff]
  %v39 = vld [vmem:[%s0 + $0xa8] sm:$0xff]
  %v40 = vld [vmem:[%s0 + $0xb0] sm:$0xff]
  %v41 = vld [vmem:[%s0 + $0xb8] sm:$0xff]
  %v42 = vld [vmem:[%s0 + $0xc0] sm:$0xff]
  %v43 = vld [vmem:[%s0 + $0xc8] sm:$0xff]
  %v44 = vld [vmem:[%s0 + $0xd0] sm:$0xff]
  %v45 = vld [vmem:[%s0 + $0xd8] sm:$0xff]
  %v46 = vld [vmem:[%s0 + $0xe0] sm:$0xff]
  %v47 = vld [vmem:[%s0 + $0xe8] sm:$0xff]
  %v48 = vld [vmem:[%s0 + $0xf0] sm:$0xff]
  %v49 = vld [vmem:[%s0 + $0xf8] sm:$0xff]
  %v50 = vld [vmem:[%s0 + $0x100] sm:$0xff]
  %v51 = vld [vmem:[%s0 + $0x108] sm:$0xff]
  %v52 = vld [vmem:[%s0 + $0x110] sm:$0xff]
  %v53 = vld [vmem:[%s0 + $0x118] sm:$0xff]
  %v54 = vld [vmem:[%s0 + $0x120] sm:$0xff]
  %v55 = vld [vmem:[%s0 + $0x128] sm:$0xff]
  %v56 = vld [vmem:[%s0 + $0x130] sm:$0xff]
  %v57 = vld [vmem:[%s0 + $0x138] sm:$0xff]
  %v58 = vld [vmem:[%s0 + $0x140] sm:$0xff]
  %v59 = vld [vmem:[%s0 + $0x148] sm:$0xff]
  %v60 = vld [vmem:[%s0 + $0x150] sm:$0xff]
  %v61 = vld [vmem:[%s0 + $0x158] sm:$0xff]
  %v62 = vld [vmem:[%s0 + $0x160] sm:$0xff]
  %v63 = vld [vmem:[%s0 + $0x168] sm:$0xff]
  %v64 = vld [vmem:[%s0 + $0x170] sm:$0xff]
  %v65 = vld [vmem:[%s0 + $0x178] sm:$0xff]
  %v66 = vld [vmem:[%s0 + $0x180] sm:$0xff]
  %v67 = vld [vmem:[%s0 + $0x188] sm:$0xff]
  %v68 = vld [vmem:[%s0 + $0x190] sm:$0xff]
  %v69 = vld [vmem:[%s0 + $0x198] sm:$0xff]
  %v70 = vld [vmem:[%s0 + $0x1a0] sm:$0xff]
  %v71 = vld [vmem:[%s0 + $0x1a8] sm:$0xff]
  %v72 = vld [vmem:[%s0 + $0x1b0] sm:$0xff]
  %v73 = vld [vmem:[%s0 + $0x1b8] sm:$0xff]
  %v74 = vld [vmem:[%s0 + $0x1c0] sm:$0xff]
  %v75 = vld [vmem:[%s0 + $0x1c8] sm:$0xff]
  %v76 = vld [vmem:[%s0 + $0x1d0] sm:$0xff]
  %v77 = vld [vmem:[%s0 + $0x1d8] sm:$0xff]
  %v78 = vld [vmem:[%s0 + $0x1e0] sm:$0xff]
  %v79 = vld [vmem:[%s0 + $0x1e8] sm:$0xff]
  %v80 = vld [vmem:[%s0 + $0x1f0] sm:$0xff]
  %v81 = vld [vmem:[%s0 + $0x1f8] sm:$0xff]
  %v82 = vld [vmem:[%s1] sm:$0xf]
  %v83 = vld [vmem:[%s1 + $0x4] sm:$0xf]
  %v84 = vld [vmem:[%s1 + $0x8] sm:$0xf]
  %v85 = vld [vmem:[%s1 + $0xc] sm:$0xf]
  %v86 = vld [vmem:[%s1 + $0x10] sm:$0xf]
  %v87 = vld [vmem:[%s1 + $0x14] sm:$0xf]
  %v88 = vld [vmem:[%s1 + $0x18] sm:$0xf]
  %v89 = vld [vmem:[%s1 + $0x1c] sm:$0xf]
  %v90 = vld [vmem:[%s1 + $0x20] sm:$0xf]
  %v91 = vld [vmem:[%s1 + $0x24] sm:$0xf]
  %v92 = vld [vmem:[%s1 + $0x28] sm:$0xf]
  %v93 = vld [vmem:[%s1 + $0x2c] sm:$0xf]
  %v94 = vld [vmem:[%s1 + $0x30] sm:$0xf]
  %v95 = vld [vmem:[%s1 + $0x34] sm:$0xf]
  %v96 = vld [vmem:[%s1 + $0x38] sm:$0xf]
  %v97 = vld [vmem:[%s1 + $0x3c] sm:$0xf]
  %v98 = vld [vmem:[%s1 + $0x40] sm:$0xf]
  %v99 = vld [vmem:[%s1 + $0x44] sm:$0xf]
  %v100 = vld [vmem:[%s1 + $0x48] sm:$0xf]
  %v101 = vld [vmem:[%s1 + $0x4c] sm:$0xf]
  %v102 = vld [vmem:[%s1 + $0x50] sm:$0xf]
  %v103 = vld [vmem:[%s1 + $0x54] sm:$0xf]
  %v104 = vld [vmem:[%s1 + $0x58] sm:$0xf]
  %v105 = vld [vmem:[%s1 + $0x5c] sm:$0xf]
  %v106 = vld [vmem:[%s1 + $0x60] sm:$0xf]
  %v107 = vld [vmem:[%s1 + $0x64] sm:$0xf]
  %v108 = vld [vmem:[%s1 + $0x68] sm:$0xf]
  %v109 = vld [vmem:[%s1 + $0x6c] sm:$0xf]
  %v110 = vld [vmem:[%s1 + $0x70] sm:$0xf]
  %v111 = vld [vmem:[%s1 + $0x74] sm:$0xf]
  %v112 = vld [vmem:[%s1 + $0x78] sm:$0xf]
  %v113 = vld [vmem:[%s1 + $0x7c] sm:$0xf]
  %v178 = vunpack.c.l.b16 %v18
  %v179 = vunpack.c.h.b16 %v18
  %v180 = vunpack.c.l.b16 %v19
  %v181 = vunpack.c.h.b16 %v19
  %v182 = vunpack.c.l.b16 %v20
  %v183 = vunpack.c.h.b16 %v20
  %v184 = vunpack.c.l.b16 %v21
  %v185 = vunpack.c.h.b16 %v21
  %v186 = vunpack.c.l.b16 %v22
  %v187 = vunpack.c.h.b16 %v22
  %v188 = vunpack.c.l.b16 %v23
  %v189 = vunpack.c.h.b16 %v23
  %v190 = vunpack.c.l.b16 %v24
  %v191 = vunpack.c.h.b16 %v24
  %v192 = vunpack.c.l.b16 %v25
  %v193 = vunpack.c.h.b16 %v25
  %v194 = vunpack.c.l.b16 %v26
  %v195 = vunpack.c.h.b16 %v26
  %v196 = vunpack.c.l.b16 %v27
  %v197 = vunpack.c.h.b16 %v27
  %v198 = vunpack.c.l.b16 %v28
  %v199 = vunpack.c.h.b16 %v28
  %v200 = vunpack.c.l.b16 %v29
  %v201 = vunpack.c.h.b16 %v29
  %v202 = vunpack.c.l.b16 %v30
  %v203 = vunpack.c.h.b16 %v30
  %v204 = vunpack.c.l.b16 %v31
  %v205 = vunpack.c.h.b16 %v31
  %v206 = vunpack.c.l.b16 %v32
  %v207 = vunpack.c.h.b16 %v32
  %v208 = vunpack.c.l.b16 %v33
  %v209 = vunpack.c.h.b16 %v33
  %v210 = vunpack.c.l.b16 %v34
  %v211 = vunpack.c.h.b16 %v34
  %v212 = vunpack.c.l.b16 %v35
  %v213 = vunpack.c.h.b16 %v35
  %v214 = vunpack.c.l.b16 %v36
  %v215 = vunpack.c.h.b16 %v36
  %v216 = vunpack.c.l.b16 %v37
  %v217 = vunpack.c.h.b16 %v37
  %v218 = vunpack.c.l.b16 %v38
  %v219 = vunpack.c.h.b16 %v38
  %v220 = vunpack.c.l.b16 %v39
  %v221 = vunpack.c.h.b16 %v39
  %v222 = vunpack.c.l.b16 %v40
  %v223 = vunpack.c.h.b16 %v40
  %v224 = vunpack.c.l.b16 %v41
  %v225 = vunpack.c.h.b16 %v41
  %v226 = vunpack.c.l.b16 %v42
  %v227 = vunpack.c.h.b16 %v42
  %v228 = vunpack.c.l.b16 %v43
  %v229 = vunpack.c.h.b16 %v43
  %v230 = vunpack.c.l.b16 %v44
  %v231 = vunpack.c.h.b16 %v44
  %v232 = vunpack.c.l.b16 %v45
  %v233 = vunpack.c.h.b16 %v45
  %v234 = vunpack.c.l.b16 %v46
  %v235 = vunpack.c.h.b16 %v46
  %v236 = vunpack.c.l.b16 %v47
  %v237 = vunpack.c.h.b16 %v47
  %v238 = vunpack.c.l.b16 %v48
  %v239 = vunpack.c.h.b16 %v48
  %v240 = vunpack.c.l.b16 %v49
  %v241 = vunpack.c.h.b16 %v49
  %v242 = vunpack.c.l.b16 %v50
  %v243 = vunpack.c.h.b16 %v50
  %v244 = vunpack.c.l.b16 %v51
  %v245 = vunpack.c.h.b16 %v51
  %v246 = vunpack.c.l.b16 %v52
  %v247 = vunpack.c.h.b16 %v52
  %v248 = vunpack.c.l.b16 %v53
  %v249 = vunpack.c.h.b16 %v53
  %v250 = vunpack.c.l.b16 %v54
  %v251 = vunpack.c.h.b16 %v54
  %v252 = vunpack.c.l.b16 %v55
  %v253 = vunpack.c.h.b16 %v55
  %v254 = vunpack.c.l.b16 %v56
  %v255 = vunpack.c.h.b16 %v56
  %v256 = vunpack.c.l.b16 %v57
  %v257 = vunpack.c.h.b16 %v57
  %v258 = vunpack.c.l.b16 %v58
  %v259 = vunpack.c.h.b16 %v58
  %v260 = vunpack.c.l.b16 %v59
  %v261 = vunpack.c.h.b16 %v59
  %v262 = vunpack.c.l.b16 %v60
  %v263 = vunpack.c.h.b16 %v60
  %v264 = vunpack.c.l.b16 %v61
  %v265 = vunpack.c.h.b16 %v61
  %v266 = vunpack.c.l.b16 %v62
  %v267 = vunpack.c.h.b16 %v62
  %v268 = vunpack.c.l.b16 %v63
  %v269 = vunpack.c.h.b16 %v63
  %v270 = vunpack.c.l.b16 %v64
  %v271 = vunpack.c.h.b16 %v64
  %v272 = vunpack.c.l.b16 %v65
  %v273 = vunpack.c.h.b16 %v65
  %v274 = vunpack.c.l.b16 %v66
  %v275 = vunpack.c.h.b16 %v66
  %v276 = vunpack.c.l.b16 %v67
  %v277 = vunpack.c.h.b16 %v67
  %v278 = vunpack.c.l.b16 %v68
  %v279 = vunpack.c.h.b16 %v68
  %v280 = vunpack.c.l.b16 %v69
  %v281 = vunpack.c.h.b16 %v69
  %v282 = vunpack.c.l.b16 %v70
  %v283 = vunpack.c.h.b16 %v70
  %v284 = vunpack.c.l.b16 %v71
  %v285 = vunpack.c.h.b16 %v71
  %v286 = vunpack.c.l.b16 %v72
  %v287 = vunpack.c.h.b16 %v72
  %v288 = vunpack.c.l.b16 %v73
  %v289 = vunpack.c.h.b16 %v73
  %v290 = vunpack.c.l.b16 %v74
  %v291 = vunpack.c.h.b16 %v74
  %v292 = vunpack.c.l.b16 %v75
  %v293 = vunpack.c.h.b16 %v75
  %v294 = vunpack.c.l.b16 %v76
  %v295 = vunpack.c.h.b16 %v76
  %v296 = vunpack.c.l.b16 %v77
  %v297 = vunpack.c.h.b16 %v77
  %v298 = vunpack.c.l.b16 %v78
  %v299 = vunpack.c.h.b16 %v78
  %v300 = vunpack.c.l.b16 %v79
  %v301 = vunpack.c.h.b16 %v79
  %v302 = vunpack.c.l.b16 %v80
  %v303 = vunpack.c.h.b16 %v80
  %v304 = vunpack.c.l.b16 %v81
  %v305 = vunpack.c.h.b16 %v81
  %v306 = vpack.c.b16 %v180, %v178
  %v307 = vpack.c.b16 %v181, %v179
  %v308 = vpack.c.b16 %v184, %v182
  %v309 = vpack.c.b16 %v185, %v183
  %v310 = vpack.c.b16 %v188, %v186
  %v311 = vpack.c.b16 %v189, %v187
  %v312 = vpack.c.b16 %v192, %v190
  %v313 = vpack.c.b16 %v193, %v191
  %v314 = vpack.c.b16 %v196, %v194
  %v315 = vpack.c.b16 %v197, %v195
  %v316 = vpack.c.b16 %v200, %v198
  %v317 = vpack.c.b16 %v201, %v199
  %v318 = vpack.c.b16 %v204, %v202
  %v319 = vpack.c.b16 %v205, %v203
  %v320 = vpack.c.b16 %v208, %v206
  %v321 = vpack.c.b16 %v209, %v207
  %v322 = vpack.c.b16 %v212, %v210
  %v323 = vpack.c.b16 %v213, %v211
  %v324 = vpack.c.b16 %v216, %v214
  %v325 = vpack.c.b16 %v217, %v215
  %v326 = vpack.c.b16 %v220, %v218
  %v327 = vpack.c.b16 %v221, %v219
  %v328 = vpack.c.b16 %v224, %v222
  %v329 = vpack.c.b16 %v225, %v223
  %v330 = vpack.c.b16 %v228, %v226
  %v331 = vpack.c.b16 %v229, %v227
  %v332 = vpack.c.b16 %v232, %v230
  %v333 = vpack.c.b16 %v233, %v231
  %v334 = vpack.c.b16 %v236, %v234
  %v335 = vpack.c.b16 %v237, %v235
  %v336 = vpack.c.b16 %v240, %v238
  %v337 = vpack.c.b16 %v241, %v239
  %v338 = vpack.c.b16 %v244, %v242
  %v339 = vpack.c.b16 %v245, %v243
  %v340 = vpack.c.b16 %v248, %v246
  %v341 = vpack.c.b16 %v249, %v247
  %v342 = vpack.c.b16 %v252, %v250
  %v343 = vpack.c.b16 %v253, %v251
  %v344 = vpack.c.b16 %v256, %v254
  %v345 = vpack.c.b16 %v257, %v255
  %v346 = vpack.c.b16 %v260, %v258
  %v347 = vpack.c.b16 %v261, %v259
  %v348 = vpack.c.b16 %v264, %v262
  %v349 = vpack.c.b16 %v265, %v263
  %v350 = vpack.c.b16 %v268, %v266
  %v351 = vpack.c.b16 %v269, %v267
  %v352 = vpack.c.b16 %v272, %v270
  %v353 = vpack.c.b16 %v273, %v271
  %v354 = vpack.c.b16 %v276, %v274
  %v355 = vpack.c.b16 %v277, %v275
  %v356 = vpack.c.b16 %v280, %v278
  %v357 = vpack.c.b16 %v281, %v279
  %v358 = vpack.c.b16 %v284, %v282
  %v359 = vpack.c.b16 %v285, %v283
  %v360 = vpack.c.b16 %v288, %v286
  %v361 = vpack.c.b16 %v289, %v287
  %v362 = vpack.c.b16 %v292, %v290
  %v363 = vpack.c.b16 %v293, %v291
  %v364 = vpack.c.b16 %v296, %v294
  %v365 = vpack.c.b16 %v297, %v295
  %v366 = vpack.c.b16 %v300, %v298
  %v367 = vpack.c.b16 %v301, %v299
  %v368 = vpack.c.b16 %v304, %v302
  %v369 = vpack.c.b16 %v305, %v303
  %v466 = vunpack.c.l.b16 %v82
  %v467 = vunpack.c.l.b16 %v83
  %v468 = vunpack.c.l.b16 %v84
  %v469 = vunpack.c.l.b16 %v85
  %v470 = vunpack.c.l.b16 %v86
  %v471 = vunpack.c.l.b16 %v87
  %v472 = vunpack.c.l.b16 %v88
  %v473 = vunpack.c.l.b16 %v89
  %v474 = vunpack.c.l.b16 %v90
  %v475 = vunpack.c.l.b16 %v91
  %v476 = vunpack.c.l.b16 %v92
  %v477 = vunpack.c.l.b16 %v93
  %v478 = vunpack.c.l.b16 %v94
  %v479 = vunpack.c.l.b16 %v95
  %v480 = vunpack.c.l.b16 %v96
  %v481 = vunpack.c.l.b16 %v97
  %v482 = vunpack.c.l.b16 %v98
  %v483 = vunpack.c.l.b16 %v99
  %v484 = vunpack.c.l.b16 %v100
  %v485 = vunpack.c.l.b16 %v101
  %v486 = vunpack.c.l.b16 %v102
  %v487 = vunpack.c.l.b16 %v103
  %v488 = vunpack.c.l.b16 %v104
  %v489 = vunpack.c.l.b16 %v105
  %v490 = vunpack.c.l.b16 %v106
  %v491 = vunpack.c.l.b16 %v107
  %v492 = vunpack.c.l.b16 %v108
  %v493 = vunpack.c.l.b16 %v109
  %v494 = vunpack.c.l.b16 %v110
  %v495 = vunpack.c.l.b16 %v111
  %v496 = vunpack.c.l.b16 %v112
  %v497 = vunpack.c.l.b16 %v113
  %v498 = vpack.c.b16 %v467, %v466
  %v499 = vpack.c.b16 %v469, %v468
  %v500 = vpack.c.b16 %v471, %v470
  %v501 = vpack.c.b16 %v473, %v472
  %v502 = vpack.c.b16 %v475, %v474
  %v503 = vpack.c.b16 %v477, %v476
  %v504 = vpack.c.b16 %v479, %v478
  %v505 = vpack.c.b16 %v481, %v480
  %v506 = vpack.c.b16 %v483, %v482
  %v507 = vpack.c.b16 %v485, %v484
  %v508 = vpack.c.b16 %v487, %v486
  %v509 = vpack.c.b16 %v489, %v488
  %v510 = vpack.c.b16 %v491, %v490
  %v511 = vpack.c.b16 %v493, %v492
  %v512 = vpack.c.b16 %v495, %v494
  %v513 = vpack.c.b16 %v497, %v496
  %530 = vmatprep.subr.bf16.mxu0 0
  %531 = vmatpush1.bf16.msra.mxu0 %v498
  %532 = vmatprep.subr.bf16.mxu0 0
  %533 = vmatpush1.bf16.msra.mxu0 %v499
  %534 = vmatprep.subr.bf16.mxu0 0
  %535 = vmatpush1.bf16.msra.mxu0 %v500
  %536 = vmatprep.subr.bf16.mxu0 0
  %537 = vmatpush1.bf16.msra.mxu0 %v501
  %538 = vmatprep.subr.bf16.mxu0 0
  %539 = vmatpush1.bf16.msra.mxu0 %v502
  %540 = vmatprep.subr.bf16.mxu0 0
  %541 = vmatpush1.bf16.msra.mxu0 %v503
  %542 = vmatprep.subr.bf16.mxu0 0
  %543 = vmatpush1.bf16.msra.mxu0 %v504
  %544 = vmatprep.subr.bf16.mxu0 0
  %545 = vmatpush1.bf16.msra.mxu0 %v505
  %546 = vmatprep.subr.bf16.mxu0 0
  %547 = vmatpush1.bf16.msra.mxu0 %v506
  %548 = vmatprep.subr.bf16.mxu0 0
  %549 = vmatpush1.bf16.msra.mxu0 %v507
  %550 = vmatprep.subr.bf16.mxu0 0
  %551 = vmatpush1.bf16.msra.mxu0 %v508
  %552 = vmatprep.subr.bf16.mxu0 0
  %553 = vmatpush1.bf16.msra.mxu0 %v509
  %554 = vmatprep.subr.bf16.mxu0 0
  %555 = vmatpush1.bf16.msra.mxu0 %v510
  %556 = vmatprep.subr.bf16.mxu0 0
  %557 = vmatpush1.bf16.msra.mxu0 %v511
  %558 = vmatprep.subr.bf16.mxu0 0
  %559 = vmatpush1.bf16.msra.mxu0 %v512
  %560 = vmatprep.subr.bf16.mxu0 0
  %561 = vmatpush1.bf16.msra.mxu0 %v513
  %562 = vmatprep.mubr.bf16.mxu0 %v307
  %563 = vmatmul.mubr.bf16.gmra.mrb[0].mxu0 %v306
  %v564 = vpop.f32.mrb[0].mxu0
  %v565 = vadd.f32 0.0, %v564
  %v566 = vpop.f32.mrb[0].mxu0
  %v567 = vpop.f32.mrb[0].mxu0
  %v568 = vadd.f32 0.0, %v567
  %v569 = vpop.f32.mrb[0].mxu0
  %570 = vmatprep.mubr.bf16.mxu0 %v309
  %571 = vmatmul.mubr.bf16.gmra.mrb[0].mxu0 %v308
  %v572 = vpop.f32.mrb[0].mxu0
  %v573 = vadd.f32 0.0, %v572
  %v574 = vpop.f32.mrb[0].mxu0
  %v575 = vpop.f32.mrb[0].mxu0
  %v576 = vadd.f32 0.0, %v575
  %v577 = vpop.f32.mrb[0].mxu0
  %578 = vmatprep.mubr.bf16.mxu0 %v311
  %579 = vmatmul.mubr.bf16.gmra.mrb[0].mxu0 %v310
  %v580 = vpop.f32.mrb[0].mxu0
  %v581 = vadd.f32 0.0, %v580
  %v582 = vpop.f32.mrb[0].mxu0
  %v583 = vpop.f32.mrb[0].mxu0
  %v584 = vadd.f32 0.0, %v583
  %v585 = vpop.f32.mrb[0].mxu0
  %586 = vmatprep.mubr.bf16.mxu0 %v313
  %587 = vmatmul.mubr.bf16.gmra.mrb[0].mxu0 %v312
  %v588 = vpop.f32.mrb[0].mxu0
  %v589 = vadd.f32 0.0, %v588
  %v590 = vpop.f32.mrb[0].mxu0
  %v591 = vpop.f32.mrb[0].mxu0
  %v592 = vadd.f32 0.0, %v591
  %v593 = vpop.f32.mrb[0].mxu0
  %594 = vmatprep.mubr.bf16.mxu0 %v315
  %595 = vmatmul.mubr.bf16.gmra.mrb[0].mxu0 %v314
  %v596 = vpop.f32.mrb[0].mxu0
  %v597 = vadd.f32 0.0, %v596
  %v598 = vpop.f32.mrb[0].mxu0
  %v599 = vpop.f32.mrb[0].mxu0
  %v600 = vadd.f32 0.0, %v599
  %v601 = vpop.f32.mrb[0].mxu0
  %602 = vmatprep.mubr.bf16.mxu0 %v317
  %603 = vmatmul.mubr.bf16.gmra.mrb[0].mxu0 %v316
  %v604 = vpop.f32.mrb[0].mxu0
  %v605 = vadd.f32 0.0, %v604
  %v606 = vpop.f32.mrb[0].mxu0
  %v607 = vpop.f32.mrb[0].mxu0
  %v608 = vadd.f32 0.0, %v607
  %v609 = vpop.f32.mrb[0].mxu0
  %610 = vmatprep.mubr.bf16.mxu0 %v319
  %611 = vmatmul.mubr.bf16.gmra.mrb[0].mxu0 %v318
  %v612 = vpop.f32.mrb[0].mxu0
  %v613 = vadd.f32 0.0, %v612
  %v614 = vpop.f32.mrb[0].mxu0
  %v615 = vpop.f32.mrb[0].mxu0
  %v616 = vadd.f32 0.0, %v615
  %v617 = vpop.f32.mrb[0].mxu0
  %618 = vmatprep.mubr.bf16.mxu0 %v321
  %619 = vmatmul.mubr.bf16.gmra.mrb[0].mxu0 %v320
  %v620 = vpop.f32.mrb[0].mxu0
  %v621 = vadd.f32 0.0, %v620
  %v622 = vpop.f32.mrb[0].mxu0
  %v623 = vpop.f32.mrb[0].mxu0
  %v624 = vadd.f32 0.0, %v623
  %v625 = vpop.f32.mrb[0].mxu0
  %626 = vmatprep.mubr.bf16.mxu0 %v323
  %627 = vmatmul.mubr.bf16.gmra.mrb[0].mxu0 %v322
  %v628 = vpop.f32.mrb[0].mxu0
  %v629 = vadd.f32 0.0, %v628
  %v630 = vpop.f32.mrb[0].mxu0
  %v631 = vpop.f32.mrb[0].mxu0
  %v632 = vadd.f32 0.0, %v631
  %v633 = vpop.f32.mrb[0].mxu0
  %634 = vmatprep.mubr.bf16.mxu0 %v325
  %635 = vmatmul.mubr.bf16.gmra.mrb[0].mxu0 %v324
  %v636 = vpop.f32.mrb[0].mxu0
  %v637 = vadd.f32 0.0, %v636
  %v638 = vpop.f32.mrb[0].mxu0
  %v639 = vpop.f32.mrb[0].mxu0
  %v640 = vadd.f32 0.0, %v639
  %v641 = vpop.f32.mrb[0].mxu0
  %642 = vmatprep.mubr.bf16.mxu0 %v327
  %643 = vmatmul.mubr.bf16.gmra.mrb[0].mxu0 %v326
  %v644 = vpop.f32.mrb[0].mxu0
  %v645 = vadd.f32 0.0, %v644
  %v646 = vpop.f32.mrb[0].mxu0
  %v647 = vpop.f32.mrb[0].mxu0
  %v648 = vadd.f32 0.0, %v647
  %v649 = vpop.f32.mrb[0].mxu0
  %650 = vmatprep.mubr.bf16.mxu0 %v329
  %651 = vmatmul.mubr.bf16.gmra.mrb[0].mxu0 %v328
  %v652 = vpop.f32.mrb[0].mxu0
  %v653 = vadd.f32 0.0, %v652
  %v654 = vpop.f32.mrb[0].mxu0
  %v655 = vpop.f32.mrb[0].mxu0
  %v656 = vadd.f32 0.0, %v655
  %v657 = vpop.f32.mrb[0].mxu0
  %658 = vmatprep.mubr.bf16.mxu0 %v331
  %659 = vmatmul.mubr.bf16.gmra.mrb[0].mxu0 %v330
  %v660 = vpop.f32.mrb[0].mxu0
  %v661 = vadd.f32 0.0, %v660
  %v662 = vpop.f32.mrb[0].mxu0
  %v663 = vpop.f32.mrb[0].mxu0
  %v664 = vadd.f32 0.0, %v663
  %v665 = vpop.f32.mrb[0].mxu0
  %666 = vmatprep.mubr.bf16.mxu0 %v333
  %667 = vmatmul.mubr.bf16.gmra.mrb[0].mxu0 %v332
  %v668 = vpop.f32.mrb[0].mxu0
  %v669 = vadd.f32 0.0, %v668
  %v670 = vpop.f32.mrb[0].mxu0
  %v671 = vpop.f32.mrb[0].mxu0
  %v672 = vadd.f32 0.0, %v671
  %v673 = vpop.f32.mrb[0].mxu0
  %674 = vmatprep.mubr.bf16.mxu0 %v335
  %675 = vmatmul.mubr.bf16.gmra.mrb[0].mxu0 %v334
  %v676 = vpop.f32.mrb[0].mxu0
  %v677 = vadd.f32 0.0, %v676
  %v678 = vpop.f32.mrb[0].mxu0
  %v679 = vpop.f32.mrb[0].mxu0
  %v680 = vadd.f32 0.0, %v679
  %v681 = vpop.f32.mrb[0].mxu0
  %682 = vmatprep.mubr.bf16.mxu0 %v337
  %683 = vmatmul.mubr.bf16.gmra.mrb[0].mxu0 %v336
  %v684 = vpop.f32.mrb[0].mxu0
  %v685 = vadd.f32 0.0, %v684
  %v686 = vpop.f32.mrb[0].mxu0
  %v687 = vpop.f32.mrb[0].mxu0
  %v688 = vadd.f32 0.0, %v687
  %v689 = vpop.f32.mrb[0].mxu0
  %690 = vmatprep.mubr.bf16.mxu0 %v339
  %691 = vmatmul.mubr.bf16.gmra.mrb[0].mxu0 %v338
  %v692 = vpop.f32.mrb[0].mxu0
  %v693 = vadd.f32 0.0, %v692
  %v694 = vpop.f32.mrb[0].mxu0
  %v695 = vpop.f32.mrb[0].mxu0
  %v696 = vadd.f32 0.0, %v695
  %v697 = vpop.f32.mrb[0].mxu0
  %698 = vmatprep.mubr.bf16.mxu0 %v341
  %699 = vmatmul.mubr.bf16.gmra.mrb[0].mxu0 %v340
  %v700 = vpop.f32.mrb[0].mxu0
  %v701 = vadd.f32 0.0, %v700
  %v702 = vpop.f32.mrb[0].mxu0
  %v703 = vpop.f32.mrb[0].mxu0
  %v704 = vadd.f32 0.0, %v703
  %v705 = vpop.f32.mrb[0].mxu0
  %706 = vmatprep.mubr.bf16.mxu0 %v343
  %707 = vmatmul.mubr.bf16.gmra.mrb[0].mxu0 %v342
  %v708 = vpop.f32.mrb[0].mxu0
  %v709 = vadd.f32 0.0, %v708
  %v710 = vpop.f32.mrb[0].mxu0
  %v711 = vpop.f32.mrb[0].mxu0
  %v712 = vadd.f32 0.0, %v711
  %v713 = vpop.f32.mrb[0].mxu0
  %714 = vmatprep.mubr.bf16.mxu0 %v345
  %715 = vmatmul.mubr.bf16.gmra.mrb[0].mxu0 %v344
  %v716 = vpop.f32.mrb[0].mxu0
  %v717 = vadd.f32 0.0, %v716
  %v718 = vpop.f32.mrb[0].mxu0
  %v719 = vpop.f32.mrb[0].mxu0
  %v720 = vadd.f32 0.0, %v719
  %v721 = vpop.f32.mrb[0].mxu0
  %722 = vmatprep.mubr.bf16.mxu0 %v347
  %723 = vmatmul.mubr.bf16.gmra.mrb[0].mxu0 %v346
  %v724 = vpop.f32.mrb[0].mxu0
  %v725 = vadd.f32 0.0, %v724
  %v726 = vpop.f32.mrb[0].mxu0
  %v727 = vpop.f32.mrb[0].mxu0
  %v728 = vadd.f32 0.0, %v727
  %v729 = vpop.f32.mrb[0].mxu0
  %730 = vmatprep.mubr.bf16.mxu0 %v349
  %731 = vmatmul.mubr.bf16.gmra.mrb[0].mxu0 %v348
  %v732 = vpop.f32.mrb[0].mxu0
  %v733 = vadd.f32 0.0, %v732
  %v734 = vpop.f32.mrb[0].mxu0
  %v735 = vpop.f32.mrb[0].mxu0
  %v736 = vadd.f32 0.0, %v735
  %v737 = vpop.f32.mrb[0].mxu0
  %738 = vmatprep.mubr.bf16.mxu0 %v351
  %739 = vmatmul.mubr.bf16.gmra.mrb[0].mxu0 %v350
  %v740 = vpop.f32.mrb[0].mxu0
  %v741 = vadd.f32 0.0, %v740
  %v742 = vpop.f32.mrb[0].mxu0
  %v743 = vpop.f32.mrb[0].mxu0
  %v744 = vadd.f32 0.0, %v743
  %v745 = vpop.f32.mrb[0].mxu0
  %746 = vmatprep.mubr.bf16.mxu0 %v353
  %747 = vmatmul.mubr.bf16.gmra.mrb[0].mxu0 %v352
  %v748 = vpop.f32.mrb[0].mxu0
  %v749 = vadd.f32 0.0, %v748
  %v750 = vpop.f32.mrb[0].mxu0
  %v751 = vpop.f32.mrb[0].mxu0
  %v752 = vadd.f32 0.0, %v751
  %v753 = vpop.f32.mrb[0].mxu0
  %754 = vmatprep.mubr.bf16.mxu0 %v355
  %755 = vmatmul.mubr.bf16.gmra.mrb[0].mxu0 %v354
  %v756 = vpop.f32.mrb[0].mxu0
  %v757 = vadd.f32 0.0, %v756
  %v758 = vpop.f32.mrb[0].mxu0
  %v759 = vpop.f32.mrb[0].mxu0
  %v760 = vadd.f32 0.0, %v759
  %v761 = vpop.f32.mrb[0].mxu0
  %762 = vmatprep.mubr.bf16.mxu0 %v357
  %763 = vmatmul.mubr.bf16.gmra.mrb[0].mxu0 %v356
  %v764 = vpop.f32.mrb[0].mxu0
  %v765 = vadd.f32 0.0, %v764
  %v766 = vpop.f32.mrb[0].mxu0
  %v767 = vpop.f32.mrb[0].mxu0
  %v768 = vadd.f32 0.0, %v767
  %v769 = vpop.f32.mrb[0].mxu0
  %770 = vmatprep.mubr.bf16.mxu0 %v359
  %771 = vmatmul.mubr.bf16.gmra.mrb[0].mxu0 %v358
  %v772 = vpop.f32.mrb[0].mxu0
  %v773 = vadd.f32 0.0, %v772
  %v774 = vpop.f32.mrb[0].mxu0
  %v775 = vpop.f32.mrb[0].mxu0
  %v776 = vadd.f32 0.0, %v775
  %v777 = vpop.f32.mrb[0].mxu0
  %778 = vmatprep.mubr.bf16.mxu0 %v361
  %779 = vmatmul.mubr.bf16.gmra.mrb[0].mxu0 %v360
  %v780 = vpop.f32.mrb[0].mxu0
  %v781 = vadd.f32 0.0, %v780
  %v782 = vpop.f32.mrb[0].mxu0
  %v783 = vpop.f32.mrb[0].mxu0
  %v784 = vadd.f32 0.0, %v783
  %v785 = vpop.f32.mrb[0].mxu0
  %786 = vmatprep.mubr.bf16.mxu0 %v363
  %787 = vmatmul.mubr.bf16.gmra.mrb[0].mxu0 %v362
  %v788 = vpop.f32.mrb[0].mxu0
  %v789 = vadd.f32 0.0, %v788
  %v790 = vpop.f32.mrb[0].mxu0
  %v791 = vpop.f32.mrb[0].mxu0
  %v792 = vadd.f32 0.0, %v791
  %v793 = vpop.f32.mrb[0].mxu0
  %794 = vmatprep.mubr.bf16.mxu0 %v365
  %795 = vmatmul.mubr.bf16.gmra.mrb[0].mxu0 %v364
  %v796 = vpop.f32.mrb[0].mxu0
  %v797 = vadd.f32 0.0, %v796
  %v798 = vpop.f32.mrb[0].mxu0
  %v799 = vpop.f32.mrb[0].mxu0
  %v800 = vadd.f32 0.0, %v799
  %v801 = vpop.f32.mrb[0].mxu0
  %802 = vmatprep.mubr.bf16.mxu0 %v367
  %803 = vmatmul.mubr.bf16.gmra.mrb[0].mxu0 %v366
  %v804 = vpop.f32.mrb[0].mxu0
  %v805 = vadd.f32 0.0, %v804
  %v806 = vpop.f32.mrb[0].mxu0
  %v807 = vpop.f32.mrb[0].mxu0
  %v808 = vadd.f32 0.0, %v807
  %v809 = vpop.f32.mrb[0].mxu0
  %810 = vmatprep.mubr.bf16.mxu0 %v369
  %811 = vmatmul.mubr.bf16.gmra.mrb[0].mxu0 %v368
  %v812 = vpop.f32.mrb[0].mxu0
  %v813 = vadd.f32 0.0, %v812
  %v814 = vpop.f32.mrb[0].mxu0
  %v815 = vpop.f32.mrb[0].mxu0
  %v816 = vadd.f32 0.0, %v815
  %v817 = vpop.f32.mrb[0].mxu0
  %818 = vdwg.mxu0
  %v819 = vld [vmem:[%s2] sm:$0x1]
  %v821 = vlaneseq
  %v822 = vshrl.u32 %v821, 7
  %v823 = vsub.s32 0, %v822
  %v824 = vrot.slane %v819, %v823
  %v826 = vmul.f32 %v565, %v824
  %v827 = vmul.f32 %v568, %v824
  %v828 = vmul.f32 %v573, %v824
  %v829 = vmul.f32 %v576, %v824
  %v830 = vmul.f32 %v581, %v824
  %v831 = vmul.f32 %v584, %v824
  %v832 = vmul.f32 %v589, %v824
  %v833 = vmul.f32 %v592, %v824
  %v834 = vmul.f32 %v597, %v824
  %v835 = vmul.f32 %v600, %v824
  %v836 = vmul.f32 %v605, %v824
  %v837 = vmul.f32 %v608, %v824
  %v838 = vmul.f32 %v613, %v824
  %v839 = vmul.f32 %v616, %v824
  %v840 = vmul.f32 %v621, %v824
  %v841 = vmul.f32 %v624, %v824
  %v842 = vmul.f32 %v629, %v824
  %v843 = vmul.f32 %v632, %v824
  %v844 = vmul.f32 %v637, %v824
  %v845 = vmul.f32 %v640, %v824
  %v846 = vmul.f32 %v645, %v824
  %v847 = vmul.f32 %v648, %v824
  %v848 = vmul.f32 %v653, %v824
  %v849 = vmul.f32 %v656, %v824
  %v850 = vmul.f32 %v661, %v824
  %v851 = vmul.f32 %v664, %v824
  %v852 = vmul.f32 %v669, %v824
  %v853 = vmul.f32 %v672, %v824
  %v854 = vmul.f32 %v677, %v824
  %v855 = vmul.f32 %v680, %v824
  %v856 = vmul.f32 %v685, %v824
  %v857 = vmul.f32 %v688, %v824
  %v858 = vmul.f32 %v693, %v824
  %v859 = vmul.f32 %v696, %v824
  %v860 = vmul.f32 %v701, %v824
  %v861 = vmul.f32 %v704, %v824
  %v862 = vmul.f32 %v709, %v824
  %v863 = vmul.f32 %v712, %v824
  %v864 = vmul.f32 %v717, %v824
  %v865 = vmul.f32 %v720, %v824
  %v866 = vmul.f32 %v725, %v824
  %v867 = vmul.f32 %v728, %v824
  %v868 = vmul.f32 %v733, %v824
  %v869 = vmul.f32 %v736, %v824
  %v870 = vmul.f32 %v741, %v824
  %v871 = vmul.f32 %v744, %v824
  %v872 = vmul.f32 %v749, %v824
  %v873 = vmul.f32 %v752, %v824
  %v874 = vmul.f32 %v757, %v824
  %v875 = vmul.f32 %v760, %v824
  %v876 = vmul.f32 %v765, %v824
  %v877 = vmul.f32 %v768, %v824
  %v878 = vmul.f32 %v773, %v824
  %v879 = vmul.f32 %v776, %v824
  %v880 = vmul.f32 %v781, %v824
  %v881 = vmul.f32 %v784, %v824
  %v882 = vmul.f32 %v789, %v824
  %v883 = vmul.f32 %v792, %v824
  %v884 = vmul.f32 %v797, %v824
  %v885 = vmul.f32 %v800, %v824
  %v886 = vmul.f32 %v805, %v824
  %v887 = vmul.f32 %v808, %v824
  %v888 = vmul.f32 %v813, %v824
  %v889 = vmul.f32 %v816, %v824
  %v890 = vld [vmem:[%s3] sm:$0x1]
  %v892 = vlaneseq
  %v893 = vshrl.u32 %v892, 7
  %v894 = vsub.s32 0, %v893
  %v895 = vrot.slane %v890, %v894
  %v897 = vadd.f32 %v826, %v895
  %v898 = vadd.f32 %v827, %v895
  %v899 = vadd.f32 %v828, %v895
  %v900 = vadd.f32 %v829, %v895
  %v901 = vadd.f32 %v830, %v895
  %v902 = vadd.f32 %v831, %v895
  %v903 = vadd.f32 %v832, %v895
  %v904 = vadd.f32 %v833, %v895
  %v905 = vadd.f32 %v834, %v895
  %v906 = vadd.f32 %v835, %v895
  %v907 = vadd.f32 %v836, %v895
  %v908 = vadd.f32 %v837, %v895
  %v909 = vadd.f32 %v838, %v895
  %v910 = vadd.f32 %v839, %v895
  %v911 = vadd.f32 %v840, %v895
  %v912 = vadd.f32 %v841, %v895
  %v913 = vadd.f32 %v842, %v895
  %v914 = vadd.f32 %v843, %v895
  %v915 = vadd.f32 %v844, %v895
  %v916 = vadd.f32 %v845, %v895
  %v917 = vadd.f32 %v846, %v895
  %v918 = vadd.f32 %v847, %v895
  %v919 = vadd.f32 %v848, %v895
  %v920 = vadd.f32 %v849, %v895
  %v921 = vadd.f32 %v850, %v895
  %v922 = vadd.f32 %v851, %v895
  %v923 = vadd.f32 %v852, %v895
  %v924 = vadd.f32 %v853, %v895
  %v925 = vadd.f32 %v854, %v895
  %v926 = vadd.f32 %v855, %v895
  %v927 = vadd.f32 %v856, %v895
  %v928 = vadd.f32 %v857, %v895
  %v929 = vadd.f32 %v858, %v895
  %v930 = vadd.f32 %v859, %v895
  %v931 = vadd.f32 %v860, %v895
  %v932 = vadd.f32 %v861, %v895
  %v933 = vadd.f32 %v862, %v895
  %v934 = vadd.f32 %v863, %v895
  %v935 = vadd.f32 %v864, %v895
  %v936 = vadd.f32 %v865, %v895
  %v937 = vadd.f32 %v866, %v895
  %v938 = vadd.f32 %v867, %v895
  %v939 = vadd.f32 %v868, %v895
  %v940 = vadd.f32 %v869, %v895
  %v941 = vadd.f32 %v870, %v895
  %v942 = vadd.f32 %v871, %v895
  %v943 = vadd.f32 %v872, %v895
  %v944 = vadd.f32 %v873, %v895
  %v945 = vadd.f32 %v874, %v895
  %v946 = vadd.f32 %v875, %v895
  %v947 = vadd.f32 %v876, %v895
  %v948 = vadd.f32 %v877, %v895
  %v949 = vadd.f32 %v878, %v895
  %v950 = vadd.f32 %v879, %v895
  %v951 = vadd.f32 %v880, %v895
  %v952 = vadd.f32 %v881, %v895
  %v953 = vadd.f32 %v882, %v895
  %v954 = vadd.f32 %v883, %v895
  %v955 = vadd.f32 %v884, %v895
  %v956 = vadd.f32 %v885, %v895
  %v957 = vadd.f32 %v886, %v895
  %v958 = vadd.f32 %v887, %v895
  %v959 = vadd.f32 %v888, %v895
  %v960 = vadd.f32 %v889, %v895
  %vm961 = vcmp.gt.f32.partialorder %v897, 0.0
  %vm962 = vcmp.gt.f32.partialorder %v898, 0.0
  %vm963 = vcmp.gt.f32.partialorder %v899, 0.0
  %vm964 = vcmp.gt.f32.partialorder %v900, 0.0
  %vm965 = vcmp.gt.f32.partialorder %v901, 0.0
  %vm966 = vcmp.gt.f32.partialorder %v902, 0.0
  %vm967 = vcmp.gt.f32.partialorder %v903, 0.0
  %vm968 = vcmp.gt.f32.partialorder %v904, 0.0
  %vm969 = vcmp.gt.f32.partialorder %v905, 0.0
  %vm970 = vcmp.gt.f32.partialorder %v906, 0.0
  %vm971 = vcmp.gt.f32.partialorder %v907, 0.0
  %vm972 = vcmp.gt.f32.partialorder %v908, 0.0
  %vm973 = vcmp.gt.f32.partialorder %v909, 0.0
  %vm974 = vcmp.gt.f32.partialorder %v910, 0.0
  %vm975 = vcmp.gt.f32.partialorder %v911, 0.0
  %vm976 = vcmp.gt.f32.partialorder %v912, 0.0
  %vm977 = vcmp.gt.f32.partialorder %v913, 0.0
  %vm978 = vcmp.gt.f32.partialorder %v914, 0.0
  %vm979 = vcmp.gt.f32.partialorder %v915, 0.0
  %vm980 = vcmp.gt.f32.partialorder %v916, 0.0
  %vm981 = vcmp.gt.f32.partialorder %v917, 0.0
  %vm982 = vcmp.gt.f32.partialorder %v918, 0.0
  %vm983 = vcmp.gt.f32.partialorder %v919, 0.0
  %vm984 = vcmp.gt.f32.partialorder %v920, 0.0
  %vm985 = vcmp.gt.f32.partialorder %v921, 0.0
  %vm986 = vcmp.gt.f32.partialorder %v922, 0.0
  %vm987 = vcmp.gt.f32.partialorder %v923, 0.0
  %vm988 = vcmp.gt.f32.partialorder %v924, 0.0
  %vm989 = vcmp.gt.f32.partialorder %v925, 0.0
  %vm990 = vcmp.gt.f32.partialorder %v926, 0.0
  %vm991 = vcmp.gt.f32.partialorder %v927, 0.0
  %vm992 = vcmp.gt.f32.partialorder %v928, 0.0
  %vm993 = vcmp.gt.f32.partialorder %v929, 0.0
  %vm994 = vcmp.gt.f32.partialorder %v930, 0.0
  %vm995 = vcmp.gt.f32.partialorder %v931, 0.0
  %vm996 = vcmp.gt.f32.partialorder %v932, 0.0
  %vm997 = vcmp.gt.f32.partialorder %v933, 0.0
  %vm998 = vcmp.gt.f32.partialorder %v934, 0.0
  %vm999 = vcmp.gt.f32.partialorder %v935, 0.0
  %vm1000 = vcmp.gt.f32.partialorder %v936, 0.0
  %vm1001 = vcmp.gt.f32.partialorder %v937, 0.0
  %vm1002 = vcmp.gt.f32.partialorder %v938, 0.0
  %vm1003 = vcmp.gt.f32.partialorder %v939, 0.0
  %vm1004 = vcmp.gt.f32.partialorder %v940, 0.0
  %vm1005 = vcmp.gt.f32.partialorder %v941, 0.0
  %vm1006 = vcmp.gt.f32.partialorder %v942, 0.0
  %vm1007 = vcmp.gt.f32.partialorder %v943, 0.0
  %vm1008 = vcmp.gt.f32.partialorder %v944, 0.0
  %vm1009 = vcmp.gt.f32.partialorder %v945, 0.0
  %vm1010 = vcmp.gt.f32.partialorder %v946, 0.0
  %vm1011 = vcmp.gt.f32.partialorder %v947, 0.0
  %vm1012 = vcmp.gt.f32.partialorder %v948, 0.0
  %vm1013 = vcmp.gt.f32.partialorder %v949, 0.0
  %vm1014 = vcmp.gt.f32.partialorder %v950, 0.0
  %vm1015 = vcmp.gt.f32.partialorder %v951, 0.0
  %vm1016 = vcmp.gt.f32.partialorder %v952, 0.0
  %vm1017 = vcmp.gt.f32.partialorder %v953, 0.0
  %vm1018 = vcmp.gt.f32.partialorder %v954, 0.0
  %vm1019 = vcmp.gt.f32.partialorder %v955, 0.0
  %vm1020 = vcmp.gt.f32.partialorder %v956, 0.0
  %vm1021 = vcmp.gt.f32.partialorder %v957, 0.0
  %vm1022 = vcmp.gt.f32.partialorder %v958, 0.0
  %vm1023 = vcmp.gt.f32.partialorder %v959, 0.0
  %vm1024 = vcmp.gt.f32.partialorder %v960, 0.0
  %v1025 = vmul.f32 %v897, 0.1
  %v1026 = vmul.f32 %v898, 0.1
  %v1027 = vmul.f32 %v899, 0.1
  %v1028 = vmul.f32 %v900, 0.1
  %v1029 = vmul.f32 %v901, 0.1
  %v1030 = vmul.f32 %v902, 0.1
  %v1031 = vmul.f32 %v903, 0.1
  %v1032 = vmul.f32 %v904, 0.1
  %v1033 = vmul.f32 %v905, 0.1
  %v1034 = vmul.f32 %v906, 0.1
  %v1035 = vmul.f32 %v907, 0.1
  %v1036 = vmul.f32 %v908, 0.1
  %v1037 = vmul.f32 %v909, 0.1
  %v1038 = vmul.f32 %v910, 0.1
  %v1039 = vmul.f32 %v911, 0.1
  %v1040 = vmul.f32 %v912, 0.1
  %v1041 = vmul.f32 %v913, 0.1
  %v1042 = vmul.f32 %v914, 0.1
  %v1043 = vmul.f32 %v915, 0.1
  %v1044 = vmul.f32 %v916, 0.1
  %v1045 = vmul.f32 %v917, 0.1
  %v1046 = vmul.f32 %v918, 0.1
  %v1047 = vmul.f32 %v919, 0.1
  %v1048 = vmul.f32 %v920, 0.1
  %v1049 = vmul.f32 %v921, 0.1
  %v1050 = vmul.f32 %v922, 0.1
  %v1051 = vmul.f32 %v923, 0.1
  %v1052 = vmul.f32 %v924, 0.1
  %v1053 = vmul.f32 %v925, 0.1
  %v1054 = vmul.f32 %v926, 0.1
  %v1055 = vmul.f32 %v927, 0.1
  %v1056 = vmul.f32 %v928, 0.1
  %v1057 = vmul.f32 %v929, 0.1
  %v1058 = vmul.f32 %v930, 0.1
  %v1059 = vmul.f32 %v931, 0.1
  %v1060 = vmul.f32 %v932, 0.1
  %v1061 = vmul.f32 %v933, 0.1
  %v1062 = vmul.f32 %v934, 0.1
  %v1063 = vmul.f32 %v935, 0.1
  %v1064 = vmul.f32 %v936, 0.1
  %v1065 = vmul.f32 %v937, 0.1
  %v1066 = vmul.f32 %v938, 0.1
  %v1067 = vmul.f32 %v939, 0.1
  %v1068 = vmul.f32 %v940, 0.1
  %v1069 = vmul.f32 %v941, 0.1
  %v1070 = vmul.f32 %v942, 0.1
  %v1071 = vmul.f32 %v943, 0.1
  %v1072 = vmul.f32 %v944, 0.1
  %v1073 = vmul.f32 %v945, 0.1
  %v1074 = vmul.f32 %v946, 0.1
  %v1075 = vmul.f32 %v947, 0.1
  %v1076 = vmul.f32 %v948, 0.1
  %v1077 = vmul.f32 %v949, 0.1
  %v1078 = vmul.f32 %v950, 0.1
  %v1079 = vmul.f32 %v951, 0.1
  %v1080 = vmul.f32 %v952, 0.1
  %v1081 = vmul.f32 %v953, 0.1
  %v1082 = vmul.f32 %v954, 0.1
  %v1083 = vmul.f32 %v955, 0.1
  %v1084 = vmul.f32 %v956, 0.1
  %v1085 = vmul.f32 %v957, 0.1
  %v1086 = vmul.f32 %v958, 0.1
  %v1087 = vmul.f32 %v959, 0.1
  %v1088 = vmul.f32 %v960, 0.1
  %v1089 = vsel %vm961, %v897, %v1025
  %v1090 = vsel %vm962, %v898, %v1026
  %v1091 = vsel %vm963, %v899, %v1027
  %v1092 = vsel %vm964, %v900, %v1028
  %v1093 = vsel %vm965, %v901, %v1029
  %v1094 = vsel %vm966, %v902, %v1030
  %v1095 = vsel %vm967, %v903, %v1031
  %v1096 = vsel %vm968, %v904, %v1032
  %v1097 = vsel %vm969, %v905, %v1033
  %v1098 = vsel %vm970, %v906, %v1034
  %v1099 = vsel %vm971, %v907, %v1035
  %v1100 = vsel %vm972, %v908, %v1036
  %v1101 = vsel %vm973, %v909, %v1037
  %v1102 = vsel %vm974, %v910, %v1038
  %v1103 = vsel %vm975, %v911, %v1039
  %v1104 = vsel %vm976, %v912, %v1040
  %v1105 = vsel %vm977, %v913, %v1041
  %v1106 = vsel %vm978, %v914, %v1042
  %v1107 = vsel %vm979, %v915, %v1043
  %v1108 = vsel %vm980, %v916, %v1044
  %v1109 = vsel %vm981, %v917, %v1045
  %v1110 = vsel %vm982, %v918, %v1046
  %v1111 = vsel %vm983, %v919, %v1047
  %v1112 = vsel %vm984, %v920, %v1048
  %v1113 = vsel %vm985, %v921, %v1049
  %v1114 = vsel %vm986, %v922, %v1050
  %v1115 = vsel %vm987, %v923, %v1051
  %v1116 = vsel %vm988, %v924, %v1052
  %v1117 = vsel %vm989, %v925, %v1053
  %v1118 = vsel %vm990, %v926, %v1054
  %v1119 = vsel %vm991, %v927, %v1055
  %v1120 = vsel %vm992, %v928, %v1056
  %v1121 = vsel %vm993, %v929, %v1057
  %v1122 = vsel %vm994, %v930, %v1058
  %v1123 = vsel %vm995, %v931, %v1059
  %v1124 = vsel %vm996, %v932, %v1060
  %v1125 = vsel %vm997, %v933, %v1061
  %v1126 = vsel %vm998, %v934, %v1062
  %v1127 = vsel %vm999, %v935, %v1063
  %v1128 = vsel %vm1000, %v936, %v1064
  %v1129 = vsel %vm1001, %v937, %v1065
  %v1130 = vsel %vm1002, %v938, %v1066
  %v1131 = vsel %vm1003, %v939, %v1067
  %v1132 = vsel %vm1004, %v940, %v1068
  %v1133 = vsel %vm1005, %v941, %v1069
  %v1134 = vsel %vm1006, %v942, %v1070
  %v1135 = vsel %vm1007, %v943, %v1071
  %v1136 = vsel %vm1008, %v944, %v1072
  %v1137 = vsel %vm1009, %v945, %v1073
  %v1138 = vsel %vm1010, %v946, %v1074
  %v1139 = vsel %vm1011, %v947, %v1075
  %v1140 = vsel %vm1012, %v948, %v1076
  %v1141 = vsel %vm1013, %v949, %v1077
  %v1142 = vsel %vm1014, %v950, %v1078
  %v1143 = vsel %vm1015, %v951, %v1079
  %v1144 = vsel %vm1016, %v952, %v1080
  %v1145 = vsel %vm1017, %v953, %v1081
  %v1146 = vsel %vm1018, %v954, %v1082
  %v1147 = vsel %vm1019, %v955, %v1083
  %v1148 = vsel %vm1020, %v956, %v1084
  %v1149 = vsel %vm1021, %v957, %v1085
  %v1150 = vsel %vm1022, %v958, %v1086
  %v1151 = vsel %vm1023, %v959, %v1087
  %v1152 = vsel %vm1024, %v960, %v1088
  %v1153 = vpack.c.bf16 %v1090, %v1089
  %v1154 = vpack.c.bf16 %v1092, %v1091
  %v1155 = vpack.c.bf16 %v1094, %v1093
  %v1156 = vpack.c.bf16 %v1096, %v1095
  %v1157 = vpack.c.bf16 %v1098, %v1097
  %v1158 = vpack.c.bf16 %v1100, %v1099
  %v1159 = vpack.c.bf16 %v1102, %v1101
  %v1160 = vpack.c.bf16 %v1104, %v1103
  %v1161 = vpack.c.bf16 %v1106, %v1105
  %v1162 = vpack.c.bf16 %v1108, %v1107
  %v1163 = vpack.c.bf16 %v1110, %v1109
  %v1164 = vpack.c.bf16 %v1112, %v1111
  %v1165 = vpack.c.bf16 %v1114, %v1113
  %v1166 = vpack.c.bf16 %v1116, %v1115
  %v1167 = vpack.c.bf16 %v1118, %v1117
  %v1168 = vpack.c.bf16 %v1120, %v1119
  %v1169 = vpack.c.bf16 %v1122, %v1121
  %v1170 = vpack.c.bf16 %v1124, %v1123
  %v1171 = vpack.c.bf16 %v1126, %v1125
  %v1172 = vpack.c.bf16 %v1128, %v1127
  %v1173 = vpack.c.bf16 %v1130, %v1129
  %v1174 = vpack.c.bf16 %v1132, %v1131
  %v1175 = vpack.c.bf16 %v1134, %v1133
  %v1176 = vpack.c.bf16 %v1136, %v1135
  %v1177 = vpack.c.bf16 %v1138, %v1137
  %v1178 = vpack.c.bf16 %v1140, %v1139
  %v1179 = vpack.c.bf16 %v1142, %v1141
  %v1180 = vpack.c.bf16 %v1144, %v1143
  %v1181 = vpack.c.bf16 %v1146, %v1145
  %v1182 = vpack.c.bf16 %v1148, %v1147
  %v1183 = vpack.c.bf16 %v1150, %v1149
  %v1184 = vpack.c.bf16 %v1152, %v1151
  %v1217 = vunpack.c.l.b16 %v1153
  %v1218 = vunpack.c.h.b16 %v1153
  %v1219 = vunpack.c.l.b16 %v1154
  %v1220 = vunpack.c.h.b16 %v1154
  %v1221 = vunpack.c.l.b16 %v1155
  %v1222 = vunpack.c.h.b16 %v1155
  %v1223 = vunpack.c.l.b16 %v1156
  %v1224 = vunpack.c.h.b16 %v1156
  %v1225 = vunpack.c.l.b16 %v1157
  %v1226 = vunpack.c.h.b16 %v1157
  %v1227 = vunpack.c.l.b16 %v1158
  %v1228 = vunpack.c.h.b16 %v1158
  %v1229 = vunpack.c.l.b16 %v1159
  %v1230 = vunpack.c.h.b16 %v1159
  %v1231 = vunpack.c.l.b16 %v1160
  %v1232 = vunpack.c.h.b16 %v1160
  %v1233 = vunpack.c.l.b16 %v1161
  %v1234 = vunpack.c.h.b16 %v1161
  %v1235 = vunpack.c.l.b16 %v1162
  %v1236 = vunpack.c.h.b16 %v1162
  %v1237 = vunpack.c.l.b16 %v1163
  %v1238 = vunpack.c.h.b16 %v1163
  %v1239 = vunpack.c.l.b16 %v1164
  %v1240 = vunpack.c.h.b16 %v1164
  %v1241 = vunpack.c.l.b16 %v1165
  %v1242 = vunpack.c.h.b16 %v1165
  %v1243 = vunpack.c.l.b16 %v1166
  %v1244 = vunpack.c.h.b16 %v1166
  %v1245 = vunpack.c.l.b16 %v1167
  %v1246 = vunpack.c.h.b16 %v1167
  %v1247 = vunpack.c.l.b16 %v1168
  %v1248 = vunpack.c.h.b16 %v1168
  %v1249 = vunpack.c.l.b16 %v1169
  %v1250 = vunpack.c.h.b16 %v1169
  %v1251 = vunpack.c.l.b16 %v1170
  %v1252 = vunpack.c.h.b16 %v1170
  %v1253 = vunpack.c.l.b16 %v1171
  %v1254 = vunpack.c.h.b16 %v1171
  %v1255 = vunpack.c.l.b16 %v1172
  %v1256 = vunpack.c.h.b16 %v1172
  %v1257 = vunpack.c.l.b16 %v1173
  %v1258 = vunpack.c.h.b16 %v1173
  %v1259 = vunpack.c.l.b16 %v1174
  %v1260 = vunpack.c.h.b16 %v1174
  %v1261 = vunpack.c.l.b16 %v1175
  %v1262 = vunpack.c.h.b16 %v1175
  %v1263 = vunpack.c.l.b16 %v1176
  %v1264 = vunpack.c.h.b16 %v1176
  %v1265 = vunpack.c.l.b16 %v1177
  %v1266 = vunpack.c.h.b16 %v1177
  %v1267 = vunpack.c.l.b16 %v1178
  %v1268 = vunpack.c.h.b16 %v1178
  %v1269 = vunpack.c.l.b16 %v1179
  %v1270 = vunpack.c.h.b16 %v1179
  %v1271 = vunpack.c.l.b16 %v1180
  %v1272 = vunpack.c.h.b16 %v1180
  %v1273 = vunpack.c.l.b16 %v1181
  %v1274 = vunpack.c.h.b16 %v1181
  %v1275 = vunpack.c.l.b16 %v1182
  %v1276 = vunpack.c.h.b16 %v1182
  %v1277 = vunpack.c.l.b16 %v1183
  %v1278 = vunpack.c.h.b16 %v1183
  %v1279 = vunpack.c.l.b16 %v1184
  %v1280 = vunpack.c.h.b16 %v1184
  %v1281 = vpack.c.b16 %v1217, %v1217
  %v1282 = vpack.c.b16 %v1218, %v1218
  %v1283 = vpack.c.b16 %v1219, %v1219
  %v1284 = vpack.c.b16 %v1220, %v1220
  %v1285 = vpack.c.b16 %v1221, %v1221
  %v1286 = vpack.c.b16 %v1222, %v1222
  %v1287 = vpack.c.b16 %v1223, %v1223
  %v1288 = vpack.c.b16 %v1224, %v1224
  %v1289 = vpack.c.b16 %v1225, %v1225
  %v1290 = vpack.c.b16 %v1226, %v1226
  %v1291 = vpack.c.b16 %v1227, %v1227
  %v1292 = vpack.c.b16 %v1228, %v1228
  %v1293 = vpack.c.b16 %v1229, %v1229
  %v1294 = vpack.c.b16 %v1230, %v1230
  %v1295 = vpack.c.b16 %v1231, %v1231
  %v1296 = vpack.c.b16 %v1232, %v1232
  %v1297 = vpack.c.b16 %v1233, %v1233
  %v1298 = vpack.c.b16 %v1234, %v1234
  %v1299 = vpack.c.b16 %v1235, %v1235
  %v1300 = vpack.c.b16 %v1236, %v1236
  %v1301 = vpack.c.b16 %v1237, %v1237
  %v1302 = vpack.c.b16 %v1238, %v1238
  %v1303 = vpack.c.b16 %v1239, %v1239
  %v1304 = vpack.c.b16 %v1240, %v1240
  %v1305 = vpack.c.b16 %v1241, %v1241
  %v1306 = vpack.c.b16 %v1242, %v1242
  %v1307 = vpack.c.b16 %v1243, %v1243
  %v1308 = vpack.c.b16 %v1244, %v1244
  %v1309 = vpack.c.b16 %v1245, %v1245
  %v1310 = vpack.c.b16 %v1246, %v1246
  %v1311 = vpack.c.b16 %v1247, %v1247
  %v1312 = vpack.c.b16 %v1248, %v1248
  %v1313 = vpack.c.b16 %v1249, %v1249
  %v1314 = vpack.c.b16 %v1250, %v1250
  %v1315 = vpack.c.b16 %v1251, %v1251
  %v1316 = vpack.c.b16 %v1252, %v1252
  %v1317 = vpack.c.b16 %v1253, %v1253
  %v1318 = vpack.c.b16 %v1254, %v1254
  %v1319 = vpack.c.b16 %v1255, %v1255
  %v1320 = vpack.c.b16 %v1256, %v1256
  %v1321 = vpack.c.b16 %v1257, %v1257
  %v1322 = vpack.c.b16 %v1258, %v1258
  %v1323 = vpack.c.b16 %v1259, %v1259
  %v1324 = vpack.c.b16 %v1260, %v1260
  %v1325 = vpack.c.b16 %v1261, %v1261
  %v1326 = vpack.c.b16 %v1262, %v1262
  %v1327 = vpack.c.b16 %v1263, %v1263
  %v1328 = vpack.c.b16 %v1264, %v1264
  %v1329 = vpack.c.b16 %v1265, %v1265
  %v1330 = vpack.c.b16 %v1266, %v1266
  %v1331 = vpack.c.b16 %v1267, %v1267
  %v1332 = vpack.c.b16 %v1268, %v1268
  %v1333 = vpack.c.b16 %v1269, %v1269
  %v1334 = vpack.c.b16 %v1270, %v1270
  %v1335 = vpack.c.b16 %v1271, %v1271
  %v1336 = vpack.c.b16 %v1272, %v1272
  %v1337 = vpack.c.b16 %v1273, %v1273
  %v1338 = vpack.c.b16 %v1274, %v1274
  %v1339 = vpack.c.b16 %v1275, %v1275
  %v1340 = vpack.c.b16 %v1276, %v1276
  %v1341 = vpack.c.b16 %v1277, %v1277
  %v1342 = vpack.c.b16 %v1278, %v1278
  %v1343 = vpack.c.b16 %v1279, %v1279
  %v1344 = vpack.c.b16 %v1280, %v1280
  %vm1409 = vcmask 257024
  %1410 = vst.msk [vmem:[%s4] sm:$0xf] %vm1409, %v1281
  %1411 = vst.msk [vmem:[%s4 + $0x4] sm:$0xf] %vm1409, %v1282
  %1412 = vst.msk [vmem:[%s4 + $0x8] sm:$0xf] %vm1409, %v1283
  %1413 = vst.msk [vmem:[%s4 + $0xc] sm:$0xf] %vm1409, %v1284
  %1414 = vst.msk [vmem:[%s4 + $0x10] sm:$0xf] %vm1409, %v1285
  %1415 = vst.msk [vmem:[%s4 + $0x14] sm:$0xf] %vm1409, %v1286
  %1416 = vst.msk [vmem:[%s4 + $0x18] sm:$0xf] %vm1409, %v1287
  %1417 = vst.msk [vmem:[%s4 + $0x1c] sm:$0xf] %vm1409, %v1288
  %1418 = vst.msk [vmem:[%s4 + $0x20] sm:$0xf] %vm1409, %v1289
  %1419 = vst.msk [vmem:[%s4 + $0x24] sm:$0xf] %vm1409, %v1290
  %1420 = vst.msk [vmem:[%s4 + $0x28] sm:$0xf] %vm1409, %v1291
  %1421 = vst.msk [vmem:[%s4 + $0x2c] sm:$0xf] %vm1409, %v1292
  %1422 = vst.msk [vmem:[%s4 + $0x30] sm:$0xf] %vm1409, %v1293
  %1423 = vst.msk [vmem:[%s4 + $0x34] sm:$0xf] %vm1409, %v1294
  %1424 = vst.msk [vmem:[%s4 + $0x38] sm:$0xf] %vm1409, %v1295
  %1425 = vst.msk [vmem:[%s4 + $0x3c] sm:$0xf] %vm1409, %v1296
  %1426 = vst.msk [vmem:[%s4 + $0x40] sm:$0xf] %vm1409, %v1297
  %1427 = vst.msk [vmem:[%s4 + $0x44] sm:$0xf] %vm1409, %v1298
  %1428 = vst.msk [vmem:[%s4 + $0x48] sm:$0xf] %vm1409, %v1299
  %1429 = vst.msk [vmem:[%s4 + $0x4c] sm:$0xf] %vm1409, %v1300
  %1430 = vst.msk [vmem:[%s4 + $0x50] sm:$0xf] %vm1409, %v1301
  %1431 = vst.msk [vmem:[%s4 + $0x54] sm:$0xf] %vm1409, %v1302
  %1432 = vst.msk [vmem:[%s4 + $0x58] sm:$0xf] %vm1409, %v1303
  %1433 = vst.msk [vmem:[%s4 + $0x5c] sm:$0xf] %vm1409, %v1304
  %1434 = vst.msk [vmem:[%s4 + $0x60] sm:$0xf] %vm1409, %v1305
  %1435 = vst.msk [vmem:[%s4 + $0x64] sm:$0xf] %vm1409, %v1306
  %1436 = vst.msk [vmem:[%s4 + $0x68] sm:$0xf] %vm1409, %v1307
  %1437 = vst.msk [vmem:[%s4 + $0x6c] sm:$0xf] %vm1409, %v1308
  %1438 = vst.msk [vmem:[%s4 + $0x70] sm:$0xf] %vm1409, %v1309
  %1439 = vst.msk [vmem:[%s4 + $0x74] sm:$0xf] %vm1409, %v1310
  %1440 = vst.msk [vmem:[%s4 + $0x78] sm:$0xf] %vm1409, %v1311
  %1441 = vst.msk [vmem:[%s4 + $0x7c] sm:$0xf] %vm1409, %v1312
  %1442 = vst.msk [vmem:[%s4 + $0x80] sm:$0xf] %vm1409, %v1313
  %1443 = vst.msk [vmem:[%s4 + $0x84] sm:$0xf] %vm1409, %v1314
  %1444 = vst.msk [vmem:[%s4 + $0x88] sm:$0xf] %vm1409, %v1315
  %1445 = vst.msk [vmem:[%s4 + $0x8c] sm:$0xf] %vm1409, %v1316
  %1446 = vst.msk [vmem:[%s4 + $0x90] sm:$0xf] %vm1409, %v1317
  %1447 = vst.msk [vmem:[%s4 + $0x94] sm:$0xf] %vm1409, %v1318
  %1448 = vst.msk [vmem:[%s4 + $0x98] sm:$0xf] %vm1409, %v1319
  %1449 = vst.msk [vmem:[%s4 + $0x9c] sm:$0xf] %vm1409, %v1320
  %1450 = vst.msk [vmem:[%s4 + $0xa0] sm:$0xf] %vm1409, %v1321
  %1451 = vst.msk [vmem:[%s4 + $0xa4] sm:$0xf] %vm1409, %v1322
  %1452 = vst.msk [vmem:[%s4 + $0xa8] sm:$0xf] %vm1409, %v1323
  %1453 = vst.msk [vmem:[%s4 + $0xac] sm:$0xf] %vm1409, %v1324
  %1454 = vst.msk [vmem:[%s4 + $0xb0] sm:$0xf] %vm1409, %v1325
  %1455 = vst.msk [vmem:[%s4 + $0xb4] sm:$0xf] %vm1409, %v1326
  %1456 = vst.msk [vmem:[%s4 + $0xb8] sm:$0xf] %vm1409, %v1327
  %1457 = vst.msk [vmem:[%s4 + $0xbc] sm:$0xf] %vm1409, %v1328
  %1458 = vst.msk [vmem:[%s4 + $0xc0] sm:$0xf] %vm1409, %v1329
  %1459 = vst.msk [vmem:[%s4 + $0xc4] sm:$0xf] %vm1409, %v1330
  %1460 = vst.msk [vmem:[%s4 + $0xc8] sm:$0xf] %vm1409, %v1331
  %1461 = vst.msk [vmem:[%s4 + $0xcc] sm:$0xf] %vm1409, %v1332
  %1462 = vst.msk [vmem:[%s4 + $0xd0] sm:$0xf] %vm1409, %v1333
  %1463 = vst.msk [vmem:[%s4 + $0xd4] sm:$0xf] %vm1409, %v1334
  %1464 = vst.msk [vmem:[%s4 + $0xd8] sm:$0xf] %vm1409, %v1335
  %1465 = vst.msk [vmem:[%s4 + $0xdc] sm:$0xf] %vm1409, %v1336
  %1466 = vst.msk [vmem:[%s4 + $0xe0] sm:$0xf] %vm1409, %v1337
  %1467 = vst.msk [vmem:[%s4 + $0xe4] sm:$0xf] %vm1409, %v1338
  %1468 = vst.msk [vmem:[%s4 + $0xe8] sm:$0xf] %vm1409, %v1339
  %1469 = vst.msk [vmem:[%s4 + $0xec] sm:$0xf] %vm1409, %v1340
  %1470 = vst.msk [vmem:[%s4 + $0xf0] sm:$0xf] %vm1409, %v1341
  %1471 = vst.msk [vmem:[%s4 + $0xf4] sm:$0xf] %vm1409, %v1342
  %1472 = vst.msk [vmem:[%s4 + $0xf8] sm:$0xf] %vm1409, %v1343
  %1473 = vst.msk [vmem:[%s4 + $0xfc] sm:$0xf] %vm1409, %v1344
  // Predicated region
  $region18: #{darknet_forward.26} parent=0 // pred_check
    _
  $region19: #{darknet_forward.26} parent=0 // pred_check_branch
    %1475 = sbr.rel (0) target = $region21
  $region20: #{darknet_forward.26} parent=0 // pred_region
    _
  $region21: #{darknet_forward.26} parent=0 // pred_fallthru
    _
  // Predicated region
  $region22: #{darknet_forward.26} parent=0 // pred_check
    _
  $region23: #{darknet_forward.26} parent=0 // pred_check_branch
    %1477 = sbr.rel (0) target = $region25
  $region24: #{darknet_forward.26} parent=0 // pred_region
    _
  $region25: #{darknet_forward.26} parent=0 // pred_fallthru
    _

// kernel: darknet_forward.27
$region0: #{darknet_forward.27}
  #allocation0 [shape = 'u32[]', space=smem, size = 0x4, offset = 0x4, fixed_abs, tag = 'smem constant byte address 0x4 - core index']
  #allocation1 [shape = 'u32[144,128]{1,0:T(1,128)}', space=vmem, size = 0x12000, scoped, tag = 'internal scratch']
  %s0 = inlined_call_operand.vmem [shape: bf16[512,128], index: 0, kind: input, shape index: {}]
  %s1 = inlined_call_operand.vmem [shape: bf16[128,16], index: 1, kind: input, shape index: {}]
  %s2 = inlined_call_operand.vmem [shape: f32[1,16], index: 2, kind: input, shape index: {}]
  %s3 = inlined_call_operand.vmem [shape: f32[1,16], index: 3, kind: input, shape index: {}]
  %s4 = inlined_call_operand.vmem [shape: bf16[512,16], index: 4, kind: output, shape index: {}]
  %s5 = sld [smem:[#allocation0]]
  $region26: #{darknet_forward.27} parent=0
    _
  %s7 = ssub.s32 1, %s5
  %s8 = scalar_select 0, %s7, %s5
  // Predicated region
  $region2: #{darknet_forward.27} parent=0 // pred_check
    _
  $region3: #{darknet_forward.27} parent=0 // pred_check_branch
    %10 = sbr.rel (0) target = $region5
  $region4: #{darknet_forward.27} parent=0 // pred_region
    _
  $region5: #{darknet_forward.27} parent=0 // pred_fallthru
    _
  // Predicated region
  $region6: #{darknet_forward.27} parent=0 // pred_check
    _
  $region7: #{darknet_forward.27} parent=0 // pred_check_branch
    %12 = sbr.rel (0) target = $region9
  $region8: #{darknet_forward.27} parent=0 // pred_region
    _
  $region9: #{darknet_forward.27} parent=0 // pred_fallthru
    _
  // Predicated region
  $region10: #{darknet_forward.27} parent=0 // pred_check
    _
  $region11: #{darknet_forward.27} parent=0 // pred_check_branch
    %14 = sbr.rel (0) target = $region13
  $region12: #{darknet_forward.27} parent=0 // pred_region
    _
  $region13: #{darknet_forward.27} parent=0 // pred_fallthru
    _
  // Predicated region
  $region14: #{darknet_forward.27} parent=0 // pred_check
    _
  $region15: #{darknet_forward.27} parent=0 // pred_check_branch
    %16 = sbr.rel (0) target = $region17
  $region16: #{darknet_forward.27} parent=0 // pred_region
    _
  $region17: #{darknet_forward.27} parent=0 // pred_fallthru
    _
  %v18 = vld [vmem:[%s0] sm:$0xf]
  %v19 = vld [vmem:[%s0 + $0x4] sm:$0xf]
  %v20 = vld [vmem:[%s0 + $0x8] sm:$0xf]
  %v21 = vld [vmem:[%s0 + $0xc] sm:$0xf]
  %v22 = vld [vmem:[%s0 + $0x10] sm:$0xf]
  %v23 = vld [vmem:[%s0 + $0x14] sm:$0xf]
  %v24 = vld [vmem:[%s0 + $0x18] sm:$0xf]
  %v25 = vld [vmem:[%s0 + $0x1c] sm:$0xf]
  %v26 = vld [vmem:[%s0 + $0x20] sm:$0xf]
  %v27 = vld [vmem:[%s0 + $0x24] sm:$0xf]
  %v28 = vld [vmem:[%s0 + $0x28] sm:$0xf]
  %v29 = vld [vmem:[%s0 + $0x2c] sm:$0xf]
  %v30 = vld [vmem:[%s0 + $0x30] sm:$0xf]
  %v31 = vld [vmem:[%s0 + $0x34] sm:$0xf]
  %v32 = vld [vmem:[%s0 + $0x38] sm:$0xf]
  %v33 = vld [vmem:[%s0 + $0x3c] sm:$0xf]
  %v34 = vld [vmem:[%s0 + $0x40] sm:$0xf]
  %v35 = vld [vmem:[%s0 + $0x44] sm:$0xf]
  %v36 = vld [vmem:[%s0 + $0x48] sm:$0xf]
  %v37 = vld [vmem:[%s0 + $0x4c] sm:$0xf]
  %v38 = vld [vmem:[%s0 + $0x50] sm:$0xf]
  %v39 = vld [vmem:[%s0 + $0x54] sm:$0xf]
  %v40 = vld [vmem:[%s0 + $0x58] sm:$0xf]
  %v41 = vld [vmem:[%s0 + $0x5c] sm:$0xf]
  %v42 = vld [vmem:[%s0 + $0x60] sm:$0xf]
  %v43 = vld [vmem:[%s0 + $0x64] sm:$0xf]
  %v44 = vld [vmem:[%s0 + $0x68] sm:$0xf]
  %v45 = vld [vmem:[%s0 + $0x6c] sm:$0xf]
  %v46 = vld [vmem:[%s0 + $0x70] sm:$0xf]
  %v47 = vld [vmem:[%s0 + $0x74] sm:$0xf]
  %v48 = vld [vmem:[%s0 + $0x78] sm:$0xf]
  %v49 = vld [vmem:[%s0 + $0x7c] sm:$0xf]
  %v50 = vld [vmem:[%s0 + $0x80] sm:$0xf]
  %v51 = vld [vmem:[%s0 + $0x84] sm:$0xf]
  %v52 = vld [vmem:[%s0 + $0x88] sm:$0xf]
  %v53 = vld [vmem:[%s0 + $0x8c] sm:$0xf]
  %v54 = vld [vmem:[%s0 + $0x90] sm:$0xf]
  %v55 = vld [vmem:[%s0 + $0x94] sm:$0xf]
  %v56 = vld [vmem:[%s0 + $0x98] sm:$0xf]
  %v57 = vld [vmem:[%s0 + $0x9c] sm:$0xf]
  %v58 = vld [vmem:[%s0 + $0xa0] sm:$0xf]
  %v59 = vld [vmem:[%s0 + $0xa4] sm:$0xf]
  %v60 = vld [vmem:[%s0 + $0xa8] sm:$0xf]
  %v61 = vld [vmem:[%s0 + $0xac] sm:$0xf]
  %v62 = vld [vmem:[%s0 + $0xb0] sm:$0xf]
  %v63 = vld [vmem:[%s0 + $0xb4] sm:$0xf]
  %v64 = vld [vmem:[%s0 + $0xb8] sm:$0xf]
  %v65 = vld [vmem:[%s0 + $0xbc] sm:$0xf]
  %v66 = vld [vmem:[%s0 + $0xc0] sm:$0xf]
  %v67 = vld [vmem:[%s0 + $0xc4] sm:$0xf]
  %v68 = vld [vmem:[%s0 + $0xc8] sm:$0xf]
  %v69 = vld [vmem:[%s0 + $0xcc] sm:$0xf]
  %v70 = vld [vmem:[%s0 + $0xd0] sm:$0xf]
  %v71 = vld [vmem:[%s0 + $0xd4] sm:$0xf]
  %v72 = vld [vmem:[%s0 + $0xd8] sm:$0xf]
  %v73 = vld [vmem:[%s0 + $0xdc] sm:$0xf]
  %v74 = vld [vmem:[%s0 + $0xe0] sm:$0xf]
  %v75 = vld [vmem:[%s0 + $0xe4] sm:$0xf]
  %v76 = vld [vmem:[%s0 + $0xe8] sm:$0xf]
  %v77 = vld [vmem:[%s0 + $0xec] sm:$0xf]
  %v78 = vld [vmem:[%s0 + $0xf0] sm:$0xf]
  %v79 = vld [vmem:[%s0 + $0xf4] sm:$0xf]
  %v80 = vld [vmem:[%s0 + $0xf8] sm:$0xf]
  %v81 = vld [vmem:[%s0 + $0xfc] sm:$0xf]
  %v82 = vld [vmem:[%s1] sm:$0xf]
  %v83 = vld [vmem:[%s1 + $0x4] sm:$0xf]
  %v84 = vld [vmem:[%s1 + $0x8] sm:$0xf]
  %v85 = vld [vmem:[%s1 + $0xc] sm:$0xf]
  %v86 = vld [vmem:[%s1 + $0x10] sm:$0xf]
  %v87 = vld [vmem:[%s1 + $0x14] sm:$0xf]
  %v88 = vld [vmem:[%s1 + $0x18] sm:$0xf]
  %v89 = vld [vmem:[%s1 + $0x1c] sm:$0xf]
  %v90 = vld [vmem:[%s1 + $0x20] sm:$0xf]
  %v91 = vld [vmem:[%s1 + $0x24] sm:$0xf]
  %v92 = vld [vmem:[%s1 + $0x28] sm:$0xf]
  %v93 = vld [vmem:[%s1 + $0x2c] sm:$0xf]
  %v94 = vld [vmem:[%s1 + $0x30] sm:$0xf]
  %v95 = vld [vmem:[%s1 + $0x34] sm:$0xf]
  %v96 = vld [vmem:[%s1 + $0x38] sm:$0xf]
  %v97 = vld [vmem:[%s1 + $0x3c] sm:$0xf]
  %v162 = vunpack.c.l.b16 %v18
  %v163 = vunpack.c.l.b16 %v19
  %v164 = vunpack.c.l.b16 %v20
  %v165 = vunpack.c.l.b16 %v21
  %v166 = vunpack.c.l.b16 %v22
  %v167 = vunpack.c.l.b16 %v23
  %v168 = vunpack.c.l.b16 %v24
  %v169 = vunpack.c.l.b16 %v25
  %v170 = vunpack.c.l.b16 %v26
  %v171 = vunpack.c.l.b16 %v27
  %v172 = vunpack.c.l.b16 %v28
  %v173 = vunpack.c.l.b16 %v29
  %v174 = vunpack.c.l.b16 %v30
  %v175 = vunpack.c.l.b16 %v31
  %v176 = vunpack.c.l.b16 %v32
  %v177 = vunpack.c.l.b16 %v33
  %v178 = vunpack.c.l.b16 %v34
  %v179 = vunpack.c.l.b16 %v35
  %v180 = vunpack.c.l.b16 %v36
  %v181 = vunpack.c.l.b16 %v37
  %v182 = vunpack.c.l.b16 %v38
  %v183 = vunpack.c.l.b16 %v39
  %v184 = vunpack.c.l.b16 %v40
  %v185 = vunpack.c.l.b16 %v41
  %v186 = vunpack.c.l.b16 %v42
  %v187 = vunpack.c.l.b16 %v43
  %v188 = vunpack.c.l.b16 %v44
  %v189 = vunpack.c.l.b16 %v45
  %v190 = vunpack.c.l.b16 %v46
  %v191 = vunpack.c.l.b16 %v47
  %v192 = vunpack.c.l.b16 %v48
  %v193 = vunpack.c.l.b16 %v49
  %v194 = vunpack.c.l.b16 %v50
  %v195 = vunpack.c.l.b16 %v51
  %v196 = vunpack.c.l.b16 %v52
  %v197 = vunpack.c.l.b16 %v53
  %v198 = vunpack.c.l.b16 %v54
  %v199 = vunpack.c.l.b16 %v55
  %v200 = vunpack.c.l.b16 %v56
  %v201 = vunpack.c.l.b16 %v57
  %v202 = vunpack.c.l.b16 %v58
  %v203 = vunpack.c.l.b16 %v59
  %v204 = vunpack.c.l.b16 %v60
  %v205 = vunpack.c.l.b16 %v61
  %v206 = vunpack.c.l.b16 %v62
  %v207 = vunpack.c.l.b16 %v63
  %v208 = vunpack.c.l.b16 %v64
  %v209 = vunpack.c.l.b16 %v65
  %v210 = vunpack.c.l.b16 %v66
  %v211 = vunpack.c.l.b16 %v67
  %v212 = vunpack.c.l.b16 %v68
  %v213 = vunpack.c.l.b16 %v69
  %v214 = vunpack.c.l.b16 %v70
  %v215 = vunpack.c.l.b16 %v71
  %v216 = vunpack.c.l.b16 %v72
  %v217 = vunpack.c.l.b16 %v73
  %v218 = vunpack.c.l.b16 %v74
  %v219 = vunpack.c.l.b16 %v75
  %v220 = vunpack.c.l.b16 %v76
  %v221 = vunpack.c.l.b16 %v77
  %v222 = vunpack.c.l.b16 %v78
  %v223 = vunpack.c.l.b16 %v79
  %v224 = vunpack.c.l.b16 %v80
  %v225 = vunpack.c.l.b16 %v81
  %v226 = vpack.c.b16 %v163, %v162
  %v227 = vpack.c.b16 %v165, %v164
  %v228 = vpack.c.b16 %v167, %v166
  %v229 = vpack.c.b16 %v169, %v168
  %v230 = vpack.c.b16 %v171, %v170
  %v231 = vpack.c.b16 %v173, %v172
  %v232 = vpack.c.b16 %v175, %v174
  %v233 = vpack.c.b16 %v177, %v176
  %v234 = vpack.c.b16 %v179, %v178
  %v235 = vpack.c.b16 %v181, %v180
  %v236 = vpack.c.b16 %v183, %v182
  %v237 = vpack.c.b16 %v185, %v184
  %v238 = vpack.c.b16 %v187, %v186
  %v239 = vpack.c.b16 %v189, %v188
  %v240 = vpack.c.b16 %v191, %v190
  %v241 = vpack.c.b16 %v193, %v192
  %v242 = vpack.c.b16 %v195, %v194
  %v243 = vpack.c.b16 %v197, %v196
  %v244 = vpack.c.b16 %v199, %v198
  %v245 = vpack.c.b16 %v201, %v200
  %v246 = vpack.c.b16 %v203, %v202
  %v247 = vpack.c.b16 %v205, %v204
  %v248 = vpack.c.b16 %v207, %v206
  %v249 = vpack.c.b16 %v209, %v208
  %v250 = vpack.c.b16 %v211, %v210
  %v251 = vpack.c.b16 %v213, %v212
  %v252 = vpack.c.b16 %v215, %v214
  %v253 = vpack.c.b16 %v217, %v216
  %v254 = vpack.c.b16 %v219, %v218
  %v255 = vpack.c.b16 %v221, %v220
  %v256 = vpack.c.b16 %v223, %v222
  %v257 = vpack.c.b16 %v225, %v224
  %v306 = vunpack.c.l.b16 %v82
  %v307 = vunpack.c.l.b16 %v83
  %v308 = vunpack.c.l.b16 %v84
  %v309 = vunpack.c.l.b16 %v85
  %v310 = vunpack.c.l.b16 %v86
  %v311 = vunpack.c.l.b16 %v87
  %v312 = vunpack.c.l.b16 %v88
  %v313 = vunpack.c.l.b16 %v89
  %v314 = vunpack.c.l.b16 %v90
  %v315 = vunpack.c.l.b16 %v91
  %v316 = vunpack.c.l.b16 %v92
  %v317 = vunpack.c.l.b16 %v93
  %v318 = vunpack.c.l.b16 %v94
  %v319 = vunpack.c.l.b16 %v95
  %v320 = vunpack.c.l.b16 %v96
  %v321 = vunpack.c.l.b16 %v97
  %v322 = vpack.c.b16 %v307, %v306
  %v323 = vpack.c.b16 %v309, %v308
  %v324 = vpack.c.b16 %v311, %v310
  %v325 = vpack.c.b16 %v313, %v312
  %v326 = vpack.c.b16 %v315, %v314
  %v327 = vpack.c.b16 %v317, %v316
  %v328 = vpack.c.b16 %v319, %v318
  %v329 = vpack.c.b16 %v321, %v320
  %338 = vmatprep.subr.bf16.mxu0 0
  %339 = vmatpush1.bf16.msra.mxu0 %v322
  %340 = vmatprep.subr.bf16.mxu0 0
  %341 = vmatpush1.bf16.msra.mxu0 %v323
  %342 = vmatprep.subr.bf16.mxu0 0
  %343 = vmatpush1.bf16.msra.mxu0 %v324
  %344 = vmatprep.subr.bf16.mxu0 0
  %345 = vmatpush1.bf16.msra.mxu0 %v325
  %346 = vmatprep.subr.bf16.mxu0 0
  %347 = vmatpush1.bf16.msra.mxu0 %v326
  %348 = vmatprep.subr.bf16.mxu0 0
  %349 = vmatpush1.bf16.msra.mxu0 %v327
  %350 = vmatprep.subr.bf16.mxu0 0
  %351 = vmatpush1.bf16.msra.mxu0 %v328
  %352 = vmatprep.subr.bf16.mxu0 0
  %353 = vmatpush1.bf16.msra.mxu0 %v329
  %354 = vmatprep.subr.bf16.mxu0 0
  %355 = vmatpush1.bf16.msra.mxu0 0
  %356 = vmatprep.subr.bf16.mxu0 0
  %357 = vmatpush1.bf16.msra.mxu0 0
  %358 = vmatprep.subr.bf16.mxu0 0
  %359 = vmatpush1.bf16.msra.mxu0 0
  %360 = vmatprep.subr.bf16.mxu0 0
  %361 = vmatpush1.bf16.msra.mxu0 0
  %362 = vmatprep.subr.bf16.mxu0 0
  %363 = vmatpush1.bf16.msra.mxu0 0
  %364 = vmatprep.subr.bf16.mxu0 0
  %365 = vmatpush1.bf16.msra.mxu0 0
  %366 = vmatprep.subr.bf16.mxu0 0
  %367 = vmatpush1.bf16.msra.mxu0 0
  %368 = vmatprep.subr.bf16.mxu0 0
  %369 = vmatpush1.bf16.msra.mxu0 0
  %370 = vmatprep.mubr.bf16.mxu0 0
  %371 = vmatmul.mubr.bf16.gmra.mrb[0].mxu0 %v226
  %v372 = vpop.f32.mrb[0].mxu0
  %v373 = vadd.f32 0.0, %v372
  %v374 = vpop.f32.mrb[0].mxu0
  %v375 = vpop.f32.mrb[0].mxu0
  %v376 = vadd.f32 0.0, %v375
  %v377 = vpop.f32.mrb[0].mxu0
  %378 = vmatprep.mubr.bf16.mxu0 0
  %379 = vmatmul.mubr.bf16.gmra.mrb[0].mxu0 %v227
  %v380 = vpop.f32.mrb[0].mxu0
  %v381 = vadd.f32 0.0, %v380
  %v382 = vpop.f32.mrb[0].mxu0
  %v383 = vpop.f32.mrb[0].mxu0
  %v384 = vadd.f32 0.0, %v383
  %v385 = vpop.f32.mrb[0].mxu0
  %386 = vmatprep.mubr.bf16.mxu0 0
  %387 = vmatmul.mubr.bf16.gmra.mrb[0].mxu0 %v228
  %v388 = vpop.f32.mrb[0].mxu0
  %v389 = vadd.f32 0.0, %v388
  %v390 = vpop.f32.mrb[0].mxu0
  %v391 = vpop.f32.mrb[0].mxu0
  %v392 = vadd.f32 0.0, %v391
  %v393 = vpop.f32.mrb[0].mxu0
  %394 = vmatprep.mubr.bf16.mxu0 0
  %395 = vmatmul.mubr.bf16.gmra.mrb[0].mxu0 %v229
  %v396 = vpop.f32.mrb[0].mxu0
  %v397 = vadd.f32 0.0, %v396
  %v398 = vpop.f32.mrb[0].mxu0
  %v399 = vpop.f32.mrb[0].mxu0
  %v400 = vadd.f32 0.0, %v399
  %v401 = vpop.f32.mrb[0].mxu0
  %402 = vmatprep.mubr.bf16.mxu0 0
  %403 = vmatmul.mubr.bf16.gmra.mrb[0].mxu0 %v230
  %v404 = vpop.f32.mrb[0].mxu0
  %v405 = vadd.f32 0.0, %v404
  %v406 = vpop.f32.mrb[0].mxu0
  %v407 = vpop.f32.mrb[0].mxu0
  %v408 = vadd.f32 0.0, %v407
  %v409 = vpop.f32.mrb[0].mxu0
  %410 = vmatprep.mubr.bf16.mxu0 0
  %411 = vmatmul.mubr.bf16.gmra.mrb[0].mxu0 %v231
  %v412 = vpop.f32.mrb[0].mxu0
  %v413 = vadd.f32 0.0, %v412
  %v414 = vpop.f32.mrb[0].mxu0
  %v415 = vpop.f32.mrb[0].mxu0
  %v416 = vadd.f32 0.0, %v415
  %v417 = vpop.f32.mrb[0].mxu0
  %418 = vmatprep.mubr.bf16.mxu0 0
  %419 = vmatmul.mubr.bf16.gmra.mrb[0].mxu0 %v232
  %v420 = vpop.f32.mrb[0].mxu0
  %v421 = vadd.f32 0.0, %v420
  %v422 = vpop.f32.mrb[0].mxu0
  %v423 = vpop.f32.mrb[0].mxu0
  %v424 = vadd.f32 0.0, %v423
  %v425 = vpop.f32.mrb[0].mxu0
  %426 = vmatprep.mubr.bf16.mxu0 0
  %427 = vmatmul.mubr.bf16.gmra.mrb[0].mxu0 %v233
  %v428 = vpop.f32.mrb[0].mxu0
  %v429 = vadd.f32 0.0, %v428
  %v430 = vpop.f32.mrb[0].mxu0
  %v431 = vpop.f32.mrb[0].mxu0
  %v432 = vadd.f32 0.0, %v431
  %v433 = vpop.f32.mrb[0].mxu0
  %434 = vmatprep.mubr.bf16.mxu0 0
  %435 = vmatmul.mubr.bf16.gmra.mrb[0].mxu0 %v234
  %v436 = vpop.f32.mrb[0].mxu0
  %v437 = vadd.f32 0.0, %v436
  %v438 = vpop.f32.mrb[0].mxu0
  %v439 = vpop.f32.mrb[0].mxu0
  %v440 = vadd.f32 0.0, %v439
  %v441 = vpop.f32.mrb[0].mxu0
  %442 = vmatprep.mubr.bf16.mxu0 0
  %443 = vmatmul.mubr.bf16.gmra.mrb[0].mxu0 %v235
  %v444 = vpop.f32.mrb[0].mxu0
  %v445 = vadd.f32 0.0, %v444
  %v446 = vpop.f32.mrb[0].mxu0
  %v447 = vpop.f32.mrb[0].mxu0
  %v448 = vadd.f32 0.0, %v447
  %v449 = vpop.f32.mrb[0].mxu0
  %450 = vmatprep.mubr.bf16.mxu0 0
  %451 = vmatmul.mubr.bf16.gmra.mrb[0].mxu0 %v236
  %v452 = vpop.f32.mrb[0].mxu0
  %v453 = vadd.f32 0.0, %v452
  %v454 = vpop.f32.mrb[0].mxu0
  %v455 = vpop.f32.mrb[0].mxu0
  %v456 = vadd.f32 0.0, %v455
  %v457 = vpop.f32.mrb[0].mxu0
  %458 = vmatprep.mubr.bf16.mxu0 0
  %459 = vmatmul.mubr.bf16.gmra.mrb[0].mxu0 %v237
  %v460 = vpop.f32.mrb[0].mxu0
  %v461 = vadd.f32 0.0, %v460
  %v462 = vpop.f32.mrb[0].mxu0
  %v463 = vpop.f32.mrb[0].mxu0
  %v464 = vadd.f32 0.0, %v463
  %v465 = vpop.f32.mrb[0].mxu0
  %466 = vmatprep.mubr.bf16.mxu0 0
  %467 = vmatmul.mubr.bf16.gmra.mrb[0].mxu0 %v238
  %v468 = vpop.f32.mrb[0].mxu0
  %v469 = vadd.f32 0.0, %v468
  %v470 = vpop.f32.mrb[0].mxu0
  %v471 = vpop.f32.mrb[0].mxu0
  %v472 = vadd.f32 0.0, %v471
  %v473 = vpop.f32.mrb[0].mxu0
  %474 = vmatprep.mubr.bf16.mxu0 0
  %475 = vmatmul.mubr.bf16.gmra.mrb[0].mxu0 %v239
  %v476 = vpop.f32.mrb[0].mxu0
  %v477 = vadd.f32 0.0, %v476
  %v478 = vpop.f32.mrb[0].mxu0
  %v479 = vpop.f32.mrb[0].mxu0
  %v480 = vadd.f32 0.0, %v479
  %v481 = vpop.f32.mrb[0].mxu0
  %482 = vmatprep.mubr.bf16.mxu0 0
  %483 = vmatmul.mubr.bf16.gmra.mrb[0].mxu0 %v240
  %v484 = vpop.f32.mrb[0].mxu0
  %v485 = vadd.f32 0.0, %v484
  %v486 = vpop.f32.mrb[0].mxu0
  %v487 = vpop.f32.mrb[0].mxu0
  %v488 = vadd.f32 0.0, %v487
  %v489 = vpop.f32.mrb[0].mxu0
  %490 = vmatprep.mubr.bf16.mxu0 0
  %491 = vmatmul.mubr.bf16.gmra.mrb[0].mxu0 %v241
  %v492 = vpop.f32.mrb[0].mxu0
  %v493 = vadd.f32 0.0, %v492
  %v494 = vpop.f32.mrb[0].mxu0
  %v495 = vpop.f32.mrb[0].mxu0
  %v496 = vadd.f32 0.0, %v495
  %v497 = vpop.f32.mrb[0].mxu0
  %498 = vmatprep.mubr.bf16.mxu0 0
  %499 = vmatmul.mubr.bf16.gmra.mrb[0].mxu0 %v242
  %v500 = vpop.f32.mrb[0].mxu0
  %v501 = vadd.f32 0.0, %v500
  %v502 = vpop.f32.mrb[0].mxu0
  %v503 = vpop.f32.mrb[0].mxu0
  %v504 = vadd.f32 0.0, %v503
  %v505 = vpop.f32.mrb[0].mxu0
  %506 = vmatprep.mubr.bf16.mxu0 0
  %507 = vmatmul.mubr.bf16.gmra.mrb[0].mxu0 %v243
  %v508 = vpop.f32.mrb[0].mxu0
  %v509 = vadd.f32 0.0, %v508
  %v510 = vpop.f32.mrb[0].mxu0
  %v511 = vpop.f32.mrb[0].mxu0
  %v512 = vadd.f32 0.0, %v511
  %v513 = vpop.f32.mrb[0].mxu0
  %514 = vmatprep.mubr.bf16.mxu0 0
  %515 = vmatmul.mubr.bf16.gmra.mrb[0].mxu0 %v244
  %v516 = vpop.f32.mrb[0].mxu0
  %v517 = vadd.f32 0.0, %v516
  %v518 = vpop.f32.mrb[0].mxu0
  %v519 = vpop.f32.mrb[0].mxu0
  %v520 = vadd.f32 0.0, %v519
  %v521 = vpop.f32.mrb[0].mxu0
  %522 = vmatprep.mubr.bf16.mxu0 0
  %523 = vmatmul.mubr.bf16.gmra.mrb[0].mxu0 %v245
  %v524 = vpop.f32.mrb[0].mxu0
  %v525 = vadd.f32 0.0, %v524
  %v526 = vpop.f32.mrb[0].mxu0
  %v527 = vpop.f32.mrb[0].mxu0
  %v528 = vadd.f32 0.0, %v527
  %v529 = vpop.f32.mrb[0].mxu0
  %530 = vmatprep.mubr.bf16.mxu0 0
  %531 = vmatmul.mubr.bf16.gmra.mrb[0].mxu0 %v246
  %v532 = vpop.f32.mrb[0].mxu0
  %v533 = vadd.f32 0.0, %v532
  %v534 = vpop.f32.mrb[0].mxu0
  %v535 = vpop.f32.mrb[0].mxu0
  %v536 = vadd.f32 0.0, %v535
  %v537 = vpop.f32.mrb[0].mxu0
  %538 = vmatprep.mubr.bf16.mxu0 0
  %539 = vmatmul.mubr.bf16.gmra.mrb[0].mxu0 %v247
  %v540 = vpop.f32.mrb[0].mxu0
  %v541 = vadd.f32 0.0, %v540
  %v542 = vpop.f32.mrb[0].mxu0
  %v543 = vpop.f32.mrb[0].mxu0
  %v544 = vadd.f32 0.0, %v543
  %v545 = vpop.f32.mrb[0].mxu0
  %546 = vmatprep.mubr.bf16.mxu0 0
  %547 = vmatmul.mubr.bf16.gmra.mrb[0].mxu0 %v248
  %v548 = vpop.f32.mrb[0].mxu0
  %v549 = vadd.f32 0.0, %v548
  %v550 = vpop.f32.mrb[0].mxu0
  %v551 = vpop.f32.mrb[0].mxu0
  %v552 = vadd.f32 0.0, %v551
  %v553 = vpop.f32.mrb[0].mxu0
  %554 = vmatprep.mubr.bf16.mxu0 0
  %555 = vmatmul.mubr.bf16.gmra.mrb[0].mxu0 %v249
  %v556 = vpop.f32.mrb[0].mxu0
  %v557 = vadd.f32 0.0, %v556
  %v558 = vpop.f32.mrb[0].mxu0
  %v559 = vpop.f32.mrb[0].mxu0
  %v560 = vadd.f32 0.0, %v559
  %v561 = vpop.f32.mrb[0].mxu0
  %562 = vmatprep.mubr.bf16.mxu0 0
  %563 = vmatmul.mubr.bf16.gmra.mrb[0].mxu0 %v250
  %v564 = vpop.f32.mrb[0].mxu0
  %v565 = vadd.f32 0.0, %v564
  %v566 = vpop.f32.mrb[0].mxu0
  %v567 = vpop.f32.mrb[0].mxu0
  %v568 = vadd.f32 0.0, %v567
  %v569 = vpop.f32.mrb[0].mxu0
  %570 = vmatprep.mubr.bf16.mxu0 0
  %571 = vmatmul.mubr.bf16.gmra.mrb[0].mxu0 %v251
  %v572 = vpop.f32.mrb[0].mxu0
  %v573 = vadd.f32 0.0, %v572
  %v574 = vpop.f32.mrb[0].mxu0
  %v575 = vpop.f32.mrb[0].mxu0
  %v576 = vadd.f32 0.0, %v575
  %v577 = vpop.f32.mrb[0].mxu0
  %578 = vmatprep.mubr.bf16.mxu0 0
  %579 = vmatmul.mubr.bf16.gmra.mrb[0].mxu0 %v252
  %v580 = vpop.f32.mrb[0].mxu0
  %v581 = vadd.f32 0.0, %v580
  %v582 = vpop.f32.mrb[0].mxu0
  %v583 = vpop.f32.mrb[0].mxu0
  %v584 = vadd.f32 0.0, %v583
  %v585 = vpop.f32.mrb[0].mxu0
  %586 = vmatprep.mubr.bf16.mxu0 0
  %587 = vmatmul.mubr.bf16.gmra.mrb[0].mxu0 %v253
  %v588 = vpop.f32.mrb[0].mxu0
  %v589 = vadd.f32 0.0, %v588
  %v590 = vpop.f32.mrb[0].mxu0
  %v591 = vpop.f32.mrb[0].mxu0
  %v592 = vadd.f32 0.0, %v591
  %v593 = vpop.f32.mrb[0].mxu0
  %594 = vmatprep.mubr.bf16.mxu0 0
  %595 = vmatmul.mubr.bf16.gmra.mrb[0].mxu0 %v254
  %v596 = vpop.f32.mrb[0].mxu0
  %v597 = vadd.f32 0.0, %v596
  %v598 = vpop.f32.mrb[0].mxu0
  %v599 = vpop.f32.mrb[0].mxu0
  %v600 = vadd.f32 0.0, %v599
  %v601 = vpop.f32.mrb[0].mxu0
  %602 = vmatprep.mubr.bf16.mxu0 0
  %603 = vmatmul.mubr.bf16.gmra.mrb[0].mxu0 %v255
  %v604 = vpop.f32.mrb[0].mxu0
  %v605 = vadd.f32 0.0, %v604
  %v606 = vpop.f32.mrb[0].mxu0
  %v607 = vpop.f32.mrb[0].mxu0
  %v608 = vadd.f32 0.0, %v607
  %v609 = vpop.f32.mrb[0].mxu0
  %610 = vmatprep.mubr.bf16.mxu0 0
  %611 = vmatmul.mubr.bf16.gmra.mrb[0].mxu0 %v256
  %v612 = vpop.f32.mrb[0].mxu0
  %v613 = vadd.f32 0.0, %v612
  %v614 = vpop.f32.mrb[0].mxu0
  %v615 = vpop.f32.mrb[0].mxu0
  %v616 = vadd.f32 0.0, %v615
  %v617 = vpop.f32.mrb[0].mxu0
  %618 = vmatprep.mubr.bf16.mxu0 0
  %619 = vmatmul.mubr.bf16.gmra.mrb[0].mxu0 %v257
  %v620 = vpop.f32.mrb[0].mxu0
  %v621 = vadd.f32 0.0, %v620
  %v622 = vpop.f32.mrb[0].mxu0
  %v623 = vpop.f32.mrb[0].mxu0
  %v624 = vadd.f32 0.0, %v623
  %v625 = vpop.f32.mrb[0].mxu0
  %626 = vdwg.mxu0
  %v627 = vld [vmem:[%s2] sm:$0x1]
  %v629 = vlaneseq
  %v630 = vshrl.u32 %v629, 7
  %v631 = vsub.s32 0, %v630
  %v632 = vrot.slane %v627, %v631
  %v634 = vmul.f32 %v373, %v632
  %v635 = vmul.f32 %v376, %v632
  %v636 = vmul.f32 %v381, %v632
  %v637 = vmul.f32 %v384, %v632
  %v638 = vmul.f32 %v389, %v632
  %v639 = vmul.f32 %v392, %v632
  %v640 = vmul.f32 %v397, %v632
  %v641 = vmul.f32 %v400, %v632
  %v642 = vmul.f32 %v405, %v632
  %v643 = vmul.f32 %v408, %v632
  %v644 = vmul.f32 %v413, %v632
  %v645 = vmul.f32 %v416, %v632
  %v646 = vmul.f32 %v421, %v632
  %v647 = vmul.f32 %v424, %v632
  %v648 = vmul.f32 %v429, %v632
  %v649 = vmul.f32 %v432, %v632
  %v650 = vmul.f32 %v437, %v632
  %v651 = vmul.f32 %v440, %v632
  %v652 = vmul.f32 %v445, %v632
  %v653 = vmul.f32 %v448, %v632
  %v654 = vmul.f32 %v453, %v632
  %v655 = vmul.f32 %v456, %v632
  %v656 = vmul.f32 %v461, %v632
  %v657 = vmul.f32 %v464, %v632
  %v658 = vmul.f32 %v469, %v632
  %v659 = vmul.f32 %v472, %v632
  %v660 = vmul.f32 %v477, %v632
  %v661 = vmul.f32 %v480, %v632
  %v662 = vmul.f32 %v485, %v632
  %v663 = vmul.f32 %v488, %v632
  %v664 = vmul.f32 %v493, %v632
  %v665 = vmul.f32 %v496, %v632
  %v666 = vmul.f32 %v501, %v632
  %v667 = vmul.f32 %v504, %v632
  %v668 = vmul.f32 %v509, %v632
  %v669 = vmul.f32 %v512, %v632
  %v670 = vmul.f32 %v517, %v632
  %v671 = vmul.f32 %v520, %v632
  %v672 = vmul.f32 %v525, %v632
  %v673 = vmul.f32 %v528, %v632
  %v674 = vmul.f32 %v533, %v632
  %v675 = vmul.f32 %v536, %v632
  %v676 = vmul.f32 %v541, %v632
  %v677 = vmul.f32 %v544, %v632
  %v678 = vmul.f32 %v549, %v632
  %v679 = vmul.f32 %v552, %v632
  %v680 = vmul.f32 %v557, %v632
  %v681 = vmul.f32 %v560, %v632
  %v682 = vmul.f32 %v565, %v632
  %v683 = vmul.f32 %v568, %v632
  %v684 = vmul.f32 %v573, %v632
  %v685 = vmul.f32 %v576, %v632
  %v686 = vmul.f32 %v581, %v632
  %v687 = vmul.f32 %v584, %v632
  %v688 = vmul.f32 %v589, %v632
  %v689 = vmul.f32 %v592, %v632
  %v690 = vmul.f32 %v597, %v632
  %v691 = vmul.f32 %v600, %v632
  %v692 = vmul.f32 %v605, %v632
  %v693 = vmul.f32 %v608, %v632
  %v694 = vmul.f32 %v613, %v632
  %v695 = vmul.f32 %v616, %v632
  %v696 = vmul.f32 %v621, %v632
  %v697 = vmul.f32 %v624, %v632
  %v698 = vld [vmem:[%s3] sm:$0x1]
  %v700 = vlaneseq
  %v701 = vshrl.u32 %v700, 7
  %v702 = vsub.s32 0, %v701
  %v703 = vrot.slane %v698, %v702
  %v705 = vadd.f32 %v634, %v703
  %v706 = vadd.f32 %v635, %v703
  %v707 = vadd.f32 %v636, %v703
  %v708 = vadd.f32 %v637, %v703
  %v709 = vadd.f32 %v638, %v703
  %v710 = vadd.f32 %v639, %v703
  %v711 = vadd.f32 %v640, %v703
  %v712 = vadd.f32 %v641, %v703
  %v713 = vadd.f32 %v642, %v703
  %v714 = vadd.f32 %v643, %v703
  %v715 = vadd.f32 %v644, %v703
  %v716 = vadd.f32 %v645, %v703
  %v717 = vadd.f32 %v646, %v703
  %v718 = vadd.f32 %v647, %v703
  %v719 = vadd.f32 %v648, %v703
  %v720 = vadd.f32 %v649, %v703
  %v721 = vadd.f32 %v650, %v703
  %v722 = vadd.f32 %v651, %v703
  %v723 = vadd.f32 %v652, %v703
  %v724 = vadd.f32 %v653, %v703
  %v725 = vadd.f32 %v654, %v703
  %v726 = vadd.f32 %v655, %v703
  %v727 = vadd.f32 %v656, %v703
  %v728 = vadd.f32 %v657, %v703
  %v729 = vadd.f32 %v658, %v703
  %v730 = vadd.f32 %v659, %v703
  %v731 = vadd.f32 %v660, %v703
  %v732 = vadd.f32 %v661, %v703
  %v733 = vadd.f32 %v662, %v703
  %v734 = vadd.f32 %v663, %v703
  %v735 = vadd.f32 %v664, %v703
  %v736 = vadd.f32 %v665, %v703
  %v737 = vadd.f32 %v666, %v703
  %v738 = vadd.f32 %v667, %v703
  %v739 = vadd.f32 %v668, %v703
  %v740 = vadd.f32 %v669, %v703
  %v741 = vadd.f32 %v670, %v703
  %v742 = vadd.f32 %v671, %v703
  %v743 = vadd.f32 %v672, %v703
  %v744 = vadd.f32 %v673, %v703
  %v745 = vadd.f32 %v674, %v703
  %v746 = vadd.f32 %v675, %v703
  %v747 = vadd.f32 %v676, %v703
  %v748 = vadd.f32 %v677, %v703
  %v749 = vadd.f32 %v678, %v703
  %v750 = vadd.f32 %v679, %v703
  %v751 = vadd.f32 %v680, %v703
  %v752 = vadd.f32 %v681, %v703
  %v753 = vadd.f32 %v682, %v703
  %v754 = vadd.f32 %v683, %v703
  %v755 = vadd.f32 %v684, %v703
  %v756 = vadd.f32 %v685, %v703
  %v757 = vadd.f32 %v686, %v703
  %v758 = vadd.f32 %v687, %v703
  %v759 = vadd.f32 %v688, %v703
  %v760 = vadd.f32 %v689, %v703
  %v761 = vadd.f32 %v690, %v703
  %v762 = vadd.f32 %v691, %v703
  %v763 = vadd.f32 %v692, %v703
  %v764 = vadd.f32 %v693, %v703
  %v765 = vadd.f32 %v694, %v703
  %v766 = vadd.f32 %v695, %v703
  %v767 = vadd.f32 %v696, %v703
  %v768 = vadd.f32 %v697, %v703
  %vm769 = vcmp.gt.f32.partialorder %v705, 0.0
  %vm770 = vcmp.gt.f32.partialorder %v706, 0.0
  %vm771 = vcmp.gt.f32.partialorder %v707, 0.0
  %vm772 = vcmp.gt.f32.partialorder %v708, 0.0
  %vm773 = vcmp.gt.f32.partialorder %v709, 0.0
  %vm774 = vcmp.gt.f32.partialorder %v710, 0.0
  %vm775 = vcmp.gt.f32.partialorder %v711, 0.0
  %vm776 = vcmp.gt.f32.partialorder %v712, 0.0
  %vm777 = vcmp.gt.f32.partialorder %v713, 0.0
  %vm778 = vcmp.gt.f32.partialorder %v714, 0.0
  %vm779 = vcmp.gt.f32.partialorder %v715, 0.0
  %vm780 = vcmp.gt.f32.partialorder %v716, 0.0
  %vm781 = vcmp.gt.f32.partialorder %v717, 0.0
  %vm782 = vcmp.gt.f32.partialorder %v718, 0.0
  %vm783 = vcmp.gt.f32.partialorder %v719, 0.0
  %vm784 = vcmp.gt.f32.partialorder %v720, 0.0
  %vm785 = vcmp.gt.f32.partialorder %v721, 0.0
  %vm786 = vcmp.gt.f32.partialorder %v722, 0.0
  %vm787 = vcmp.gt.f32.partialorder %v723, 0.0
  %vm788 = vcmp.gt.f32.partialorder %v724, 0.0
  %vm789 = vcmp.gt.f32.partialorder %v725, 0.0
  %vm790 = vcmp.gt.f32.partialorder %v726, 0.0
  %vm791 = vcmp.gt.f32.partialorder %v727, 0.0
  %vm792 = vcmp.gt.f32.partialorder %v728, 0.0
  %vm793 = vcmp.gt.f32.partialorder %v729, 0.0
  %vm794 = vcmp.gt.f32.partialorder %v730, 0.0
  %vm795 = vcmp.gt.f32.partialorder %v731, 0.0
  %vm796 = vcmp.gt.f32.partialorder %v732, 0.0
  %vm797 = vcmp.gt.f32.partialorder %v733, 0.0
  %vm798 = vcmp.gt.f32.partialorder %v734, 0.0
  %vm799 = vcmp.gt.f32.partialorder %v735, 0.0
  %vm800 = vcmp.gt.f32.partialorder %v736, 0.0
  %vm801 = vcmp.gt.f32.partialorder %v737, 0.0
  %vm802 = vcmp.gt.f32.partialorder %v738, 0.0
  %vm803 = vcmp.gt.f32.partialorder %v739, 0.0
  %vm804 = vcmp.gt.f32.partialorder %v740, 0.0
  %vm805 = vcmp.gt.f32.partialorder %v741, 0.0
  %vm806 = vcmp.gt.f32.partialorder %v742, 0.0
  %vm807 = vcmp.gt.f32.partialorder %v743, 0.0
  %vm808 = vcmp.gt.f32.partialorder %v744, 0.0
  %vm809 = vcmp.gt.f32.partialorder %v745, 0.0
  %vm810 = vcmp.gt.f32.partialorder %v746, 0.0
  %vm811 = vcmp.gt.f32.partialorder %v747, 0.0
  %vm812 = vcmp.gt.f32.partialorder %v748, 0.0
  %vm813 = vcmp.gt.f32.partialorder %v749, 0.0
  %vm814 = vcmp.gt.f32.partialorder %v750, 0.0
  %vm815 = vcmp.gt.f32.partialorder %v751, 0.0
  %vm816 = vcmp.gt.f32.partialorder %v752, 0.0
  %vm817 = vcmp.gt.f32.partialorder %v753, 0.0
  %vm818 = vcmp.gt.f32.partialorder %v754, 0.0
  %vm819 = vcmp.gt.f32.partialorder %v755, 0.0
  %vm820 = vcmp.gt.f32.partialorder %v756, 0.0
  %vm821 = vcmp.gt.f32.partialorder %v757, 0.0
  %vm822 = vcmp.gt.f32.partialorder %v758, 0.0
  %vm823 = vcmp.gt.f32.partialorder %v759, 0.0
  %vm824 = vcmp.gt.f32.partialorder %v760, 0.0
  %vm825 = vcmp.gt.f32.partialorder %v761, 0.0
  %vm826 = vcmp.gt.f32.partialorder %v762, 0.0
  %vm827 = vcmp.gt.f32.partialorder %v763, 0.0
  %vm828 = vcmp.gt.f32.partialorder %v764, 0.0
  %vm829 = vcmp.gt.f32.partialorder %v765, 0.0
  %vm830 = vcmp.gt.f32.partialorder %v766, 0.0
  %vm831 = vcmp.gt.f32.partialorder %v767, 0.0
  %vm832 = vcmp.gt.f32.partialorder %v768, 0.0
  %v833 = vmul.f32 %v705, 0.1
  %v834 = vmul.f32 %v706, 0.1
  %v835 = vmul.f32 %v707, 0.1
  %v836 = vmul.f32 %v708, 0.1
  %v837 = vmul.f32 %v709, 0.1
  %v838 = vmul.f32 %v710, 0.1
  %v839 = vmul.f32 %v711, 0.1
  %v840 = vmul.f32 %v712, 0.1
  %v841 = vmul.f32 %v713, 0.1
  %v842 = vmul.f32 %v714, 0.1
  %v843 = vmul.f32 %v715, 0.1
  %v844 = vmul.f32 %v716, 0.1
  %v845 = vmul.f32 %v717, 0.1
  %v846 = vmul.f32 %v718, 0.1
  %v847 = vmul.f32 %v719, 0.1
  %v848 = vmul.f32 %v720, 0.1
  %v849 = vmul.f32 %v721, 0.1
  %v850 = vmul.f32 %v722, 0.1
  %v851 = vmul.f32 %v723, 0.1
  %v852 = vmul.f32 %v724, 0.1
  %v853 = vmul.f32 %v725, 0.1
  %v854 = vmul.f32 %v726, 0.1
  %v855 = vmul.f32 %v727, 0.1
  %v856 = vmul.f32 %v728, 0.1
  %v857 = vmul.f32 %v729, 0.1
  %v858 = vmul.f32 %v730, 0.1
  %v859 = vmul.f32 %v731, 0.1
  %v860 = vmul.f32 %v732, 0.1
  %v861 = vmul.f32 %v733, 0.1
  %v862 = vmul.f32 %v734, 0.1
  %v863 = vmul.f32 %v735, 0.1
  %v864 = vmul.f32 %v736, 0.1
  %v865 = vmul.f32 %v737, 0.1
  %v866 = vmul.f32 %v738, 0.1
  %v867 = vmul.f32 %v739, 0.1
  %v868 = vmul.f32 %v740, 0.1
  %v869 = vmul.f32 %v741, 0.1
  %v870 = vmul.f32 %v742, 0.1
  %v871 = vmul.f32 %v743, 0.1
  %v872 = vmul.f32 %v744, 0.1
  %v873 = vmul.f32 %v745, 0.1
  %v874 = vmul.f32 %v746, 0.1
  %v875 = vmul.f32 %v747, 0.1
  %v876 = vmul.f32 %v748, 0.1
  %v877 = vmul.f32 %v749, 0.1
  %v878 = vmul.f32 %v750, 0.1
  %v879 = vmul.f32 %v751, 0.1
  %v880 = vmul.f32 %v752, 0.1
  %v881 = vmul.f32 %v753, 0.1
  %v882 = vmul.f32 %v754, 0.1
  %v883 = vmul.f32 %v755, 0.1
  %v884 = vmul.f32 %v756, 0.1
  %v885 = vmul.f32 %v757, 0.1
  %v886 = vmul.f32 %v758, 0.1
  %v887 = vmul.f32 %v759, 0.1
  %v888 = vmul.f32 %v760, 0.1
  %v889 = vmul.f32 %v761, 0.1
  %v890 = vmul.f32 %v762, 0.1
  %v891 = vmul.f32 %v763, 0.1
  %v892 = vmul.f32 %v764, 0.1
  %v893 = vmul.f32 %v765, 0.1
  %v894 = vmul.f32 %v766, 0.1
  %v895 = vmul.f32 %v767, 0.1
  %v896 = vmul.f32 %v768, 0.1
  %v897 = vsel %vm769, %v705, %v833
  %v898 = vsel %vm770, %v706, %v834
  %v899 = vsel %vm771, %v707, %v835
  %v900 = vsel %vm772, %v708, %v836
  %v901 = vsel %vm773, %v709, %v837
  %v902 = vsel %vm774, %v710, %v838
  %v903 = vsel %vm775, %v711, %v839
  %v904 = vsel %vm776, %v712, %v840
  %v905 = vsel %vm777, %v713, %v841
  %v906 = vsel %vm778, %v714, %v842
  %v907 = vsel %vm779, %v715, %v843
  %v908 = vsel %vm780, %v716, %v844
  %v909 = vsel %vm781, %v717, %v845
  %v910 = vsel %vm782, %v718, %v846
  %v911 = vsel %vm783, %v719, %v847
  %v912 = vsel %vm784, %v720, %v848
  %v913 = vsel %vm785, %v721, %v849
  %v914 = vsel %vm786, %v722, %v850
  %v915 = vsel %vm787, %v723, %v851
  %v916 = vsel %vm788, %v724, %v852
  %v917 = vsel %vm789, %v725, %v853
  %v918 = vsel %vm790, %v726, %v854
  %v919 = vsel %vm791, %v727, %v855
  %v920 = vsel %vm792, %v728, %v856
  %v921 = vsel %vm793, %v729, %v857
  %v922 = vsel %vm794, %v730, %v858
  %v923 = vsel %vm795, %v731, %v859
  %v924 = vsel %vm796, %v732, %v860
  %v925 = vsel %vm797, %v733, %v861
  %v926 = vsel %vm798, %v734, %v862
  %v927 = vsel %vm799, %v735, %v863
  %v928 = vsel %vm800, %v736, %v864
  %v929 = vsel %vm801, %v737, %v865
  %v930 = vsel %vm802, %v738, %v866
  %v931 = vsel %vm803, %v739, %v867
  %v932 = vsel %vm804, %v740, %v868
  %v933 = vsel %vm805, %v741, %v869
  %v934 = vsel %vm806, %v742, %v870
  %v935 = vsel %vm807, %v743, %v871
  %v936 = vsel %vm808, %v744, %v872
  %v937 = vsel %vm809, %v745, %v873
  %v938 = vsel %vm810, %v746, %v874
  %v939 = vsel %vm811, %v747, %v875
  %v940 = vsel %vm812, %v748, %v876
  %v941 = vsel %vm813, %v749, %v877
  %v942 = vsel %vm814, %v750, %v878
  %v943 = vsel %vm815, %v751, %v879
  %v944 = vsel %vm816, %v752, %v880
  %v945 = vsel %vm817, %v753, %v881
  %v946 = vsel %vm818, %v754, %v882
  %v947 = vsel %vm819, %v755, %v883
  %v948 = vsel %vm820, %v756, %v884
  %v949 = vsel %vm821, %v757, %v885
  %v950 = vsel %vm822, %v758, %v886
  %v951 = vsel %vm823, %v759, %v887
  %v952 = vsel %vm824, %v760, %v888
  %v953 = vsel %vm825, %v761, %v889
  %v954 = vsel %vm826, %v762, %v890
  %v955 = vsel %vm827, %v763, %v891
  %v956 = vsel %vm828, %v764, %v892
  %v957 = vsel %vm829, %v765, %v893
  %v958 = vsel %vm830, %v766, %v894
  %v959 = vsel %vm831, %v767, %v895
  %v960 = vsel %vm832, %v768, %v896
  %v961 = vpack.c.bf16 %v898, %v897
  %v962 = vpack.c.bf16 %v900, %v899
  %v963 = vpack.c.bf16 %v902, %v901
  %v964 = vpack.c.bf16 %v904, %v903
  %v965 = vpack.c.bf16 %v906, %v905
  %v966 = vpack.c.bf16 %v908, %v907
  %v967 = vpack.c.bf16 %v910, %v909
  %v968 = vpack.c.bf16 %v912, %v911
  %v969 = vpack.c.bf16 %v914, %v913
  %v970 = vpack.c.bf16 %v916, %v915
  %v971 = vpack.c.bf16 %v918, %v917
  %v972 = vpack.c.bf16 %v920, %v919
  %v973 = vpack.c.bf16 %v922, %v921
  %v974 = vpack.c.bf16 %v924, %v923
  %v975 = vpack.c.bf16 %v926, %v925
  %v976 = vpack.c.bf16 %v928, %v927
  %v977 = vpack.c.bf16 %v930, %v929
  %v978 = vpack.c.bf16 %v932, %v931
  %v979 = vpack.c.bf16 %v934, %v933
  %v980 = vpack.c.bf16 %v936, %v935
  %v981 = vpack.c.bf16 %v938, %v937
  %v982 = vpack.c.bf16 %v940, %v939
  %v983 = vpack.c.bf16 %v942, %v941
  %v984 = vpack.c.bf16 %v944, %v943
  %v985 = vpack.c.bf16 %v946, %v945
  %v986 = vpack.c.bf16 %v948, %v947
  %v987 = vpack.c.bf16 %v950, %v949
  %v988 = vpack.c.bf16 %v952, %v951
  %v989 = vpack.c.bf16 %v954, %v953
  %v990 = vpack.c.bf16 %v956, %v955
  %v991 = vpack.c.bf16 %v958, %v957
  %v992 = vpack.c.bf16 %v960, %v959
  %v1025 = vunpack.c.l.b16 %v961
  %v1026 = vunpack.c.h.b16 %v961
  %v1027 = vunpack.c.l.b16 %v962
  %v1028 = vunpack.c.h.b16 %v962
  %v1029 = vunpack.c.l.b16 %v963
  %v1030 = vunpack.c.h.b16 %v963
  %v1031 = vunpack.c.l.b16 %v964
  %v1032 = vunpack.c.h.b16 %v964
  %v1033 = vunpack.c.l.b16 %v965
  %v1034 = vunpack.c.h.b16 %v965
  %v1035 = vunpack.c.l.b16 %v966
  %v1036 = vunpack.c.h.b16 %v966
  %v1037 = vunpack.c.l.b16 %v967
  %v1038 = vunpack.c.h.b16 %v967
  %v1039 = vunpack.c.l.b16 %v968
  %v1040 = vunpack.c.h.b16 %v968
  %v1041 = vunpack.c.l.b16 %v969
  %v1042 = vunpack.c.h.b16 %v969
  %v1043 = vunpack.c.l.b16 %v970
  %v1044 = vunpack.c.h.b16 %v970
  %v1045 = vunpack.c.l.b16 %v971
  %v1046 = vunpack.c.h.b16 %v971
  %v1047 = vunpack.c.l.b16 %v972
  %v1048 = vunpack.c.h.b16 %v972
  %v1049 = vunpack.c.l.b16 %v973
  %v1050 = vunpack.c.h.b16 %v973
  %v1051 = vunpack.c.l.b16 %v974
  %v1052 = vunpack.c.h.b16 %v974
  %v1053 = vunpack.c.l.b16 %v975
  %v1054 = vunpack.c.h.b16 %v975
  %v1055 = vunpack.c.l.b16 %v976
  %v1056 = vunpack.c.h.b16 %v976
  %v1057 = vunpack.c.l.b16 %v977
  %v1058 = vunpack.c.h.b16 %v977
  %v1059 = vunpack.c.l.b16 %v978
  %v1060 = vunpack.c.h.b16 %v978
  %v1061 = vunpack.c.l.b16 %v979
  %v1062 = vunpack.c.h.b16 %v979
  %v1063 = vunpack.c.l.b16 %v980
  %v1064 = vunpack.c.h.b16 %v980
  %v1065 = vunpack.c.l.b16 %v981
  %v1066 = vunpack.c.h.b16 %v981
  %v1067 = vunpack.c.l.b16 %v982
  %v1068 = vunpack.c.h.b16 %v982
  %v1069 = vunpack.c.l.b16 %v983
  %v1070 = vunpack.c.h.b16 %v983
  %v1071 = vunpack.c.l.b16 %v984
  %v1072 = vunpack.c.h.b16 %v984
  %v1073 = vunpack.c.l.b16 %v985
  %v1074 = vunpack.c.h.b16 %v985
  %v1075 = vunpack.c.l.b16 %v986
  %v1076 = vunpack.c.h.b16 %v986
  %v1077 = vunpack.c.l.b16 %v987
  %v1078 = vunpack.c.h.b16 %v987
  %v1079 = vunpack.c.l.b16 %v988
  %v1080 = vunpack.c.h.b16 %v988
  %v1081 = vunpack.c.l.b16 %v989
  %v1082 = vunpack.c.h.b16 %v989
  %v1083 = vunpack.c.l.b16 %v990
  %v1084 = vunpack.c.h.b16 %v990
  %v1085 = vunpack.c.l.b16 %v991
  %v1086 = vunpack.c.h.b16 %v991
  %v1087 = vunpack.c.l.b16 %v992
  %v1088 = vunpack.c.h.b16 %v992
  %v1089 = vpack.c.b16 %v1025, %v1025
  %v1090 = vpack.c.b16 %v1026, %v1026
  %v1091 = vpack.c.b16 %v1027, %v1027
  %v1092 = vpack.c.b16 %v1028, %v1028
  %v1093 = vpack.c.b16 %v1029, %v1029
  %v1094 = vpack.c.b16 %v1030, %v1030
  %v1095 = vpack.c.b16 %v1031, %v1031
  %v1096 = vpack.c.b16 %v1032, %v1032
  %v1097 = vpack.c.b16 %v1033, %v1033
  %v1098 = vpack.c.b16 %v1034, %v1034
  %v1099 = vpack.c.b16 %v1035, %v1035
  %v1100 = vpack.c.b16 %v1036, %v1036
  %v1101 = vpack.c.b16 %v1037, %v1037
  %v1102 = vpack.c.b16 %v1038, %v1038
  %v1103 = vpack.c.b16 %v1039, %v1039
  %v1104 = vpack.c.b16 %v1040, %v1040
  %v1105 = vpack.c.b16 %v1041, %v1041
  %v1106 = vpack.c.b16 %v1042, %v1042
  %v1107 = vpack.c.b16 %v1043, %v1043
  %v1108 = vpack.c.b16 %v1044, %v1044
  %v1109 = vpack.c.b16 %v1045, %v1045
  %v1110 = vpack.c.b16 %v1046, %v1046
  %v1111 = vpack.c.b16 %v1047, %v1047
  %v1112 = vpack.c.b16 %v1048, %v1048
  %v1113 = vpack.c.b16 %v1049, %v1049
  %v1114 = vpack.c.b16 %v1050, %v1050
  %v1115 = vpack.c.b16 %v1051, %v1051
  %v1116 = vpack.c.b16 %v1052, %v1052
  %v1117 = vpack.c.b16 %v1053, %v1053
  %v1118 = vpack.c.b16 %v1054, %v1054
  %v1119 = vpack.c.b16 %v1055, %v1055
  %v1120 = vpack.c.b16 %v1056, %v1056
  %v1121 = vpack.c.b16 %v1057, %v1057
  %v1122 = vpack.c.b16 %v1058, %v1058
  %v1123 = vpack.c.b16 %v1059, %v1059
  %v1124 = vpack.c.b16 %v1060, %v1060
  %v1125 = vpack.c.b16 %v1061, %v1061
  %v1126 = vpack.c.b16 %v1062, %v1062
  %v1127 = vpack.c.b16 %v1063, %v1063
  %v1128 = vpack.c.b16 %v1064, %v1064
  %v1129 = vpack.c.b16 %v1065, %v1065
  %v1130 = vpack.c.b16 %v1066, %v1066
  %v1131 = vpack.c.b16 %v1067, %v1067
  %v1132 = vpack.c.b16 %v1068, %v1068
  %v1133 = vpack.c.b16 %v1069, %v1069
  %v1134 = vpack.c.b16 %v1070, %v1070
  %v1135 = vpack.c.b16 %v1071, %v1071
  %v1136 = vpack.c.b16 %v1072, %v1072
  %v1137 = vpack.c.b16 %v1073, %v1073
  %v1138 = vpack.c.b16 %v1074, %v1074
  %v1139 = vpack.c.b16 %v1075, %v1075
  %v1140 = vpack.c.b16 %v1076, %v1076
  %v1141 = vpack.c.b16 %v1077, %v1077
  %v1142 = vpack.c.b16 %v1078, %v1078
  %v1143 = vpack.c.b16 %v1079, %v1079
  %v1144 = vpack.c.b16 %v1080, %v1080
  %v1145 = vpack.c.b16 %v1081, %v1081
  %v1146 = vpack.c.b16 %v1082, %v1082
  %v1147 = vpack.c.b16 %v1083, %v1083
  %v1148 = vpack.c.b16 %v1084, %v1084
  %v1149 = vpack.c.b16 %v1085, %v1085
  %v1150 = vpack.c.b16 %v1086, %v1086
  %v1151 = vpack.c.b16 %v1087, %v1087
  %v1152 = vpack.c.b16 %v1088, %v1088
  %vm1217 = vcmask 125952
  %1218 = vst.msk [vmem:[%s4] sm:$0xf] %vm1217, %v1089
  %1219 = vst.msk [vmem:[%s4 + $0x4] sm:$0xf] %vm1217, %v1090
  %1220 = vst.msk [vmem:[%s4 + $0x8] sm:$0xf] %vm1217, %v1091
  %1221 = vst.msk [vmem:[%s4 + $0xc] sm:$0xf] %vm1217, %v1092
  %1222 = vst.msk [vmem:[%s4 + $0x10] sm:$0xf] %vm1217, %v1093
  %1223 = vst.msk [vmem:[%s4 + $0x14] sm:$0xf] %vm1217, %v1094
  %1224 = vst.msk [vmem:[%s4 + $0x18] sm:$0xf] %vm1217, %v1095
  %1225 = vst.msk [vmem:[%s4 + $0x1c] sm:$0xf] %vm1217, %v1096
  %1226 = vst.msk [vmem:[%s4 + $0x20] sm:$0xf] %vm1217, %v1097
  %1227 = vst.msk [vmem:[%s4 + $0x24] sm:$0xf] %vm1217, %v1098
  %1228 = vst.msk [vmem:[%s4 + $0x28] sm:$0xf] %vm1217, %v1099
  %1229 = vst.msk [vmem:[%s4 + $0x2c] sm:$0xf] %vm1217, %v1100
  %1230 = vst.msk [vmem:[%s4 + $0x30] sm:$0xf] %vm1217, %v1101
  %1231 = vst.msk [vmem:[%s4 + $0x34] sm:$0xf] %vm1217, %v1102
  %1232 = vst.msk [vmem:[%s4 + $0x38] sm:$0xf] %vm1217, %v1103
  %1233 = vst.msk [vmem:[%s4 + $0x3c] sm:$0xf] %vm1217, %v1104
  %1234 = vst.msk [vmem:[%s4 + $0x40] sm:$0xf] %vm1217, %v1105
  %1235 = vst.msk [vmem:[%s4 + $0x44] sm:$0xf] %vm1217, %v1106
  %1236 = vst.msk [vmem:[%s4 + $0x48] sm:$0xf] %vm1217, %v1107
  %1237 = vst.msk [vmem:[%s4 + $0x4c] sm:$0xf] %vm1217, %v1108
  %1238 = vst.msk [vmem:[%s4 + $0x50] sm:$0xf] %vm1217, %v1109
  %1239 = vst.msk [vmem:[%s4 + $0x54] sm:$0xf] %vm1217, %v1110
  %1240 = vst.msk [vmem:[%s4 + $0x58] sm:$0xf] %vm1217, %v1111
  %1241 = vst.msk [vmem:[%s4 + $0x5c] sm:$0xf] %vm1217, %v1112
  %1242 = vst.msk [vmem:[%s4 + $0x60] sm:$0xf] %vm1217, %v1113
  %1243 = vst.msk [vmem:[%s4 + $0x64] sm:$0xf] %vm1217, %v1114
  %1244 = vst.msk [vmem:[%s4 + $0x68] sm:$0xf] %vm1217, %v1115
  %1245 = vst.msk [vmem:[%s4 + $0x6c] sm:$0xf] %vm1217, %v1116
  %1246 = vst.msk [vmem:[%s4 + $0x70] sm:$0xf] %vm1217, %v1117
  %1247 = vst.msk [vmem:[%s4 + $0x74] sm:$0xf] %vm1217, %v1118
  %1248 = vst.msk [vmem:[%s4 + $0x78] sm:$0xf] %vm1217, %v1119
  %1249 = vst.msk [vmem:[%s4 + $0x7c] sm:$0xf] %vm1217, %v1120
  %1250 = vst.msk [vmem:[%s4 + $0x80] sm:$0xf] %vm1217, %v1121
  %1251 = vst.msk [vmem:[%s4 + $0x84] sm:$0xf] %vm1217, %v1122
  %1252 = vst.msk [vmem:[%s4 + $0x88] sm:$0xf] %vm1217, %v1123
  %1253 = vst.msk [vmem:[%s4 + $0x8c] sm:$0xf] %vm1217, %v1124
  %1254 = vst.msk [vmem:[%s4 + $0x90] sm:$0xf] %vm1217, %v1125
  %1255 = vst.msk [vmem:[%s4 + $0x94] sm:$0xf] %vm1217, %v1126
  %1256 = vst.msk [vmem:[%s4 + $0x98] sm:$0xf] %vm1217, %v1127
  %1257 = vst.msk [vmem:[%s4 + $0x9c] sm:$0xf] %vm1217, %v1128
  %1258 = vst.msk [vmem:[%s4 + $0xa0] sm:$0xf] %vm1217, %v1129
  %1259 = vst.msk [vmem:[%s4 + $0xa4] sm:$0xf] %vm1217, %v1130
  %1260 = vst.msk [vmem:[%s4 + $0xa8] sm:$0xf] %vm1217, %v1131
  %1261 = vst.msk [vmem:[%s4 + $0xac] sm:$0xf] %vm1217, %v1132
  %1262 = vst.msk [vmem:[%s4 + $0xb0] sm:$0xf] %vm1217, %v1133
  %1263 = vst.msk [vmem:[%s4 + $0xb4] sm:$0xf] %vm1217, %v1134
  %1264 = vst.msk [vmem:[%s4 + $0xb8] sm:$0xf] %vm1217, %v1135
  %1265 = vst.msk [vmem:[%s4 + $0xbc] sm:$0xf] %vm1217, %v1136
  %1266 = vst.msk [vmem:[%s4 + $0xc0] sm:$0xf] %vm1217, %v1137
  %1267 = vst.msk [vmem:[%s4 + $0xc4] sm:$0xf] %vm1217, %v1138
  %1268 = vst.msk [vmem:[%s4 + $0xc8] sm:$0xf] %vm1217, %v1139
  %1269 = vst.msk [vmem:[%s4 + $0xcc] sm:$0xf] %vm1217, %v1140
  %1270 = vst.msk [vmem:[%s4 + $0xd0] sm:$0xf] %vm1217, %v1141
  %1271 = vst.msk [vmem:[%s4 + $0xd4] sm:$0xf] %vm1217, %v1142
  %1272 = vst.msk [vmem:[%s4 + $0xd8] sm:$0xf] %vm1217, %v1143
  %1273 = vst.msk [vmem:[%s4 + $0xdc] sm:$0xf] %vm1217, %v1144
  %1274 = vst.msk [vmem:[%s4 + $0xe0] sm:$0xf] %vm1217, %v1145
  %1275 = vst.msk [vmem:[%s4 + $0xe4] sm:$0xf] %vm1217, %v1146
  %1276 = vst.msk [vmem:[%s4 + $0xe8] sm:$0xf] %vm1217, %v1147
  %1277 = vst.msk [vmem:[%s4 + $0xec] sm:$0xf] %vm1217, %v1148
  %1278 = vst.msk [vmem:[%s4 + $0xf0] sm:$0xf] %vm1217, %v1149
  %1279 = vst.msk [vmem:[%s4 + $0xf4] sm:$0xf] %vm1217, %v1150
  %1280 = vst.msk [vmem:[%s4 + $0xf8] sm:$0xf] %vm1217, %v1151
  %1281 = vst.msk [vmem:[%s4 + $0xfc] sm:$0xf] %vm1217, %v1152
  // Predicated region
  $region18: #{darknet_forward.27} parent=0 // pred_check
    _
  $region19: #{darknet_forward.27} parent=0 // pred_check_branch
    %1283 = sbr.rel (0) target = $region21
  $region20: #{darknet_forward.27} parent=0 // pred_region
    _
  $region21: #{darknet_forward.27} parent=0 // pred_fallthru
    _
  // Predicated region
  $region22: #{darknet_forward.27} parent=0 // pred_check
    _
  $region23: #{darknet_forward.27} parent=0 // pred_check_branch
    %1285 = sbr.rel (0) target = $region25
  $region24: #{darknet_forward.27} parent=0 // pred_region
    _
  $region25: #{darknet_forward.27} parent=0 // pred_fallthru
    _

// kernel: darknet_forward.30
$region0: #{darknet_forward.30}
  #allocation0 [shape = 'u32[]', space=smem, size = 0x4, offset = 0x4, fixed_abs, tag = 'smem constant byte address 0x4 - core index']
  #allocation1 [shape = 'u32[144,128]{1,0:T(1,128)}', space=vmem, size = 0x12000, scoped, tag = 'internal scratch']
  %s0 = inlined_call_operand.vmem [shape: bf16[128,128], index: 0, kind: input, shape index: {}]
  %s1 = inlined_call_operand.vmem [shape: bf16[128,32], index: 1, kind: input, shape index: {}]
  %s2 = inlined_call_operand.vmem [shape: f32[1,32], index: 2, kind: input, shape index: {}]
  %s3 = inlined_call_operand.vmem [shape: f32[1,32], index: 3, kind: input, shape index: {}]
  %s4 = inlined_call_operand.vmem [shape: bf16[128,32], index: 4, kind: output, shape index: {}]
  %s5 = sld [smem:[#allocation0]]
  $region26: #{darknet_forward.30} parent=0
    _
  %s7 = ssub.s32 1, %s5
  %s8 = scalar_select 0, %s7, %s5
  // Predicated region
  $region2: #{darknet_forward.30} parent=0 // pred_check
    _
  $region3: #{darknet_forward.30} parent=0 // pred_check_branch
    %10 = sbr.rel (0) target = $region5
  $region4: #{darknet_forward.30} parent=0 // pred_region
    _
  $region5: #{darknet_forward.30} parent=0 // pred_fallthru
    _
  // Predicated region
  $region6: #{darknet_forward.30} parent=0 // pred_check
    _
  $region7: #{darknet_forward.30} parent=0 // pred_check_branch
    %12 = sbr.rel (0) target = $region9
  $region8: #{darknet_forward.30} parent=0 // pred_region
    _
  $region9: #{darknet_forward.30} parent=0 // pred_fallthru
    _
  // Predicated region
  $region10: #{darknet_forward.30} parent=0 // pred_check
    _
  $region11: #{darknet_forward.30} parent=0 // pred_check_branch
    %14 = sbr.rel (0) target = $region13
  $region12: #{darknet_forward.30} parent=0 // pred_region
    _
  $region13: #{darknet_forward.30} parent=0 // pred_fallthru
    _
  // Predicated region
  $region14: #{darknet_forward.30} parent=0 // pred_check
    _
  $region15: #{darknet_forward.30} parent=0 // pred_check_branch
    %16 = sbr.rel (0) target = $region17
  $region16: #{darknet_forward.30} parent=0 // pred_region
    _
  $region17: #{darknet_forward.30} parent=0 // pred_fallthru
    _
  %v18 = vld [vmem:[%s0] sm:$0xf]
  %v19 = vld [vmem:[%s0 + $0x4] sm:$0xf]
  %v20 = vld [vmem:[%s0 + $0x8] sm:$0xf]
  %v21 = vld [vmem:[%s0 + $0xc] sm:$0xf]
  %v22 = vld [vmem:[%s0 + $0x10] sm:$0xf]
  %v23 = vld [vmem:[%s0 + $0x14] sm:$0xf]
  %v24 = vld [vmem:[%s0 + $0x18] sm:$0xf]
  %v25 = vld [vmem:[%s0 + $0x1c] sm:$0xf]
  %v26 = vld [vmem:[%s0 + $0x20] sm:$0xf]
  %v27 = vld [vmem:[%s0 + $0x24] sm:$0xf]
  %v28 = vld [vmem:[%s0 + $0x28] sm:$0xf]
  %v29 = vld [vmem:[%s0 + $0x2c] sm:$0xf]
  %v30 = vld [vmem:[%s0 + $0x30] sm:$0xf]
  %v31 = vld [vmem:[%s0 + $0x34] sm:$0xf]
  %v32 = vld [vmem:[%s0 + $0x38] sm:$0xf]
  %v33 = vld [vmem:[%s0 + $0x3c] sm:$0xf]
  %v34 = vld [vmem:[%s1] sm:$0xf]
  %v35 = vld [vmem:[%s1 + $0x4] sm:$0xf]
  %v36 = vld [vmem:[%s1 + $0x8] sm:$0xf]
  %v37 = vld [vmem:[%s1 + $0xc] sm:$0xf]
  %v38 = vld [vmem:[%s1 + $0x10] sm:$0xf]
  %v39 = vld [vmem:[%s1 + $0x14] sm:$0xf]
  %v40 = vld [vmem:[%s1 + $0x18] sm:$0xf]
  %v41 = vld [vmem:[%s1 + $0x1c] sm:$0xf]
  %v42 = vld [vmem:[%s1 + $0x20] sm:$0xf]
  %v43 = vld [vmem:[%s1 + $0x24] sm:$0xf]
  %v44 = vld [vmem:[%s1 + $0x28] sm:$0xf]
  %v45 = vld [vmem:[%s1 + $0x2c] sm:$0xf]
  %v46 = vld [vmem:[%s1 + $0x30] sm:$0xf]
  %v47 = vld [vmem:[%s1 + $0x34] sm:$0xf]
  %v48 = vld [vmem:[%s1 + $0x38] sm:$0xf]
  %v49 = vld [vmem:[%s1 + $0x3c] sm:$0xf]
  %v66 = vunpack.c.l.b16 %v18
  %v67 = vunpack.c.l.b16 %v19
  %v68 = vunpack.c.l.b16 %v20
  %v69 = vunpack.c.l.b16 %v21
  %v70 = vunpack.c.l.b16 %v22
  %v71 = vunpack.c.l.b16 %v23
  %v72 = vunpack.c.l.b16 %v24
  %v73 = vunpack.c.l.b16 %v25
  %v74 = vunpack.c.l.b16 %v26
  %v75 = vunpack.c.l.b16 %v27
  %v76 = vunpack.c.l.b16 %v28
  %v77 = vunpack.c.l.b16 %v29
  %v78 = vunpack.c.l.b16 %v30
  %v79 = vunpack.c.l.b16 %v31
  %v80 = vunpack.c.l.b16 %v32
  %v81 = vunpack.c.l.b16 %v33
  %v82 = vpack.c.b16 %v67, %v66
  %v83 = vpack.c.b16 %v69, %v68
  %v84 = vpack.c.b16 %v71, %v70
  %v85 = vpack.c.b16 %v73, %v72
  %v86 = vpack.c.b16 %v75, %v74
  %v87 = vpack.c.b16 %v77, %v76
  %v88 = vpack.c.b16 %v79, %v78
  %v89 = vpack.c.b16 %v81, %v80
  %v114 = vunpack.c.l.b16 %v34
  %v115 = vunpack.c.l.b16 %v35
  %v116 = vunpack.c.l.b16 %v36
  %v117 = vunpack.c.l.b16 %v37
  %v118 = vunpack.c.l.b16 %v38
  %v119 = vunpack.c.l.b16 %v39
  %v120 = vunpack.c.l.b16 %v40
  %v121 = vunpack.c.l.b16 %v41
  %v122 = vunpack.c.l.b16 %v42
  %v123 = vunpack.c.l.b16 %v43
  %v124 = vunpack.c.l.b16 %v44
  %v125 = vunpack.c.l.b16 %v45
  %v126 = vunpack.c.l.b16 %v46
  %v127 = vunpack.c.l.b16 %v47
  %v128 = vunpack.c.l.b16 %v48
  %v129 = vunpack.c.l.b16 %v49
  %v130 = vpack.c.b16 %v115, %v114
  %v131 = vpack.c.b16 %v117, %v116
  %v132 = vpack.c.b16 %v119, %v118
  %v133 = vpack.c.b16 %v121, %v120
  %v134 = vpack.c.b16 %v123, %v122
  %v135 = vpack.c.b16 %v125, %v124
  %v136 = vpack.c.b16 %v127, %v126
  %v137 = vpack.c.b16 %v129, %v128
  %146 = vmatprep.subr.bf16.mxu0 0
  %147 = vmatpush1.bf16.msra.mxu0 %v130
  %148 = vmatprep.subr.bf16.mxu0 0
  %149 = vmatpush1.bf16.msra.mxu0 %v131
  %150 = vmatprep.subr.bf16.mxu0 0
  %151 = vmatpush1.bf16.msra.mxu0 %v132
  %152 = vmatprep.subr.bf16.mxu0 0
  %153 = vmatpush1.bf16.msra.mxu0 %v133
  %154 = vmatprep.subr.bf16.mxu0 0
  %155 = vmatpush1.bf16.msra.mxu0 %v134
  %156 = vmatprep.subr.bf16.mxu0 0
  %157 = vmatpush1.bf16.msra.mxu0 %v135
  %158 = vmatprep.subr.bf16.mxu0 0
  %159 = vmatpush1.bf16.msra.mxu0 %v136
  %160 = vmatprep.subr.bf16.mxu0 0
  %161 = vmatpush1.bf16.msra.mxu0 %v137
  %162 = vmatprep.subr.bf16.mxu0 0
  %163 = vmatpush1.bf16.msra.mxu0 0
  %164 = vmatprep.subr.bf16.mxu0 0
  %165 = vmatpush1.bf16.msra.mxu0 0
  %166 = vmatprep.subr.bf16.mxu0 0
  %167 = vmatpush1.bf16.msra.mxu0 0
  %168 = vmatprep.subr.bf16.mxu0 0
  %169 = vmatpush1.bf16.msra.mxu0 0
  %170 = vmatprep.subr.bf16.mxu0 0
  %171 = vmatpush1.bf16.msra.mxu0 0
  %172 = vmatprep.subr.bf16.mxu0 0
  %173 = vmatpush1.bf16.msra.mxu0 0
  %174 = vmatprep.subr.bf16.mxu0 0
  %175 = vmatpush1.bf16.msra.mxu0 0
  %176 = vmatprep.subr.bf16.mxu0 0
  %177 = vmatpush1.bf16.msra.mxu0 0
  %178 = vmatprep.mubr.bf16.mxu0 0
  %179 = vmatmul.mubr.bf16.gmra.mrb[0].mxu0 %v82
  %v180 = vpop.f32.mrb[0].mxu0
  %v181 = vadd.f32 0.0, %v180
  %v182 = vpop.f32.mrb[0].mxu0
  %v183 = vpop.f32.mrb[0].mxu0
  %v184 = vadd.f32 0.0, %v183
  %v185 = vpop.f32.mrb[0].mxu0
  %186 = vmatprep.mubr.bf16.mxu0 0
  %187 = vmatmul.mubr.bf16.gmra.mrb[0].mxu0 %v83
  %v188 = vpop.f32.mrb[0].mxu0
  %v189 = vadd.f32 0.0, %v188
  %v190 = vpop.f32.mrb[0].mxu0
  %v191 = vpop.f32.mrb[0].mxu0
  %v192 = vadd.f32 0.0, %v191
  %v193 = vpop.f32.mrb[0].mxu0
  %194 = vmatprep.mubr.bf16.mxu0 0
  %195 = vmatmul.mubr.bf16.gmra.mrb[0].mxu0 %v84
  %v196 = vpop.f32.mrb[0].mxu0
  %v197 = vadd.f32 0.0, %v196
  %v198 = vpop.f32.mrb[0].mxu0
  %v199 = vpop.f32.mrb[0].mxu0
  %v200 = vadd.f32 0.0, %v199
  %v201 = vpop.f32.mrb[0].mxu0
  %202 = vmatprep.mubr.bf16.mxu0 0
  %203 = vmatmul.mubr.bf16.gmra.mrb[0].mxu0 %v85
  %v204 = vpop.f32.mrb[0].mxu0
  %v205 = vadd.f32 0.0, %v204
  %v206 = vpop.f32.mrb[0].mxu0
  %v207 = vpop.f32.mrb[0].mxu0
  %v208 = vadd.f32 0.0, %v207
  %v209 = vpop.f32.mrb[0].mxu0
  %210 = vmatprep.mubr.bf16.mxu0 0
  %211 = vmatmul.mubr.bf16.gmra.mrb[0].mxu0 %v86
  %v212 = vpop.f32.mrb[0].mxu0
  %v213 = vadd.f32 0.0, %v212
  %v214 = vpop.f32.mrb[0].mxu0
  %v215 = vpop.f32.mrb[0].mxu0
  %v216 = vadd.f32 0.0, %v215
  %v217 = vpop.f32.mrb[0].mxu0
  %218 = vmatprep.mubr.bf16.mxu0 0
  %219 = vmatmul.mubr.bf16.gmra.mrb[0].mxu0 %v87
  %v220 = vpop.f32.mrb[0].mxu0
  %v221 = vadd.f32 0.0, %v220
  %v222 = vpop.f32.mrb[0].mxu0
  %v223 = vpop.f32.mrb[0].mxu0
  %v224 = vadd.f32 0.0, %v223
  %v225 = vpop.f32.mrb[0].mxu0
  %226 = vmatprep.mubr.bf16.mxu0 0
  %227 = vmatmul.mubr.bf16.gmra.mrb[0].mxu0 %v88
  %v228 = vpop.f32.mrb[0].mxu0
  %v229 = vadd.f32 0.0, %v228
  %v230 = vpop.f32.mrb[0].mxu0
  %v231 = vpop.f32.mrb[0].mxu0
  %v232 = vadd.f32 0.0, %v231
  %v233 = vpop.f32.mrb[0].mxu0
  %234 = vmatprep.mubr.bf16.mxu0 0
  %235 = vmatmul.mubr.bf16.gmra.mrb[0].mxu0 %v89
  %v236 = vpop.f32.mrb[0].mxu0
  %v237 = vadd.f32 0.0, %v236
  %v238 = vpop.f32.mrb[0].mxu0
  %v239 = vpop.f32.mrb[0].mxu0
  %v240 = vadd.f32 0.0, %v239
  %v241 = vpop.f32.mrb[0].mxu0
  %242 = vdwg.mxu0
  %v243 = vld [vmem:[%s2] sm:$0x1]
  %v245 = vlaneseq
  %v246 = vshrl.u32 %v245, 7
  %v247 = vsub.s32 0, %v246
  %v248 = vrot.slane %v243, %v247
  %v250 = vmul.f32 %v181, %v248
  %v251 = vmul.f32 %v184, %v248
  %v252 = vmul.f32 %v189, %v248
  %v253 = vmul.f32 %v192, %v248
  %v254 = vmul.f32 %v197, %v248
  %v255 = vmul.f32 %v200, %v248
  %v256 = vmul.f32 %v205, %v248
  %v257 = vmul.f32 %v208, %v248
  %v258 = vmul.f32 %v213, %v248
  %v259 = vmul.f32 %v216, %v248
  %v260 = vmul.f32 %v221, %v248
  %v261 = vmul.f32 %v224, %v248
  %v262 = vmul.f32 %v229, %v248
  %v263 = vmul.f32 %v232, %v248
  %v264 = vmul.f32 %v237, %v248
  %v265 = vmul.f32 %v240, %v248
  %v266 = vld [vmem:[%s3] sm:$0x1]
  %v268 = vlaneseq
  %v269 = vshrl.u32 %v268, 7
  %v270 = vsub.s32 0, %v269
  %v271 = vrot.slane %v266, %v270
  %v273 = vadd.f32 %v250, %v271
  %v274 = vadd.f32 %v251, %v271
  %v275 = vadd.f32 %v252, %v271
  %v276 = vadd.f32 %v253, %v271
  %v277 = vadd.f32 %v254, %v271
  %v278 = vadd.f32 %v255, %v271
  %v279 = vadd.f32 %v256, %v271
  %v280 = vadd.f32 %v257, %v271
  %v281 = vadd.f32 %v258, %v271
  %v282 = vadd.f32 %v259, %v271
  %v283 = vadd.f32 %v260, %v271
  %v284 = vadd.f32 %v261, %v271
  %v285 = vadd.f32 %v262, %v271
  %v286 = vadd.f32 %v263, %v271
  %v287 = vadd.f32 %v264, %v271
  %v288 = vadd.f32 %v265, %v271
  %vm289 = vcmp.gt.f32.partialorder %v273, 0.0
  %vm290 = vcmp.gt.f32.partialorder %v274, 0.0
  %vm291 = vcmp.gt.f32.partialorder %v275, 0.0
  %vm292 = vcmp.gt.f32.partialorder %v276, 0.0
  %vm293 = vcmp.gt.f32.partialorder %v277, 0.0
  %vm294 = vcmp.gt.f32.partialorder %v278, 0.0
  %vm295 = vcmp.gt.f32.partialorder %v279, 0.0
  %vm296 = vcmp.gt.f32.partialorder %v280, 0.0
  %vm297 = vcmp.gt.f32.partialorder %v281, 0.0
  %vm298 = vcmp.gt.f32.partialorder %v282, 0.0
  %vm299 = vcmp.gt.f32.partialorder %v283, 0.0
  %vm300 = vcmp.gt.f32.partialorder %v284, 0.0
  %vm301 = vcmp.gt.f32.partialorder %v285, 0.0
  %vm302 = vcmp.gt.f32.partialorder %v286, 0.0
  %vm303 = vcmp.gt.f32.partialorder %v287, 0.0
  %vm304 = vcmp.gt.f32.partialorder %v288, 0.0
  %v305 = vmul.f32 %v273, 0.1
  %v306 = vmul.f32 %v274, 0.1
  %v307 = vmul.f32 %v275, 0.1
  %v308 = vmul.f32 %v276, 0.1
  %v309 = vmul.f32 %v277, 0.1
  %v310 = vmul.f32 %v278, 0.1
  %v311 = vmul.f32 %v279, 0.1
  %v312 = vmul.f32 %v280, 0.1
  %v313 = vmul.f32 %v281, 0.1
  %v314 = vmul.f32 %v282, 0.1
  %v315 = vmul.f32 %v283, 0.1
  %v316 = vmul.f32 %v284, 0.1
  %v317 = vmul.f32 %v285, 0.1
  %v318 = vmul.f32 %v286, 0.1
  %v319 = vmul.f32 %v287, 0.1
  %v320 = vmul.f32 %v288, 0.1
  %v321 = vsel %vm289, %v273, %v305
  %v322 = vsel %vm290, %v274, %v306
  %v323 = vsel %vm291, %v275, %v307
  %v324 = vsel %vm292, %v276, %v308
  %v325 = vsel %vm293, %v277, %v309
  %v326 = vsel %vm294, %v278, %v310
  %v327 = vsel %vm295, %v279, %v311
  %v328 = vsel %vm296, %v280, %v312
  %v329 = vsel %vm297, %v281, %v313
  %v330 = vsel %vm298, %v282, %v314
  %v331 = vsel %vm299, %v283, %v315
  %v332 = vsel %vm300, %v284, %v316
  %v333 = vsel %vm301, %v285, %v317
  %v334 = vsel %vm302, %v286, %v318
  %v335 = vsel %vm303, %v287, %v319
  %v336 = vsel %vm304, %v288, %v320
  %v337 = vpack.c.bf16 %v322, %v321
  %v338 = vpack.c.bf16 %v324, %v323
  %v339 = vpack.c.bf16 %v326, %v325
  %v340 = vpack.c.bf16 %v328, %v327
  %v341 = vpack.c.bf16 %v330, %v329
  %v342 = vpack.c.bf16 %v332, %v331
  %v343 = vpack.c.bf16 %v334, %v333
  %v344 = vpack.c.bf16 %v336, %v335
  %v353 = vunpack.c.l.b16 %v337
  %v354 = vunpack.c.h.b16 %v337
  %v355 = vunpack.c.l.b16 %v338
  %v356 = vunpack.c.h.b16 %v338
  %v357 = vunpack.c.l.b16 %v339
  %v358 = vunpack.c.h.b16 %v339
  %v359 = vunpack.c.l.b16 %v340
  %v360 = vunpack.c.h.b16 %v340
  %v361 = vunpack.c.l.b16 %v341
  %v362 = vunpack.c.h.b16 %v341
  %v363 = vunpack.c.l.b16 %v342
  %v364 = vunpack.c.h.b16 %v342
  %v365 = vunpack.c.l.b16 %v343
  %v366 = vunpack.c.h.b16 %v343
  %v367 = vunpack.c.l.b16 %v344
  %v368 = vunpack.c.h.b16 %v344
  %v369 = vpack.c.b16 %v353, %v353
  %v370 = vpack.c.b16 %v354, %v354
  %v371 = vpack.c.b16 %v355, %v355
  %v372 = vpack.c.b16 %v356, %v356
  %v373 = vpack.c.b16 %v357, %v357
  %v374 = vpack.c.b16 %v358, %v358
  %v375 = vpack.c.b16 %v359, %v359
  %v376 = vpack.c.b16 %v360, %v360
  %v377 = vpack.c.b16 %v361, %v361
  %v378 = vpack.c.b16 %v362, %v362
  %v379 = vpack.c.b16 %v363, %v363
  %v380 = vpack.c.b16 %v364, %v364
  %v381 = vpack.c.b16 %v365, %v365
  %v382 = vpack.c.b16 %v366, %v366
  %v383 = vpack.c.b16 %v367, %v367
  %v384 = vpack.c.b16 %v368, %v368
  %vm401 = vcmask 257024
  %402 = vst.msk [vmem:[%s4] sm:$0xf] %vm401, %v369
  %403 = vst.msk [vmem:[%s4 + $0x4] sm:$0xf] %vm401, %v370
  %404 = vst.msk [vmem:[%s4 + $0x8] sm:$0xf] %vm401, %v371
  %405 = vst.msk [vmem:[%s4 + $0xc] sm:$0xf] %vm401, %v372
  %406 = vst.msk [vmem:[%s4 + $0x10] sm:$0xf] %vm401, %v373
  %407 = vst.msk [vmem:[%s4 + $0x14] sm:$0xf] %vm401, %v374
  %408 = vst.msk [vmem:[%s4 + $0x18] sm:$0xf] %vm401, %v375
  %409 = vst.msk [vmem:[%s4 + $0x1c] sm:$0xf] %vm401, %v376
  %410 = vst.msk [vmem:[%s4 + $0x20] sm:$0xf] %vm401, %v377
  %411 = vst.msk [vmem:[%s4 + $0x24] sm:$0xf] %vm401, %v378
  %412 = vst.msk [vmem:[%s4 + $0x28] sm:$0xf] %vm401, %v379
  %413 = vst.msk [vmem:[%s4 + $0x2c] sm:$0xf] %vm401, %v380
  %414 = vst.msk [vmem:[%s4 + $0x30] sm:$0xf] %vm401, %v381
  %415 = vst.msk [vmem:[%s4 + $0x34] sm:$0xf] %vm401, %v382
  %416 = vst.msk [vmem:[%s4 + $0x38] sm:$0xf] %vm401, %v383
  %417 = vst.msk [vmem:[%s4 + $0x3c] sm:$0xf] %vm401, %v384
  // Predicated region
  $region18: #{darknet_forward.30} parent=0 // pred_check
    _
  $region19: #{darknet_forward.30} parent=0 // pred_check_branch
    %419 = sbr.rel (0) target = $region21
  $region20: #{darknet_forward.30} parent=0 // pred_region
    _
  $region21: #{darknet_forward.30} parent=0 // pred_fallthru
    _
  // Predicated region
  $region22: #{darknet_forward.30} parent=0 // pred_check
    _
  $region23: #{darknet_forward.30} parent=0 // pred_check_branch
    %421 = sbr.rel (0) target = $region25
  $region24: #{darknet_forward.30} parent=0 // pred_region
    _
  $region25: #{darknet_forward.30} parent=0 // pred_fallthru
    _

// kernel: darknet_forward.29
$region0: #{darknet_forward.29}
  #allocation0 [shape = 'u32[]', space=smem, size = 0x4, offset = 0x4, fixed_abs, tag = 'smem constant byte address 0x4 - core index']
  #allocation1 [shape = 'u32[144,128]{1,0:T(1,128)}', space=vmem, size = 0x12000, scoped, tag = 'internal scratch']
  %s0 = inlined_call_operand.vmem [shape: bf16[128,384], index: 0, kind: input, shape index: {}]
  %s1 = inlined_call_operand.vmem [shape: bf16[384,64], index: 1, kind: input, shape index: {}]
  %s2 = inlined_call_operand.vmem [shape: f32[1,64], index: 2, kind: input, shape index: {}]
  %s3 = inlined_call_operand.vmem [shape: f32[1,64], index: 3, kind: input, shape index: {}]
  %s4 = inlined_call_operand.vmem [shape: bf16[128,64], index: 4, kind: output, shape index: {}]
  %s5 = sld [smem:[#allocation0]]
  $region26: #{darknet_forward.29} parent=0
    _
  %s7 = ssub.s32 1, %s5
  %s8 = scalar_select 0, %s7, %s5
  // Predicated region
  $region2: #{darknet_forward.29} parent=0 // pred_check
    _
  $region3: #{darknet_forward.29} parent=0 // pred_check_branch
    %10 = sbr.rel (0) target = $region5
  $region4: #{darknet_forward.29} parent=0 // pred_region
    _
  $region5: #{darknet_forward.29} parent=0 // pred_fallthru
    _
  // Predicated region
  $region6: #{darknet_forward.29} parent=0 // pred_check
    _
  $region7: #{darknet_forward.29} parent=0 // pred_check_branch
    %12 = sbr.rel (0) target = $region9
  $region8: #{darknet_forward.29} parent=0 // pred_region
    _
  $region9: #{darknet_forward.29} parent=0 // pred_fallthru
    _
  // Predicated region
  $region10: #{darknet_forward.29} parent=0 // pred_check
    _
  $region11: #{darknet_forward.29} parent=0 // pred_check_branch
    %14 = sbr.rel (0) target = $region13
  $region12: #{darknet_forward.29} parent=0 // pred_region
    _
  $region13: #{darknet_forward.29} parent=0 // pred_fallthru
    _
  // Predicated region
  $region14: #{darknet_forward.29} parent=0 // pred_check
    _
  $region15: #{darknet_forward.29} parent=0 // pred_check_branch
    %16 = sbr.rel (0) target = $region17
  $region16: #{darknet_forward.29} parent=0 // pred_region
    _
  $region17: #{darknet_forward.29} parent=0 // pred_fallthru
    _
  %v18 = vld [vmem:[%s0] sm:$0xff]
  %v19 = vld [vmem:[%s0 + $0x8] sm:$0xf]
  %v20 = vld [vmem:[%s0 + $0xc] sm:$0xff]
  %v21 = vld [vmem:[%s0 + $0x14] sm:$0xf]
  %v22 = vld [vmem:[%s0 + $0x18] sm:$0xff]
  %v23 = vld [vmem:[%s0 + $0x20] sm:$0xf]
  %v24 = vld [vmem:[%s0 + $0x24] sm:$0xff]
  %v25 = vld [vmem:[%s0 + $0x2c] sm:$0xf]
  %v26 = vld [vmem:[%s0 + $0x30] sm:$0xff]
  %v27 = vld [vmem:[%s0 + $0x38] sm:$0xf]
  %v28 = vld [vmem:[%s0 + $0x3c] sm:$0xff]
  %v29 = vld [vmem:[%s0 + $0x44] sm:$0xf]
  %v30 = vld [vmem:[%s0 + $0x48] sm:$0xff]
  %v31 = vld [vmem:[%s0 + $0x50] sm:$0xf]
  %v32 = vld [vmem:[%s0 + $0x54] sm:$0xff]
  %v33 = vld [vmem:[%s0 + $0x5c] sm:$0xf]
  %v34 = vld [vmem:[%s0 + $0x60] sm:$0xff]
  %v35 = vld [vmem:[%s0 + $0x68] sm:$0xf]
  %v36 = vld [vmem:[%s0 + $0x6c] sm:$0xff]
  %v37 = vld [vmem:[%s0 + $0x74] sm:$0xf]
  %v38 = vld [vmem:[%s0 + $0x78] sm:$0xff]
  %v39 = vld [vmem:[%s0 + $0x80] sm:$0xf]
  %v40 = vld [vmem:[%s0 + $0x84] sm:$0xff]
  %v41 = vld [vmem:[%s0 + $0x8c] sm:$0xf]
  %v42 = vld [vmem:[%s0 + $0x90] sm:$0xff]
  %v43 = vld [vmem:[%s0 + $0x98] sm:$0xf]
  %v44 = vld [vmem:[%s0 + $0x9c] sm:$0xff]
  %v45 = vld [vmem:[%s0 + $0xa4] sm:$0xf]
  %v46 = vld [vmem:[%s0 + $0xa8] sm:$0xff]
  %v47 = vld [vmem:[%s0 + $0xb0] sm:$0xf]
  %v48 = vld [vmem:[%s0 + $0xb4] sm:$0xff]
  %v49 = vld [vmem:[%s0 + $0xbc] sm:$0xf]
  %v50 = vld [vmem:[%s1] sm:$0xf]
  %v51 = vld [vmem:[%s1 + $0x4] sm:$0xf]
  %v52 = vld [vmem:[%s1 + $0x8] sm:$0xf]
  %v53 = vld [vmem:[%s1 + $0xc] sm:$0xf]
  %v54 = vld [vmem:[%s1 + $0x10] sm:$0xf]
  %v55 = vld [vmem:[%s1 + $0x14] sm:$0xf]
  %v56 = vld [vmem:[%s1 + $0x18] sm:$0xf]
  %v57 = vld [vmem:[%s1 + $0x1c] sm:$0xf]
  %v58 = vld [vmem:[%s1 + $0x20] sm:$0xf]
  %v59 = vld [vmem:[%s1 + $0x24] sm:$0xf]
  %v60 = vld [vmem:[%s1 + $0x28] sm:$0xf]
  %v61 = vld [vmem:[%s1 + $0x2c] sm:$0xf]
  %v62 = vld [vmem:[%s1 + $0x30] sm:$0xf]
  %v63 = vld [vmem:[%s1 + $0x34] sm:$0xf]
  %v64 = vld [vmem:[%s1 + $0x38] sm:$0xf]
  %v65 = vld [vmem:[%s1 + $0x3c] sm:$0xf]
  %v66 = vld [vmem:[%s1 + $0x40] sm:$0xf]
  %v67 = vld [vmem:[%s1 + $0x44] sm:$0xf]
  %v68 = vld [vmem:[%s1 + $0x48] sm:$0xf]
  %v69 = vld [vmem:[%s1 + $0x4c] sm:$0xf]
  %v70 = vld [vmem:[%s1 + $0x50] sm:$0xf]
  %v71 = vld [vmem:[%s1 + $0x54] sm:$0xf]
  %v72 = vld [vmem:[%s1 + $0x58] sm:$0xf]
  %v73 = vld [vmem:[%s1 + $0x5c] sm:$0xf]
  %v74 = vld [vmem:[%s1 + $0x60] sm:$0xf]
  %v75 = vld [vmem:[%s1 + $0x64] sm:$0xf]
  %v76 = vld [vmem:[%s1 + $0x68] sm:$0xf]
  %v77 = vld [vmem:[%s1 + $0x6c] sm:$0xf]
  %v78 = vld [vmem:[%s1 + $0x70] sm:$0xf]
  %v79 = vld [vmem:[%s1 + $0x74] sm:$0xf]
  %v80 = vld [vmem:[%s1 + $0x78] sm:$0xf]
  %v81 = vld [vmem:[%s1 + $0x7c] sm:$0xf]
  %v82 = vld [vmem:[%s1 + $0x80] sm:$0xf]
  %v83 = vld [vmem:[%s1 + $0x84] sm:$0xf]
  %v84 = vld [vmem:[%s1 + $0x88] sm:$0xf]
  %v85 = vld [vmem:[%s1 + $0x8c] sm:$0xf]
  %v86 = vld [vmem:[%s1 + $0x90] sm:$0xf]
  %v87 = vld [vmem:[%s1 + $0x94] sm:$0xf]
  %v88 = vld [vmem:[%s1 + $0x98] sm:$0xf]
  %v89 = vld [vmem:[%s1 + $0x9c] sm:$0xf]
  %v90 = vld [vmem:[%s1 + $0xa0] sm:$0xf]
  %v91 = vld [vmem:[%s1 + $0xa4] sm:$0xf]
  %v92 = vld [vmem:[%s1 + $0xa8] sm:$0xf]
  %v93 = vld [vmem:[%s1 + $0xac] sm:$0xf]
  %v94 = vld [vmem:[%s1 + $0xb0] sm:$0xf]
  %v95 = vld [vmem:[%s1 + $0xb4] sm:$0xf]
  %v96 = vld [vmem:[%s1 + $0xb8] sm:$0xf]
  %v97 = vld [vmem:[%s1 + $0xbc] sm:$0xf]
  %v130 = vunpack.c.l.b16 %v18
  %v131 = vunpack.c.h.b16 %v18
  %v132 = vunpack.c.l.b16 %v19
  %v133 = vunpack.c.l.b16 %v20
  %v134 = vunpack.c.h.b16 %v20
  %v135 = vunpack.c.l.b16 %v21
  %v136 = vunpack.c.l.b16 %v22
  %v137 = vunpack.c.h.b16 %v22
  %v138 = vunpack.c.l.b16 %v23
  %v139 = vunpack.c.l.b16 %v24
  %v140 = vunpack.c.h.b16 %v24
  %v141 = vunpack.c.l.b16 %v25
  %v142 = vunpack.c.l.b16 %v26
  %v143 = vunpack.c.h.b16 %v26
  %v144 = vunpack.c.l.b16 %v27
  %v145 = vunpack.c.l.b16 %v28
  %v146 = vunpack.c.h.b16 %v28
  %v147 = vunpack.c.l.b16 %v29
  %v148 = vunpack.c.l.b16 %v30
  %v149 = vunpack.c.h.b16 %v30
  %v150 = vunpack.c.l.b16 %v31
  %v151 = vunpack.c.l.b16 %v32
  %v152 = vunpack.c.h.b16 %v32
  %v153 = vunpack.c.l.b16 %v33
  %v154 = vunpack.c.l.b16 %v34
  %v155 = vunpack.c.h.b16 %v34
  %v156 = vunpack.c.l.b16 %v35
  %v157 = vunpack.c.l.b16 %v36
  %v158 = vunpack.c.h.b16 %v36
  %v159 = vunpack.c.l.b16 %v37
  %v160 = vunpack.c.l.b16 %v38
  %v161 = vunpack.c.h.b16 %v38
  %v162 = vunpack.c.l.b16 %v39
  %v163 = vunpack.c.l.b16 %v40
  %v164 = vunpack.c.h.b16 %v40
  %v165 = vunpack.c.l.b16 %v41
  %v166 = vunpack.c.l.b16 %v42
  %v167 = vunpack.c.h.b16 %v42
  %v168 = vunpack.c.l.b16 %v43
  %v169 = vunpack.c.l.b16 %v44
  %v170 = vunpack.c.h.b16 %v44
  %v171 = vunpack.c.l.b16 %v45
  %v172 = vunpack.c.l.b16 %v46
  %v173 = vunpack.c.h.b16 %v46
  %v174 = vunpack.c.l.b16 %v47
  %v175 = vunpack.c.l.b16 %v48
  %v176 = vunpack.c.h.b16 %v48
  %v177 = vunpack.c.l.b16 %v49
  %v178 = vpack.c.b16 %v133, %v130
  %v179 = vpack.c.b16 %v134, %v131
  %v180 = vpack.c.b16 %v135, %v132
  %v181 = vpack.c.b16 %v139, %v136
  %v182 = vpack.c.b16 %v140, %v137
  %v183 = vpack.c.b16 %v141, %v138
  %v184 = vpack.c.b16 %v145, %v142
  %v185 = vpack.c.b16 %v146, %v143
  %v186 = vpack.c.b16 %v147, %v144
  %v187 = vpack.c.b16 %v151, %v148
  %v188 = vpack.c.b16 %v152, %v149
  %v189 = vpack.c.b16 %v153, %v150
  %v190 = vpack.c.b16 %v157, %v154
  %v191 = vpack.c.b16 %v158, %v155
  %v192 = vpack.c.b16 %v159, %v156
  %v193 = vpack.c.b16 %v163, %v160
  %v194 = vpack.c.b16 %v164, %v161
  %v195 = vpack.c.b16 %v165, %v162
  %v196 = vpack.c.b16 %v169, %v166
  %v197 = vpack.c.b16 %v170, %v167
  %v198 = vpack.c.b16 %v171, %v168
  %v199 = vpack.c.b16 %v175, %v172
  %v200 = vpack.c.b16 %v176, %v173
  %v201 = vpack.c.b16 %v177, %v174
  %v274 = vunpack.c.l.b16 %v50
  %v275 = vunpack.c.l.b16 %v51
  %v276 = vunpack.c.l.b16 %v52
  %v277 = vunpack.c.l.b16 %v53
  %v278 = vunpack.c.l.b16 %v54
  %v279 = vunpack.c.l.b16 %v55
  %v280 = vunpack.c.l.b16 %v56
  %v281 = vunpack.c.l.b16 %v57
  %v282 = vunpack.c.l.b16 %v58
  %v283 = vunpack.c.l.b16 %v59
  %v284 = vunpack.c.l.b16 %v60
  %v285 = vunpack.c.l.b16 %v61
  %v286 = vunpack.c.l.b16 %v62
  %v287 = vunpack.c.l.b16 %v63
  %v288 = vunpack.c.l.b16 %v64
  %v289 = vunpack.c.l.b16 %v65
  %v290 = vunpack.c.l.b16 %v66
  %v291 = vunpack.c.l.b16 %v67
  %v292 = vunpack.c.l.b16 %v68
  %v293 = vunpack.c.l.b16 %v69
  %v294 = vunpack.c.l.b16 %v70
  %v295 = vunpack.c.l.b16 %v71
  %v296 = vunpack.c.l.b16 %v72
  %v297 = vunpack.c.l.b16 %v73
  %v298 = vunpack.c.l.b16 %v74
  %v299 = vunpack.c.l.b16 %v75
  %v300 = vunpack.c.l.b16 %v76
  %v301 = vunpack.c.l.b16 %v77
  %v302 = vunpack.c.l.b16 %v78
  %v303 = vunpack.c.l.b16 %v79
  %v304 = vunpack.c.l.b16 %v80
  %v305 = vunpack.c.l.b16 %v81
  %v306 = vunpack.c.l.b16 %v82
  %v307 = vunpack.c.l.b16 %v83
  %v308 = vunpack.c.l.b16 %v84
  %v309 = vunpack.c.l.b16 %v85
  %v310 = vunpack.c.l.b16 %v86
  %v311 = vunpack.c.l.b16 %v87
  %v312 = vunpack.c.l.b16 %v88
  %v313 = vunpack.c.l.b16 %v89
  %v314 = vunpack.c.l.b16 %v90
  %v315 = vunpack.c.l.b16 %v91
  %v316 = vunpack.c.l.b16 %v92
  %v317 = vunpack.c.l.b16 %v93
  %v318 = vunpack.c.l.b16 %v94
  %v319 = vunpack.c.l.b16 %v95
  %v320 = vunpack.c.l.b16 %v96
  %v321 = vunpack.c.l.b16 %v97
  %v322 = vpack.c.b16 %v275, %v274
  %v323 = vpack.c.b16 %v277, %v276
  %v324 = vpack.c.b16 %v279, %v278
  %v325 = vpack.c.b16 %v281, %v280
  %v326 = vpack.c.b16 %v283, %v282
  %v327 = vpack.c.b16 %v285, %v284
  %v328 = vpack.c.b16 %v287, %v286
  %v329 = vpack.c.b16 %v289, %v288
  %v330 = vpack.c.b16 %v291, %v290
  %v331 = vpack.c.b16 %v293, %v292
  %v332 = vpack.c.b16 %v295, %v294
  %v333 = vpack.c.b16 %v297, %v296
  %v334 = vpack.c.b16 %v299, %v298
  %v335 = vpack.c.b16 %v301, %v300
  %v336 = vpack.c.b16 %v303, %v302
  %v337 = vpack.c.b16 %v305, %v304
  %v338 = vpack.c.b16 %v307, %v306
  %v339 = vpack.c.b16 %v309, %v308
  %v340 = vpack.c.b16 %v311, %v310
  %v341 = vpack.c.b16 %v313, %v312
  %v342 = vpack.c.b16 %v315, %v314
  %v343 = vpack.c.b16 %v317, %v316
  %v344 = vpack.c.b16 %v319, %v318
  %v345 = vpack.c.b16 %v321, %v320
  %370 = vmatprep.subr.bf16.mxu0 0
  %371 = vmatpush1.bf16.msra.mxu0 %v322
  %372 = vmatprep.subr.bf16.mxu0 0
  %373 = vmatpush1.bf16.msra.mxu0 %v323
  %374 = vmatprep.subr.bf16.mxu0 0
  %375 = vmatpush1.bf16.msra.mxu0 %v324
  %376 = vmatprep.subr.bf16.mxu0 0
  %377 = vmatpush1.bf16.msra.mxu0 %v325
  %378 = vmatprep.subr.bf16.mxu0 0
  %379 = vmatpush1.bf16.msra.mxu0 %v326
  %380 = vmatprep.subr.bf16.mxu0 0
  %381 = vmatpush1.bf16.msra.mxu0 %v327
  %382 = vmatprep.subr.bf16.mxu0 0
  %383 = vmatpush1.bf16.msra.mxu0 %v328
  %384 = vmatprep.subr.bf16.mxu0 0
  %385 = vmatpush1.bf16.msra.mxu0 %v329
  %386 = vmatprep.subr.bf16.mxu0 0
  %387 = vmatpush1.bf16.msra.mxu0 %v330
  %388 = vmatprep.subr.bf16.mxu0 0
  %389 = vmatpush1.bf16.msra.mxu0 %v331
  %390 = vmatprep.subr.bf16.mxu0 0
  %391 = vmatpush1.bf16.msra.mxu0 %v332
  %392 = vmatprep.subr.bf16.mxu0 0
  %393 = vmatpush1.bf16.msra.mxu0 %v333
  %394 = vmatprep.subr.bf16.mxu0 0
  %395 = vmatpush1.bf16.msra.mxu0 %v334
  %396 = vmatprep.subr.bf16.mxu0 0
  %397 = vmatpush1.bf16.msra.mxu0 %v335
  %398 = vmatprep.subr.bf16.mxu0 0
  %399 = vmatpush1.bf16.msra.mxu0 %v336
  %400 = vmatprep.subr.bf16.mxu0 0
  %401 = vmatpush1.bf16.msra.mxu0 %v337
  %402 = vmatprep.mubr.bf16.mxu0 %v179
  %403 = vmatmul.mubr.bf16.gmra.mrb[0].mxu0 %v178
  %v404 = vpop.f32.mrb[0].mxu0
  %v405 = vadd.f32 0.0, %v404
  %v406 = vpop.f32.mrb[0].mxu0
  %v407 = vpop.f32.mrb[0].mxu0
  %v408 = vadd.f32 0.0, %v407
  %v409 = vpop.f32.mrb[0].mxu0
  %410 = vmatprep.mubr.bf16.mxu0 %v182
  %411 = vmatmul.mubr.bf16.gmra.mrb[0].mxu0 %v181
  %v412 = vpop.f32.mrb[0].mxu0
  %v413 = vadd.f32 0.0, %v412
  %v414 = vpop.f32.mrb[0].mxu0
  %v415 = vpop.f32.mrb[0].mxu0
  %v416 = vadd.f32 0.0, %v415
  %v417 = vpop.f32.mrb[0].mxu0
  %418 = vmatprep.mubr.bf16.mxu0 %v185
  %419 = vmatmul.mubr.bf16.gmra.mrb[0].mxu0 %v184
  %v420 = vpop.f32.mrb[0].mxu0
  %v421 = vadd.f32 0.0, %v420
  %v422 = vpop.f32.mrb[0].mxu0
  %v423 = vpop.f32.mrb[0].mxu0
  %v424 = vadd.f32 0.0, %v423
  %v425 = vpop.f32.mrb[0].mxu0
  %426 = vmatprep.mubr.bf16.mxu0 %v188
  %427 = vmatmul.mubr.bf16.gmra.mrb[0].mxu0 %v187
  %v428 = vpop.f32.mrb[0].mxu0
  %v429 = vadd.f32 0.0, %v428
  %v430 = vpop.f32.mrb[0].mxu0
  %v431 = vpop.f32.mrb[0].mxu0
  %v432 = vadd.f32 0.0, %v431
  %v433 = vpop.f32.mrb[0].mxu0
  %434 = vmatprep.mubr.bf16.mxu0 %v191
  %435 = vmatmul.mubr.bf16.gmra.mrb[0].mxu0 %v190
  %v436 = vpop.f32.mrb[0].mxu0
  %v437 = vadd.f32 0.0, %v436
  %v438 = vpop.f32.mrb[0].mxu0
  %v439 = vpop.f32.mrb[0].mxu0
  %v440 = vadd.f32 0.0, %v439
  %v441 = vpop.f32.mrb[0].mxu0
  %442 = vmatprep.mubr.bf16.mxu0 %v194
  %443 = vmatmul.mubr.bf16.gmra.mrb[0].mxu0 %v193
  %v444 = vpop.f32.mrb[0].mxu0
  %v445 = vadd.f32 0.0, %v444
  %v446 = vpop.f32.mrb[0].mxu0
  %v447 = vpop.f32.mrb[0].mxu0
  %v448 = vadd.f32 0.0, %v447
  %v449 = vpop.f32.mrb[0].mxu0
  %450 = vmatprep.mubr.bf16.mxu0 %v197
  %451 = vmatmul.mubr.bf16.gmra.mrb[0].mxu0 %v196
  %v452 = vpop.f32.mrb[0].mxu0
  %v453 = vadd.f32 0.0, %v452
  %v454 = vpop.f32.mrb[0].mxu0
  %v455 = vpop.f32.mrb[0].mxu0
  %v456 = vadd.f32 0.0, %v455
  %v457 = vpop.f32.mrb[0].mxu0
  %458 = vmatprep.mubr.bf16.mxu0 %v200
  %459 = vmatmul.mubr.bf16.gmra.mrb[0].mxu0 %v199
  %v460 = vpop.f32.mrb[0].mxu0
  %v461 = vadd.f32 0.0, %v460
  %v462 = vpop.f32.mrb[0].mxu0
  %v463 = vpop.f32.mrb[0].mxu0
  %v464 = vadd.f32 0.0, %v463
  %v465 = vpop.f32.mrb[0].mxu0
  %466 = vdwg.mxu0
  %467 = vmatprep.subr.bf16.mxu0 0
  %468 = vmatpush1.bf16.msra.mxu0 %v338
  %469 = vmatprep.subr.bf16.mxu0 0
  %470 = vmatpush1.bf16.msra.mxu0 %v339
  %471 = vmatprep.subr.bf16.mxu0 0
  %472 = vmatpush1.bf16.msra.mxu0 %v340
  %473 = vmatprep.subr.bf16.mxu0 0
  %474 = vmatpush1.bf16.msra.mxu0 %v341
  %475 = vmatprep.subr.bf16.mxu0 0
  %476 = vmatpush1.bf16.msra.mxu0 %v342
  %477 = vmatprep.subr.bf16.mxu0 0
  %478 = vmatpush1.bf16.msra.mxu0 %v343
  %479 = vmatprep.subr.bf16.mxu0 0
  %480 = vmatpush1.bf16.msra.mxu0 %v344
  %481 = vmatprep.subr.bf16.mxu0 0
  %482 = vmatpush1.bf16.msra.mxu0 %v345
  %483 = vmatprep.subr.bf16.mxu0 0
  %484 = vmatpush1.bf16.msra.mxu0 0
  %485 = vmatprep.subr.bf16.mxu0 0
  %486 = vmatpush1.bf16.msra.mxu0 0
  %487 = vmatprep.subr.bf16.mxu0 0
  %488 = vmatpush1.bf16.msra.mxu0 0
  %489 = vmatprep.subr.bf16.mxu0 0
  %490 = vmatpush1.bf16.msra.mxu0 0
  %491 = vmatprep.subr.bf16.mxu0 0
  %492 = vmatpush1.bf16.msra.mxu0 0
  %493 = vmatprep.subr.bf16.mxu0 0
  %494 = vmatpush1.bf16.msra.mxu0 0
  %495 = vmatprep.subr.bf16.mxu0 0
  %496 = vmatpush1.bf16.msra.mxu0 0
  %497 = vmatprep.subr.bf16.mxu0 0
  %498 = vmatpush1.bf16.msra.mxu0 0
  %499 = vmatprep.mubr.bf16.mxu0 0
  %500 = vmatmul.mubr.bf16.gmra.mrb[0].mxu0 %v180
  %v501 = vpop.f32.mrb[0].mxu0
  %v502 = vadd.f32 %v405, %v501
  %v503 = vpop.f32.mrb[0].mxu0
  %v504 = vpop.f32.mrb[0].mxu0
  %v505 = vadd.f32 %v408, %v504
  %v506 = vpop.f32.mrb[0].mxu0
  %507 = vmatprep.mubr.bf16.mxu0 0
  %508 = vmatmul.mubr.bf16.gmra.mrb[0].mxu0 %v183
  %v509 = vpop.f32.mrb[0].mxu0
  %v510 = vadd.f32 %v413, %v509
  %v511 = vpop.f32.mrb[0].mxu0
  %v512 = vpop.f32.mrb[0].mxu0
  %v513 = vadd.f32 %v416, %v512
  %v514 = vpop.f32.mrb[0].mxu0
  %515 = vmatprep.mubr.bf16.mxu0 0
  %516 = vmatmul.mubr.bf16.gmra.mrb[0].mxu0 %v186
  %v517 = vpop.f32.mrb[0].mxu0
  %v518 = vadd.f32 %v421, %v517
  %v519 = vpop.f32.mrb[0].mxu0
  %v520 = vpop.f32.mrb[0].mxu0
  %v521 = vadd.f32 %v424, %v520
  %v522 = vpop.f32.mrb[0].mxu0
  %523 = vmatprep.mubr.bf16.mxu0 0
  %524 = vmatmul.mubr.bf16.gmra.mrb[0].mxu0 %v189
  %v525 = vpop.f32.mrb[0].mxu0
  %v526 = vadd.f32 %v429, %v525
  %v527 = vpop.f32.mrb[0].mxu0
  %v528 = vpop.f32.mrb[0].mxu0
  %v529 = vadd.f32 %v432, %v528
  %v530 = vpop.f32.mrb[0].mxu0
  %531 = vmatprep.mubr.bf16.mxu0 0
  %532 = vmatmul.mubr.bf16.gmra.mrb[0].mxu0 %v192
  %v533 = vpop.f32.mrb[0].mxu0
  %v534 = vadd.f32 %v437, %v533
  %v535 = vpop.f32.mrb[0].mxu0
  %v536 = vpop.f32.mrb[0].mxu0
  %v537 = vadd.f32 %v440, %v536
  %v538 = vpop.f32.mrb[0].mxu0
  %539 = vmatprep.mubr.bf16.mxu0 0
  %540 = vmatmul.mubr.bf16.gmra.mrb[0].mxu0 %v195
  %v541 = vpop.f32.mrb[0].mxu0
  %v542 = vadd.f32 %v445, %v541
  %v543 = vpop.f32.mrb[0].mxu0
  %v544 = vpop.f32.mrb[0].mxu0
  %v545 = vadd.f32 %v448, %v544
  %v546 = vpop.f32.mrb[0].mxu0
  %547 = vmatprep.mubr.bf16.mxu0 0
  %548 = vmatmul.mubr.bf16.gmra.mrb[0].mxu0 %v198
  %v549 = vpop.f32.mrb[0].mxu0
  %v550 = vadd.f32 %v453, %v549
  %v551 = vpop.f32.mrb[0].mxu0
  %v552 = vpop.f32.mrb[0].mxu0
  %v553 = vadd.f32 %v456, %v552
  %v554 = vpop.f32.mrb[0].mxu0
  %555 = vmatprep.mubr.bf16.mxu0 0
  %556 = vmatmul.mubr.bf16.gmra.mrb[0].mxu0 %v201
  %v557 = vpop.f32.mrb[0].mxu0
  %v558 = vadd.f32 %v461, %v557
  %v559 = vpop.f32.mrb[0].mxu0
  %v560 = vpop.f32.mrb[0].mxu0
  %v561 = vadd.f32 %v464, %v560
  %v562 = vpop.f32.mrb[0].mxu0
  %563 = vdwg.mxu0
  %v564 = vld [vmem:[%s2] sm:$0x1]
  %v566 = vlaneseq
  %v567 = vshrl.u32 %v566, 7
  %v568 = vsub.s32 0, %v567
  %v569 = vrot.slane %v564, %v568
  %v571 = vmul.f32 %v502, %v569
  %v572 = vmul.f32 %v505, %v569
  %v573 = vmul.f32 %v510, %v569
  %v574 = vmul.f32 %v513, %v569
  %v575 = vmul.f32 %v518, %v569
  %v576 = vmul.f32 %v521, %v569
  %v577 = vmul.f32 %v526, %v569
  %v578 = vmul.f32 %v529, %v569
  %v579 = vmul.f32 %v534, %v569
  %v580 = vmul.f32 %v537, %v569
  %v581 = vmul.f32 %v542, %v569
  %v582 = vmul.f32 %v545, %v569
  %v583 = vmul.f32 %v550, %v569
  %v584 = vmul.f32 %v553, %v569
  %v585 = vmul.f32 %v558, %v569
  %v586 = vmul.f32 %v561, %v569
  %v587 = vld [vmem:[%s3] sm:$0x1]
  %v589 = vlaneseq
  %v590 = vshrl.u32 %v589, 7
  %v591 = vsub.s32 0, %v590
  %v592 = vrot.slane %v587, %v591
  %v594 = vadd.f32 %v571, %v592
  %v595 = vadd.f32 %v572, %v592
  %v596 = vadd.f32 %v573, %v592
  %v597 = vadd.f32 %v574, %v592
  %v598 = vadd.f32 %v575, %v592
  %v599 = vadd.f32 %v576, %v592
  %v600 = vadd.f32 %v577, %v592
  %v601 = vadd.f32 %v578, %v592
  %v602 = vadd.f32 %v579, %v592
  %v603 = vadd.f32 %v580, %v592
  %v604 = vadd.f32 %v581, %v592
  %v605 = vadd.f32 %v582, %v592
  %v606 = vadd.f32 %v583, %v592
  %v607 = vadd.f32 %v584, %v592
  %v608 = vadd.f32 %v585, %v592
  %v609 = vadd.f32 %v586, %v592
  %vm610 = vcmp.gt.f32.partialorder %v594, 0.0
  %vm611 = vcmp.gt.f32.partialorder %v595, 0.0
  %vm612 = vcmp.gt.f32.partialorder %v596, 0.0
  %vm613 = vcmp.gt.f32.partialorder %v597, 0.0
  %vm614 = vcmp.gt.f32.partialorder %v598, 0.0
  %vm615 = vcmp.gt.f32.partialorder %v599, 0.0
  %vm616 = vcmp.gt.f32.partialorder %v600, 0.0
  %vm617 = vcmp.gt.f32.partialorder %v601, 0.0
  %vm618 = vcmp.gt.f32.partialorder %v602, 0.0
  %vm619 = vcmp.gt.f32.partialorder %v603, 0.0
  %vm620 = vcmp.gt.f32.partialorder %v604, 0.0
  %vm621 = vcmp.gt.f32.partialorder %v605, 0.0
  %vm622 = vcmp.gt.f32.partialorder %v606, 0.0
  %vm623 = vcmp.gt.f32.partialorder %v607, 0.0
  %vm624 = vcmp.gt.f32.partialorder %v608, 0.0
  %vm625 = vcmp.gt.f32.partialorder %v609, 0.0
  %v626 = vmul.f32 %v594, 0.1
  %v627 = vmul.f32 %v595, 0.1
  %v628 = vmul.f32 %v596, 0.1
  %v629 = vmul.f32 %v597, 0.1
  %v630 = vmul.f32 %v598, 0.1
  %v631 = vmul.f32 %v599, 0.1
  %v632 = vmul.f32 %v600, 0.1
  %v633 = vmul.f32 %v601, 0.1
  %v634 = vmul.f32 %v602, 0.1
  %v635 = vmul.f32 %v603, 0.1
  %v636 = vmul.f32 %v604, 0.1
  %v637 = vmul.f32 %v605, 0.1
  %v638 = vmul.f32 %v606, 0.1
  %v639 = vmul.f32 %v607, 0.1
  %v640 = vmul.f32 %v608, 0.1
  %v641 = vmul.f32 %v609, 0.1
  %v642 = vsel %vm610, %v594, %v626
  %v643 = vsel %vm611, %v595, %v627
  %v644 = vsel %vm612, %v596, %v628
  %v645 = vsel %vm613, %v597, %v629
  %v646 = vsel %vm614, %v598, %v630
  %v647 = vsel %vm615, %v599, %v631
  %v648 = vsel %vm616, %v600, %v632
  %v649 = vsel %vm617, %v601, %v633
  %v650 = vsel %vm618, %v602, %v634
  %v651 = vsel %vm619, %v603, %v635
  %v652 = vsel %vm620, %v604, %v636
  %v653 = vsel %vm621, %v605, %v637
  %v654 = vsel %vm622, %v606, %v638
  %v655 = vsel %vm623, %v607, %v639
  %v656 = vsel %vm624, %v608, %v640
  %v657 = vsel %vm625, %v609, %v641
  %v658 = vpack.c.bf16 %v643, %v642
  %v659 = vpack.c.bf16 %v645, %v644
  %v660 = vpack.c.bf16 %v647, %v646
  %v661 = vpack.c.bf16 %v649, %v648
  %v662 = vpack.c.bf16 %v651, %v650
  %v663 = vpack.c.bf16 %v653, %v652
  %v664 = vpack.c.bf16 %v655, %v654
  %v665 = vpack.c.bf16 %v657, %v656
  %v674 = vunpack.c.l.b16 %v658
  %v675 = vunpack.c.h.b16 %v658
  %v676 = vunpack.c.l.b16 %v659
  %v677 = vunpack.c.h.b16 %v659
  %v678 = vunpack.c.l.b16 %v660
  %v679 = vunpack.c.h.b16 %v660
  %v680 = vunpack.c.l.b16 %v661
  %v681 = vunpack.c.h.b16 %v661
  %v682 = vunpack.c.l.b16 %v662
  %v683 = vunpack.c.h.b16 %v662
  %v684 = vunpack.c.l.b16 %v663
  %v685 = vunpack.c.h.b16 %v663
  %v686 = vunpack.c.l.b16 %v664
  %v687 = vunpack.c.h.b16 %v664
  %v688 = vunpack.c.l.b16 %v665
  %v689 = vunpack.c.h.b16 %v665
  %v690 = vpack.c.b16 %v674, %v674
  %v691 = vpack.c.b16 %v675, %v675
  %v692 = vpack.c.b16 %v676, %v676
  %v693 = vpack.c.b16 %v677, %v677
  %v694 = vpack.c.b16 %v678, %v678
  %v695 = vpack.c.b16 %v679, %v679
  %v696 = vpack.c.b16 %v680, %v680
  %v697 = vpack.c.b16 %v681, %v681
  %v698 = vpack.c.b16 %v682, %v682
  %v699 = vpack.c.b16 %v683, %v683
  %v700 = vpack.c.b16 %v684, %v684
  %v701 = vpack.c.b16 %v685, %v685
  %v702 = vpack.c.b16 %v686, %v686
  %v703 = vpack.c.b16 %v687, %v687
  %v704 = vpack.c.b16 %v688, %v688
  %v705 = vpack.c.b16 %v689, %v689
  %vm722 = vcmask 519168
  %723 = vst.msk [vmem:[%s4] sm:$0xf] %vm722, %v690
  %724 = vst.msk [vmem:[%s4 + $0x4] sm:$0xf] %vm722, %v691
  %725 = vst.msk [vmem:[%s4 + $0x8] sm:$0xf] %vm722, %v692
  %726 = vst.msk [vmem:[%s4 + $0xc] sm:$0xf] %vm722, %v693
  %727 = vst.msk [vmem:[%s4 + $0x10] sm:$0xf] %vm722, %v694
  %728 = vst.msk [vmem:[%s4 + $0x14] sm:$0xf] %vm722, %v695
  %729 = vst.msk [vmem:[%s4 + $0x18] sm:$0xf] %vm722, %v696
  %730 = vst.msk [vmem:[%s4 + $0x1c] sm:$0xf] %vm722, %v697
  %731 = vst.msk [vmem:[%s4 + $0x20] sm:$0xf] %vm722, %v698
  %732 = vst.msk [vmem:[%s4 + $0x24] sm:$0xf] %vm722, %v699
  %733 = vst.msk [vmem:[%s4 + $0x28] sm:$0xf] %vm722, %v700
  %734 = vst.msk [vmem:[%s4 + $0x2c] sm:$0xf] %vm722, %v701
  %735 = vst.msk [vmem:[%s4 + $0x30] sm:$0xf] %vm722, %v702
  %736 = vst.msk [vmem:[%s4 + $0x34] sm:$0xf] %vm722, %v703
  %737 = vst.msk [vmem:[%s4 + $0x38] sm:$0xf] %vm722, %v704
  %738 = vst.msk [vmem:[%s4 + $0x3c] sm:$0xf] %vm722, %v705
  // Predicated region
  $region18: #{darknet_forward.29} parent=0 // pred_check
    _
  $region19: #{darknet_forward.29} parent=0 // pred_check_branch
    %740 = sbr.rel (0) target = $region21
  $region20: #{darknet_forward.29} parent=0 // pred_region
    _
  $region21: #{darknet_forward.29} parent=0 // pred_fallthru
    _
  // Predicated region
  $region22: #{darknet_forward.29} parent=0 // pred_check
    _
  $region23: #{darknet_forward.29} parent=0 // pred_check_branch
    %742 = sbr.rel (0) target = $region25
  $region24: #{darknet_forward.29} parent=0 // pred_region
    _
  $region25: #{darknet_forward.29} parent=0 // pred_fallthru
    _

// kernel: darknet_forward.35
$region0: #{darknet_forward.35}
  #allocation0 [shape = 'u32[]', space=smem, size = 0x4, offset = 0x4, fixed_abs, tag = 'smem constant byte address 0x4 - core index']
  #allocation1 [shape = 'u32[144,128]{1,0:T(1,128)}', space=vmem, size = 0x12000, scoped, tag = 'internal scratch']
  %s0 = inlined_call_operand.vmem [shape: bf16[32,128], index: 0, kind: input, shape index: {}]
  %s1 = inlined_call_operand.vmem [shape: bf16[128,64], index: 1, kind: input, shape index: {}]
  %s2 = inlined_call_operand.hbm [shape: f32[1,64], index: 2, kind: input, shape index: {}]
  %s3 = inlined_call_operand.hbm [shape: f32[1,64], index: 3, kind: input, shape index: {}]
  %s4 = inlined_call_operand.vmem [shape: bf16[32,64], index: 4, kind: output, shape index: {}]
  %s5 = sld [smem:[#allocation0]]
  $region34: #{darknet_forward.35} parent=0
    _
  %s7 = ssub.s32 1, %s5
  %s8 = scalar_select 0, %s7, %s5
  $region1: #{darknet_forward.35} parent=0
    #allocation2 [shape = 'u8[512]{0}', space=vmem, size = 0x400, scoped, tag = 'input window, operand 2, single buffered']
    #allocation3 [shape = 's32[1]{0}', space=sflag, size = 0x4, scoped, tag = 'scoped memory for darknet_forward.35']
    #allocation4 [shape = 'u8[512]{0}', space=vmem, size = 0x400, scoped, tag = 'input window, operand 3, single buffered']
    #allocation5 [shape = 's32[1]{0}', space=sflag, size = 0x4, scoped, tag = 'scoped memory for darknet_forward.35']
    %9 = vsyncpa [#allocation3], 0
    %10 = vsyncpa [#allocation5], 0
    // Predicated region
    $region2: #{darknet_forward.35} parent=1 // pred_check
      _
    $region3: #{darknet_forward.35} parent=1 // pred_check_branch
      %12 = sbr.rel (0) target = $region5
    $region4: #{darknet_forward.35} parent=1 // pred_region
      _
    $region5: #{darknet_forward.35} parent=1 // pred_fallthru
      _
    // Predicated region
    $region6: #{darknet_forward.35} parent=1 // pred_check
      _
    $region7: #{darknet_forward.35} parent=1 // pred_check_branch
      %14 = sbr.rel (0) target = $region9
    $region8: #{darknet_forward.35} parent=1 // pred_region
      _
    $region9: #{darknet_forward.35} parent=1 // pred_fallthru
      _
    // Predicated region
    $region10: #{darknet_forward.35} parent=1 // pred_check
      _
    $region11: #{darknet_forward.35} parent=1 // pred_check_branch
      %16 = sbr.rel (0) target = $region13
    $region12: #{darknet_forward.35} parent=1 // pred_region
      %s18 = ssub.s32 16, 16
      %19 = vsyncadd [#allocation3], %s18
      %s21 = sshll.u32 [#allocation2], 4
      %s22 = int_to_ptr.vmem [resolvable:$true] %s21
      %24 = dma.hbm_to_vmem [thread:$0]  %s2, 16, %s22, [#allocation3]
    $region13: #{darknet_forward.35} parent=1 // pred_fallthru
      _
    // Predicated region
    $region14: #{darknet_forward.35} parent=1 // pred_check
      _
    $region15: #{darknet_forward.35} parent=1 // pred_check_branch
      %26 = sbr.rel (0) target = $region17
    $region16: #{darknet_forward.35} parent=1 // pred_region
      %s28 = ssub.s32 16, 16
      %29 = vsyncadd [#allocation5], %s28
      %s31 = sshll.u32 [#allocation4], 4
      %s32 = int_to_ptr.vmem [resolvable:$true] %s31
      %34 = dma.hbm_to_vmem [thread:$0]  %s3, 16, %s32, [#allocation5]
    $region17: #{darknet_forward.35} parent=1 // pred_fallthru
      _
    // Predicated region
    $region18: #{darknet_forward.35} parent=1 // pred_check
      _
    $region19: #{darknet_forward.35} parent=1 // pred_check_branch
      %36 = sbr.rel (0) target = $region21
    $region20: #{darknet_forward.35} parent=1 // pred_region
      %37 = dma.done [#allocation3], 16
    $region21: #{darknet_forward.35} parent=1 // pred_fallthru
      _
    // Predicated region
    $region22: #{darknet_forward.35} parent=1 // pred_check
      _
    $region23: #{darknet_forward.35} parent=1 // pred_check_branch
      %39 = sbr.rel (0) target = $region25
    $region24: #{darknet_forward.35} parent=1 // pred_region
      %40 = dma.done [#allocation5], 16
    $region25: #{darknet_forward.35} parent=1 // pred_fallthru
      _
    %v42 = vld [vmem:[%s0] sm:$0xf]
    %v43 = vld [vmem:[%s0 + $0x4] sm:$0xf]
    %v44 = vld [vmem:[%s0 + $0x8] sm:$0xf]
    %v45 = vld [vmem:[%s0 + $0xc] sm:$0xf]
    %v46 = vld [vmem:[%s1] sm:$0xf]
    %v47 = vld [vmem:[%s1 + $0x4] sm:$0xf]
    %v48 = vld [vmem:[%s1 + $0x8] sm:$0xf]
    %v49 = vld [vmem:[%s1 + $0xc] sm:$0xf]
    %v50 = vld [vmem:[%s1 + $0x10] sm:$0xf]
    %v51 = vld [vmem:[%s1 + $0x14] sm:$0xf]
    %v52 = vld [vmem:[%s1 + $0x18] sm:$0xf]
    %v53 = vld [vmem:[%s1 + $0x1c] sm:$0xf]
    %v54 = vld [vmem:[%s1 + $0x20] sm:$0xf]
    %v55 = vld [vmem:[%s1 + $0x24] sm:$0xf]
    %v56 = vld [vmem:[%s1 + $0x28] sm:$0xf]
    %v57 = vld [vmem:[%s1 + $0x2c] sm:$0xf]
    %v58 = vld [vmem:[%s1 + $0x30] sm:$0xf]
    %v59 = vld [vmem:[%s1 + $0x34] sm:$0xf]
    %v60 = vld [vmem:[%s1 + $0x38] sm:$0xf]
    %v61 = vld [vmem:[%s1 + $0x3c] sm:$0xf]
    %v66 = vunpack.c.l.b16 %v42
    %v67 = vunpack.c.l.b16 %v43
    %v68 = vunpack.c.l.b16 %v44
    %v69 = vunpack.c.l.b16 %v45
    %v70 = vpack.c.b16 %v67, %v66
    %v71 = vpack.c.b16 %v69, %v68
    %v90 = vunpack.c.l.b16 %v46
    %v91 = vunpack.c.l.b16 %v47
    %v92 = vunpack.c.l.b16 %v48
    %v93 = vunpack.c.l.b16 %v49
    %v94 = vunpack.c.l.b16 %v50
    %v95 = vunpack.c.l.b16 %v51
    %v96 = vunpack.c.l.b16 %v52
    %v97 = vunpack.c.l.b16 %v53
    %v98 = vunpack.c.l.b16 %v54
    %v99 = vunpack.c.l.b16 %v55
    %v100 = vunpack.c.l.b16 %v56
    %v101 = vunpack.c.l.b16 %v57
    %v102 = vunpack.c.l.b16 %v58
    %v103 = vunpack.c.l.b16 %v59
    %v104 = vunpack.c.l.b16 %v60
    %v105 = vunpack.c.l.b16 %v61
    %v106 = vpack.c.b16 %v91, %v90
    %v107 = vpack.c.b16 %v93, %v92
    %v108 = vpack.c.b16 %v95, %v94
    %v109 = vpack.c.b16 %v97, %v96
    %v110 = vpack.c.b16 %v99, %v98
    %v111 = vpack.c.b16 %v101, %v100
    %v112 = vpack.c.b16 %v103, %v102
    %v113 = vpack.c.b16 %v105, %v104
    %122 = vmatprep.subr.bf16.mxu0 0
    %123 = vmatpush1.bf16.msra.mxu0 %v106
    %124 = vmatprep.subr.bf16.mxu0 0
    %125 = vmatpush1.bf16.msra.mxu0 %v107
    %126 = vmatprep.subr.bf16.mxu0 0
    %127 = vmatpush1.bf16.msra.mxu0 %v108
    %128 = vmatprep.subr.bf16.mxu0 0
    %129 = vmatpush1.bf16.msra.mxu0 %v109
    %130 = vmatprep.subr.bf16.mxu0 0
    %131 = vmatpush1.bf16.msra.mxu0 %v110
    %132 = vmatprep.subr.bf16.mxu0 0
    %133 = vmatpush1.bf16.msra.mxu0 %v111
    %134 = vmatprep.subr.bf16.mxu0 0
    %135 = vmatpush1.bf16.msra.mxu0 %v112
    %136 = vmatprep.subr.bf16.mxu0 0
    %137 = vmatpush1.bf16.msra.mxu0 %v113
    %138 = vmatprep.subr.bf16.mxu0 0
    %139 = vmatpush1.bf16.msra.mxu0 0
    %140 = vmatprep.subr.bf16.mxu0 0
    %141 = vmatpush1.bf16.msra.mxu0 0
    %142 = vmatprep.subr.bf16.mxu0 0
    %143 = vmatpush1.bf16.msra.mxu0 0
    %144 = vmatprep.subr.bf16.mxu0 0
    %145 = vmatpush1.bf16.msra.mxu0 0
    %146 = vmatprep.subr.bf16.mxu0 0
    %147 = vmatpush1.bf16.msra.mxu0 0
    %148 = vmatprep.subr.bf16.mxu0 0
    %149 = vmatpush1.bf16.msra.mxu0 0
    %150 = vmatprep.subr.bf16.mxu0 0
    %151 = vmatpush1.bf16.msra.mxu0 0
    %152 = vmatprep.subr.bf16.mxu0 0
    %153 = vmatpush1.bf16.msra.mxu0 0
    %154 = vmatprep.mubr.bf16.mxu0 0
    %155 = vmatmul.mubr.bf16.gmra.mrb[0].mxu0 %v70
    %v156 = vpop.f32.mrb[0].mxu0
    %v157 = vadd.f32 0.0, %v156
    %v158 = vpop.f32.mrb[0].mxu0
    %v159 = vpop.f32.mrb[0].mxu0
    %v160 = vadd.f32 0.0, %v159
    %v161 = vpop.f32.mrb[0].mxu0
    %162 = vmatprep.mubr.bf16.mxu0 0
    %163 = vmatmul.mubr.bf16.gmra.mrb[0].mxu0 %v71
    %v164 = vpop.f32.mrb[0].mxu0
    %v165 = vadd.f32 0.0, %v164
    %v166 = vpop.f32.mrb[0].mxu0
    %v167 = vpop.f32.mrb[0].mxu0
    %v168 = vadd.f32 0.0, %v167
    %v169 = vpop.f32.mrb[0].mxu0
    %170 = vdwg.mxu0
    %v171 = vld [vmem:[#allocation2] sm:$0x1]
    %v173 = vlaneseq
    %v174 = vshrl.u32 %v173, 7
    %v175 = vsub.s32 0, %v174
    %v176 = vrot.slane %v171, %v175
    %v178 = vmul.f32 %v157, %v176
    %v179 = vmul.f32 %v160, %v176
    %v180 = vmul.f32 %v165, %v176
    %v181 = vmul.f32 %v168, %v176
    %v182 = vld [vmem:[#allocation4] sm:$0x1]
    %v184 = vlaneseq
    %v185 = vshrl.u32 %v184, 7
    %v186 = vsub.s32 0, %v185
    %v187 = vrot.slane %v182, %v186
    %v189 = vadd.f32 %v178, %v187
    %v190 = vadd.f32 %v179, %v187
    %v191 = vadd.f32 %v180, %v187
    %v192 = vadd.f32 %v181, %v187
    %vm193 = vcmp.gt.f32.partialorder %v189, 0.0
    %vm194 = vcmp.gt.f32.partialorder %v190, 0.0
    %vm195 = vcmp.gt.f32.partialorder %v191, 0.0
    %vm196 = vcmp.gt.f32.partialorder %v192, 0.0
    %v197 = vmul.f32 %v189, 0.1
    %v198 = vmul.f32 %v190, 0.1
    %v199 = vmul.f32 %v191, 0.1
    %v200 = vmul.f32 %v192, 0.1
    %v201 = vsel %vm193, %v189, %v197
    %v202 = vsel %vm194, %v190, %v198
    %v203 = vsel %vm195, %v191, %v199
    %v204 = vsel %vm196, %v192, %v200
    %v205 = vpack.c.bf16 %v202, %v201
    %v206 = vpack.c.bf16 %v204, %v203
    %v209 = vunpack.c.l.b16 %v205
    %v210 = vunpack.c.h.b16 %v205
    %v211 = vunpack.c.l.b16 %v206
    %v212 = vunpack.c.h.b16 %v206
    %v213 = vpack.c.b16 %v209, %v209
    %v214 = vpack.c.b16 %v210, %v210
    %v215 = vpack.c.b16 %v211, %v211
    %v216 = vpack.c.b16 %v212, %v212
    %vm221 = vcmask 519168
    %222 = vst.msk [vmem:[%s4] sm:$0xf] %vm221, %v213
    %223 = vst.msk [vmem:[%s4 + $0x4] sm:$0xf] %vm221, %v214
    %224 = vst.msk [vmem:[%s4 + $0x8] sm:$0xf] %vm221, %v215
    %225 = vst.msk [vmem:[%s4 + $0xc] sm:$0xf] %vm221, %v216
    // Predicated region
    $region26: #{darknet_forward.35} parent=1 // pred_check
      _
    $region27: #{darknet_forward.35} parent=1 // pred_check_branch
      %227 = sbr.rel (0) target = $region29
    $region28: #{darknet_forward.35} parent=1 // pred_region
      _
    $region29: #{darknet_forward.35} parent=1 // pred_fallthru
      _
    // Predicated region
    $region30: #{darknet_forward.35} parent=1 // pred_check
      _
    $region31: #{darknet_forward.35} parent=1 // pred_check_branch
      %229 = sbr.rel (0) target = $region33
    $region32: #{darknet_forward.35} parent=1 // pred_region
      _
    $region33: #{darknet_forward.35} parent=1 // pred_fallthru
      _
    %230 = vsyncpa [#allocation3], 1
    %231 = vsyncpa [#allocation5], 1

// kernel: darknet_forward.34
$region0: #{darknet_forward.34}
  #allocation0 [shape = 'u32[]', space=smem, size = 0x4, offset = 0x4, fixed_abs, tag = 'smem constant byte address 0x4 - core index']
  #allocation1 [shape = 'u32[144,128]{1,0:T(1,128)}', space=vmem, size = 0x12000, scoped, tag = 'internal scratch']
  %s0 = inlined_call_operand.vmem [shape: bf16[32,640], index: 0, kind: input, shape index: {}]
  %s1 = inlined_call_operand.vmem [shape: bf16[640,128], index: 1, kind: input, shape index: {}]
  %s2 = inlined_call_operand.hbm [shape: f32[1,128], index: 2, kind: input, shape index: {}]
  %s3 = inlined_call_operand.hbm [shape: f32[1,128], index: 3, kind: input, shape index: {}]
  %s4 = inlined_call_operand.vmem [shape: bf16[32,128], index: 4, kind: output, shape index: {}]
  %s5 = sld [smem:[#allocation0]]
  $region34: #{darknet_forward.34} parent=0
    _
  %s7 = ssub.s32 1, %s5
  %s8 = scalar_select 0, %s7, %s5
  $region1: #{darknet_forward.34} parent=0
    #allocation2 [shape = 'u8[512]{0}', space=vmem, size = 0x400, scoped, tag = 'input window, operand 2, single buffered']
    #allocation3 [shape = 's32[1]{0}', space=sflag, size = 0x4, scoped, tag = 'scoped memory for darknet_forward.34']
    #allocation4 [shape = 'u8[512]{0}', space=vmem, size = 0x400, scoped, tag = 'input window, operand 3, single buffered']
    #allocation5 [shape = 's32[1]{0}', space=sflag, size = 0x4, scoped, tag = 'scoped memory for darknet_forward.34']
    %9 = vsyncpa [#allocation3], 0
    %10 = vsyncpa [#allocation5], 0
    // Predicated region
    $region2: #{darknet_forward.34} parent=1 // pred_check
      _
    $region3: #{darknet_forward.34} parent=1 // pred_check_branch
      %12 = sbr.rel (0) target = $region5
    $region4: #{darknet_forward.34} parent=1 // pred_region
      _
    $region5: #{darknet_forward.34} parent=1 // pred_fallthru
      _
    // Predicated region
    $region6: #{darknet_forward.34} parent=1 // pred_check
      _
    $region7: #{darknet_forward.34} parent=1 // pred_check_branch
      %14 = sbr.rel (0) target = $region9
    $region8: #{darknet_forward.34} parent=1 // pred_region
      _
    $region9: #{darknet_forward.34} parent=1 // pred_fallthru
      _
    // Predicated region
    $region10: #{darknet_forward.34} parent=1 // pred_check
      _
    $region11: #{darknet_forward.34} parent=1 // pred_check_branch
      %16 = sbr.rel (0) target = $region13
    $region12: #{darknet_forward.34} parent=1 // pred_region
      %s18 = ssub.s32 16, 16
      %19 = vsyncadd [#allocation3], %s18
      %s21 = sshll.u32 [#allocation2], 4
      %s22 = int_to_ptr.vmem [resolvable:$true] %s21
      %24 = dma.hbm_to_vmem [thread:$0]  %s2, 16, %s22, [#allocation3]
    $region13: #{darknet_forward.34} parent=1 // pred_fallthru
      _
    // Predicated region
    $region14: #{darknet_forward.34} parent=1 // pred_check
      _
    $region15: #{darknet_forward.34} parent=1 // pred_check_branch
      %26 = sbr.rel (0) target = $region17
    $region16: #{darknet_forward.34} parent=1 // pred_region
      %s28 = ssub.s32 16, 16
      %29 = vsyncadd [#allocation5], %s28
      %s31 = sshll.u32 [#allocation4], 4
      %s32 = int_to_ptr.vmem [resolvable:$true] %s31
      %34 = dma.hbm_to_vmem [thread:$0]  %s3, 16, %s32, [#allocation5]
    $region17: #{darknet_forward.34} parent=1 // pred_fallthru
      _
    // Predicated region
    $region18: #{darknet_forward.34} parent=1 // pred_check
      _
    $region19: #{darknet_forward.34} parent=1 // pred_check_branch
      %36 = sbr.rel (0) target = $region21
    $region20: #{darknet_forward.34} parent=1 // pred_region
      %37 = dma.done [#allocation3], 16
    $region21: #{darknet_forward.34} parent=1 // pred_fallthru
      _
    // Predicated region
    $region22: #{darknet_forward.34} parent=1 // pred_check
      _
    $region23: #{darknet_forward.34} parent=1 // pred_check_branch
      %39 = sbr.rel (0) target = $region25
    $region24: #{darknet_forward.34} parent=1 // pred_region
      %40 = dma.done [#allocation5], 16
    $region25: #{darknet_forward.34} parent=1 // pred_fallthru
      _
    %v42 = vld [vmem:[%s0] sm:$0xff]
    %v43 = vld [vmem:[%s0 + $0x8] sm:$0xff]
    %v44 = vld [vmem:[%s0 + $0x10] sm:$0xf]
    %v45 = vld [vmem:[%s0 + $0x14] sm:$0xff]
    %v46 = vld [vmem:[%s0 + $0x1c] sm:$0xff]
    %v47 = vld [vmem:[%s0 + $0x24] sm:$0xf]
    %v48 = vld [vmem:[%s0 + $0x28] sm:$0xff]
    %v49 = vld [vmem:[%s0 + $0x30] sm:$0xff]
    %v50 = vld [vmem:[%s0 + $0x38] sm:$0xf]
    %v51 = vld [vmem:[%s0 + $0x3c] sm:$0xff]
    %v52 = vld [vmem:[%s0 + $0x44] sm:$0xff]
    %v53 = vld [vmem:[%s0 + $0x4c] sm:$0xf]
    %v54 = vld [vmem:[%s1] sm:$0xf]
    %v55 = vld [vmem:[%s1 + $0x4] sm:$0xf]
    %v56 = vld [vmem:[%s1 + $0x8] sm:$0xf]
    %v57 = vld [vmem:[%s1 + $0xc] sm:$0xf]
    %v58 = vld [vmem:[%s1 + $0x10] sm:$0xf]
    %v59 = vld [vmem:[%s1 + $0x14] sm:$0xf]
    %v60 = vld [vmem:[%s1 + $0x18] sm:$0xf]
    %v61 = vld [vmem:[%s1 + $0x1c] sm:$0xf]
    %v62 = vld [vmem:[%s1 + $0x20] sm:$0xf]
    %v63 = vld [vmem:[%s1 + $0x24] sm:$0xf]
    %v64 = vld [vmem:[%s1 + $0x28] sm:$0xf]
    %v65 = vld [vmem:[%s1 + $0x2c] sm:$0xf]
    %v66 = vld [vmem:[%s1 + $0x30] sm:$0xf]
    %v67 = vld [vmem:[%s1 + $0x34] sm:$0xf]
    %v68 = vld [vmem:[%s1 + $0x38] sm:$0xf]
    %v69 = vld [vmem:[%s1 + $0x3c] sm:$0xf]
    %v70 = vld [vmem:[%s1 + $0x40] sm:$0xf]
    %v71 = vld [vmem:[%s1 + $0x44] sm:$0xf]
    %v72 = vld [vmem:[%s1 + $0x48] sm:$0xf]
    %v73 = vld [vmem:[%s1 + $0x4c] sm:$0xf]
    %v74 = vld [vmem:[%s1 + $0x50] sm:$0xf]
    %v75 = vld [vmem:[%s1 + $0x54] sm:$0xf]
    %v76 = vld [vmem:[%s1 + $0x58] sm:$0xf]
    %v77 = vld [vmem:[%s1 + $0x5c] sm:$0xf]
    %v78 = vld [vmem:[%s1 + $0x60] sm:$0xf]
    %v79 = vld [vmem:[%s1 + $0x64] sm:$0xf]
    %v80 = vld [vmem:[%s1 + $0x68] sm:$0xf]
    %v81 = vld [vmem:[%s1 + $0x6c] sm:$0xf]
    %v82 = vld [vmem:[%s1 + $0x70] sm:$0xf]
    %v83 = vld [vmem:[%s1 + $0x74] sm:$0xf]
    %v84 = vld [vmem:[%s1 + $0x78] sm:$0xf]
    %v85 = vld [vmem:[%s1 + $0x7c] sm:$0xf]
    %v86 = vld [vmem:[%s1 + $0x80] sm:$0xf]
    %v87 = vld [vmem:[%s1 + $0x84] sm:$0xf]
    %v88 = vld [vmem:[%s1 + $0x88] sm:$0xf]
    %v89 = vld [vmem:[%s1 + $0x8c] sm:$0xf]
    %v90 = vld [vmem:[%s1 + $0x90] sm:$0xf]
    %v91 = vld [vmem:[%s1 + $0x94] sm:$0xf]
    %v92 = vld [vmem:[%s1 + $0x98] sm:$0xf]
    %v93 = vld [vmem:[%s1 + $0x9c] sm:$0xf]
    %v94 = vld [vmem:[%s1 + $0xa0] sm:$0xf]
    %v95 = vld [vmem:[%s1 + $0xa4] sm:$0xf]
    %v96 = vld [vmem:[%s1 + $0xa8] sm:$0xf]
    %v97 = vld [vmem:[%s1 + $0xac] sm:$0xf]
    %v98 = vld [vmem:[%s1 + $0xb0] sm:$0xf]
    %v99 = vld [vmem:[%s1 + $0xb4] sm:$0xf]
    %v100 = vld [vmem:[%s1 + $0xb8] sm:$0xf]
    %v101 = vld [vmem:[%s1 + $0xbc] sm:$0xf]
    %v102 = vld [vmem:[%s1 + $0xc0] sm:$0xf]
    %v103 = vld [vmem:[%s1 + $0xc4] sm:$0xf]
    %v104 = vld [vmem:[%s1 + $0xc8] sm:$0xf]
    %v105 = vld [vmem:[%s1 + $0xcc] sm:$0xf]
    %v106 = vld [vmem:[%s1 + $0xd0] sm:$0xf]
    %v107 = vld [vmem:[%s1 + $0xd4] sm:$0xf]
    %v108 = vld [vmem:[%s1 + $0xd8] sm:$0xf]
    %v109 = vld [vmem:[%s1 + $0xdc] sm:$0xf]
    %v110 = vld [vmem:[%s1 + $0xe0] sm:$0xf]
    %v111 = vld [vmem:[%s1 + $0xe4] sm:$0xf]
    %v112 = vld [vmem:[%s1 + $0xe8] sm:$0xf]
    %v113 = vld [vmem:[%s1 + $0xec] sm:$0xf]
    %v114 = vld [vmem:[%s1 + $0xf0] sm:$0xf]
    %v115 = vld [vmem:[%s1 + $0xf4] sm:$0xf]
    %v116 = vld [vmem:[%s1 + $0xf8] sm:$0xf]
    %v117 = vld [vmem:[%s1 + $0xfc] sm:$0xf]
    %v118 = vld [vmem:[%s1 + $0x100] sm:$0xf]
    %v119 = vld [vmem:[%s1 + $0x104] sm:$0xf]
    %v120 = vld [vmem:[%s1 + $0x108] sm:$0xf]
    %v121 = vld [vmem:[%s1 + $0x10c] sm:$0xf]
    %v122 = vld [vmem:[%s1 + $0x110] sm:$0xf]
    %v123 = vld [vmem:[%s1 + $0x114] sm:$0xf]
    %v124 = vld [vmem:[%s1 + $0x118] sm:$0xf]
    %v125 = vld [vmem:[%s1 + $0x11c] sm:$0xf]
    %v126 = vld [vmem:[%s1 + $0x120] sm:$0xf]
    %v127 = vld [vmem:[%s1 + $0x124] sm:$0xf]
    %v128 = vld [vmem:[%s1 + $0x128] sm:$0xf]
    %v129 = vld [vmem:[%s1 + $0x12c] sm:$0xf]
    %v130 = vld [vmem:[%s1 + $0x130] sm:$0xf]
    %v131 = vld [vmem:[%s1 + $0x134] sm:$0xf]
    %v132 = vld [vmem:[%s1 + $0x138] sm:$0xf]
    %v133 = vld [vmem:[%s1 + $0x13c] sm:$0xf]
    %v146 = vunpack.c.l.b16 %v42
    %v147 = vunpack.c.h.b16 %v42
    %v148 = vunpack.c.l.b16 %v43
    %v149 = vunpack.c.h.b16 %v43
    %v150 = vunpack.c.l.b16 %v44
    %v151 = vunpack.c.l.b16 %v45
    %v152 = vunpack.c.h.b16 %v45
    %v153 = vunpack.c.l.b16 %v46
    %v154 = vunpack.c.h.b16 %v46
    %v155 = vunpack.c.l.b16 %v47
    %v156 = vunpack.c.l.b16 %v48
    %v157 = vunpack.c.h.b16 %v48
    %v158 = vunpack.c.l.b16 %v49
    %v159 = vunpack.c.h.b16 %v49
    %v160 = vunpack.c.l.b16 %v50
    %v161 = vunpack.c.l.b16 %v51
    %v162 = vunpack.c.h.b16 %v51
    %v163 = vunpack.c.l.b16 %v52
    %v164 = vunpack.c.h.b16 %v52
    %v165 = vunpack.c.l.b16 %v53
    %v166 = vpack.c.b16 %v151, %v146
    %v167 = vpack.c.b16 %v152, %v147
    %v168 = vpack.c.b16 %v153, %v148
    %v169 = vpack.c.b16 %v154, %v149
    %v170 = vpack.c.b16 %v155, %v150
    %v171 = vpack.c.b16 %v161, %v156
    %v172 = vpack.c.b16 %v162, %v157
    %v173 = vpack.c.b16 %v163, %v158
    %v174 = vpack.c.b16 %v164, %v159
    %v175 = vpack.c.b16 %v165, %v160
    %v266 = vunpack.c.l.b16 %v54
    %v267 = vunpack.c.l.b16 %v55
    %v268 = vunpack.c.l.b16 %v56
    %v269 = vunpack.c.l.b16 %v57
    %v270 = vunpack.c.l.b16 %v58
    %v271 = vunpack.c.l.b16 %v59
    %v272 = vunpack.c.l.b16 %v60
    %v273 = vunpack.c.l.b16 %v61
    %v274 = vunpack.c.l.b16 %v62
    %v275 = vunpack.c.l.b16 %v63
    %v276 = vunpack.c.l.b16 %v64
    %v277 = vunpack.c.l.b16 %v65
    %v278 = vunpack.c.l.b16 %v66
    %v279 = vunpack.c.l.b16 %v67
    %v280 = vunpack.c.l.b16 %v68
    %v281 = vunpack.c.l.b16 %v69
    %v282 = vunpack.c.l.b16 %v70
    %v283 = vunpack.c.l.b16 %v71
    %v284 = vunpack.c.l.b16 %v72
    %v285 = vunpack.c.l.b16 %v73
    %v286 = vunpack.c.l.b16 %v74
    %v287 = vunpack.c.l.b16 %v75
    %v288 = vunpack.c.l.b16 %v76
    %v289 = vunpack.c.l.b16 %v77
    %v290 = vunpack.c.l.b16 %v78
    %v291 = vunpack.c.l.b16 %v79
    %v292 = vunpack.c.l.b16 %v80
    %v293 = vunpack.c.l.b16 %v81
    %v294 = vunpack.c.l.b16 %v82
    %v295 = vunpack.c.l.b16 %v83
    %v296 = vunpack.c.l.b16 %v84
    %v297 = vunpack.c.l.b16 %v85
    %v298 = vunpack.c.l.b16 %v86
    %v299 = vunpack.c.l.b16 %v87
    %v300 = vunpack.c.l.b16 %v88
    %v301 = vunpack.c.l.b16 %v89
    %v302 = vunpack.c.l.b16 %v90
    %v303 = vunpack.c.l.b16 %v91
    %v304 = vunpack.c.l.b16 %v92
    %v305 = vunpack.c.l.b16 %v93
    %v306 = vunpack.c.l.b16 %v94
    %v307 = vunpack.c.l.b16 %v95
    %v308 = vunpack.c.l.b16 %v96
    %v309 = vunpack.c.l.b16 %v97
    %v310 = vunpack.c.l.b16 %v98
    %v311 = vunpack.c.l.b16 %v99
    %v312 = vunpack.c.l.b16 %v100
    %v313 = vunpack.c.l.b16 %v101
    %v314 = vunpack.c.l.b16 %v102
    %v315 = vunpack.c.l.b16 %v103
    %v316 = vunpack.c.l.b16 %v104
    %v317 = vunpack.c.l.b16 %v105
    %v318 = vunpack.c.l.b16 %v106
    %v319 = vunpack.c.l.b16 %v107
    %v320 = vunpack.c.l.b16 %v108
    %v321 = vunpack.c.l.b16 %v109
    %v322 = vunpack.c.l.b16 %v110
    %v323 = vunpack.c.l.b16 %v111
    %v324 = vunpack.c.l.b16 %v112
    %v325 = vunpack.c.l.b16 %v113
    %v326 = vunpack.c.l.b16 %v114
    %v327 = vunpack.c.l.b16 %v115
    %v328 = vunpack.c.l.b16 %v116
    %v329 = vunpack.c.l.b16 %v117
    %v330 = vunpack.c.l.b16 %v118
    %v331 = vunpack.c.l.b16 %v119
    %v332 = vunpack.c.l.b16 %v120
    %v333 = vunpack.c.l.b16 %v121
    %v334 = vunpack.c.l.b16 %v122
    %v335 = vunpack.c.l.b16 %v123
    %v336 = vunpack.c.l.b16 %v124
    %v337 = vunpack.c.l.b16 %v125
    %v338 = vunpack.c.l.b16 %v126
    %v339 = vunpack.c.l.b16 %v127
    %v340 = vunpack.c.l.b16 %v128
    %v341 = vunpack.c.l.b16 %v129
    %v342 = vunpack.c.l.b16 %v130
    %v343 = vunpack.c.l.b16 %v131
    %v344 = vunpack.c.l.b16 %v132
    %v345 = vunpack.c.l.b16 %v133
    %v346 = vpack.c.b16 %v267, %v266
    %v347 = vpack.c.b16 %v269, %v268
    %v348 = vpack.c.b16 %v271, %v270
    %v349 = vpack.c.b16 %v273, %v272
    %v350 = vpack.c.b16 %v275, %v274
    %v351 = vpack.c.b16 %v277, %v276
    %v352 = vpack.c.b16 %v279, %v278
    %v353 = vpack.c.b16 %v281, %v280
    %v354 = vpack.c.b16 %v283, %v282
    %v355 = vpack.c.b16 %v285, %v284
    %v356 = vpack.c.b16 %v287, %v286
    %v357 = vpack.c.b16 %v289, %v288
    %v358 = vpack.c.b16 %v291, %v290
    %v359 = vpack.c.b16 %v293, %v292
    %v360 = vpack.c.b16 %v295, %v294
    %v361 = vpack.c.b16 %v297, %v296
    %v362 = vpack.c.b16 %v299, %v298
    %v363 = vpack.c.b16 %v301, %v300
    %v364 = vpack.c.b16 %v303, %v302
    %v365 = vpack.c.b16 %v305, %v304
    %v366 = vpack.c.b16 %v307, %v306
    %v367 = vpack.c.b16 %v309, %v308
    %v368 = vpack.c.b16 %v311, %v310
    %v369 = vpack.c.b16 %v313, %v312
    %v370 = vpack.c.b16 %v315, %v314
    %v371 = vpack.c.b16 %v317, %v316
    %v372 = vpack.c.b16 %v319, %v318
    %v373 = vpack.c.b16 %v321, %v320
    %v374 = vpack.c.b16 %v323, %v322
    %v375 = vpack.c.b16 %v325, %v324
    %v376 = vpack.c.b16 %v327, %v326
    %v377 = vpack.c.b16 %v329, %v328
    %v378 = vpack.c.b16 %v331, %v330
    %v379 = vpack.c.b16 %v333, %v332
    %v380 = vpack.c.b16 %v335, %v334
    %v381 = vpack.c.b16 %v337, %v336
    %v382 = vpack.c.b16 %v339, %v338
    %v383 = vpack.c.b16 %v341, %v340
    %v384 = vpack.c.b16 %v343, %v342
    %v385 = vpack.c.b16 %v345, %v344
    %426 = vmatprep.subr.bf16.mxu0 0
    %427 = vmatpush1.bf16.msra.mxu0 %v346
    %428 = vmatprep.subr.bf16.mxu0 0
    %429 = vmatpush1.bf16.msra.mxu0 %v347
    %430 = vmatprep.subr.bf16.mxu0 0
    %431 = vmatpush1.bf16.msra.mxu0 %v348
    %432 = vmatprep.subr.bf16.mxu0 0
    %433 = vmatpush1.bf16.msra.mxu0 %v349
    %434 = vmatprep.subr.bf16.mxu0 0
    %435 = vmatpush1.bf16.msra.mxu0 %v350
    %436 = vmatprep.subr.bf16.mxu0 0
    %437 = vmatpush1.bf16.msra.mxu0 %v351
    %438 = vmatprep.subr.bf16.mxu0 0
    %439 = vmatpush1.bf16.msra.mxu0 %v352
    %440 = vmatprep.subr.bf16.mxu0 0
    %441 = vmatpush1.bf16.msra.mxu0 %v353
    %442 = vmatprep.subr.bf16.mxu0 0
    %443 = vmatpush1.bf16.msra.mxu0 %v354
    %444 = vmatprep.subr.bf16.mxu0 0
    %445 = vmatpush1.bf16.msra.mxu0 %v355
    %446 = vmatprep.subr.bf16.mxu0 0
    %447 = vmatpush1.bf16.msra.mxu0 %v356
    %448 = vmatprep.subr.bf16.mxu0 0
    %449 = vmatpush1.bf16.msra.mxu0 %v357
    %450 = vmatprep.subr.bf16.mxu0 0
    %451 = vmatpush1.bf16.msra.mxu0 %v358
    %452 = vmatprep.subr.bf16.mxu0 0
    %453 = vmatpush1.bf16.msra.mxu0 %v359
    %454 = vmatprep.subr.bf16.mxu0 0
    %455 = vmatpush1.bf16.msra.mxu0 %v360
    %456 = vmatprep.subr.bf16.mxu0 0
    %457 = vmatpush1.bf16.msra.mxu0 %v361
    %458 = vmatprep.mubr.bf16.mxu0 %v167
    %459 = vmatmul.mubr.bf16.gmra.mrb[0].mxu0 %v166
    %v460 = vpop.f32.mrb[0].mxu0
    %v461 = vadd.f32 0.0, %v460
    %v462 = vpop.f32.mrb[0].mxu0
    %v463 = vpop.f32.mrb[0].mxu0
    %v464 = vadd.f32 0.0, %v463
    %v465 = vpop.f32.mrb[0].mxu0
    %466 = vmatprep.mubr.bf16.mxu0 %v172
    %467 = vmatmul.mubr.bf16.gmra.mrb[0].mxu0 %v171
    %v468 = vpop.f32.mrb[0].mxu0
    %v469 = vadd.f32 0.0, %v468
    %v470 = vpop.f32.mrb[0].mxu0
    %v471 = vpop.f32.mrb[0].mxu0
    %v472 = vadd.f32 0.0, %v471
    %v473 = vpop.f32.mrb[0].mxu0
    %474 = vdwg.mxu0
    %475 = vmatprep.subr.bf16.mxu0 0
    %476 = vmatpush1.bf16.msra.mxu0 %v362
    %477 = vmatprep.subr.bf16.mxu0 0
    %478 = vmatpush1.bf16.msra.mxu0 %v363
    %479 = vmatprep.subr.bf16.mxu0 0
    %480 = vmatpush1.bf16.msra.mxu0 %v364
    %481 = vmatprep.subr.bf16.mxu0 0
    %482 = vmatpush1.bf16.msra.mxu0 %v365
    %483 = vmatprep.subr.bf16.mxu0 0
    %484 = vmatpush1.bf16.msra.mxu0 %v366
    %485 = vmatprep.subr.bf16.mxu0 0
    %486 = vmatpush1.bf16.msra.mxu0 %v367
    %487 = vmatprep.subr.bf16.mxu0 0
    %488 = vmatpush1.bf16.msra.mxu0 %v368
    %489 = vmatprep.subr.bf16.mxu0 0
    %490 = vmatpush1.bf16.msra.mxu0 %v369
    %491 = vmatprep.subr.bf16.mxu0 0
    %492 = vmatpush1.bf16.msra.mxu0 %v370
    %493 = vmatprep.subr.bf16.mxu0 0
    %494 = vmatpush1.bf16.msra.mxu0 %v371
    %495 = vmatprep.subr.bf16.mxu0 0
    %496 = vmatpush1.bf16.msra.mxu0 %v372
    %497 = vmatprep.subr.bf16.mxu0 0
    %498 = vmatpush1.bf16.msra.mxu0 %v373
    %499 = vmatprep.subr.bf16.mxu0 0
    %500 = vmatpush1.bf16.msra.mxu0 %v374
    %501 = vmatprep.subr.bf16.mxu0 0
    %502 = vmatpush1.bf16.msra.mxu0 %v375
    %503 = vmatprep.subr.bf16.mxu0 0
    %504 = vmatpush1.bf16.msra.mxu0 %v376
    %505 = vmatprep.subr.bf16.mxu0 0
    %506 = vmatpush1.bf16.msra.mxu0 %v377
    %507 = vmatprep.mubr.bf16.mxu0 %v169
    %508 = vmatmul.mubr.bf16.gmra.mrb[0].mxu0 %v168
    %v509 = vpop.f32.mrb[0].mxu0
    %v510 = vadd.f32 %v461, %v509
    %v511 = vpop.f32.mrb[0].mxu0
    %v512 = vpop.f32.mrb[0].mxu0
    %v513 = vadd.f32 %v464, %v512
    %v514 = vpop.f32.mrb[0].mxu0
    %515 = vmatprep.mubr.bf16.mxu0 %v174
    %516 = vmatmul.mubr.bf16.gmra.mrb[0].mxu0 %v173
    %v517 = vpop.f32.mrb[0].mxu0
    %v518 = vadd.f32 %v469, %v517
    %v519 = vpop.f32.mrb[0].mxu0
    %v520 = vpop.f32.mrb[0].mxu0
    %v521 = vadd.f32 %v472, %v520
    %v522 = vpop.f32.mrb[0].mxu0
    %523 = vdwg.mxu0
    %524 = vmatprep.subr.bf16.mxu0 0
    %525 = vmatpush1.bf16.msra.mxu0 %v378
    %526 = vmatprep.subr.bf16.mxu0 0
    %527 = vmatpush1.bf16.msra.mxu0 %v379
    %528 = vmatprep.subr.bf16.mxu0 0
    %529 = vmatpush1.bf16.msra.mxu0 %v380
    %530 = vmatprep.subr.bf16.mxu0 0
    %531 = vmatpush1.bf16.msra.mxu0 %v381
    %532 = vmatprep.subr.bf16.mxu0 0
    %533 = vmatpush1.bf16.msra.mxu0 %v382
    %534 = vmatprep.subr.bf16.mxu0 0
    %535 = vmatpush1.bf16.msra.mxu0 %v383
    %536 = vmatprep.subr.bf16.mxu0 0
    %537 = vmatpush1.bf16.msra.mxu0 %v384
    %538 = vmatprep.subr.bf16.mxu0 0
    %539 = vmatpush1.bf16.msra.mxu0 %v385
    %540 = vmatprep.subr.bf16.mxu0 0
    %541 = vmatpush1.bf16.msra.mxu0 0
    %542 = vmatprep.subr.bf16.mxu0 0
    %543 = vmatpush1.bf16.msra.mxu0 0
    %544 = vmatprep.subr.bf16.mxu0 0
    %545 = vmatpush1.bf16.msra.mxu0 0
    %546 = vmatprep.subr.bf16.mxu0 0
    %547 = vmatpush1.bf16.msra.mxu0 0
    %548 = vmatprep.subr.bf16.mxu0 0
    %549 = vmatpush1.bf16.msra.mxu0 0
    %550 = vmatprep.subr.bf16.mxu0 0
    %551 = vmatpush1.bf16.msra.mxu0 0
    %552 = vmatprep.subr.bf16.mxu0 0
    %553 = vmatpush1.bf16.msra.mxu0 0
    %554 = vmatprep.subr.bf16.mxu0 0
    %555 = vmatpush1.bf16.msra.mxu0 0
    %556 = vmatprep.mubr.bf16.mxu0 0
    %557 = vmatmul.mubr.bf16.gmra.mrb[0].mxu0 %v170
    %v558 = vpop.f32.mrb[0].mxu0
    %v559 = vadd.f32 %v510, %v558
    %v560 = vpop.f32.mrb[0].mxu0
    %v561 = vpop.f32.mrb[0].mxu0
    %v562 = vadd.f32 %v513, %v561
    %v563 = vpop.f32.mrb[0].mxu0
    %564 = vmatprep.mubr.bf16.mxu0 0
    %565 = vmatmul.mubr.bf16.gmra.mrb[0].mxu0 %v175
    %v566 = vpop.f32.mrb[0].mxu0
    %v567 = vadd.f32 %v518, %v566
    %v568 = vpop.f32.mrb[0].mxu0
    %v569 = vpop.f32.mrb[0].mxu0
    %v570 = vadd.f32 %v521, %v569
    %v571 = vpop.f32.mrb[0].mxu0
    %572 = vdwg.mxu0
    %v573 = vld [vmem:[#allocation2] sm:$0x1]
    %v575 = vlaneseq
    %v576 = vshrl.u32 %v575, 7
    %v577 = vsub.s32 0, %v576
    %v578 = vrot.slane %v573, %v577
    %v580 = vmul.f32 %v559, %v578
    %v581 = vmul.f32 %v562, %v578
    %v582 = vmul.f32 %v567, %v578
    %v583 = vmul.f32 %v570, %v578
    %v584 = vld [vmem:[#allocation4] sm:$0x1]
    %v586 = vlaneseq
    %v587 = vshrl.u32 %v586, 7
    %v588 = vsub.s32 0, %v587
    %v589 = vrot.slane %v584, %v588
    %v591 = vadd.f32 %v580, %v589
    %v592 = vadd.f32 %v581, %v589
    %v593 = vadd.f32 %v582, %v589
    %v594 = vadd.f32 %v583, %v589
    %vm595 = vcmp.gt.f32.partialorder %v591, 0.0
    %vm596 = vcmp.gt.f32.partialorder %v592, 0.0
    %vm597 = vcmp.gt.f32.partialorder %v593, 0.0
    %vm598 = vcmp.gt.f32.partialorder %v594, 0.0
    %v599 = vmul.f32 %v591, 0.1
    %v600 = vmul.f32 %v592, 0.1
    %v601 = vmul.f32 %v593, 0.1
    %v602 = vmul.f32 %v594, 0.1
    %v603 = vsel %vm595, %v591, %v599
    %v604 = vsel %vm596, %v592, %v600
    %v605 = vsel %vm597, %v593, %v601
    %v606 = vsel %vm598, %v594, %v602
    %v607 = vpack.c.bf16 %v604, %v603
    %v608 = vpack.c.bf16 %v606, %v605
    %v611 = vunpack.c.l.b16 %v607
    %v612 = vunpack.c.h.b16 %v607
    %v613 = vunpack.c.l.b16 %v608
    %v614 = vunpack.c.h.b16 %v608
    %v615 = vpack.c.b16 %v611, %v611
    %v616 = vpack.c.b16 %v612, %v612
    %v617 = vpack.c.b16 %v613, %v613
    %v618 = vpack.c.b16 %v614, %v614
    %623 = vst [vmem:[%s4] sm:$0xf] %v615
    %624 = vst [vmem:[%s4 + $0x4] sm:$0xf] %v616
    %625 = vst [vmem:[%s4 + $0x8] sm:$0xf] %v617
    %626 = vst [vmem:[%s4 + $0xc] sm:$0xf] %v618
    // Predicated region
    $region26: #{darknet_forward.34} parent=1 // pred_check
      _
    $region27: #{darknet_forward.34} parent=1 // pred_check_branch
      %628 = sbr.rel (0) target = $region29
    $region28: #{darknet_forward.34} parent=1 // pred_region
      _
    $region29: #{darknet_forward.34} parent=1 // pred_fallthru
      _
    // Predicated region
    $region30: #{darknet_forward.34} parent=1 // pred_check
      _
    $region31: #{darknet_forward.34} parent=1 // pred_check_branch
      %630 = sbr.rel (0) target = $region33
    $region32: #{darknet_forward.34} parent=1 // pred_region
      _
    $region33: #{darknet_forward.34} parent=1 // pred_fallthru
      _
    %631 = vsyncpa [#allocation3], 1
    %632 = vsyncpa [#allocation5], 1

// kernel: darknet_forward.38
$region0: #{darknet_forward.38}
  #allocation0 [shape = 'u32[]', space=smem, size = 0x4, offset = 0x4, fixed_abs, tag = 'smem constant byte address 0x4 - core index']
  #allocation1 [shape = 'u32[144,128]{1,0:T(1,128)}', space=vmem, size = 0x12000, scoped, tag = 'internal scratch']
  %s0 = inlined_call_operand.vmem [shape: bf16[32,640], index: 0, kind: input, shape index: {}]
  %s1 = inlined_call_operand.vmem [shape: bf16[640,128], index: 1, kind: input, shape index: {}]
  %s2 = inlined_call_operand.vmem [shape: f32[1,128], index: 2, kind: input, shape index: {}]
  %s3 = inlined_call_operand.vmem [shape: f32[1,128], index: 3, kind: input, shape index: {}]
  %s4 = inlined_call_operand.vmem [shape: bf16[32,128], index: 4, kind: output, shape index: {}]
  %s5 = sld [smem:[#allocation0]]
  $region26: #{darknet_forward.38} parent=0
    _
  %s7 = ssub.s32 1, %s5
  %s8 = scalar_select 0, %s7, %s5
  // Predicated region
  $region2: #{darknet_forward.38} parent=0 // pred_check
    _
  $region3: #{darknet_forward.38} parent=0 // pred_check_branch
    %10 = sbr.rel (0) target = $region5
  $region4: #{darknet_forward.38} parent=0 // pred_region
    _
  $region5: #{darknet_forward.38} parent=0 // pred_fallthru
    _
  // Predicated region
  $region6: #{darknet_forward.38} parent=0 // pred_check
    _
  $region7: #{darknet_forward.38} parent=0 // pred_check_branch
    %12 = sbr.rel (0) target = $region9
  $region8: #{darknet_forward.38} parent=0 // pred_region
    _
  $region9: #{darknet_forward.38} parent=0 // pred_fallthru
    _
  // Predicated region
  $region10: #{darknet_forward.38} parent=0 // pred_check
    _
  $region11: #{darknet_forward.38} parent=0 // pred_check_branch
    %14 = sbr.rel (0) target = $region13
  $region12: #{darknet_forward.38} parent=0 // pred_region
    _
  $region13: #{darknet_forward.38} parent=0 // pred_fallthru
    _
  // Predicated region
  $region14: #{darknet_forward.38} parent=0 // pred_check
    _
  $region15: #{darknet_forward.38} parent=0 // pred_check_branch
    %16 = sbr.rel (0) target = $region17
  $region16: #{darknet_forward.38} parent=0 // pred_region
    _
  $region17: #{darknet_forward.38} parent=0 // pred_fallthru
    _
  %v18 = vld [vmem:[%s0] sm:$0xff]
  %v19 = vld [vmem:[%s0 + $0x8] sm:$0xff]
  %v20 = vld [vmem:[%s0 + $0x10] sm:$0xf]
  %v21 = vld [vmem:[%s0 + $0x14] sm:$0xff]
  %v22 = vld [vmem:[%s0 + $0x1c] sm:$0xff]
  %v23 = vld [vmem:[%s0 + $0x24] sm:$0xf]
  %v24 = vld [vmem:[%s0 + $0x28] sm:$0xff]
  %v25 = vld [vmem:[%s0 + $0x30] sm:$0xff]
  %v26 = vld [vmem:[%s0 + $0x38] sm:$0xf]
  %v27 = vld [vmem:[%s0 + $0x3c] sm:$0xff]
  %v28 = vld [vmem:[%s0 + $0x44] sm:$0xff]
  %v29 = vld [vmem:[%s0 + $0x4c] sm:$0xf]
  %v30 = vld [vmem:[%s1] sm:$0xf]
  %v31 = vld [vmem:[%s1 + $0x4] sm:$0xf]
  %v32 = vld [vmem:[%s1 + $0x8] sm:$0xf]
  %v33 = vld [vmem:[%s1 + $0xc] sm:$0xf]
  %v34 = vld [vmem:[%s1 + $0x10] sm:$0xf]
  %v35 = vld [vmem:[%s1 + $0x14] sm:$0xf]
  %v36 = vld [vmem:[%s1 + $0x18] sm:$0xf]
  %v37 = vld [vmem:[%s1 + $0x1c] sm:$0xf]
  %v38 = vld [vmem:[%s1 + $0x20] sm:$0xf]
  %v39 = vld [vmem:[%s1 + $0x24] sm:$0xf]
  %v40 = vld [vmem:[%s1 + $0x28] sm:$0xf]
  %v41 = vld [vmem:[%s1 + $0x2c] sm:$0xf]
  %v42 = vld [vmem:[%s1 + $0x30] sm:$0xf]
  %v43 = vld [vmem:[%s1 + $0x34] sm:$0xf]
  %v44 = vld [vmem:[%s1 + $0x38] sm:$0xf]
  %v45 = vld [vmem:[%s1 + $0x3c] sm:$0xf]
  %v46 = vld [vmem:[%s1 + $0x40] sm:$0xf]
  %v47 = vld [vmem:[%s1 + $0x44] sm:$0xf]
  %v48 = vld [vmem:[%s1 + $0x48] sm:$0xf]
  %v49 = vld [vmem:[%s1 + $0x4c] sm:$0xf]
  %v50 = vld [vmem:[%s1 + $0x50] sm:$0xf]
  %v51 = vld [vmem:[%s1 + $0x54] sm:$0xf]
  %v52 = vld [vmem:[%s1 + $0x58] sm:$0xf]
  %v53 = vld [vmem:[%s1 + $0x5c] sm:$0xf]
  %v54 = vld [vmem:[%s1 + $0x60] sm:$0xf]
  %v55 = vld [vmem:[%s1 + $0x64] sm:$0xf]
  %v56 = vld [vmem:[%s1 + $0x68] sm:$0xf]
  %v57 = vld [vmem:[%s1 + $0x6c] sm:$0xf]
  %v58 = vld [vmem:[%s1 + $0x70] sm:$0xf]
  %v59 = vld [vmem:[%s1 + $0x74] sm:$0xf]
  %v60 = vld [vmem:[%s1 + $0x78] sm:$0xf]
  %v61 = vld [vmem:[%s1 + $0x7c] sm:$0xf]
  %v62 = vld [vmem:[%s1 + $0x80] sm:$0xf]
  %v63 = vld [vmem:[%s1 + $0x84] sm:$0xf]
  %v64 = vld [vmem:[%s1 + $0x88] sm:$0xf]
  %v65 = vld [vmem:[%s1 + $0x8c] sm:$0xf]
  %v66 = vld [vmem:[%s1 + $0x90] sm:$0xf]
  %v67 = vld [vmem:[%s1 + $0x94] sm:$0xf]
  %v68 = vld [vmem:[%s1 + $0x98] sm:$0xf]
  %v69 = vld [vmem:[%s1 + $0x9c] sm:$0xf]
  %v70 = vld [vmem:[%s1 + $0xa0] sm:$0xf]
  %v71 = vld [vmem:[%s1 + $0xa4] sm:$0xf]
  %v72 = vld [vmem:[%s1 + $0xa8] sm:$0xf]
  %v73 = vld [vmem:[%s1 + $0xac] sm:$0xf]
  %v74 = vld [vmem:[%s1 + $0xb0] sm:$0xf]
  %v75 = vld [vmem:[%s1 + $0xb4] sm:$0xf]
  %v76 = vld [vmem:[%s1 + $0xb8] sm:$0xf]
  %v77 = vld [vmem:[%s1 + $0xbc] sm:$0xf]
  %v78 = vld [vmem:[%s1 + $0xc0] sm:$0xf]
  %v79 = vld [vmem:[%s1 + $0xc4] sm:$0xf]
  %v80 = vld [vmem:[%s1 + $0xc8] sm:$0xf]
  %v81 = vld [vmem:[%s1 + $0xcc] sm:$0xf]
  %v82 = vld [vmem:[%s1 + $0xd0] sm:$0xf]
  %v83 = vld [vmem:[%s1 + $0xd4] sm:$0xf]
  %v84 = vld [vmem:[%s1 + $0xd8] sm:$0xf]
  %v85 = vld [vmem:[%s1 + $0xdc] sm:$0xf]
  %v86 = vld [vmem:[%s1 + $0xe0] sm:$0xf]
  %v87 = vld [vmem:[%s1 + $0xe4] sm:$0xf]
  %v88 = vld [vmem:[%s1 + $0xe8] sm:$0xf]
  %v89 = vld [vmem:[%s1 + $0xec] sm:$0xf]
  %v90 = vld [vmem:[%s1 + $0xf0] sm:$0xf]
  %v91 = vld [vmem:[%s1 + $0xf4] sm:$0xf]
  %v92 = vld [vmem:[%s1 + $0xf8] sm:$0xf]
  %v93 = vld [vmem:[%s1 + $0xfc] sm:$0xf]
  %v94 = vld [vmem:[%s1 + $0x100] sm:$0xf]
  %v95 = vld [vmem:[%s1 + $0x104] sm:$0xf]
  %v96 = vld [vmem:[%s1 + $0x108] sm:$0xf]
  %v97 = vld [vmem:[%s1 + $0x10c] sm:$0xf]
  %v98 = vld [vmem:[%s1 + $0x110] sm:$0xf]
  %v99 = vld [vmem:[%s1 + $0x114] sm:$0xf]
  %v100 = vld [vmem:[%s1 + $0x118] sm:$0xf]
  %v101 = vld [vmem:[%s1 + $0x11c] sm:$0xf]
  %v102 = vld [vmem:[%s1 + $0x120] sm:$0xf]
  %v103 = vld [vmem:[%s1 + $0x124] sm:$0xf]
  %v104 = vld [vmem:[%s1 + $0x128] sm:$0xf]
  %v105 = vld [vmem:[%s1 + $0x12c] sm:$0xf]
  %v106 = vld [vmem:[%s1 + $0x130] sm:$0xf]
  %v107 = vld [vmem:[%s1 + $0x134] sm:$0xf]
  %v108 = vld [vmem:[%s1 + $0x138] sm:$0xf]
  %v109 = vld [vmem:[%s1 + $0x13c] sm:$0xf]
  %v122 = vunpack.c.l.b16 %v18
  %v123 = vunpack.c.h.b16 %v18
  %v124 = vunpack.c.l.b16 %v19
  %v125 = vunpack.c.h.b16 %v19
  %v126 = vunpack.c.l.b16 %v20
  %v127 = vunpack.c.l.b16 %v21
  %v128 = vunpack.c.h.b16 %v21
  %v129 = vunpack.c.l.b16 %v22
  %v130 = vunpack.c.h.b16 %v22
  %v131 = vunpack.c.l.b16 %v23
  %v132 = vunpack.c.l.b16 %v24
  %v133 = vunpack.c.h.b16 %v24
  %v134 = vunpack.c.l.b16 %v25
  %v135 = vunpack.c.h.b16 %v25
  %v136 = vunpack.c.l.b16 %v26
  %v137 = vunpack.c.l.b16 %v27
  %v138 = vunpack.c.h.b16 %v27
  %v139 = vunpack.c.l.b16 %v28
  %v140 = vunpack.c.h.b16 %v28
  %v141 = vunpack.c.l.b16 %v29
  %v142 = vpack.c.b16 %v127, %v122
  %v143 = vpack.c.b16 %v128, %v123
  %v144 = vpack.c.b16 %v129, %v124
  %v145 = vpack.c.b16 %v130, %v125
  %v146 = vpack.c.b16 %v131, %v126
  %v147 = vpack.c.b16 %v137, %v132
  %v148 = vpack.c.b16 %v138, %v133
  %v149 = vpack.c.b16 %v139, %v134
  %v150 = vpack.c.b16 %v140, %v135
  %v151 = vpack.c.b16 %v141, %v136
  %v242 = vunpack.c.l.b16 %v30
  %v243 = vunpack.c.l.b16 %v31
  %v244 = vunpack.c.l.b16 %v32
  %v245 = vunpack.c.l.b16 %v33
  %v246 = vunpack.c.l.b16 %v34
  %v247 = vunpack.c.l.b16 %v35
  %v248 = vunpack.c.l.b16 %v36
  %v249 = vunpack.c.l.b16 %v37
  %v250 = vunpack.c.l.b16 %v38
  %v251 = vunpack.c.l.b16 %v39
  %v252 = vunpack.c.l.b16 %v40
  %v253 = vunpack.c.l.b16 %v41
  %v254 = vunpack.c.l.b16 %v42
  %v255 = vunpack.c.l.b16 %v43
  %v256 = vunpack.c.l.b16 %v44
  %v257 = vunpack.c.l.b16 %v45
  %v258 = vunpack.c.l.b16 %v46
  %v259 = vunpack.c.l.b16 %v47
  %v260 = vunpack.c.l.b16 %v48
  %v261 = vunpack.c.l.b16 %v49
  %v262 = vunpack.c.l.b16 %v50
  %v263 = vunpack.c.l.b16 %v51
  %v264 = vunpack.c.l.b16 %v52
  %v265 = vunpack.c.l.b16 %v53
  %v266 = vunpack.c.l.b16 %v54
  %v267 = vunpack.c.l.b16 %v55
  %v268 = vunpack.c.l.b16 %v56
  %v269 = vunpack.c.l.b16 %v57
  %v270 = vunpack.c.l.b16 %v58
  %v271 = vunpack.c.l.b16 %v59
  %v272 = vunpack.c.l.b16 %v60
  %v273 = vunpack.c.l.b16 %v61
  %v274 = vunpack.c.l.b16 %v62
  %v275 = vunpack.c.l.b16 %v63
  %v276 = vunpack.c.l.b16 %v64
  %v277 = vunpack.c.l.b16 %v65
  %v278 = vunpack.c.l.b16 %v66
  %v279 = vunpack.c.l.b16 %v67
  %v280 = vunpack.c.l.b16 %v68
  %v281 = vunpack.c.l.b16 %v69
  %v282 = vunpack.c.l.b16 %v70
  %v283 = vunpack.c.l.b16 %v71
  %v284 = vunpack.c.l.b16 %v72
  %v285 = vunpack.c.l.b16 %v73
  %v286 = vunpack.c.l.b16 %v74
  %v287 = vunpack.c.l.b16 %v75
  %v288 = vunpack.c.l.b16 %v76
  %v289 = vunpack.c.l.b16 %v77
  %v290 = vunpack.c.l.b16 %v78
  %v291 = vunpack.c.l.b16 %v79
  %v292 = vunpack.c.l.b16 %v80
  %v293 = vunpack.c.l.b16 %v81
  %v294 = vunpack.c.l.b16 %v82
  %v295 = vunpack.c.l.b16 %v83
  %v296 = vunpack.c.l.b16 %v84
  %v297 = vunpack.c.l.b16 %v85
  %v298 = vunpack.c.l.b16 %v86
  %v299 = vunpack.c.l.b16 %v87
  %v300 = vunpack.c.l.b16 %v88
  %v301 = vunpack.c.l.b16 %v89
  %v302 = vunpack.c.l.b16 %v90
  %v303 = vunpack.c.l.b16 %v91
  %v304 = vunpack.c.l.b16 %v92
  %v305 = vunpack.c.l.b16 %v93
  %v306 = vunpack.c.l.b16 %v94
  %v307 = vunpack.c.l.b16 %v95
  %v308 = vunpack.c.l.b16 %v96
  %v309 = vunpack.c.l.b16 %v97
  %v310 = vunpack.c.l.b16 %v98
  %v311 = vunpack.c.l.b16 %v99
  %v312 = vunpack.c.l.b16 %v100
  %v313 = vunpack.c.l.b16 %v101
  %v314 = vunpack.c.l.b16 %v102
  %v315 = vunpack.c.l.b16 %v103
  %v316 = vunpack.c.l.b16 %v104
  %v317 = vunpack.c.l.b16 %v105
  %v318 = vunpack.c.l.b16 %v106
  %v319 = vunpack.c.l.b16 %v107
  %v320 = vunpack.c.l.b16 %v108
  %v321 = vunpack.c.l.b16 %v109
  %v322 = vpack.c.b16 %v243, %v242
  %v323 = vpack.c.b16 %v245, %v244
  %v324 = vpack.c.b16 %v247, %v246
  %v325 = vpack.c.b16 %v249, %v248
  %v326 = vpack.c.b16 %v251, %v250
  %v327 = vpack.c.b16 %v253, %v252
  %v328 = vpack.c.b16 %v255, %v254
  %v329 = vpack.c.b16 %v257, %v256
  %v330 = vpack.c.b16 %v259, %v258
  %v331 = vpack.c.b16 %v261, %v260
  %v332 = vpack.c.b16 %v263, %v262
  %v333 = vpack.c.b16 %v265, %v264
  %v334 = vpack.c.b16 %v267, %v266
  %v335 = vpack.c.b16 %v269, %v268
  %v336 = vpack.c.b16 %v271, %v270
  %v337 = vpack.c.b16 %v273, %v272
  %v338 = vpack.c.b16 %v275, %v274
  %v339 = vpack.c.b16 %v277, %v276
  %v340 = vpack.c.b16 %v279, %v278
  %v341 = vpack.c.b16 %v281, %v280
  %v342 = vpack.c.b16 %v283, %v282
  %v343 = vpack.c.b16 %v285, %v284
  %v344 = vpack.c.b16 %v287, %v286
  %v345 = vpack.c.b16 %v289, %v288
  %v346 = vpack.c.b16 %v291, %v290
  %v347 = vpack.c.b16 %v293, %v292
  %v348 = vpack.c.b16 %v295, %v294
  %v349 = vpack.c.b16 %v297, %v296
  %v350 = vpack.c.b16 %v299, %v298
  %v351 = vpack.c.b16 %v301, %v300
  %v352 = vpack.c.b16 %v303, %v302
  %v353 = vpack.c.b16 %v305, %v304
  %v354 = vpack.c.b16 %v307, %v306
  %v355 = vpack.c.b16 %v309, %v308
  %v356 = vpack.c.b16 %v311, %v310
  %v357 = vpack.c.b16 %v313, %v312
  %v358 = vpack.c.b16 %v315, %v314
  %v359 = vpack.c.b16 %v317, %v316
  %v360 = vpack.c.b16 %v319, %v318
  %v361 = vpack.c.b16 %v321, %v320
  %402 = vmatprep.subr.bf16.mxu0 0
  %403 = vmatpush1.bf16.msra.mxu0 %v322
  %404 = vmatprep.subr.bf16.mxu0 0
  %405 = vmatpush1.bf16.msra.mxu0 %v323
  %406 = vmatprep.subr.bf16.mxu0 0
  %407 = vmatpush1.bf16.msra.mxu0 %v324
  %408 = vmatprep.subr.bf16.mxu0 0
  %409 = vmatpush1.bf16.msra.mxu0 %v325
  %410 = vmatprep.subr.bf16.mxu0 0
  %411 = vmatpush1.bf16.msra.mxu0 %v326
  %412 = vmatprep.subr.bf16.mxu0 0
  %413 = vmatpush1.bf16.msra.mxu0 %v327
  %414 = vmatprep.subr.bf16.mxu0 0
  %415 = vmatpush1.bf16.msra.mxu0 %v328
  %416 = vmatprep.subr.bf16.mxu0 0
  %417 = vmatpush1.bf16.msra.mxu0 %v329
  %418 = vmatprep.subr.bf16.mxu0 0
  %419 = vmatpush1.bf16.msra.mxu0 %v330
  %420 = vmatprep.subr.bf16.mxu0 0
  %421 = vmatpush1.bf16.msra.mxu0 %v331
  %422 = vmatprep.subr.bf16.mxu0 0
  %423 = vmatpush1.bf16.msra.mxu0 %v332
  %424 = vmatprep.subr.bf16.mxu0 0
  %425 = vmatpush1.bf16.msra.mxu0 %v333
  %426 = vmatprep.subr.bf16.mxu0 0
  %427 = vmatpush1.bf16.msra.mxu0 %v334
  %428 = vmatprep.subr.bf16.mxu0 0
  %429 = vmatpush1.bf16.msra.mxu0 %v335
  %430 = vmatprep.subr.bf16.mxu0 0
  %431 = vmatpush1.bf16.msra.mxu0 %v336
  %432 = vmatprep.subr.bf16.mxu0 0
  %433 = vmatpush1.bf16.msra.mxu0 %v337
  %434 = vmatprep.mubr.bf16.mxu0 %v143
  %435 = vmatmul.mubr.bf16.gmra.mrb[0].mxu0 %v142
  %v436 = vpop.f32.mrb[0].mxu0
  %v437 = vadd.f32 0.0, %v436
  %v438 = vpop.f32.mrb[0].mxu0
  %v439 = vpop.f32.mrb[0].mxu0
  %v440 = vadd.f32 0.0, %v439
  %v441 = vpop.f32.mrb[0].mxu0
  %442 = vmatprep.mubr.bf16.mxu0 %v148
  %443 = vmatmul.mubr.bf16.gmra.mrb[0].mxu0 %v147
  %v444 = vpop.f32.mrb[0].mxu0
  %v445 = vadd.f32 0.0, %v444
  %v446 = vpop.f32.mrb[0].mxu0
  %v447 = vpop.f32.mrb[0].mxu0
  %v448 = vadd.f32 0.0, %v447
  %v449 = vpop.f32.mrb[0].mxu0
  %450 = vdwg.mxu0
  %451 = vmatprep.subr.bf16.mxu0 0
  %452 = vmatpush1.bf16.msra.mxu0 %v338
  %453 = vmatprep.subr.bf16.mxu0 0
  %454 = vmatpush1.bf16.msra.mxu0 %v339
  %455 = vmatprep.subr.bf16.mxu0 0
  %456 = vmatpush1.bf16.msra.mxu0 %v340
  %457 = vmatprep.subr.bf16.mxu0 0
  %458 = vmatpush1.bf16.msra.mxu0 %v341
  %459 = vmatprep.subr.bf16.mxu0 0
  %460 = vmatpush1.bf16.msra.mxu0 %v342
  %461 = vmatprep.subr.bf16.mxu0 0
  %462 = vmatpush1.bf16.msra.mxu0 %v343
  %463 = vmatprep.subr.bf16.mxu0 0
  %464 = vmatpush1.bf16.msra.mxu0 %v344
  %465 = vmatprep.subr.bf16.mxu0 0
  %466 = vmatpush1.bf16.msra.mxu0 %v345
  %467 = vmatprep.subr.bf16.mxu0 0
  %468 = vmatpush1.bf16.msra.mxu0 %v346
  %469 = vmatprep.subr.bf16.mxu0 0
  %470 = vmatpush1.bf16.msra.mxu0 %v347
  %471 = vmatprep.subr.bf16.mxu0 0
  %472 = vmatpush1.bf16.msra.mxu0 %v348
  %473 = vmatprep.subr.bf16.mxu0 0
  %474 = vmatpush1.bf16.msra.mxu0 %v349
  %475 = vmatprep.subr.bf16.mxu0 0
  %476 = vmatpush1.bf16.msra.mxu0 %v350
  %477 = vmatprep.subr.bf16.mxu0 0
  %478 = vmatpush1.bf16.msra.mxu0 %v351
  %479 = vmatprep.subr.bf16.mxu0 0
  %480 = vmatpush1.bf16.msra.mxu0 %v352
  %481 = vmatprep.subr.bf16.mxu0 0
  %482 = vmatpush1.bf16.msra.mxu0 %v353
  %483 = vmatprep.mubr.bf16.mxu0 %v145
  %484 = vmatmul.mubr.bf16.gmra.mrb[0].mxu0 %v144
  %v485 = vpop.f32.mrb[0].mxu0
  %v486 = vadd.f32 %v437, %v485
  %v487 = vpop.f32.mrb[0].mxu0
  %v488 = vpop.f32.mrb[0].mxu0
  %v489 = vadd.f32 %v440, %v488
  %v490 = vpop.f32.mrb[0].mxu0
  %491 = vmatprep.mubr.bf16.mxu0 %v150
  %492 = vmatmul.mubr.bf16.gmra.mrb[0].mxu0 %v149
  %v493 = vpop.f32.mrb[0].mxu0
  %v494 = vadd.f32 %v445, %v493
  %v495 = vpop.f32.mrb[0].mxu0
  %v496 = vpop.f32.mrb[0].mxu0
  %v497 = vadd.f32 %v448, %v496
  %v498 = vpop.f32.mrb[0].mxu0
  %499 = vdwg.mxu0
  %500 = vmatprep.subr.bf16.mxu0 0
  %501 = vmatpush1.bf16.msra.mxu0 %v354
  %502 = vmatprep.subr.bf16.mxu0 0
  %503 = vmatpush1.bf16.msra.mxu0 %v355
  %504 = vmatprep.subr.bf16.mxu0 0
  %505 = vmatpush1.bf16.msra.mxu0 %v356
  %506 = vmatprep.subr.bf16.mxu0 0
  %507 = vmatpush1.bf16.msra.mxu0 %v357
  %508 = vmatprep.subr.bf16.mxu0 0
  %509 = vmatpush1.bf16.msra.mxu0 %v358
  %510 = vmatprep.subr.bf16.mxu0 0
  %511 = vmatpush1.bf16.msra.mxu0 %v359
  %512 = vmatprep.subr.bf16.mxu0 0
  %513 = vmatpush1.bf16.msra.mxu0 %v360
  %514 = vmatprep.subr.bf16.mxu0 0
  %515 = vmatpush1.bf16.msra.mxu0 %v361
  %516 = vmatprep.subr.bf16.mxu0 0
  %517 = vmatpush1.bf16.msra.mxu0 0
  %518 = vmatprep.subr.bf16.mxu0 0
  %519 = vmatpush1.bf16.msra.mxu0 0
  %520 = vmatprep.subr.bf16.mxu0 0
  %521 = vmatpush1.bf16.msra.mxu0 0
  %522 = vmatprep.subr.bf16.mxu0 0
  %523 = vmatpush1.bf16.msra.mxu0 0
  %524 = vmatprep.subr.bf16.mxu0 0
  %525 = vmatpush1.bf16.msra.mxu0 0
  %526 = vmatprep.subr.bf16.mxu0 0
  %527 = vmatpush1.bf16.msra.mxu0 0
  %528 = vmatprep.subr.bf16.mxu0 0
  %529 = vmatpush1.bf16.msra.mxu0 0
  %530 = vmatprep.subr.bf16.mxu0 0
  %531 = vmatpush1.bf16.msra.mxu0 0
  %532 = vmatprep.mubr.bf16.mxu0 0
  %533 = vmatmul.mubr.bf16.gmra.mrb[0].mxu0 %v146
  %v534 = vpop.f32.mrb[0].mxu0
  %v535 = vadd.f32 %v486, %v534
  %v536 = vpop.f32.mrb[0].mxu0
  %v537 = vpop.f32.mrb[0].mxu0
  %v538 = vadd.f32 %v489, %v537
  %v539 = vpop.f32.mrb[0].mxu0
  %540 = vmatprep.mubr.bf16.mxu0 0
  %541 = vmatmul.mubr.bf16.gmra.mrb[0].mxu0 %v151
  %v542 = vpop.f32.mrb[0].mxu0
  %v543 = vadd.f32 %v494, %v542
  %v544 = vpop.f32.mrb[0].mxu0
  %v545 = vpop.f32.mrb[0].mxu0
  %v546 = vadd.f32 %v497, %v545
  %v547 = vpop.f32.mrb[0].mxu0
  %548 = vdwg.mxu0
  %v549 = vld [vmem:[%s2] sm:$0x1]
  %v551 = vlaneseq
  %v552 = vshrl.u32 %v551, 7
  %v553 = vsub.s32 0, %v552
  %v554 = vrot.slane %v549, %v553
  %v556 = vmul.f32 %v535, %v554
  %v557 = vmul.f32 %v538, %v554
  %v558 = vmul.f32 %v543, %v554
  %v559 = vmul.f32 %v546, %v554
  %v560 = vld [vmem:[%s3] sm:$0x1]
  %v562 = vlaneseq
  %v563 = vshrl.u32 %v562, 7
  %v564 = vsub.s32 0, %v563
  %v565 = vrot.slane %v560, %v564
  %v567 = vadd.f32 %v556, %v565
  %v568 = vadd.f32 %v557, %v565
  %v569 = vadd.f32 %v558, %v565
  %v570 = vadd.f32 %v559, %v565
  %vm571 = vcmp.gt.f32.partialorder %v567, 0.0
  %vm572 = vcmp.gt.f32.partialorder %v568, 0.0
  %vm573 = vcmp.gt.f32.partialorder %v569, 0.0
  %vm574 = vcmp.gt.f32.partialorder %v570, 0.0
  %v575 = vmul.f32 %v567, 0.1
  %v576 = vmul.f32 %v568, 0.1
  %v577 = vmul.f32 %v569, 0.1
  %v578 = vmul.f32 %v570, 0.1
  %v579 = vsel %vm571, %v567, %v575
  %v580 = vsel %vm572, %v568, %v576
  %v581 = vsel %vm573, %v569, %v577
  %v582 = vsel %vm574, %v570, %v578
  %v583 = vpack.c.bf16 %v580, %v579
  %v584 = vpack.c.bf16 %v582, %v581
  %v587 = vunpack.c.l.b16 %v583
  %v588 = vunpack.c.h.b16 %v583
  %v589 = vunpack.c.l.b16 %v584
  %v590 = vunpack.c.h.b16 %v584
  %v591 = vpack.c.b16 %v587, %v587
  %v592 = vpack.c.b16 %v588, %v588
  %v593 = vpack.c.b16 %v589, %v589
  %v594 = vpack.c.b16 %v590, %v590
  %599 = vst [vmem:[%s4] sm:$0xf] %v591
  %600 = vst [vmem:[%s4 + $0x4] sm:$0xf] %v592
  %601 = vst [vmem:[%s4 + $0x8] sm:$0xf] %v593
  %602 = vst [vmem:[%s4 + $0xc] sm:$0xf] %v594
  // Predicated region
  $region18: #{darknet_forward.38} parent=0 // pred_check
    _
  $region19: #{darknet_forward.38} parent=0 // pred_check_branch
    %604 = sbr.rel (0) target = $region21
  $region20: #{darknet_forward.38} parent=0 // pred_region
    _
  $region21: #{darknet_forward.38} parent=0 // pred_fallthru
    _
  // Predicated region
  $region22: #{darknet_forward.38} parent=0 // pred_check
    _
  $region23: #{darknet_forward.38} parent=0 // pred_check_branch
    %606 = sbr.rel (0) target = $region25
  $region24: #{darknet_forward.38} parent=0 // pred_region
    _
  $region25: #{darknet_forward.38} parent=0 // pred_fallthru
    _

// kernel: darknet_forward.40
$region0: #{darknet_forward.40}
  #allocation0 [shape = 'u32[]', space=smem, size = 0x4, offset = 0x4, fixed_abs, tag = 'smem constant byte address 0x4 - core index']
  #allocation1 [shape = 'u32[144,128]{1,0:T(1,128)}', space=vmem, size = 0x12000, scoped, tag = 'internal scratch']
  %s0 = inlined_call_operand.vmem [shape: bf16[8,128], index: 0, kind: input, shape index: {}]
  %s1 = inlined_call_operand.vmem [shape: bf16[128,64], index: 1, kind: input, shape index: {}]
  %s2 = inlined_call_operand.vmem [shape: f32[1,64], index: 2, kind: input, shape index: {}]
  %s3 = inlined_call_operand.vmem [shape: f32[1,64], index: 3, kind: input, shape index: {}]
  %s4 = inlined_call_operand.vmem [shape: bf16[8,64], index: 4, kind: output, shape index: {}]
  %s5 = sld [smem:[#allocation0]]
  $region26: #{darknet_forward.40} parent=0
    _
  %s7 = ssub.s32 1, %s5
  %s8 = scalar_select 0, %s7, %s5
  // Predicated region
  $region2: #{darknet_forward.40} parent=0 // pred_check
    _
  $region3: #{darknet_forward.40} parent=0 // pred_check_branch
    %10 = sbr.rel (0) target = $region5
  $region4: #{darknet_forward.40} parent=0 // pred_region
    _
  $region5: #{darknet_forward.40} parent=0 // pred_fallthru
    _
  // Predicated region
  $region6: #{darknet_forward.40} parent=0 // pred_check
    _
  $region7: #{darknet_forward.40} parent=0 // pred_check_branch
    %12 = sbr.rel (0) target = $region9
  $region8: #{darknet_forward.40} parent=0 // pred_region
    _
  $region9: #{darknet_forward.40} parent=0 // pred_fallthru
    _
  // Predicated region
  $region10: #{darknet_forward.40} parent=0 // pred_check
    _
  $region11: #{darknet_forward.40} parent=0 // pred_check_branch
    %14 = sbr.rel (0) target = $region13
  $region12: #{darknet_forward.40} parent=0 // pred_region
    _
  $region13: #{darknet_forward.40} parent=0 // pred_fallthru
    _
  // Predicated region
  $region14: #{darknet_forward.40} parent=0 // pred_check
    _
  $region15: #{darknet_forward.40} parent=0 // pred_check_branch
    %16 = sbr.rel (0) target = $region17
  $region16: #{darknet_forward.40} parent=0 // pred_region
    _
  $region17: #{darknet_forward.40} parent=0 // pred_fallthru
    _
  %v18 = vld [vmem:[%s0] sm:$0xf]
  %v19 = vld [vmem:[%s1] sm:$0xf]
  %v20 = vld [vmem:[%s1 + $0x4] sm:$0xf]
  %v21 = vld [vmem:[%s1 + $0x8] sm:$0xf]
  %v22 = vld [vmem:[%s1 + $0xc] sm:$0xf]
  %v23 = vld [vmem:[%s1 + $0x10] sm:$0xf]
  %v24 = vld [vmem:[%s1 + $0x14] sm:$0xf]
  %v25 = vld [vmem:[%s1 + $0x18] sm:$0xf]
  %v26 = vld [vmem:[%s1 + $0x1c] sm:$0xf]
  %v27 = vld [vmem:[%s1 + $0x20] sm:$0xf]
  %v28 = vld [vmem:[%s1 + $0x24] sm:$0xf]
  %v29 = vld [vmem:[%s1 + $0x28] sm:$0xf]
  %v30 = vld [vmem:[%s1 + $0x2c] sm:$0xf]
  %v31 = vld [vmem:[%s1 + $0x30] sm:$0xf]
  %v32 = vld [vmem:[%s1 + $0x34] sm:$0xf]
  %v33 = vld [vmem:[%s1 + $0x38] sm:$0xf]
  %v34 = vld [vmem:[%s1 + $0x3c] sm:$0xf]
  %v51 = vunpack.c.l.b16 %v19
  %v52 = vunpack.c.l.b16 %v20
  %v53 = vunpack.c.l.b16 %v21
  %v54 = vunpack.c.l.b16 %v22
  %v55 = vunpack.c.l.b16 %v23
  %v56 = vunpack.c.l.b16 %v24
  %v57 = vunpack.c.l.b16 %v25
  %v58 = vunpack.c.l.b16 %v26
  %v59 = vunpack.c.l.b16 %v27
  %v60 = vunpack.c.l.b16 %v28
  %v61 = vunpack.c.l.b16 %v29
  %v62 = vunpack.c.l.b16 %v30
  %v63 = vunpack.c.l.b16 %v31
  %v64 = vunpack.c.l.b16 %v32
  %v65 = vunpack.c.l.b16 %v33
  %v66 = vunpack.c.l.b16 %v34
  %v67 = vpack.c.b16 %v52, %v51
  %v68 = vpack.c.b16 %v54, %v53
  %v69 = vpack.c.b16 %v56, %v55
  %v70 = vpack.c.b16 %v58, %v57
  %v71 = vpack.c.b16 %v60, %v59
  %v72 = vpack.c.b16 %v62, %v61
  %v73 = vpack.c.b16 %v64, %v63
  %v74 = vpack.c.b16 %v66, %v65
  %83 = vmatprep.subr.bf16.mxu0 0
  %84 = vmatpush1.bf16.msra.mxu0 %v67
  %85 = vmatprep.subr.bf16.mxu0 0
  %86 = vmatpush1.bf16.msra.mxu0 %v68
  %87 = vmatprep.subr.bf16.mxu0 0
  %88 = vmatpush1.bf16.msra.mxu0 %v69
  %89 = vmatprep.subr.bf16.mxu0 0
  %90 = vmatpush1.bf16.msra.mxu0 %v70
  %91 = vmatprep.subr.bf16.mxu0 0
  %92 = vmatpush1.bf16.msra.mxu0 %v71
  %93 = vmatprep.subr.bf16.mxu0 0
  %94 = vmatpush1.bf16.msra.mxu0 %v72
  %95 = vmatprep.subr.bf16.mxu0 0
  %96 = vmatpush1.bf16.msra.mxu0 %v73
  %97 = vmatprep.subr.bf16.mxu0 0
  %98 = vmatpush1.bf16.msra.mxu0 %v74
  %99 = vmatprep.subr.bf16.mxu0 0
  %100 = vmatpush1.bf16.msra.mxu0 0
  %101 = vmatprep.subr.bf16.mxu0 0
  %102 = vmatpush1.bf16.msra.mxu0 0
  %103 = vmatprep.subr.bf16.mxu0 0
  %104 = vmatpush1.bf16.msra.mxu0 0
  %105 = vmatprep.subr.bf16.mxu0 0
  %106 = vmatpush1.bf16.msra.mxu0 0
  %107 = vmatprep.subr.bf16.mxu0 0
  %108 = vmatpush1.bf16.msra.mxu0 0
  %109 = vmatprep.subr.bf16.mxu0 0
  %110 = vmatpush1.bf16.msra.mxu0 0
  %111 = vmatprep.subr.bf16.mxu0 0
  %112 = vmatpush1.bf16.msra.mxu0 0
  %113 = vmatprep.subr.bf16.mxu0 0
  %114 = vmatpush1.bf16.msra.mxu0 0
  %115 = vmatprep.mubr.bf16.mxu0 0
  %116 = vmatmul.mubr.bf16.gmra.mrb[0].mxu0 %v18
  %v117 = vpop.f32.mrb[0].mxu0
  %v118 = vadd.f32 0.0, %v117
  %v119 = vpop.f32.mrb[0].mxu0
  %v120 = vpop.f32.mrb[0].mxu0
  %v121 = vpop.f32.mrb[0].mxu0
  %122 = vdwg.mxu0
  %v123 = vld [vmem:[%s2] sm:$0x1]
  %v125 = vlaneseq
  %v126 = vshrl.u32 %v125, 7
  %v127 = vsub.s32 0, %v126
  %v128 = vrot.slane %v123, %v127
  %v130 = vmul.f32 %v118, %v128
  %v131 = vld [vmem:[%s3] sm:$0x1]
  %v133 = vlaneseq
  %v134 = vshrl.u32 %v133, 7
  %v135 = vsub.s32 0, %v134
  %v136 = vrot.slane %v131, %v135
  %v138 = vadd.f32 %v130, %v136
  %vm139 = vcmp.gt.f32.partialorder %v138, 0.0
  %v140 = vmul.f32 %v138, 0.1
  %v141 = vsel %vm139, %v138, %v140
  %v142 = vpack.c.bf16 %v141, %v141
  %vm143 = vcmask 519168
  %144 = vst.msk [vmem:[%s4] sm:$0xf] %vm143, %v142
  // Predicated region
  $region18: #{darknet_forward.40} parent=0 // pred_check
    _
  $region19: #{darknet_forward.40} parent=0 // pred_check_branch
    %146 = sbr.rel (0) target = $region21
  $region20: #{darknet_forward.40} parent=0 // pred_region
    _
  $region21: #{darknet_forward.40} parent=0 // pred_fallthru
    _
  // Predicated region
  $region22: #{darknet_forward.40} parent=0 // pred_check
    _
  $region23: #{darknet_forward.40} parent=0 // pred_check_branch
    %148 = sbr.rel (0) target = $region25
  $region24: #{darknet_forward.40} parent=0 // pred_region
    _
  $region25: #{darknet_forward.40} parent=0 // pred_fallthru
    _

// kernel: darknet_forward.39
$region0: #{darknet_forward.39}
  #allocation0 [shape = 'u32[]', space=smem, size = 0x4, offset = 0x4, fixed_abs, tag = 'smem constant byte address 0x4 - core index']
  #allocation1 [shape = 'u32[144,128]{1,0:T(1,128)}', space=vmem, size = 0x12000, scoped, tag = 'internal scratch']
  %s0 = inlined_call_operand.vmem [shape: bf16[8,1152], index: 0, kind: input, shape index: {}]
  %s1 = inlined_call_operand.vmem [shape: bf16[1152,128], index: 1, kind: input, shape index: {}]
  %s2 = inlined_call_operand.vmem [shape: f32[1,128], index: 2, kind: input, shape index: {}]
  %s3 = inlined_call_operand.vmem [shape: f32[1,128], index: 3, kind: input, shape index: {}]
  %s4 = inlined_call_operand.vmem [shape: bf16[8,128], index: 4, kind: output, shape index: {}]
  %s5 = sld [smem:[#allocation0]]
  $region26: #{darknet_forward.39} parent=0
    _
  %s7 = ssub.s32 1, %s5
  %s8 = scalar_select 0, %s7, %s5
  // Predicated region
  $region2: #{darknet_forward.39} parent=0 // pred_check
    _
  $region3: #{darknet_forward.39} parent=0 // pred_check_branch
    %10 = sbr.rel (0) target = $region5
  $region4: #{darknet_forward.39} parent=0 // pred_region
    _
  $region5: #{darknet_forward.39} parent=0 // pred_fallthru
    _
  // Predicated region
  $region6: #{darknet_forward.39} parent=0 // pred_check
    _
  $region7: #{darknet_forward.39} parent=0 // pred_check_branch
    %12 = sbr.rel (0) target = $region9
  $region8: #{darknet_forward.39} parent=0 // pred_region
    _
  $region9: #{darknet_forward.39} parent=0 // pred_fallthru
    _
  // Predicated region
  $region10: #{darknet_forward.39} parent=0 // pred_check
    _
  $region11: #{darknet_forward.39} parent=0 // pred_check_branch
    %14 = sbr.rel (0) target = $region13
  $region12: #{darknet_forward.39} parent=0 // pred_region
    _
  $region13: #{darknet_forward.39} parent=0 // pred_fallthru
    _
  // Predicated region
  $region14: #{darknet_forward.39} parent=0 // pred_check
    _
  $region15: #{darknet_forward.39} parent=0 // pred_check_branch
    %16 = sbr.rel (0) target = $region17
  $region16: #{darknet_forward.39} parent=0 // pred_region
    _
  $region17: #{darknet_forward.39} parent=0 // pred_fallthru
    _
  %v18 = vld [vmem:[%s0] sm:$0xff]
  %v19 = vld [vmem:[%s0 + $0x8] sm:$0xff]
  %v20 = vld [vmem:[%s0 + $0x10] sm:$0xff]
  %v21 = vld [vmem:[%s0 + $0x18] sm:$0xff]
  %v22 = vld [vmem:[%s0 + $0x20] sm:$0xf]
  %v23 = vld [vmem:[%s1] sm:$0xf]
  %v24 = vld [vmem:[%s1 + $0x4] sm:$0xf]
  %v25 = vld [vmem:[%s1 + $0x8] sm:$0xf]
  %v26 = vld [vmem:[%s1 + $0xc] sm:$0xf]
  %v27 = vld [vmem:[%s1 + $0x10] sm:$0xf]
  %v28 = vld [vmem:[%s1 + $0x14] sm:$0xf]
  %v29 = vld [vmem:[%s1 + $0x18] sm:$0xf]
  %v30 = vld [vmem:[%s1 + $0x1c] sm:$0xf]
  %v31 = vld [vmem:[%s1 + $0x20] sm:$0xf]
  %v32 = vld [vmem:[%s1 + $0x24] sm:$0xf]
  %v33 = vld [vmem:[%s1 + $0x28] sm:$0xf]
  %v34 = vld [vmem:[%s1 + $0x2c] sm:$0xf]
  %v35 = vld [vmem:[%s1 + $0x30] sm:$0xf]
  %v36 = vld [vmem:[%s1 + $0x34] sm:$0xf]
  %v37 = vld [vmem:[%s1 + $0x38] sm:$0xf]
  %v38 = vld [vmem:[%s1 + $0x3c] sm:$0xf]
  %v39 = vld [vmem:[%s1 + $0x40] sm:$0xf]
  %v40 = vld [vmem:[%s1 + $0x44] sm:$0xf]
  %v41 = vld [vmem:[%s1 + $0x48] sm:$0xf]
  %v42 = vld [vmem:[%s1 + $0x4c] sm:$0xf]
  %v43 = vld [vmem:[%s1 + $0x50] sm:$0xf]
  %v44 = vld [vmem:[%s1 + $0x54] sm:$0xf]
  %v45 = vld [vmem:[%s1 + $0x58] sm:$0xf]
  %v46 = vld [vmem:[%s1 + $0x5c] sm:$0xf]
  %v47 = vld [vmem:[%s1 + $0x60] sm:$0xf]
  %v48 = vld [vmem:[%s1 + $0x64] sm:$0xf]
  %v49 = vld [vmem:[%s1 + $0x68] sm:$0xf]
  %v50 = vld [vmem:[%s1 + $0x6c] sm:$0xf]
  %v51 = vld [vmem:[%s1 + $0x70] sm:$0xf]
  %v52 = vld [vmem:[%s1 + $0x74] sm:$0xf]
  %v53 = vld [vmem:[%s1 + $0x78] sm:$0xf]
  %v54 = vld [vmem:[%s1 + $0x7c] sm:$0xf]
  %v55 = vld [vmem:[%s1 + $0x80] sm:$0xf]
  %v56 = vld [vmem:[%s1 + $0x84] sm:$0xf]
  %v57 = vld [vmem:[%s1 + $0x88] sm:$0xf]
  %v58 = vld [vmem:[%s1 + $0x8c] sm:$0xf]
  %v59 = vld [vmem:[%s1 + $0x90] sm:$0xf]
  %v60 = vld [vmem:[%s1 + $0x94] sm:$0xf]
  %v61 = vld [vmem:[%s1 + $0x98] sm:$0xf]
  %v62 = vld [vmem:[%s1 + $0x9c] sm:$0xf]
  %v63 = vld [vmem:[%s1 + $0xa0] sm:$0xf]
  %v64 = vld [vmem:[%s1 + $0xa4] sm:$0xf]
  %v65 = vld [vmem:[%s1 + $0xa8] sm:$0xf]
  %v66 = vld [vmem:[%s1 + $0xac] sm:$0xf]
  %v67 = vld [vmem:[%s1 + $0xb0] sm:$0xf]
  %v68 = vld [vmem:[%s1 + $0xb4] sm:$0xf]
  %v69 = vld [vmem:[%s1 + $0xb8] sm:$0xf]
  %v70 = vld [vmem:[%s1 + $0xbc] sm:$0xf]
  %v71 = vld [vmem:[%s1 + $0xc0] sm:$0xf]
  %v72 = vld [vmem:[%s1 + $0xc4] sm:$0xf]
  %v73 = vld [vmem:[%s1 + $0xc8] sm:$0xf]
  %v74 = vld [vmem:[%s1 + $0xcc] sm:$0xf]
  %v75 = vld [vmem:[%s1 + $0xd0] sm:$0xf]
  %v76 = vld [vmem:[%s1 + $0xd4] sm:$0xf]
  %v77 = vld [vmem:[%s1 + $0xd8] sm:$0xf]
  %v78 = vld [vmem:[%s1 + $0xdc] sm:$0xf]
  %v79 = vld [vmem:[%s1 + $0xe0] sm:$0xf]
  %v80 = vld [vmem:[%s1 + $0xe4] sm:$0xf]
  %v81 = vld [vmem:[%s1 + $0xe8] sm:$0xf]
  %v82 = vld [vmem:[%s1 + $0xec] sm:$0xf]
  %v83 = vld [vmem:[%s1 + $0xf0] sm:$0xf]
  %v84 = vld [vmem:[%s1 + $0xf4] sm:$0xf]
  %v85 = vld [vmem:[%s1 + $0xf8] sm:$0xf]
  %v86 = vld [vmem:[%s1 + $0xfc] sm:$0xf]
  %v87 = vld [vmem:[%s1 + $0x100] sm:$0xf]
  %v88 = vld [vmem:[%s1 + $0x104] sm:$0xf]
  %v89 = vld [vmem:[%s1 + $0x108] sm:$0xf]
  %v90 = vld [vmem:[%s1 + $0x10c] sm:$0xf]
  %v91 = vld [vmem:[%s1 + $0x110] sm:$0xf]
  %v92 = vld [vmem:[%s1 + $0x114] sm:$0xf]
  %v93 = vld [vmem:[%s1 + $0x118] sm:$0xf]
  %v94 = vld [vmem:[%s1 + $0x11c] sm:$0xf]
  %v95 = vld [vmem:[%s1 + $0x120] sm:$0xf]
  %v96 = vld [vmem:[%s1 + $0x124] sm:$0xf]
  %v97 = vld [vmem:[%s1 + $0x128] sm:$0xf]
  %v98 = vld [vmem:[%s1 + $0x12c] sm:$0xf]
  %v99 = vld [vmem:[%s1 + $0x130] sm:$0xf]
  %v100 = vld [vmem:[%s1 + $0x134] sm:$0xf]
  %v101 = vld [vmem:[%s1 + $0x138] sm:$0xf]
  %v102 = vld [vmem:[%s1 + $0x13c] sm:$0xf]
  %v103 = vld [vmem:[%s1 + $0x140] sm:$0xf]
  %v104 = vld [vmem:[%s1 + $0x144] sm:$0xf]
  %v105 = vld [vmem:[%s1 + $0x148] sm:$0xf]
  %v106 = vld [vmem:[%s1 + $0x14c] sm:$0xf]
  %v107 = vld [vmem:[%s1 + $0x150] sm:$0xf]
  %v108 = vld [vmem:[%s1 + $0x154] sm:$0xf]
  %v109 = vld [vmem:[%s1 + $0x158] sm:$0xf]
  %v110 = vld [vmem:[%s1 + $0x15c] sm:$0xf]
  %v111 = vld [vmem:[%s1 + $0x160] sm:$0xf]
  %v112 = vld [vmem:[%s1 + $0x164] sm:$0xf]
  %v113 = vld [vmem:[%s1 + $0x168] sm:$0xf]
  %v114 = vld [vmem:[%s1 + $0x16c] sm:$0xf]
  %v115 = vld [vmem:[%s1 + $0x170] sm:$0xf]
  %v116 = vld [vmem:[%s1 + $0x174] sm:$0xf]
  %v117 = vld [vmem:[%s1 + $0x178] sm:$0xf]
  %v118 = vld [vmem:[%s1 + $0x17c] sm:$0xf]
  %v119 = vld [vmem:[%s1 + $0x180] sm:$0xf]
  %v120 = vld [vmem:[%s1 + $0x184] sm:$0xf]
  %v121 = vld [vmem:[%s1 + $0x188] sm:$0xf]
  %v122 = vld [vmem:[%s1 + $0x18c] sm:$0xf]
  %v123 = vld [vmem:[%s1 + $0x190] sm:$0xf]
  %v124 = vld [vmem:[%s1 + $0x194] sm:$0xf]
  %v125 = vld [vmem:[%s1 + $0x198] sm:$0xf]
  %v126 = vld [vmem:[%s1 + $0x19c] sm:$0xf]
  %v127 = vld [vmem:[%s1 + $0x1a0] sm:$0xf]
  %v128 = vld [vmem:[%s1 + $0x1a4] sm:$0xf]
  %v129 = vld [vmem:[%s1 + $0x1a8] sm:$0xf]
  %v130 = vld [vmem:[%s1 + $0x1ac] sm:$0xf]
  %v131 = vld [vmem:[%s1 + $0x1b0] sm:$0xf]
  %v132 = vld [vmem:[%s1 + $0x1b4] sm:$0xf]
  %v133 = vld [vmem:[%s1 + $0x1b8] sm:$0xf]
  %v134 = vld [vmem:[%s1 + $0x1bc] sm:$0xf]
  %v135 = vld [vmem:[%s1 + $0x1c0] sm:$0xf]
  %v136 = vld [vmem:[%s1 + $0x1c4] sm:$0xf]
  %v137 = vld [vmem:[%s1 + $0x1c8] sm:$0xf]
  %v138 = vld [vmem:[%s1 + $0x1cc] sm:$0xf]
  %v139 = vld [vmem:[%s1 + $0x1d0] sm:$0xf]
  %v140 = vld [vmem:[%s1 + $0x1d4] sm:$0xf]
  %v141 = vld [vmem:[%s1 + $0x1d8] sm:$0xf]
  %v142 = vld [vmem:[%s1 + $0x1dc] sm:$0xf]
  %v143 = vld [vmem:[%s1 + $0x1e0] sm:$0xf]
  %v144 = vld [vmem:[%s1 + $0x1e4] sm:$0xf]
  %v145 = vld [vmem:[%s1 + $0x1e8] sm:$0xf]
  %v146 = vld [vmem:[%s1 + $0x1ec] sm:$0xf]
  %v147 = vld [vmem:[%s1 + $0x1f0] sm:$0xf]
  %v148 = vld [vmem:[%s1 + $0x1f4] sm:$0xf]
  %v149 = vld [vmem:[%s1 + $0x1f8] sm:$0xf]
  %v150 = vld [vmem:[%s1 + $0x1fc] sm:$0xf]
  %v151 = vld [vmem:[%s1 + $0x200] sm:$0xf]
  %v152 = vld [vmem:[%s1 + $0x204] sm:$0xf]
  %v153 = vld [vmem:[%s1 + $0x208] sm:$0xf]
  %v154 = vld [vmem:[%s1 + $0x20c] sm:$0xf]
  %v155 = vld [vmem:[%s1 + $0x210] sm:$0xf]
  %v156 = vld [vmem:[%s1 + $0x214] sm:$0xf]
  %v157 = vld [vmem:[%s1 + $0x218] sm:$0xf]
  %v158 = vld [vmem:[%s1 + $0x21c] sm:$0xf]
  %v159 = vld [vmem:[%s1 + $0x220] sm:$0xf]
  %v160 = vld [vmem:[%s1 + $0x224] sm:$0xf]
  %v161 = vld [vmem:[%s1 + $0x228] sm:$0xf]
  %v162 = vld [vmem:[%s1 + $0x22c] sm:$0xf]
  %v163 = vld [vmem:[%s1 + $0x230] sm:$0xf]
  %v164 = vld [vmem:[%s1 + $0x234] sm:$0xf]
  %v165 = vld [vmem:[%s1 + $0x238] sm:$0xf]
  %v166 = vld [vmem:[%s1 + $0x23c] sm:$0xf]
  %v172 = vunpack.c.l.b16 %v18
  %v173 = vunpack.c.h.b16 %v18
  %v174 = vunpack.c.l.b16 %v19
  %v175 = vunpack.c.h.b16 %v19
  %v176 = vunpack.c.l.b16 %v20
  %v177 = vunpack.c.h.b16 %v20
  %v178 = vunpack.c.l.b16 %v21
  %v179 = vunpack.c.h.b16 %v21
  %v180 = vunpack.c.l.b16 %v22
  %v181 = vpack.c.b16 %v172, %v172
  %v182 = vpack.c.b16 %v173, %v173
  %v183 = vpack.c.b16 %v174, %v174
  %v184 = vpack.c.b16 %v175, %v175
  %v185 = vpack.c.b16 %v176, %v176
  %v186 = vpack.c.b16 %v177, %v177
  %v187 = vpack.c.b16 %v178, %v178
  %v188 = vpack.c.b16 %v179, %v179
  %v189 = vpack.c.b16 %v180, %v180
  %v343 = vunpack.c.l.b16 %v23
  %v344 = vunpack.c.l.b16 %v24
  %v345 = vunpack.c.l.b16 %v25
  %v346 = vunpack.c.l.b16 %v26
  %v347 = vunpack.c.l.b16 %v27
  %v348 = vunpack.c.l.b16 %v28
  %v349 = vunpack.c.l.b16 %v29
  %v350 = vunpack.c.l.b16 %v30
  %v351 = vunpack.c.l.b16 %v31
  %v352 = vunpack.c.l.b16 %v32
  %v353 = vunpack.c.l.b16 %v33
  %v354 = vunpack.c.l.b16 %v34
  %v355 = vunpack.c.l.b16 %v35
  %v356 = vunpack.c.l.b16 %v36
  %v357 = vunpack.c.l.b16 %v37
  %v358 = vunpack.c.l.b16 %v38
  %v359 = vunpack.c.l.b16 %v39
  %v360 = vunpack.c.l.b16 %v40
  %v361 = vunpack.c.l.b16 %v41
  %v362 = vunpack.c.l.b16 %v42
  %v363 = vunpack.c.l.b16 %v43
  %v364 = vunpack.c.l.b16 %v44
  %v365 = vunpack.c.l.b16 %v45
  %v366 = vunpack.c.l.b16 %v46
  %v367 = vunpack.c.l.b16 %v47
  %v368 = vunpack.c.l.b16 %v48
  %v369 = vunpack.c.l.b16 %v49
  %v370 = vunpack.c.l.b16 %v50
  %v371 = vunpack.c.l.b16 %v51
  %v372 = vunpack.c.l.b16 %v52
  %v373 = vunpack.c.l.b16 %v53
  %v374 = vunpack.c.l.b16 %v54
  %v375 = vunpack.c.l.b16 %v55
  %v376 = vunpack.c.l.b16 %v56
  %v377 = vunpack.c.l.b16 %v57
  %v378 = vunpack.c.l.b16 %v58
  %v379 = vunpack.c.l.b16 %v59
  %v380 = vunpack.c.l.b16 %v60
  %v381 = vunpack.c.l.b16 %v61
  %v382 = vunpack.c.l.b16 %v62
  %v383 = vunpack.c.l.b16 %v63
  %v384 = vunpack.c.l.b16 %v64
  %v385 = vunpack.c.l.b16 %v65
  %v386 = vunpack.c.l.b16 %v66
  %v387 = vunpack.c.l.b16 %v67
  %v388 = vunpack.c.l.b16 %v68
  %v389 = vunpack.c.l.b16 %v69
  %v390 = vunpack.c.l.b16 %v70
  %v391 = vunpack.c.l.b16 %v71
  %v392 = vunpack.c.l.b16 %v72
  %v393 = vunpack.c.l.b16 %v73
  %v394 = vunpack.c.l.b16 %v74
  %v395 = vunpack.c.l.b16 %v75
  %v396 = vunpack.c.l.b16 %v76
  %v397 = vunpack.c.l.b16 %v77
  %v398 = vunpack.c.l.b16 %v78
  %v399 = vunpack.c.l.b16 %v79
  %v400 = vunpack.c.l.b16 %v80
  %v401 = vunpack.c.l.b16 %v81
  %v402 = vunpack.c.l.b16 %v82
  %v403 = vunpack.c.l.b16 %v83
  %v404 = vunpack.c.l.b16 %v84
  %v405 = vunpack.c.l.b16 %v85
  %v406 = vunpack.c.l.b16 %v86
  %v407 = vunpack.c.l.b16 %v87
  %v408 = vunpack.c.l.b16 %v88
  %v409 = vunpack.c.l.b16 %v89
  %v410 = vunpack.c.l.b16 %v90
  %v411 = vunpack.c.l.b16 %v91
  %v412 = vunpack.c.l.b16 %v92
  %v413 = vunpack.c.l.b16 %v93
  %v414 = vunpack.c.l.b16 %v94
  %v415 = vunpack.c.l.b16 %v95
  %v416 = vunpack.c.l.b16 %v96
  %v417 = vunpack.c.l.b16 %v97
  %v418 = vunpack.c.l.b16 %v98
  %v419 = vunpack.c.l.b16 %v99
  %v420 = vunpack.c.l.b16 %v100
  %v421 = vunpack.c.l.b16 %v101
  %v422 = vunpack.c.l.b16 %v102
  %v423 = vunpack.c.l.b16 %v103
  %v424 = vunpack.c.l.b16 %v104
  %v425 = vunpack.c.l.b16 %v105
  %v426 = vunpack.c.l.b16 %v106
  %v427 = vunpack.c.l.b16 %v107
  %v428 = vunpack.c.l.b16 %v108
  %v429 = vunpack.c.l.b16 %v109
  %v430 = vunpack.c.l.b16 %v110
  %v431 = vunpack.c.l.b16 %v111
  %v432 = vunpack.c.l.b16 %v112
  %v433 = vunpack.c.l.b16 %v113
  %v434 = vunpack.c.l.b16 %v114
  %v435 = vunpack.c.l.b16 %v115
  %v436 = vunpack.c.l.b16 %v116
  %v437 = vunpack.c.l.b16 %v117
  %v438 = vunpack.c.l.b16 %v118
  %v439 = vunpack.c.l.b16 %v119
  %v440 = vunpack.c.l.b16 %v120
  %v441 = vunpack.c.l.b16 %v121
  %v442 = vunpack.c.l.b16 %v122
  %v443 = vunpack.c.l.b16 %v123
  %v444 = vunpack.c.l.b16 %v124
  %v445 = vunpack.c.l.b16 %v125
  %v446 = vunpack.c.l.b16 %v126
  %v447 = vunpack.c.l.b16 %v127
  %v448 = vunpack.c.l.b16 %v128
  %v449 = vunpack.c.l.b16 %v129
  %v450 = vunpack.c.l.b16 %v130
  %v451 = vunpack.c.l.b16 %v131
  %v452 = vunpack.c.l.b16 %v132
  %v453 = vunpack.c.l.b16 %v133
  %v454 = vunpack.c.l.b16 %v134
  %v455 = vunpack.c.l.b16 %v135
  %v456 = vunpack.c.l.b16 %v136
  %v457 = vunpack.c.l.b16 %v137
  %v458 = vunpack.c.l.b16 %v138
  %v459 = vunpack.c.l.b16 %v139
  %v460 = vunpack.c.l.b16 %v140
  %v461 = vunpack.c.l.b16 %v141
  %v462 = vunpack.c.l.b16 %v142
  %v463 = vunpack.c.l.b16 %v143
  %v464 = vunpack.c.l.b16 %v144
  %v465 = vunpack.c.l.b16 %v145
  %v466 = vunpack.c.l.b16 %v146
  %v467 = vunpack.c.l.b16 %v147
  %v468 = vunpack.c.l.b16 %v148
  %v469 = vunpack.c.l.b16 %v149
  %v470 = vunpack.c.l.b16 %v150
  %v471 = vunpack.c.l.b16 %v151
  %v472 = vunpack.c.l.b16 %v152
  %v473 = vunpack.c.l.b16 %v153
  %v474 = vunpack.c.l.b16 %v154
  %v475 = vunpack.c.l.b16 %v155
  %v476 = vunpack.c.l.b16 %v156
  %v477 = vunpack.c.l.b16 %v157
  %v478 = vunpack.c.l.b16 %v158
  %v479 = vunpack.c.l.b16 %v159
  %v480 = vunpack.c.l.b16 %v160
  %v481 = vunpack.c.l.b16 %v161
  %v482 = vunpack.c.l.b16 %v162
  %v483 = vunpack.c.l.b16 %v163
  %v484 = vunpack.c.l.b16 %v164
  %v485 = vunpack.c.l.b16 %v165
  %v486 = vunpack.c.l.b16 %v166
  %v487 = vpack.c.b16 %v344, %v343
  %v488 = vpack.c.b16 %v346, %v345
  %v489 = vpack.c.b16 %v348, %v347
  %v490 = vpack.c.b16 %v350, %v349
  %v491 = vpack.c.b16 %v352, %v351
  %v492 = vpack.c.b16 %v354, %v353
  %v493 = vpack.c.b16 %v356, %v355
  %v494 = vpack.c.b16 %v358, %v357
  %v495 = vpack.c.b16 %v360, %v359
  %v496 = vpack.c.b16 %v362, %v361
  %v497 = vpack.c.b16 %v364, %v363
  %v498 = vpack.c.b16 %v366, %v365
  %v499 = vpack.c.b16 %v368, %v367
  %v500 = vpack.c.b16 %v370, %v369
  %v501 = vpack.c.b16 %v372, %v371
  %v502 = vpack.c.b16 %v374, %v373
  %v503 = vpack.c.b16 %v376, %v375
  %v504 = vpack.c.b16 %v378, %v377
  %v505 = vpack.c.b16 %v380, %v379
  %v506 = vpack.c.b16 %v382, %v381
  %v507 = vpack.c.b16 %v384, %v383
  %v508 = vpack.c.b16 %v386, %v385
  %v509 = vpack.c.b16 %v388, %v387
  %v510 = vpack.c.b16 %v390, %v389
  %v511 = vpack.c.b16 %v392, %v391
  %v512 = vpack.c.b16 %v394, %v393
  %v513 = vpack.c.b16 %v396, %v395
  %v514 = vpack.c.b16 %v398, %v397
  %v515 = vpack.c.b16 %v400, %v399
  %v516 = vpack.c.b16 %v402, %v401
  %v517 = vpack.c.b16 %v404, %v403
  %v518 = vpack.c.b16 %v406, %v405
  %v519 = vpack.c.b16 %v408, %v407
  %v520 = vpack.c.b16 %v410, %v409
  %v521 = vpack.c.b16 %v412, %v411
  %v522 = vpack.c.b16 %v414, %v413
  %v523 = vpack.c.b16 %v416, %v415
  %v524 = vpack.c.b16 %v418, %v417
  %v525 = vpack.c.b16 %v420, %v419
  %v526 = vpack.c.b16 %v422, %v421
  %v527 = vpack.c.b16 %v424, %v423
  %v528 = vpack.c.b16 %v426, %v425
  %v529 = vpack.c.b16 %v428, %v427
  %v530 = vpack.c.b16 %v430, %v429
  %v531 = vpack.c.b16 %v432, %v431
  %v532 = vpack.c.b16 %v434, %v433
  %v533 = vpack.c.b16 %v436, %v435
  %v534 = vpack.c.b16 %v438, %v437
  %v535 = vpack.c.b16 %v440, %v439
  %v536 = vpack.c.b16 %v442, %v441
  %v537 = vpack.c.b16 %v444, %v443
  %v538 = vpack.c.b16 %v446, %v445
  %v539 = vpack.c.b16 %v448, %v447
  %v540 = vpack.c.b16 %v450, %v449
  %v541 = vpack.c.b16 %v452, %v451
  %v542 = vpack.c.b16 %v454, %v453
  %v543 = vpack.c.b16 %v456, %v455
  %v544 = vpack.c.b16 %v458, %v457
  %v545 = vpack.c.b16 %v460, %v459
  %v546 = vpack.c.b16 %v462, %v461
  %v547 = vpack.c.b16 %v464, %v463
  %v548 = vpack.c.b16 %v466, %v465
  %v549 = vpack.c.b16 %v468, %v467
  %v550 = vpack.c.b16 %v470, %v469
  %v551 = vpack.c.b16 %v472, %v471
  %v552 = vpack.c.b16 %v474, %v473
  %v553 = vpack.c.b16 %v476, %v475
  %v554 = vpack.c.b16 %v478, %v477
  %v555 = vpack.c.b16 %v480, %v479
  %v556 = vpack.c.b16 %v482, %v481
  %v557 = vpack.c.b16 %v484, %v483
  %v558 = vpack.c.b16 %v486, %v485
  %631 = vmatprep.subr.bf16.mxu0 0
  %632 = vmatpush1.bf16.msra.mxu0 %v487
  %633 = vmatprep.subr.bf16.mxu0 0
  %634 = vmatpush1.bf16.msra.mxu0 %v488
  %635 = vmatprep.subr.bf16.mxu0 0
  %636 = vmatpush1.bf16.msra.mxu0 %v489
  %637 = vmatprep.subr.bf16.mxu0 0
  %638 = vmatpush1.bf16.msra.mxu0 %v490
  %639 = vmatprep.subr.bf16.mxu0 0
  %640 = vmatpush1.bf16.msra.mxu0 %v491
  %641 = vmatprep.subr.bf16.mxu0 0
  %642 = vmatpush1.bf16.msra.mxu0 %v492
  %643 = vmatprep.subr.bf16.mxu0 0
  %644 = vmatpush1.bf16.msra.mxu0 %v493
  %645 = vmatprep.subr.bf16.mxu0 0
  %646 = vmatpush1.bf16.msra.mxu0 %v494
  %647 = vmatprep.subr.bf16.mxu0 0
  %648 = vmatpush1.bf16.msra.mxu0 %v495
  %649 = vmatprep.subr.bf16.mxu0 0
  %650 = vmatpush1.bf16.msra.mxu0 %v496
  %651 = vmatprep.subr.bf16.mxu0 0
  %652 = vmatpush1.bf16.msra.mxu0 %v497
  %653 = vmatprep.subr.bf16.mxu0 0
  %654 = vmatpush1.bf16.msra.mxu0 %v498
  %655 = vmatprep.subr.bf16.mxu0 0
  %656 = vmatpush1.bf16.msra.mxu0 %v499
  %657 = vmatprep.subr.bf16.mxu0 0
  %658 = vmatpush1.bf16.msra.mxu0 %v500
  %659 = vmatprep.subr.bf16.mxu0 0
  %660 = vmatpush1.bf16.msra.mxu0 %v501
  %661 = vmatprep.subr.bf16.mxu0 0
  %662 = vmatpush1.bf16.msra.mxu0 %v502
  %663 = vmatprep.mubr.bf16.mxu0 %v182
  %664 = vmatmul.mubr.bf16.gmra.mrb[0].mxu0 %v181
  %v665 = vpop.f32.mrb[0].mxu0
  %v666 = vadd.f32 0.0, %v665
  %v667 = vpop.f32.mrb[0].mxu0
  %v668 = vpop.f32.mrb[0].mxu0
  %v669 = vpop.f32.mrb[0].mxu0
  %670 = vdwg.mxu0
  %671 = vmatprep.subr.bf16.mxu0 0
  %672 = vmatpush1.bf16.msra.mxu0 %v503
  %673 = vmatprep.subr.bf16.mxu0 0
  %674 = vmatpush1.bf16.msra.mxu0 %v504
  %675 = vmatprep.subr.bf16.mxu0 0
  %676 = vmatpush1.bf16.msra.mxu0 %v505
  %677 = vmatprep.subr.bf16.mxu0 0
  %678 = vmatpush1.bf16.msra.mxu0 %v506
  %679 = vmatprep.subr.bf16.mxu0 0
  %680 = vmatpush1.bf16.msra.mxu0 %v507
  %681 = vmatprep.subr.bf16.mxu0 0
  %682 = vmatpush1.bf16.msra.mxu0 %v508
  %683 = vmatprep.subr.bf16.mxu0 0
  %684 = vmatpush1.bf16.msra.mxu0 %v509
  %685 = vmatprep.subr.bf16.mxu0 0
  %686 = vmatpush1.bf16.msra.mxu0 %v510
  %687 = vmatprep.subr.bf16.mxu0 0
  %688 = vmatpush1.bf16.msra.mxu0 %v511
  %689 = vmatprep.subr.bf16.mxu0 0
  %690 = vmatpush1.bf16.msra.mxu0 %v512
  %691 = vmatprep.subr.bf16.mxu0 0
  %692 = vmatpush1.bf16.msra.mxu0 %v513
  %693 = vmatprep.subr.bf16.mxu0 0
  %694 = vmatpush1.bf16.msra.mxu0 %v514
  %695 = vmatprep.subr.bf16.mxu0 0
  %696 = vmatpush1.bf16.msra.mxu0 %v515
  %697 = vmatprep.subr.bf16.mxu0 0
  %698 = vmatpush1.bf16.msra.mxu0 %v516
  %699 = vmatprep.subr.bf16.mxu0 0
  %700 = vmatpush1.bf16.msra.mxu0 %v517
  %701 = vmatprep.subr.bf16.mxu0 0
  %702 = vmatpush1.bf16.msra.mxu0 %v518
  %703 = vmatprep.mubr.bf16.mxu0 %v184
  %704 = vmatmul.mubr.bf16.gmra.mrb[0].mxu0 %v183
  %v705 = vpop.f32.mrb[0].mxu0
  %v706 = vadd.f32 %v666, %v705
  %v707 = vpop.f32.mrb[0].mxu0
  %v708 = vpop.f32.mrb[0].mxu0
  %v709 = vpop.f32.mrb[0].mxu0
  %710 = vdwg.mxu0
  %711 = vmatprep.subr.bf16.mxu0 0
  %712 = vmatpush1.bf16.msra.mxu0 %v519
  %713 = vmatprep.subr.bf16.mxu0 0
  %714 = vmatpush1.bf16.msra.mxu0 %v520
  %715 = vmatprep.subr.bf16.mxu0 0
  %716 = vmatpush1.bf16.msra.mxu0 %v521
  %717 = vmatprep.subr.bf16.mxu0 0
  %718 = vmatpush1.bf16.msra.mxu0 %v522
  %719 = vmatprep.subr.bf16.mxu0 0
  %720 = vmatpush1.bf16.msra.mxu0 %v523
  %721 = vmatprep.subr.bf16.mxu0 0
  %722 = vmatpush1.bf16.msra.mxu0 %v524
  %723 = vmatprep.subr.bf16.mxu0 0
  %724 = vmatpush1.bf16.msra.mxu0 %v525
  %725 = vmatprep.subr.bf16.mxu0 0
  %726 = vmatpush1.bf16.msra.mxu0 %v526
  %727 = vmatprep.subr.bf16.mxu0 0
  %728 = vmatpush1.bf16.msra.mxu0 %v527
  %729 = vmatprep.subr.bf16.mxu0 0
  %730 = vmatpush1.bf16.msra.mxu0 %v528
  %731 = vmatprep.subr.bf16.mxu0 0
  %732 = vmatpush1.bf16.msra.mxu0 %v529
  %733 = vmatprep.subr.bf16.mxu0 0
  %734 = vmatpush1.bf16.msra.mxu0 %v530
  %735 = vmatprep.subr.bf16.mxu0 0
  %736 = vmatpush1.bf16.msra.mxu0 %v531
  %737 = vmatprep.subr.bf16.mxu0 0
  %738 = vmatpush1.bf16.msra.mxu0 %v532
  %739 = vmatprep.subr.bf16.mxu0 0
  %740 = vmatpush1.bf16.msra.mxu0 %v533
  %741 = vmatprep.subr.bf16.mxu0 0
  %742 = vmatpush1.bf16.msra.mxu0 %v534
  %743 = vmatprep.mubr.bf16.mxu0 %v186
  %744 = vmatmul.mubr.bf16.gmra.mrb[0].mxu0 %v185
  %v745 = vpop.f32.mrb[0].mxu0
  %v746 = vadd.f32 %v706, %v745
  %v747 = vpop.f32.mrb[0].mxu0
  %v748 = vpop.f32.mrb[0].mxu0
  %v749 = vpop.f32.mrb[0].mxu0
  %750 = vdwg.mxu0
  %751 = vmatprep.subr.bf16.mxu0 0
  %752 = vmatpush1.bf16.msra.mxu0 %v535
  %753 = vmatprep.subr.bf16.mxu0 0
  %754 = vmatpush1.bf16.msra.mxu0 %v536
  %755 = vmatprep.subr.bf16.mxu0 0
  %756 = vmatpush1.bf16.msra.mxu0 %v537
  %757 = vmatprep.subr.bf16.mxu0 0
  %758 = vmatpush1.bf16.msra.mxu0 %v538
  %759 = vmatprep.subr.bf16.mxu0 0
  %760 = vmatpush1.bf16.msra.mxu0 %v539
  %761 = vmatprep.subr.bf16.mxu0 0
  %762 = vmatpush1.bf16.msra.mxu0 %v540
  %763 = vmatprep.subr.bf16.mxu0 0
  %764 = vmatpush1.bf16.msra.mxu0 %v541
  %765 = vmatprep.subr.bf16.mxu0 0
  %766 = vmatpush1.bf16.msra.mxu0 %v542
  %767 = vmatprep.subr.bf16.mxu0 0
  %768 = vmatpush1.bf16.msra.mxu0 %v543
  %769 = vmatprep.subr.bf16.mxu0 0
  %770 = vmatpush1.bf16.msra.mxu0 %v544
  %771 = vmatprep.subr.bf16.mxu0 0
  %772 = vmatpush1.bf16.msra.mxu0 %v545
  %773 = vmatprep.subr.bf16.mxu0 0
  %774 = vmatpush1.bf16.msra.mxu0 %v546
  %775 = vmatprep.subr.bf16.mxu0 0
  %776 = vmatpush1.bf16.msra.mxu0 %v547
  %777 = vmatprep.subr.bf16.mxu0 0
  %778 = vmatpush1.bf16.msra.mxu0 %v548
  %779 = vmatprep.subr.bf16.mxu0 0
  %780 = vmatpush1.bf16.msra.mxu0 %v549
  %781 = vmatprep.subr.bf16.mxu0 0
  %782 = vmatpush1.bf16.msra.mxu0 %v550
  %783 = vmatprep.mubr.bf16.mxu0 %v188
  %784 = vmatmul.mubr.bf16.gmra.mrb[0].mxu0 %v187
  %v785 = vpop.f32.mrb[0].mxu0
  %v786 = vadd.f32 %v746, %v785
  %v787 = vpop.f32.mrb[0].mxu0
  %v788 = vpop.f32.mrb[0].mxu0
  %v789 = vpop.f32.mrb[0].mxu0
  %790 = vdwg.mxu0
  %791 = vmatprep.subr.bf16.mxu0 0
  %792 = vmatpush1.bf16.msra.mxu0 %v551
  %793 = vmatprep.subr.bf16.mxu0 0
  %794 = vmatpush1.bf16.msra.mxu0 %v552
  %795 = vmatprep.subr.bf16.mxu0 0
  %796 = vmatpush1.bf16.msra.mxu0 %v553
  %797 = vmatprep.subr.bf16.mxu0 0
  %798 = vmatpush1.bf16.msra.mxu0 %v554
  %799 = vmatprep.subr.bf16.mxu0 0
  %800 = vmatpush1.bf16.msra.mxu0 %v555
  %801 = vmatprep.subr.bf16.mxu0 0
  %802 = vmatpush1.bf16.msra.mxu0 %v556
  %803 = vmatprep.subr.bf16.mxu0 0
  %804 = vmatpush1.bf16.msra.mxu0 %v557
  %805 = vmatprep.subr.bf16.mxu0 0
  %806 = vmatpush1.bf16.msra.mxu0 %v558
  %807 = vmatprep.subr.bf16.mxu0 0
  %808 = vmatpush1.bf16.msra.mxu0 0
  %809 = vmatprep.subr.bf16.mxu0 0
  %810 = vmatpush1.bf16.msra.mxu0 0
  %811 = vmatprep.subr.bf16.mxu0 0
  %812 = vmatpush1.bf16.msra.mxu0 0
  %813 = vmatprep.subr.bf16.mxu0 0
  %814 = vmatpush1.bf16.msra.mxu0 0
  %815 = vmatprep.subr.bf16.mxu0 0
  %816 = vmatpush1.bf16.msra.mxu0 0
  %817 = vmatprep.subr.bf16.mxu0 0
  %818 = vmatpush1.bf16.msra.mxu0 0
  %819 = vmatprep.subr.bf16.mxu0 0
  %820 = vmatpush1.bf16.msra.mxu0 0
  %821 = vmatprep.subr.bf16.mxu0 0
  %822 = vmatpush1.bf16.msra.mxu0 0
  %823 = vmatprep.mubr.bf16.mxu0 0
  %824 = vmatmul.mubr.bf16.gmra.mrb[0].mxu0 %v189
  %v825 = vpop.f32.mrb[0].mxu0
  %v826 = vadd.f32 %v786, %v825
  %v827 = vpop.f32.mrb[0].mxu0
  %v828 = vpop.f32.mrb[0].mxu0
  %v829 = vpop.f32.mrb[0].mxu0
  %830 = vdwg.mxu0
  %v831 = vld [vmem:[%s2] sm:$0x1]
  %v833 = vlaneseq
  %v834 = vshrl.u32 %v833, 7
  %v835 = vsub.s32 0, %v834
  %v836 = vrot.slane %v831, %v835
  %v838 = vmul.f32 %v826, %v836
  %v839 = vld [vmem:[%s3] sm:$0x1]
  %v841 = vlaneseq
  %v842 = vshrl.u32 %v841, 7
  %v843 = vsub.s32 0, %v842
  %v844 = vrot.slane %v839, %v843
  %v846 = vadd.f32 %v838, %v844
  %vm847 = vcmp.gt.f32.partialorder %v846, 0.0
  %v848 = vmul.f32 %v846, 0.1
  %v849 = vsel %vm847, %v846, %v848
  %v850 = vpack.c.bf16 %v849, %v849
  %851 = vst [vmem:[%s4] sm:$0xf] %v850
  // Predicated region
  $region18: #{darknet_forward.39} parent=0 // pred_check
    _
  $region19: #{darknet_forward.39} parent=0 // pred_check_branch
    %853 = sbr.rel (0) target = $region21
  $region20: #{darknet_forward.39} parent=0 // pred_region
    _
  $region21: #{darknet_forward.39} parent=0 // pred_fallthru
    _
  // Predicated region
  $region22: #{darknet_forward.39} parent=0 // pred_check
    _
  $region23: #{darknet_forward.39} parent=0 // pred_check_branch
    %855 = sbr.rel (0) target = $region25
  $region24: #{darknet_forward.39} parent=0 // pred_region
    _
  $region25: #{darknet_forward.39} parent=0 // pred_fallthru
    _

// kernel: darknet_forward.41
$region0: #{darknet_forward.41}
  #allocation0 [shape = 'u32[]', space=smem, size = 0x4, offset = 0x4, fixed_abs, tag = 'smem constant byte address 0x4 - core index']
  #allocation1 [shape = 'u32[144,128]{1,0:T(1,128)}', space=vmem, size = 0x12000, scoped, tag = 'internal scratch']
  %s0 = inlined_call_operand.vmem [shape: bf16[8,640], index: 0, kind: input, shape index: {}]
  %s1 = inlined_call_operand.vmem [shape: bf16[640,128], index: 1, kind: input, shape index: {}]
  %s2 = inlined_call_operand.vmem [shape: f32[1,128], index: 2, kind: input, shape index: {}]
  %s3 = inlined_call_operand.vmem [shape: f32[1,128], index: 3, kind: input, shape index: {}]
  %s4 = inlined_call_operand.vmem [shape: bf16[8,128], index: 4, kind: output, shape index: {}]
  %s5 = sld [smem:[#allocation0]]
  $region26: #{darknet_forward.41} parent=0
    _
  %s7 = ssub.s32 1, %s5
  %s8 = scalar_select 0, %s7, %s5
  // Predicated region
  $region2: #{darknet_forward.41} parent=0 // pred_check
    _
  $region3: #{darknet_forward.41} parent=0 // pred_check_branch
    %10 = sbr.rel (0) target = $region5
  $region4: #{darknet_forward.41} parent=0 // pred_region
    _
  $region5: #{darknet_forward.41} parent=0 // pred_fallthru
    _
  // Predicated region
  $region6: #{darknet_forward.41} parent=0 // pred_check
    _
  $region7: #{darknet_forward.41} parent=0 // pred_check_branch
    %12 = sbr.rel (0) target = $region9
  $region8: #{darknet_forward.41} parent=0 // pred_region
    _
  $region9: #{darknet_forward.41} parent=0 // pred_fallthru
    _
  // Predicated region
  $region10: #{darknet_forward.41} parent=0 // pred_check
    _
  $region11: #{darknet_forward.41} parent=0 // pred_check_branch
    %14 = sbr.rel (0) target = $region13
  $region12: #{darknet_forward.41} parent=0 // pred_region
    _
  $region13: #{darknet_forward.41} parent=0 // pred_fallthru
    _
  // Predicated region
  $region14: #{darknet_forward.41} parent=0 // pred_check
    _
  $region15: #{darknet_forward.41} parent=0 // pred_check_branch
    %16 = sbr.rel (0) target = $region17
  $region16: #{darknet_forward.41} parent=0 // pred_region
    _
  $region17: #{darknet_forward.41} parent=0 // pred_fallthru
    _
  %v18 = vld [vmem:[%s0] sm:$0xff]
  %v19 = vld [vmem:[%s0 + $0x8] sm:$0xff]
  %v20 = vld [vmem:[%s0 + $0x10] sm:$0xf]
  %v21 = vld [vmem:[%s1] sm:$0xf]
  %v22 = vld [vmem:[%s1 + $0x4] sm:$0xf]
  %v23 = vld [vmem:[%s1 + $0x8] sm:$0xf]
  %v24 = vld [vmem:[%s1 + $0xc] sm:$0xf]
  %v25 = vld [vmem:[%s1 + $0x10] sm:$0xf]
  %v26 = vld [vmem:[%s1 + $0x14] sm:$0xf]
  %v27 = vld [vmem:[%s1 + $0x18] sm:$0xf]
  %v28 = vld [vmem:[%s1 + $0x1c] sm:$0xf]
  %v29 = vld [vmem:[%s1 + $0x20] sm:$0xf]
  %v30 = vld [vmem:[%s1 + $0x24] sm:$0xf]
  %v31 = vld [vmem:[%s1 + $0x28] sm:$0xf]
  %v32 = vld [vmem:[%s1 + $0x2c] sm:$0xf]
  %v33 = vld [vmem:[%s1 + $0x30] sm:$0xf]
  %v34 = vld [vmem:[%s1 + $0x34] sm:$0xf]
  %v35 = vld [vmem:[%s1 + $0x38] sm:$0xf]
  %v36 = vld [vmem:[%s1 + $0x3c] sm:$0xf]
  %v37 = vld [vmem:[%s1 + $0x40] sm:$0xf]
  %v38 = vld [vmem:[%s1 + $0x44] sm:$0xf]
  %v39 = vld [vmem:[%s1 + $0x48] sm:$0xf]
  %v40 = vld [vmem:[%s1 + $0x4c] sm:$0xf]
  %v41 = vld [vmem:[%s1 + $0x50] sm:$0xf]
  %v42 = vld [vmem:[%s1 + $0x54] sm:$0xf]
  %v43 = vld [vmem:[%s1 + $0x58] sm:$0xf]
  %v44 = vld [vmem:[%s1 + $0x5c] sm:$0xf]
  %v45 = vld [vmem:[%s1 + $0x60] sm:$0xf]
  %v46 = vld [vmem:[%s1 + $0x64] sm:$0xf]
  %v47 = vld [vmem:[%s1 + $0x68] sm:$0xf]
  %v48 = vld [vmem:[%s1 + $0x6c] sm:$0xf]
  %v49 = vld [vmem:[%s1 + $0x70] sm:$0xf]
  %v50 = vld [vmem:[%s1 + $0x74] sm:$0xf]
  %v51 = vld [vmem:[%s1 + $0x78] sm:$0xf]
  %v52 = vld [vmem:[%s1 + $0x7c] sm:$0xf]
  %v53 = vld [vmem:[%s1 + $0x80] sm:$0xf]
  %v54 = vld [vmem:[%s1 + $0x84] sm:$0xf]
  %v55 = vld [vmem:[%s1 + $0x88] sm:$0xf]
  %v56 = vld [vmem:[%s1 + $0x8c] sm:$0xf]
  %v57 = vld [vmem:[%s1 + $0x90] sm:$0xf]
  %v58 = vld [vmem:[%s1 + $0x94] sm:$0xf]
  %v59 = vld [vmem:[%s1 + $0x98] sm:$0xf]
  %v60 = vld [vmem:[%s1 + $0x9c] sm:$0xf]
  %v61 = vld [vmem:[%s1 + $0xa0] sm:$0xf]
  %v62 = vld [vmem:[%s1 + $0xa4] sm:$0xf]
  %v63 = vld [vmem:[%s1 + $0xa8] sm:$0xf]
  %v64 = vld [vmem:[%s1 + $0xac] sm:$0xf]
  %v65 = vld [vmem:[%s1 + $0xb0] sm:$0xf]
  %v66 = vld [vmem:[%s1 + $0xb4] sm:$0xf]
  %v67 = vld [vmem:[%s1 + $0xb8] sm:$0xf]
  %v68 = vld [vmem:[%s1 + $0xbc] sm:$0xf]
  %v69 = vld [vmem:[%s1 + $0xc0] sm:$0xf]
  %v70 = vld [vmem:[%s1 + $0xc4] sm:$0xf]
  %v71 = vld [vmem:[%s1 + $0xc8] sm:$0xf]
  %v72 = vld [vmem:[%s1 + $0xcc] sm:$0xf]
  %v73 = vld [vmem:[%s1 + $0xd0] sm:$0xf]
  %v74 = vld [vmem:[%s1 + $0xd4] sm:$0xf]
  %v75 = vld [vmem:[%s1 + $0xd8] sm:$0xf]
  %v76 = vld [vmem:[%s1 + $0xdc] sm:$0xf]
  %v77 = vld [vmem:[%s1 + $0xe0] sm:$0xf]
  %v78 = vld [vmem:[%s1 + $0xe4] sm:$0xf]
  %v79 = vld [vmem:[%s1 + $0xe8] sm:$0xf]
  %v80 = vld [vmem:[%s1 + $0xec] sm:$0xf]
  %v81 = vld [vmem:[%s1 + $0xf0] sm:$0xf]
  %v82 = vld [vmem:[%s1 + $0xf4] sm:$0xf]
  %v83 = vld [vmem:[%s1 + $0xf8] sm:$0xf]
  %v84 = vld [vmem:[%s1 + $0xfc] sm:$0xf]
  %v85 = vld [vmem:[%s1 + $0x100] sm:$0xf]
  %v86 = vld [vmem:[%s1 + $0x104] sm:$0xf]
  %v87 = vld [vmem:[%s1 + $0x108] sm:$0xf]
  %v88 = vld [vmem:[%s1 + $0x10c] sm:$0xf]
  %v89 = vld [vmem:[%s1 + $0x110] sm:$0xf]
  %v90 = vld [vmem:[%s1 + $0x114] sm:$0xf]
  %v91 = vld [vmem:[%s1 + $0x118] sm:$0xf]
  %v92 = vld [vmem:[%s1 + $0x11c] sm:$0xf]
  %v93 = vld [vmem:[%s1 + $0x120] sm:$0xf]
  %v94 = vld [vmem:[%s1 + $0x124] sm:$0xf]
  %v95 = vld [vmem:[%s1 + $0x128] sm:$0xf]
  %v96 = vld [vmem:[%s1 + $0x12c] sm:$0xf]
  %v97 = vld [vmem:[%s1 + $0x130] sm:$0xf]
  %v98 = vld [vmem:[%s1 + $0x134] sm:$0xf]
  %v99 = vld [vmem:[%s1 + $0x138] sm:$0xf]
  %v100 = vld [vmem:[%s1 + $0x13c] sm:$0xf]
  %v104 = vunpack.c.l.b16 %v18
  %v105 = vunpack.c.h.b16 %v18
  %v106 = vunpack.c.l.b16 %v19
  %v107 = vunpack.c.h.b16 %v19
  %v108 = vunpack.c.l.b16 %v20
  %v109 = vpack.c.b16 %v104, %v104
  %v110 = vpack.c.b16 %v105, %v105
  %v111 = vpack.c.b16 %v106, %v106
  %v112 = vpack.c.b16 %v107, %v107
  %v113 = vpack.c.b16 %v108, %v108
  %v199 = vunpack.c.l.b16 %v21
  %v200 = vunpack.c.l.b16 %v22
  %v201 = vunpack.c.l.b16 %v23
  %v202 = vunpack.c.l.b16 %v24
  %v203 = vunpack.c.l.b16 %v25
  %v204 = vunpack.c.l.b16 %v26
  %v205 = vunpack.c.l.b16 %v27
  %v206 = vunpack.c.l.b16 %v28
  %v207 = vunpack.c.l.b16 %v29
  %v208 = vunpack.c.l.b16 %v30
  %v209 = vunpack.c.l.b16 %v31
  %v210 = vunpack.c.l.b16 %v32
  %v211 = vunpack.c.l.b16 %v33
  %v212 = vunpack.c.l.b16 %v34
  %v213 = vunpack.c.l.b16 %v35
  %v214 = vunpack.c.l.b16 %v36
  %v215 = vunpack.c.l.b16 %v37
  %v216 = vunpack.c.l.b16 %v38
  %v217 = vunpack.c.l.b16 %v39
  %v218 = vunpack.c.l.b16 %v40
  %v219 = vunpack.c.l.b16 %v41
  %v220 = vunpack.c.l.b16 %v42
  %v221 = vunpack.c.l.b16 %v43
  %v222 = vunpack.c.l.b16 %v44
  %v223 = vunpack.c.l.b16 %v45
  %v224 = vunpack.c.l.b16 %v46
  %v225 = vunpack.c.l.b16 %v47
  %v226 = vunpack.c.l.b16 %v48
  %v227 = vunpack.c.l.b16 %v49
  %v228 = vunpack.c.l.b16 %v50
  %v229 = vunpack.c.l.b16 %v51
  %v230 = vunpack.c.l.b16 %v52
  %v231 = vunpack.c.l.b16 %v53
  %v232 = vunpack.c.l.b16 %v54
  %v233 = vunpack.c.l.b16 %v55
  %v234 = vunpack.c.l.b16 %v56
  %v235 = vunpack.c.l.b16 %v57
  %v236 = vunpack.c.l.b16 %v58
  %v237 = vunpack.c.l.b16 %v59
  %v238 = vunpack.c.l.b16 %v60
  %v239 = vunpack.c.l.b16 %v61
  %v240 = vunpack.c.l.b16 %v62
  %v241 = vunpack.c.l.b16 %v63
  %v242 = vunpack.c.l.b16 %v64
  %v243 = vunpack.c.l.b16 %v65
  %v244 = vunpack.c.l.b16 %v66
  %v245 = vunpack.c.l.b16 %v67
  %v246 = vunpack.c.l.b16 %v68
  %v247 = vunpack.c.l.b16 %v69
  %v248 = vunpack.c.l.b16 %v70
  %v249 = vunpack.c.l.b16 %v71
  %v250 = vunpack.c.l.b16 %v72
  %v251 = vunpack.c.l.b16 %v73
  %v252 = vunpack.c.l.b16 %v74
  %v253 = vunpack.c.l.b16 %v75
  %v254 = vunpack.c.l.b16 %v76
  %v255 = vunpack.c.l.b16 %v77
  %v256 = vunpack.c.l.b16 %v78
  %v257 = vunpack.c.l.b16 %v79
  %v258 = vunpack.c.l.b16 %v80
  %v259 = vunpack.c.l.b16 %v81
  %v260 = vunpack.c.l.b16 %v82
  %v261 = vunpack.c.l.b16 %v83
  %v262 = vunpack.c.l.b16 %v84
  %v263 = vunpack.c.l.b16 %v85
  %v264 = vunpack.c.l.b16 %v86
  %v265 = vunpack.c.l.b16 %v87
  %v266 = vunpack.c.l.b16 %v88
  %v267 = vunpack.c.l.b16 %v89
  %v268 = vunpack.c.l.b16 %v90
  %v269 = vunpack.c.l.b16 %v91
  %v270 = vunpack.c.l.b16 %v92
  %v271 = vunpack.c.l.b16 %v93
  %v272 = vunpack.c.l.b16 %v94
  %v273 = vunpack.c.l.b16 %v95
  %v274 = vunpack.c.l.b16 %v96
  %v275 = vunpack.c.l.b16 %v97
  %v276 = vunpack.c.l.b16 %v98
  %v277 = vunpack.c.l.b16 %v99
  %v278 = vunpack.c.l.b16 %v100
  %v279 = vpack.c.b16 %v200, %v199
  %v280 = vpack.c.b16 %v202, %v201
  %v281 = vpack.c.b16 %v204, %v203
  %v282 = vpack.c.b16 %v206, %v205
  %v283 = vpack.c.b16 %v208, %v207
  %v284 = vpack.c.b16 %v210, %v209
  %v285 = vpack.c.b16 %v212, %v211
  %v286 = vpack.c.b16 %v214, %v213
  %v287 = vpack.c.b16 %v216, %v215
  %v288 = vpack.c.b16 %v218, %v217
  %v289 = vpack.c.b16 %v220, %v219
  %v290 = vpack.c.b16 %v222, %v221
  %v291 = vpack.c.b16 %v224, %v223
  %v292 = vpack.c.b16 %v226, %v225
  %v293 = vpack.c.b16 %v228, %v227
  %v294 = vpack.c.b16 %v230, %v229
  %v295 = vpack.c.b16 %v232, %v231
  %v296 = vpack.c.b16 %v234, %v233
  %v297 = vpack.c.b16 %v236, %v235
  %v298 = vpack.c.b16 %v238, %v237
  %v299 = vpack.c.b16 %v240, %v239
  %v300 = vpack.c.b16 %v242, %v241
  %v301 = vpack.c.b16 %v244, %v243
  %v302 = vpack.c.b16 %v246, %v245
  %v303 = vpack.c.b16 %v248, %v247
  %v304 = vpack.c.b16 %v250, %v249
  %v305 = vpack.c.b16 %v252, %v251
  %v306 = vpack.c.b16 %v254, %v253
  %v307 = vpack.c.b16 %v256, %v255
  %v308 = vpack.c.b16 %v258, %v257
  %v309 = vpack.c.b16 %v260, %v259
  %v310 = vpack.c.b16 %v262, %v261
  %v311 = vpack.c.b16 %v264, %v263
  %v312 = vpack.c.b16 %v266, %v265
  %v313 = vpack.c.b16 %v268, %v267
  %v314 = vpack.c.b16 %v270, %v269
  %v315 = vpack.c.b16 %v272, %v271
  %v316 = vpack.c.b16 %v274, %v273
  %v317 = vpack.c.b16 %v276, %v275
  %v318 = vpack.c.b16 %v278, %v277
  %359 = vmatprep.subr.bf16.mxu0 0
  %360 = vmatpush1.bf16.msra.mxu0 %v279
  %361 = vmatprep.subr.bf16.mxu0 0
  %362 = vmatpush1.bf16.msra.mxu0 %v280
  %363 = vmatprep.subr.bf16.mxu0 0
  %364 = vmatpush1.bf16.msra.mxu0 %v281
  %365 = vmatprep.subr.bf16.mxu0 0
  %366 = vmatpush1.bf16.msra.mxu0 %v282
  %367 = vmatprep.subr.bf16.mxu0 0
  %368 = vmatpush1.bf16.msra.mxu0 %v283
  %369 = vmatprep.subr.bf16.mxu0 0
  %370 = vmatpush1.bf16.msra.mxu0 %v284
  %371 = vmatprep.subr.bf16.mxu0 0
  %372 = vmatpush1.bf16.msra.mxu0 %v285
  %373 = vmatprep.subr.bf16.mxu0 0
  %374 = vmatpush1.bf16.msra.mxu0 %v286
  %375 = vmatprep.subr.bf16.mxu0 0
  %376 = vmatpush1.bf16.msra.mxu0 %v287
  %377 = vmatprep.subr.bf16.mxu0 0
  %378 = vmatpush1.bf16.msra.mxu0 %v288
  %379 = vmatprep.subr.bf16.mxu0 0
  %380 = vmatpush1.bf16.msra.mxu0 %v289
  %381 = vmatprep.subr.bf16.mxu0 0
  %382 = vmatpush1.bf16.msra.mxu0 %v290
  %383 = vmatprep.subr.bf16.mxu0 0
  %384 = vmatpush1.bf16.msra.mxu0 %v291
  %385 = vmatprep.subr.bf16.mxu0 0
  %386 = vmatpush1.bf16.msra.mxu0 %v292
  %387 = vmatprep.subr.bf16.mxu0 0
  %388 = vmatpush1.bf16.msra.mxu0 %v293
  %389 = vmatprep.subr.bf16.mxu0 0
  %390 = vmatpush1.bf16.msra.mxu0 %v294
  %391 = vmatprep.mubr.bf16.mxu0 %v110
  %392 = vmatmul.mubr.bf16.gmra.mrb[0].mxu0 %v109
  %v393 = vpop.f32.mrb[0].mxu0
  %v394 = vadd.f32 0.0, %v393
  %v395 = vpop.f32.mrb[0].mxu0
  %v396 = vpop.f32.mrb[0].mxu0
  %v397 = vpop.f32.mrb[0].mxu0
  %398 = vdwg.mxu0
  %399 = vmatprep.subr.bf16.mxu0 0
  %400 = vmatpush1.bf16.msra.mxu0 %v295
  %401 = vmatprep.subr.bf16.mxu0 0
  %402 = vmatpush1.bf16.msra.mxu0 %v296
  %403 = vmatprep.subr.bf16.mxu0 0
  %404 = vmatpush1.bf16.msra.mxu0 %v297
  %405 = vmatprep.subr.bf16.mxu0 0
  %406 = vmatpush1.bf16.msra.mxu0 %v298
  %407 = vmatprep.subr.bf16.mxu0 0
  %408 = vmatpush1.bf16.msra.mxu0 %v299
  %409 = vmatprep.subr.bf16.mxu0 0
  %410 = vmatpush1.bf16.msra.mxu0 %v300
  %411 = vmatprep.subr.bf16.mxu0 0
  %412 = vmatpush1.bf16.msra.mxu0 %v301
  %413 = vmatprep.subr.bf16.mxu0 0
  %414 = vmatpush1.bf16.msra.mxu0 %v302
  %415 = vmatprep.subr.bf16.mxu0 0
  %416 = vmatpush1.bf16.msra.mxu0 %v303
  %417 = vmatprep.subr.bf16.mxu0 0
  %418 = vmatpush1.bf16.msra.mxu0 %v304
  %419 = vmatprep.subr.bf16.mxu0 0
  %420 = vmatpush1.bf16.msra.mxu0 %v305
  %421 = vmatprep.subr.bf16.mxu0 0
  %422 = vmatpush1.bf16.msra.mxu0 %v306
  %423 = vmatprep.subr.bf16.mxu0 0
  %424 = vmatpush1.bf16.msra.mxu0 %v307
  %425 = vmatprep.subr.bf16.mxu0 0
  %426 = vmatpush1.bf16.msra.mxu0 %v308
  %427 = vmatprep.subr.bf16.mxu0 0
  %428 = vmatpush1.bf16.msra.mxu0 %v309
  %429 = vmatprep.subr.bf16.mxu0 0
  %430 = vmatpush1.bf16.msra.mxu0 %v310
  %431 = vmatprep.mubr.bf16.mxu0 %v112
  %432 = vmatmul.mubr.bf16.gmra.mrb[0].mxu0 %v111
  %v433 = vpop.f32.mrb[0].mxu0
  %v434 = vadd.f32 %v394, %v433
  %v435 = vpop.f32.mrb[0].mxu0
  %v436 = vpop.f32.mrb[0].mxu0
  %v437 = vpop.f32.mrb[0].mxu0
  %438 = vdwg.mxu0
  %439 = vmatprep.subr.bf16.mxu0 0
  %440 = vmatpush1.bf16.msra.mxu0 %v311
  %441 = vmatprep.subr.bf16.mxu0 0
  %442 = vmatpush1.bf16.msra.mxu0 %v312
  %443 = vmatprep.subr.bf16.mxu0 0
  %444 = vmatpush1.bf16.msra.mxu0 %v313
  %445 = vmatprep.subr.bf16.mxu0 0
  %446 = vmatpush1.bf16.msra.mxu0 %v314
  %447 = vmatprep.subr.bf16.mxu0 0
  %448 = vmatpush1.bf16.msra.mxu0 %v315
  %449 = vmatprep.subr.bf16.mxu0 0
  %450 = vmatpush1.bf16.msra.mxu0 %v316
  %451 = vmatprep.subr.bf16.mxu0 0
  %452 = vmatpush1.bf16.msra.mxu0 %v317
  %453 = vmatprep.subr.bf16.mxu0 0
  %454 = vmatpush1.bf16.msra.mxu0 %v318
  %455 = vmatprep.subr.bf16.mxu0 0
  %456 = vmatpush1.bf16.msra.mxu0 0
  %457 = vmatprep.subr.bf16.mxu0 0
  %458 = vmatpush1.bf16.msra.mxu0 0
  %459 = vmatprep.subr.bf16.mxu0 0
  %460 = vmatpush1.bf16.msra.mxu0 0
  %461 = vmatprep.subr.bf16.mxu0 0
  %462 = vmatpush1.bf16.msra.mxu0 0
  %463 = vmatprep.subr.bf16.mxu0 0
  %464 = vmatpush1.bf16.msra.mxu0 0
  %465 = vmatprep.subr.bf16.mxu0 0
  %466 = vmatpush1.bf16.msra.mxu0 0
  %467 = vmatprep.subr.bf16.mxu0 0
  %468 = vmatpush1.bf16.msra.mxu0 0
  %469 = vmatprep.subr.bf16.mxu0 0
  %470 = vmatpush1.bf16.msra.mxu0 0
  %471 = vmatprep.mubr.bf16.mxu0 0
  %472 = vmatmul.mubr.bf16.gmra.mrb[0].mxu0 %v113
  %v473 = vpop.f32.mrb[0].mxu0
  %v474 = vadd.f32 %v434, %v473
  %v475 = vpop.f32.mrb[0].mxu0
  %v476 = vpop.f32.mrb[0].mxu0
  %v477 = vpop.f32.mrb[0].mxu0
  %478 = vdwg.mxu0
  %v479 = vld [vmem:[%s2] sm:$0x1]
  %v481 = vlaneseq
  %v482 = vshrl.u32 %v481, 7
  %v483 = vsub.s32 0, %v482
  %v484 = vrot.slane %v479, %v483
  %v486 = vmul.f32 %v474, %v484
  %v487 = vld [vmem:[%s3] sm:$0x1]
  %v489 = vlaneseq
  %v490 = vshrl.u32 %v489, 7
  %v491 = vsub.s32 0, %v490
  %v492 = vrot.slane %v487, %v491
  %v494 = vadd.f32 %v486, %v492
  %vm495 = vcmp.gt.f32.partialorder %v494, 0.0
  %v496 = vmul.f32 %v494, 0.1
  %v497 = vsel %vm495, %v494, %v496
  %v498 = vpack.c.bf16 %v497, %v497
  %499 = vst [vmem:[%s4] sm:$0xf] %v498
  // Predicated region
  $region18: #{darknet_forward.41} parent=0 // pred_check
    _
  $region19: #{darknet_forward.41} parent=0 // pred_check_branch
    %501 = sbr.rel (0) target = $region21
  $region20: #{darknet_forward.41} parent=0 // pred_region
    _
  $region21: #{darknet_forward.41} parent=0 // pred_fallthru
    _
  // Predicated region
  $region22: #{darknet_forward.41} parent=0 // pred_check
    _
  $region23: #{darknet_forward.41} parent=0 // pred_check_branch
    %503 = sbr.rel (0) target = $region25
  $region24: #{darknet_forward.41} parent=0 // pred_region
    _
  $region25: #{darknet_forward.41} parent=0 // pred_fallthru
    _

// kernel: darknet_forward.45
$region0: #{darknet_forward.45}
  #allocation0 [shape = 'u32[]', space=smem, size = 0x4, offset = 0x4, fixed_abs, tag = 'smem constant byte address 0x4 - core index']
  #allocation1 [shape = 'u32[144,128]{1,0:T(1,128)}', space=vmem, size = 0x12000, scoped, tag = 'internal scratch']
  %s0 = inlined_call_operand.vmem [shape: bf16[2,256], index: 0, kind: input, shape index: {}]
  %s1 = inlined_call_operand.vmem [shape: bf16[256,128], index: 1, kind: input, shape index: {}]
  %s2 = inlined_call_operand.vmem [shape: f32[1,128], index: 2, kind: input, shape index: {}]
  %s3 = inlined_call_operand.vmem [shape: f32[1,128], index: 3, kind: input, shape index: {}]
  %s4 = inlined_call_operand.vmem [shape: bf16[2,128], index: 4, kind: output, shape index: {}]
  %s5 = sld [smem:[#allocation0]]
  $region26: #{darknet_forward.45} parent=0
    _
  %s7 = ssub.s32 1, %s5
  %s8 = scalar_select 0, %s7, %s5
  // Predicated region
  $region2: #{darknet_forward.45} parent=0 // pred_check
    _
  $region3: #{darknet_forward.45} parent=0 // pred_check_branch
    %10 = sbr.rel (0) target = $region5
  $region4: #{darknet_forward.45} parent=0 // pred_region
    _
  $region5: #{darknet_forward.45} parent=0 // pred_fallthru
    _
  // Predicated region
  $region6: #{darknet_forward.45} parent=0 // pred_check
    _
  $region7: #{darknet_forward.45} parent=0 // pred_check_branch
    %12 = sbr.rel (0) target = $region9
  $region8: #{darknet_forward.45} parent=0 // pred_region
    _
  $region9: #{darknet_forward.45} parent=0 // pred_fallthru
    _
  // Predicated region
  $region10: #{darknet_forward.45} parent=0 // pred_check
    _
  $region11: #{darknet_forward.45} parent=0 // pred_check_branch
    %14 = sbr.rel (0) target = $region13
  $region12: #{darknet_forward.45} parent=0 // pred_region
    _
  $region13: #{darknet_forward.45} parent=0 // pred_fallthru
    _
  // Predicated region
  $region14: #{darknet_forward.45} parent=0 // pred_check
    _
  $region15: #{darknet_forward.45} parent=0 // pred_check_branch
    %16 = sbr.rel (0) target = $region17
  $region16: #{darknet_forward.45} parent=0 // pred_region
    _
  $region17: #{darknet_forward.45} parent=0 // pred_fallthru
    _
  %v18 = vld [vmem:[%s0] sm:$0x3]
  %v19 = vld [vmem:[%s1] sm:$0xf]
  %v20 = vld [vmem:[%s1 + $0x4] sm:$0xf]
  %v21 = vld [vmem:[%s1 + $0x8] sm:$0xf]
  %v22 = vld [vmem:[%s1 + $0xc] sm:$0xf]
  %v23 = vld [vmem:[%s1 + $0x10] sm:$0xf]
  %v24 = vld [vmem:[%s1 + $0x14] sm:$0xf]
  %v25 = vld [vmem:[%s1 + $0x18] sm:$0xf]
  %v26 = vld [vmem:[%s1 + $0x1c] sm:$0xf]
  %v27 = vld [vmem:[%s1 + $0x20] sm:$0xf]
  %v28 = vld [vmem:[%s1 + $0x24] sm:$0xf]
  %v29 = vld [vmem:[%s1 + $0x28] sm:$0xf]
  %v30 = vld [vmem:[%s1 + $0x2c] sm:$0xf]
  %v31 = vld [vmem:[%s1 + $0x30] sm:$0xf]
  %v32 = vld [vmem:[%s1 + $0x34] sm:$0xf]
  %v33 = vld [vmem:[%s1 + $0x38] sm:$0xf]
  %v34 = vld [vmem:[%s1 + $0x3c] sm:$0xf]
  %v35 = vld [vmem:[%s1 + $0x40] sm:$0xf]
  %v36 = vld [vmem:[%s1 + $0x44] sm:$0xf]
  %v37 = vld [vmem:[%s1 + $0x48] sm:$0xf]
  %v38 = vld [vmem:[%s1 + $0x4c] sm:$0xf]
  %v39 = vld [vmem:[%s1 + $0x50] sm:$0xf]
  %v40 = vld [vmem:[%s1 + $0x54] sm:$0xf]
  %v41 = vld [vmem:[%s1 + $0x58] sm:$0xf]
  %v42 = vld [vmem:[%s1 + $0x5c] sm:$0xf]
  %v43 = vld [vmem:[%s1 + $0x60] sm:$0xf]
  %v44 = vld [vmem:[%s1 + $0x64] sm:$0xf]
  %v45 = vld [vmem:[%s1 + $0x68] sm:$0xf]
  %v46 = vld [vmem:[%s1 + $0x6c] sm:$0xf]
  %v47 = vld [vmem:[%s1 + $0x70] sm:$0xf]
  %v48 = vld [vmem:[%s1 + $0x74] sm:$0xf]
  %v49 = vld [vmem:[%s1 + $0x78] sm:$0xf]
  %v50 = vld [vmem:[%s1 + $0x7c] sm:$0xf]
  %v53 = vunpack.c.l.s4 1966171168
  %v54 = vunpack.c.0.s8 %v53
  %v55 = vlaneseq
  %v56 = vshrl.u32 %v55, 7
  %v57 = vsub.s32 %v54, %v56
  %v58 = vrot.slane %v18, %v57
  %v59 = vcombine.high %v58, %v58
  %v61 = vunpack.c.l.s4 1966171168
  %v62 = vunpack.c.0.s8 %v61
  %v63 = vlaneseq
  %v64 = vshrl.u32 %v63, 7
  %v65 = vsub.s32 %v62, %v64
  %v66 = vrot.slane %v58, %v65
  %v68 = vunpack.c.l.s4 1966171168
  %v69 = vunpack.c.0.s8 %v68
  %v70 = vlaneseq
  %v71 = vshrl.u32 %v70, 7
  %v72 = vsub.s32 %v69, %v71
  %v73 = vrot.slane %v59, %v72
  %v108 = vunpack.c.l.b16 %v19
  %v109 = vunpack.c.l.b16 %v20
  %v110 = vunpack.c.l.b16 %v21
  %v111 = vunpack.c.l.b16 %v22
  %v112 = vunpack.c.l.b16 %v23
  %v113 = vunpack.c.l.b16 %v24
  %v114 = vunpack.c.l.b16 %v25
  %v115 = vunpack.c.l.b16 %v26
  %v116 = vunpack.c.l.b16 %v27
  %v117 = vunpack.c.l.b16 %v28
  %v118 = vunpack.c.l.b16 %v29
  %v119 = vunpack.c.l.b16 %v30
  %v120 = vunpack.c.l.b16 %v31
  %v121 = vunpack.c.l.b16 %v32
  %v122 = vunpack.c.l.b16 %v33
  %v123 = vunpack.c.l.b16 %v34
  %v124 = vunpack.c.l.b16 %v35
  %v125 = vunpack.c.l.b16 %v36
  %v126 = vunpack.c.l.b16 %v37
  %v127 = vunpack.c.l.b16 %v38
  %v128 = vunpack.c.l.b16 %v39
  %v129 = vunpack.c.l.b16 %v40
  %v130 = vunpack.c.l.b16 %v41
  %v131 = vunpack.c.l.b16 %v42
  %v132 = vunpack.c.l.b16 %v43
  %v133 = vunpack.c.l.b16 %v44
  %v134 = vunpack.c.l.b16 %v45
  %v135 = vunpack.c.l.b16 %v46
  %v136 = vunpack.c.l.b16 %v47
  %v137 = vunpack.c.l.b16 %v48
  %v138 = vunpack.c.l.b16 %v49
  %v139 = vunpack.c.l.b16 %v50
  %v140 = vpack.c.b16 %v109, %v108
  %v141 = vpack.c.b16 %v111, %v110
  %v142 = vpack.c.b16 %v113, %v112
  %v143 = vpack.c.b16 %v115, %v114
  %v144 = vpack.c.b16 %v117, %v116
  %v145 = vpack.c.b16 %v119, %v118
  %v146 = vpack.c.b16 %v121, %v120
  %v147 = vpack.c.b16 %v123, %v122
  %v148 = vpack.c.b16 %v125, %v124
  %v149 = vpack.c.b16 %v127, %v126
  %v150 = vpack.c.b16 %v129, %v128
  %v151 = vpack.c.b16 %v131, %v130
  %v152 = vpack.c.b16 %v133, %v132
  %v153 = vpack.c.b16 %v135, %v134
  %v154 = vpack.c.b16 %v137, %v136
  %v155 = vpack.c.b16 %v139, %v138
  %172 = vmatprep.subr.bf16.mxu0 0
  %173 = vmatpush1.bf16.msra.mxu0 %v140
  %174 = vmatprep.subr.bf16.mxu0 0
  %175 = vmatpush1.bf16.msra.mxu0 %v141
  %176 = vmatprep.subr.bf16.mxu0 0
  %177 = vmatpush1.bf16.msra.mxu0 %v142
  %178 = vmatprep.subr.bf16.mxu0 0
  %179 = vmatpush1.bf16.msra.mxu0 %v143
  %180 = vmatprep.subr.bf16.mxu0 0
  %181 = vmatpush1.bf16.msra.mxu0 %v144
  %182 = vmatprep.subr.bf16.mxu0 0
  %183 = vmatpush1.bf16.msra.mxu0 %v145
  %184 = vmatprep.subr.bf16.mxu0 0
  %185 = vmatpush1.bf16.msra.mxu0 %v146
  %186 = vmatprep.subr.bf16.mxu0 0
  %187 = vmatpush1.bf16.msra.mxu0 %v147
  %188 = vmatprep.subr.bf16.mxu0 0
  %189 = vmatpush1.bf16.msra.mxu0 %v148
  %190 = vmatprep.subr.bf16.mxu0 0
  %191 = vmatpush1.bf16.msra.mxu0 %v149
  %192 = vmatprep.subr.bf16.mxu0 0
  %193 = vmatpush1.bf16.msra.mxu0 %v150
  %194 = vmatprep.subr.bf16.mxu0 0
  %195 = vmatpush1.bf16.msra.mxu0 %v151
  %196 = vmatprep.subr.bf16.mxu0 0
  %197 = vmatpush1.bf16.msra.mxu0 %v152
  %198 = vmatprep.subr.bf16.mxu0 0
  %199 = vmatpush1.bf16.msra.mxu0 %v153
  %200 = vmatprep.subr.bf16.mxu0 0
  %201 = vmatpush1.bf16.msra.mxu0 %v154
  %202 = vmatprep.subr.bf16.mxu0 0
  %203 = vmatpush1.bf16.msra.mxu0 %v155
  %204 = vmatprep.mubr.bf16.mxu0 %v73
  %205 = vmatmul.mubr.bf16.gmra.mrb[0].mxu0 %v66
  %v206 = vpop.f32.mrb[0].mxu0
  %v207 = vadd.f32 0.0, %v206
  %v208 = vpop.f32.mrb[0].mxu0
  %v209 = vpop.f32.mrb[0].mxu0
  %v210 = vpop.f32.mrb[0].mxu0
  %211 = vdwg.mxu0
  %v212 = vld [vmem:[%s2] sm:$0x1]
  %v214 = vlaneseq
  %v215 = vshrl.u32 %v214, 7
  %v216 = vsub.s32 0, %v215
  %v217 = vrot.slane %v212, %v216
  %v219 = vmul.f32 %v207, %v217
  %v220 = vld [vmem:[%s3] sm:$0x1]
  %v222 = vlaneseq
  %v223 = vshrl.u32 %v222, 7
  %v224 = vsub.s32 0, %v223
  %v225 = vrot.slane %v220, %v224
  %v227 = vadd.f32 %v219, %v225
  %vm228 = vcmp.gt.f32.partialorder %v227, 0.0
  %v229 = vmul.f32 %v227, 0.1
  %v230 = vsel %vm228, %v227, %v229
  %v231 = vpack.c.bf16 %v230, %v230
  %232 = vst [vmem:[%s4] sm:$0x1] %v231
  // Predicated region
  $region18: #{darknet_forward.45} parent=0 // pred_check
    _
  $region19: #{darknet_forward.45} parent=0 // pred_check_branch
    %234 = sbr.rel (0) target = $region21
  $region20: #{darknet_forward.45} parent=0 // pred_region
    _
  $region21: #{darknet_forward.45} parent=0 // pred_fallthru
    _
  // Predicated region
  $region22: #{darknet_forward.45} parent=0 // pred_check
    _
  $region23: #{darknet_forward.45} parent=0 // pred_check_branch
    %236 = sbr.rel (0) target = $region25
  $region24: #{darknet_forward.45} parent=0 // pred_region
    _
  $region25: #{darknet_forward.45} parent=0 // pred_fallthru
    _

// kernel: darknet_forward.44
$region0: #{darknet_forward.44}
  #allocation0 [shape = 'u32[]', space=smem, size = 0x4, offset = 0x4, fixed_abs, tag = 'smem constant byte address 0x4 - core index']
  #allocation1 [shape = 'u32[144,128]{1,0:T(1,128)}', space=vmem, size = 0x12000, scoped, tag = 'internal scratch']
  %s0 = inlined_call_operand.vmem [shape: bf16[2,1152], index: 0, kind: input, shape index: {}]
  %s1 = inlined_call_operand.vmem [shape: bf16[1152,256], index: 1, kind: input, shape index: {}]
  %s2 = inlined_call_operand.vmem [shape: f32[1,256], index: 2, kind: input, shape index: {}]
  %s3 = inlined_call_operand.vmem [shape: f32[1,256], index: 3, kind: input, shape index: {}]
  %s4 = inlined_call_operand.vmem [shape: bf16[2,256], index: 4, kind: output, shape index: {}]
  %s5 = sld [smem:[#allocation0]]
  $region26: #{darknet_forward.44} parent=0
    _
  %s7 = ssub.s32 1, %s5
  %s8 = scalar_select 0, %s7, %s5
  // Predicated region
  $region2: #{darknet_forward.44} parent=0 // pred_check
    _
  $region3: #{darknet_forward.44} parent=0 // pred_check_branch
    %10 = sbr.rel (0) target = $region5
  $region4: #{darknet_forward.44} parent=0 // pred_region
    _
  $region5: #{darknet_forward.44} parent=0 // pred_fallthru
    _
  // Predicated region
  $region6: #{darknet_forward.44} parent=0 // pred_check
    _
  $region7: #{darknet_forward.44} parent=0 // pred_check_branch
    %12 = sbr.rel (0) target = $region9
  $region8: #{darknet_forward.44} parent=0 // pred_region
    _
  $region9: #{darknet_forward.44} parent=0 // pred_fallthru
    _
  // Predicated region
  $region10: #{darknet_forward.44} parent=0 // pred_check
    _
  $region11: #{darknet_forward.44} parent=0 // pred_check_branch
    %14 = sbr.rel (0) target = $region13
  $region12: #{darknet_forward.44} parent=0 // pred_region
    _
  $region13: #{darknet_forward.44} parent=0 // pred_fallthru
    _
  // Predicated region
  $region14: #{darknet_forward.44} parent=0 // pred_check
    _
  $region15: #{darknet_forward.44} parent=0 // pred_check_branch
    %16 = sbr.rel (0) target = $region17
  $region16: #{darknet_forward.44} parent=0 // pred_region
    _
  $region17: #{darknet_forward.44} parent=0 // pred_fallthru
    _
  %v18 = vld [vmem:[%s0] sm:$0xff]
  %v19 = vld [vmem:[%s0 + $0x8] sm:$0x1]
  %v20 = vld [vmem:[%s1] sm:$0xff]
  %v21 = vld [vmem:[%s1 + $0x8] sm:$0xff]
  %v22 = vld [vmem:[%s1 + $0x10] sm:$0xff]
  %v23 = vld [vmem:[%s1 + $0x18] sm:$0xff]
  %v24 = vld [vmem:[%s1 + $0x20] sm:$0xff]
  %v25 = vld [vmem:[%s1 + $0x28] sm:$0xff]
  %v26 = vld [vmem:[%s1 + $0x30] sm:$0xff]
  %v27 = vld [vmem:[%s1 + $0x38] sm:$0xff]
  %v28 = vld [vmem:[%s1 + $0x40] sm:$0xff]
  %v29 = vld [vmem:[%s1 + $0x48] sm:$0xff]
  %v30 = vld [vmem:[%s1 + $0x50] sm:$0xff]
  %v31 = vld [vmem:[%s1 + $0x58] sm:$0xff]
  %v32 = vld [vmem:[%s1 + $0x60] sm:$0xff]
  %v33 = vld [vmem:[%s1 + $0x68] sm:$0xff]
  %v34 = vld [vmem:[%s1 + $0x70] sm:$0xff]
  %v35 = vld [vmem:[%s1 + $0x78] sm:$0xff]
  %v36 = vld [vmem:[%s1 + $0x80] sm:$0xff]
  %v37 = vld [vmem:[%s1 + $0x88] sm:$0xff]
  %v38 = vld [vmem:[%s1 + $0x90] sm:$0xff]
  %v39 = vld [vmem:[%s1 + $0x98] sm:$0xff]
  %v40 = vld [vmem:[%s1 + $0xa0] sm:$0xff]
  %v41 = vld [vmem:[%s1 + $0xa8] sm:$0xff]
  %v42 = vld [vmem:[%s1 + $0xb0] sm:$0xff]
  %v43 = vld [vmem:[%s1 + $0xb8] sm:$0xff]
  %v44 = vld [vmem:[%s1 + $0xc0] sm:$0xff]
  %v45 = vld [vmem:[%s1 + $0xc8] sm:$0xff]
  %v46 = vld [vmem:[%s1 + $0xd0] sm:$0xff]
  %v47 = vld [vmem:[%s1 + $0xd8] sm:$0xff]
  %v48 = vld [vmem:[%s1 + $0xe0] sm:$0xff]
  %v49 = vld [vmem:[%s1 + $0xe8] sm:$0xff]
  %v50 = vld [vmem:[%s1 + $0xf0] sm:$0xff]
  %v51 = vld [vmem:[%s1 + $0xf8] sm:$0xff]
  %v52 = vld [vmem:[%s1 + $0x100] sm:$0xff]
  %v53 = vld [vmem:[%s1 + $0x108] sm:$0xff]
  %v54 = vld [vmem:[%s1 + $0x110] sm:$0xff]
  %v55 = vld [vmem:[%s1 + $0x118] sm:$0xff]
  %v56 = vld [vmem:[%s1 + $0x120] sm:$0xff]
  %v57 = vld [vmem:[%s1 + $0x128] sm:$0xff]
  %v58 = vld [vmem:[%s1 + $0x130] sm:$0xff]
  %v59 = vld [vmem:[%s1 + $0x138] sm:$0xff]
  %v60 = vld [vmem:[%s1 + $0x140] sm:$0xff]
  %v61 = vld [vmem:[%s1 + $0x148] sm:$0xff]
  %v62 = vld [vmem:[%s1 + $0x150] sm:$0xff]
  %v63 = vld [vmem:[%s1 + $0x158] sm:$0xff]
  %v64 = vld [vmem:[%s1 + $0x160] sm:$0xff]
  %v65 = vld [vmem:[%s1 + $0x168] sm:$0xff]
  %v66 = vld [vmem:[%s1 + $0x170] sm:$0xff]
  %v67 = vld [vmem:[%s1 + $0x178] sm:$0xff]
  %v68 = vld [vmem:[%s1 + $0x180] sm:$0xff]
  %v69 = vld [vmem:[%s1 + $0x188] sm:$0xff]
  %v70 = vld [vmem:[%s1 + $0x190] sm:$0xff]
  %v71 = vld [vmem:[%s1 + $0x198] sm:$0xff]
  %v72 = vld [vmem:[%s1 + $0x1a0] sm:$0xff]
  %v73 = vld [vmem:[%s1 + $0x1a8] sm:$0xff]
  %v74 = vld [vmem:[%s1 + $0x1b0] sm:$0xff]
  %v75 = vld [vmem:[%s1 + $0x1b8] sm:$0xff]
  %v76 = vld [vmem:[%s1 + $0x1c0] sm:$0xff]
  %v77 = vld [vmem:[%s1 + $0x1c8] sm:$0xff]
  %v78 = vld [vmem:[%s1 + $0x1d0] sm:$0xff]
  %v79 = vld [vmem:[%s1 + $0x1d8] sm:$0xff]
  %v80 = vld [vmem:[%s1 + $0x1e0] sm:$0xff]
  %v81 = vld [vmem:[%s1 + $0x1e8] sm:$0xff]
  %v82 = vld [vmem:[%s1 + $0x1f0] sm:$0xff]
  %v83 = vld [vmem:[%s1 + $0x1f8] sm:$0xff]
  %v84 = vld [vmem:[%s1 + $0x200] sm:$0xff]
  %v85 = vld [vmem:[%s1 + $0x208] sm:$0xff]
  %v86 = vld [vmem:[%s1 + $0x210] sm:$0xff]
  %v87 = vld [vmem:[%s1 + $0x218] sm:$0xff]
  %v88 = vld [vmem:[%s1 + $0x220] sm:$0xff]
  %v89 = vld [vmem:[%s1 + $0x228] sm:$0xff]
  %v90 = vld [vmem:[%s1 + $0x230] sm:$0xff]
  %v91 = vld [vmem:[%s1 + $0x238] sm:$0xff]
  %v92 = vld [vmem:[%s1 + $0x240] sm:$0xff]
  %v93 = vld [vmem:[%s1 + $0x248] sm:$0xff]
  %v94 = vld [vmem:[%s1 + $0x250] sm:$0xff]
  %v95 = vld [vmem:[%s1 + $0x258] sm:$0xff]
  %v96 = vld [vmem:[%s1 + $0x260] sm:$0xff]
  %v97 = vld [vmem:[%s1 + $0x268] sm:$0xff]
  %v98 = vld [vmem:[%s1 + $0x270] sm:$0xff]
  %v99 = vld [vmem:[%s1 + $0x278] sm:$0xff]
  %v100 = vld [vmem:[%s1 + $0x280] sm:$0xff]
  %v101 = vld [vmem:[%s1 + $0x288] sm:$0xff]
  %v102 = vld [vmem:[%s1 + $0x290] sm:$0xff]
  %v103 = vld [vmem:[%s1 + $0x298] sm:$0xff]
  %v104 = vld [vmem:[%s1 + $0x2a0] sm:$0xff]
  %v105 = vld [vmem:[%s1 + $0x2a8] sm:$0xff]
  %v106 = vld [vmem:[%s1 + $0x2b0] sm:$0xff]
  %v107 = vld [vmem:[%s1 + $0x2b8] sm:$0xff]
  %v108 = vld [vmem:[%s1 + $0x2c0] sm:$0xff]
  %v109 = vld [vmem:[%s1 + $0x2c8] sm:$0xff]
  %v110 = vld [vmem:[%s1 + $0x2d0] sm:$0xff]
  %v111 = vld [vmem:[%s1 + $0x2d8] sm:$0xff]
  %v112 = vld [vmem:[%s1 + $0x2e0] sm:$0xff]
  %v113 = vld [vmem:[%s1 + $0x2e8] sm:$0xff]
  %v114 = vld [vmem:[%s1 + $0x2f0] sm:$0xff]
  %v115 = vld [vmem:[%s1 + $0x2f8] sm:$0xff]
  %v116 = vld [vmem:[%s1 + $0x300] sm:$0xff]
  %v117 = vld [vmem:[%s1 + $0x308] sm:$0xff]
  %v118 = vld [vmem:[%s1 + $0x310] sm:$0xff]
  %v119 = vld [vmem:[%s1 + $0x318] sm:$0xff]
  %v120 = vld [vmem:[%s1 + $0x320] sm:$0xff]
  %v121 = vld [vmem:[%s1 + $0x328] sm:$0xff]
  %v122 = vld [vmem:[%s1 + $0x330] sm:$0xff]
  %v123 = vld [vmem:[%s1 + $0x338] sm:$0xff]
  %v124 = vld [vmem:[%s1 + $0x340] sm:$0xff]
  %v125 = vld [vmem:[%s1 + $0x348] sm:$0xff]
  %v126 = vld [vmem:[%s1 + $0x350] sm:$0xff]
  %v127 = vld [vmem:[%s1 + $0x358] sm:$0xff]
  %v128 = vld [vmem:[%s1 + $0x360] sm:$0xff]
  %v129 = vld [vmem:[%s1 + $0x368] sm:$0xff]
  %v130 = vld [vmem:[%s1 + $0x370] sm:$0xff]
  %v131 = vld [vmem:[%s1 + $0x378] sm:$0xff]
  %v132 = vld [vmem:[%s1 + $0x380] sm:$0xff]
  %v133 = vld [vmem:[%s1 + $0x388] sm:$0xff]
  %v134 = vld [vmem:[%s1 + $0x390] sm:$0xff]
  %v135 = vld [vmem:[%s1 + $0x398] sm:$0xff]
  %v136 = vld [vmem:[%s1 + $0x3a0] sm:$0xff]
  %v137 = vld [vmem:[%s1 + $0x3a8] sm:$0xff]
  %v138 = vld [vmem:[%s1 + $0x3b0] sm:$0xff]
  %v139 = vld [vmem:[%s1 + $0x3b8] sm:$0xff]
  %v140 = vld [vmem:[%s1 + $0x3c0] sm:$0xff]
  %v141 = vld [vmem:[%s1 + $0x3c8] sm:$0xff]
  %v142 = vld [vmem:[%s1 + $0x3d0] sm:$0xff]
  %v143 = vld [vmem:[%s1 + $0x3d8] sm:$0xff]
  %v144 = vld [vmem:[%s1 + $0x3e0] sm:$0xff]
  %v145 = vld [vmem:[%s1 + $0x3e8] sm:$0xff]
  %v146 = vld [vmem:[%s1 + $0x3f0] sm:$0xff]
  %v147 = vld [vmem:[%s1 + $0x3f8] sm:$0xff]
  %v148 = vld [vmem:[%s1 + $0x400] sm:$0xff]
  %v149 = vld [vmem:[%s1 + $0x408] sm:$0xff]
  %v150 = vld [vmem:[%s1 + $0x410] sm:$0xff]
  %v151 = vld [vmem:[%s1 + $0x418] sm:$0xff]
  %v152 = vld [vmem:[%s1 + $0x420] sm:$0xff]
  %v153 = vld [vmem:[%s1 + $0x428] sm:$0xff]
  %v154 = vld [vmem:[%s1 + $0x430] sm:$0xff]
  %v155 = vld [vmem:[%s1 + $0x438] sm:$0xff]
  %v156 = vld [vmem:[%s1 + $0x440] sm:$0xff]
  %v157 = vld [vmem:[%s1 + $0x448] sm:$0xff]
  %v158 = vld [vmem:[%s1 + $0x450] sm:$0xff]
  %v159 = vld [vmem:[%s1 + $0x458] sm:$0xff]
  %v160 = vld [vmem:[%s1 + $0x460] sm:$0xff]
  %v161 = vld [vmem:[%s1 + $0x468] sm:$0xff]
  %v162 = vld [vmem:[%s1 + $0x470] sm:$0xff]
  %v163 = vld [vmem:[%s1 + $0x478] sm:$0xff]
  %v166 = vcombine.high %v18, %v18
  %v168 = vunpack.c.l.s4 1966171168
  %v169 = vunpack.c.0.s8 %v168
  %v170 = vlaneseq
  %v171 = vshrl.u32 %v170, 7
  %v172 = vsub.s32 %v169, %v171
  %v173 = vrot.slane %v18, %v172
  %v175 = vunpack.c.l.s4 1966171168
  %v176 = vunpack.c.0.s8 %v175
  %v177 = vlaneseq
  %v178 = vshrl.u32 %v177, 7
  %v179 = vsub.s32 %v176, %v178
  %v180 = vrot.slane %v166, %v179
  %v181 = vcombine.high %v173, %v173
  %v182 = vcombine.high %v180, %v180
  %v184 = vunpack.c.l.s4 1966171168
  %v185 = vunpack.c.0.s8 %v184
  %v186 = vlaneseq
  %v187 = vshrl.u32 %v186, 7
  %v188 = vsub.s32 %v185, %v187
  %v189 = vrot.slane %v173, %v188
  %v191 = vunpack.c.l.s4 1966171168
  %v192 = vunpack.c.0.s8 %v191
  %v193 = vlaneseq
  %v194 = vshrl.u32 %v193, 7
  %v195 = vsub.s32 %v192, %v194
  %v196 = vrot.slane %v180, %v195
  %v198 = vunpack.c.l.s4 1966171168
  %v199 = vunpack.c.0.s8 %v198
  %v200 = vlaneseq
  %v201 = vshrl.u32 %v200, 7
  %v202 = vsub.s32 %v199, %v201
  %v203 = vrot.slane %v181, %v202
  %v205 = vunpack.c.l.s4 1966171168
  %v206 = vunpack.c.0.s8 %v205
  %v207 = vlaneseq
  %v208 = vshrl.u32 %v207, 7
  %v209 = vsub.s32 %v206, %v208
  %v210 = vrot.slane %v182, %v209
  %v211 = vcombine.high %v189, %v189
  %v212 = vcombine.high %v196, %v196
  %v213 = vcombine.high %v203, %v203
  %v214 = vcombine.high %v210, %v210
  %v216 = vunpack.c.l.s4 1966171168
  %v217 = vunpack.c.0.s8 %v216
  %v218 = vlaneseq
  %v219 = vshrl.u32 %v218, 7
  %v220 = vsub.s32 %v217, %v219
  %v221 = vrot.slane %v19, %v220
  %v223 = vunpack.c.l.s4 1966171168
  %v224 = vunpack.c.0.s8 %v223
  %v225 = vlaneseq
  %v226 = vshrl.u32 %v225, 7
  %v227 = vsub.s32 %v224, %v226
  %v228 = vrot.slane %v221, %v227
  %v382 = vunpack.c.l.b16 %v20
  %v383 = vunpack.c.h.b16 %v20
  %v384 = vunpack.c.l.b16 %v21
  %v385 = vunpack.c.h.b16 %v21
  %v386 = vunpack.c.l.b16 %v22
  %v387 = vunpack.c.h.b16 %v22
  %v388 = vunpack.c.l.b16 %v23
  %v389 = vunpack.c.h.b16 %v23
  %v390 = vunpack.c.l.b16 %v24
  %v391 = vunpack.c.h.b16 %v24
  %v392 = vunpack.c.l.b16 %v25
  %v393 = vunpack.c.h.b16 %v25
  %v394 = vunpack.c.l.b16 %v26
  %v395 = vunpack.c.h.b16 %v26
  %v396 = vunpack.c.l.b16 %v27
  %v397 = vunpack.c.h.b16 %v27
  %v398 = vunpack.c.l.b16 %v28
  %v399 = vunpack.c.h.b16 %v28
  %v400 = vunpack.c.l.b16 %v29
  %v401 = vunpack.c.h.b16 %v29
  %v402 = vunpack.c.l.b16 %v30
  %v403 = vunpack.c.h.b16 %v30
  %v404 = vunpack.c.l.b16 %v31
  %v405 = vunpack.c.h.b16 %v31
  %v406 = vunpack.c.l.b16 %v32
  %v407 = vunpack.c.h.b16 %v32
  %v408 = vunpack.c.l.b16 %v33
  %v409 = vunpack.c.h.b16 %v33
  %v410 = vunpack.c.l.b16 %v34
  %v411 = vunpack.c.h.b16 %v34
  %v412 = vunpack.c.l.b16 %v35
  %v413 = vunpack.c.h.b16 %v35
  %v414 = vunpack.c.l.b16 %v36
  %v415 = vunpack.c.h.b16 %v36
  %v416 = vunpack.c.l.b16 %v37
  %v417 = vunpack.c.h.b16 %v37
  %v418 = vunpack.c.l.b16 %v38
  %v419 = vunpack.c.h.b16 %v38
  %v420 = vunpack.c.l.b16 %v39
  %v421 = vunpack.c.h.b16 %v39
  %v422 = vunpack.c.l.b16 %v40
  %v423 = vunpack.c.h.b16 %v40
  %v424 = vunpack.c.l.b16 %v41
  %v425 = vunpack.c.h.b16 %v41
  %v426 = vunpack.c.l.b16 %v42
  %v427 = vunpack.c.h.b16 %v42
  %v428 = vunpack.c.l.b16 %v43
  %v429 = vunpack.c.h.b16 %v43
  %v430 = vunpack.c.l.b16 %v44
  %v431 = vunpack.c.h.b16 %v44
  %v432 = vunpack.c.l.b16 %v45
  %v433 = vunpack.c.h.b16 %v45
  %v434 = vunpack.c.l.b16 %v46
  %v435 = vunpack.c.h.b16 %v46
  %v436 = vunpack.c.l.b16 %v47
  %v437 = vunpack.c.h.b16 %v47
  %v438 = vunpack.c.l.b16 %v48
  %v439 = vunpack.c.h.b16 %v48
  %v440 = vunpack.c.l.b16 %v49
  %v441 = vunpack.c.h.b16 %v49
  %v442 = vunpack.c.l.b16 %v50
  %v443 = vunpack.c.h.b16 %v50
  %v444 = vunpack.c.l.b16 %v51
  %v445 = vunpack.c.h.b16 %v51
  %v446 = vunpack.c.l.b16 %v52
  %v447 = vunpack.c.h.b16 %v52
  %v448 = vunpack.c.l.b16 %v53
  %v449 = vunpack.c.h.b16 %v53
  %v450 = vunpack.c.l.b16 %v54
  %v451 = vunpack.c.h.b16 %v54
  %v452 = vunpack.c.l.b16 %v55
  %v453 = vunpack.c.h.b16 %v55
  %v454 = vunpack.c.l.b16 %v56
  %v455 = vunpack.c.h.b16 %v56
  %v456 = vunpack.c.l.b16 %v57
  %v457 = vunpack.c.h.b16 %v57
  %v458 = vunpack.c.l.b16 %v58
  %v459 = vunpack.c.h.b16 %v58
  %v460 = vunpack.c.l.b16 %v59
  %v461 = vunpack.c.h.b16 %v59
  %v462 = vunpack.c.l.b16 %v60
  %v463 = vunpack.c.h.b16 %v60
  %v464 = vunpack.c.l.b16 %v61
  %v465 = vunpack.c.h.b16 %v61
  %v466 = vunpack.c.l.b16 %v62
  %v467 = vunpack.c.h.b16 %v62
  %v468 = vunpack.c.l.b16 %v63
  %v469 = vunpack.c.h.b16 %v63
  %v470 = vunpack.c.l.b16 %v64
  %v471 = vunpack.c.h.b16 %v64
  %v472 = vunpack.c.l.b16 %v65
  %v473 = vunpack.c.h.b16 %v65
  %v474 = vunpack.c.l.b16 %v66
  %v475 = vunpack.c.h.b16 %v66
  %v476 = vunpack.c.l.b16 %v67
  %v477 = vunpack.c.h.b16 %v67
  %v478 = vunpack.c.l.b16 %v68
  %v479 = vunpack.c.h.b16 %v68
  %v480 = vunpack.c.l.b16 %v69
  %v481 = vunpack.c.h.b16 %v69
  %v482 = vunpack.c.l.b16 %v70
  %v483 = vunpack.c.h.b16 %v70
  %v484 = vunpack.c.l.b16 %v71
  %v485 = vunpack.c.h.b16 %v71
  %v486 = vunpack.c.l.b16 %v72
  %v487 = vunpack.c.h.b16 %v72
  %v488 = vunpack.c.l.b16 %v73
  %v489 = vunpack.c.h.b16 %v73
  %v490 = vunpack.c.l.b16 %v74
  %v491 = vunpack.c.h.b16 %v74
  %v492 = vunpack.c.l.b16 %v75
  %v493 = vunpack.c.h.b16 %v75
  %v494 = vunpack.c.l.b16 %v76
  %v495 = vunpack.c.h.b16 %v76
  %v496 = vunpack.c.l.b16 %v77
  %v497 = vunpack.c.h.b16 %v77
  %v498 = vunpack.c.l.b16 %v78
  %v499 = vunpack.c.h.b16 %v78
  %v500 = vunpack.c.l.b16 %v79
  %v501 = vunpack.c.h.b16 %v79
  %v502 = vunpack.c.l.b16 %v80
  %v503 = vunpack.c.h.b16 %v80
  %v504 = vunpack.c.l.b16 %v81
  %v505 = vunpack.c.h.b16 %v81
  %v506 = vunpack.c.l.b16 %v82
  %v507 = vunpack.c.h.b16 %v82
  %v508 = vunpack.c.l.b16 %v83
  %v509 = vunpack.c.h.b16 %v83
  %v510 = vunpack.c.l.b16 %v84
  %v511 = vunpack.c.h.b16 %v84
  %v512 = vunpack.c.l.b16 %v85
  %v513 = vunpack.c.h.b16 %v85
  %v514 = vunpack.c.l.b16 %v86
  %v515 = vunpack.c.h.b16 %v86
  %v516 = vunpack.c.l.b16 %v87
  %v517 = vunpack.c.h.b16 %v87
  %v518 = vunpack.c.l.b16 %v88
  %v519 = vunpack.c.h.b16 %v88
  %v520 = vunpack.c.l.b16 %v89
  %v521 = vunpack.c.h.b16 %v89
  %v522 = vunpack.c.l.b16 %v90
  %v523 = vunpack.c.h.b16 %v90
  %v524 = vunpack.c.l.b16 %v91
  %v525 = vunpack.c.h.b16 %v91
  %v526 = vunpack.c.l.b16 %v92
  %v527 = vunpack.c.h.b16 %v92
  %v528 = vunpack.c.l.b16 %v93
  %v529 = vunpack.c.h.b16 %v93
  %v530 = vunpack.c.l.b16 %v94
  %v531 = vunpack.c.h.b16 %v94
  %v532 = vunpack.c.l.b16 %v95
  %v533 = vunpack.c.h.b16 %v95
  %v534 = vunpack.c.l.b16 %v96
  %v535 = vunpack.c.h.b16 %v96
  %v536 = vunpack.c.l.b16 %v97
  %v537 = vunpack.c.h.b16 %v97
  %v538 = vunpack.c.l.b16 %v98
  %v539 = vunpack.c.h.b16 %v98
  %v540 = vunpack.c.l.b16 %v99
  %v541 = vunpack.c.h.b16 %v99
  %v542 = vunpack.c.l.b16 %v100
  %v543 = vunpack.c.h.b16 %v100
  %v544 = vunpack.c.l.b16 %v101
  %v545 = vunpack.c.h.b16 %v101
  %v546 = vunpack.c.l.b16 %v102
  %v547 = vunpack.c.h.b16 %v102
  %v548 = vunpack.c.l.b16 %v103
  %v549 = vunpack.c.h.b16 %v103
  %v550 = vunpack.c.l.b16 %v104
  %v551 = vunpack.c.h.b16 %v104
  %v552 = vunpack.c.l.b16 %v105
  %v553 = vunpack.c.h.b16 %v105
  %v554 = vunpack.c.l.b16 %v106
  %v555 = vunpack.c.h.b16 %v106
  %v556 = vunpack.c.l.b16 %v107
  %v557 = vunpack.c.h.b16 %v107
  %v558 = vunpack.c.l.b16 %v108
  %v559 = vunpack.c.h.b16 %v108
  %v560 = vunpack.c.l.b16 %v109
  %v561 = vunpack.c.h.b16 %v109
  %v562 = vunpack.c.l.b16 %v110
  %v563 = vunpack.c.h.b16 %v110
  %v564 = vunpack.c.l.b16 %v111
  %v565 = vunpack.c.h.b16 %v111
  %v566 = vunpack.c.l.b16 %v112
  %v567 = vunpack.c.h.b16 %v112
  %v568 = vunpack.c.l.b16 %v113
  %v569 = vunpack.c.h.b16 %v113
  %v570 = vunpack.c.l.b16 %v114
  %v571 = vunpack.c.h.b16 %v114
  %v572 = vunpack.c.l.b16 %v115
  %v573 = vunpack.c.h.b16 %v115
  %v574 = vunpack.c.l.b16 %v116
  %v575 = vunpack.c.h.b16 %v116
  %v576 = vunpack.c.l.b16 %v117
  %v577 = vunpack.c.h.b16 %v117
  %v578 = vunpack.c.l.b16 %v118
  %v579 = vunpack.c.h.b16 %v118
  %v580 = vunpack.c.l.b16 %v119
  %v581 = vunpack.c.h.b16 %v119
  %v582 = vunpack.c.l.b16 %v120
  %v583 = vunpack.c.h.b16 %v120
  %v584 = vunpack.c.l.b16 %v121
  %v585 = vunpack.c.h.b16 %v121
  %v586 = vunpack.c.l.b16 %v122
  %v587 = vunpack.c.h.b16 %v122
  %v588 = vunpack.c.l.b16 %v123
  %v589 = vunpack.c.h.b16 %v123
  %v590 = vunpack.c.l.b16 %v124
  %v591 = vunpack.c.h.b16 %v124
  %v592 = vunpack.c.l.b16 %v125
  %v593 = vunpack.c.h.b16 %v125
  %v594 = vunpack.c.l.b16 %v126
  %v595 = vunpack.c.h.b16 %v126
  %v596 = vunpack.c.l.b16 %v127
  %v597 = vunpack.c.h.b16 %v127
  %v598 = vunpack.c.l.b16 %v128
  %v599 = vunpack.c.h.b16 %v128
  %v600 = vunpack.c.l.b16 %v129
  %v601 = vunpack.c.h.b16 %v129
  %v602 = vunpack.c.l.b16 %v130
  %v603 = vunpack.c.h.b16 %v130
  %v604 = vunpack.c.l.b16 %v131
  %v605 = vunpack.c.h.b16 %v131
  %v606 = vunpack.c.l.b16 %v132
  %v607 = vunpack.c.h.b16 %v132
  %v608 = vunpack.c.l.b16 %v133
  %v609 = vunpack.c.h.b16 %v133
  %v610 = vunpack.c.l.b16 %v134
  %v611 = vunpack.c.h.b16 %v134
  %v612 = vunpack.c.l.b16 %v135
  %v613 = vunpack.c.h.b16 %v135
  %v614 = vunpack.c.l.b16 %v136
  %v615 = vunpack.c.h.b16 %v136
  %v616 = vunpack.c.l.b16 %v137
  %v617 = vunpack.c.h.b16 %v137
  %v618 = vunpack.c.l.b16 %v138
  %v619 = vunpack.c.h.b16 %v138
  %v620 = vunpack.c.l.b16 %v139
  %v621 = vunpack.c.h.b16 %v139
  %v622 = vunpack.c.l.b16 %v140
  %v623 = vunpack.c.h.b16 %v140
  %v624 = vunpack.c.l.b16 %v141
  %v625 = vunpack.c.h.b16 %v141
  %v626 = vunpack.c.l.b16 %v142
  %v627 = vunpack.c.h.b16 %v142
  %v628 = vunpack.c.l.b16 %v143
  %v629 = vunpack.c.h.b16 %v143
  %v630 = vunpack.c.l.b16 %v144
  %v631 = vunpack.c.h.b16 %v144
  %v632 = vunpack.c.l.b16 %v145
  %v633 = vunpack.c.h.b16 %v145
  %v634 = vunpack.c.l.b16 %v146
  %v635 = vunpack.c.h.b16 %v146
  %v636 = vunpack.c.l.b16 %v147
  %v637 = vunpack.c.h.b16 %v147
  %v638 = vunpack.c.l.b16 %v148
  %v639 = vunpack.c.h.b16 %v148
  %v640 = vunpack.c.l.b16 %v149
  %v641 = vunpack.c.h.b16 %v149
  %v642 = vunpack.c.l.b16 %v150
  %v643 = vunpack.c.h.b16 %v150
  %v644 = vunpack.c.l.b16 %v151
  %v645 = vunpack.c.h.b16 %v151
  %v646 = vunpack.c.l.b16 %v152
  %v647 = vunpack.c.h.b16 %v152
  %v648 = vunpack.c.l.b16 %v153
  %v649 = vunpack.c.h.b16 %v153
  %v650 = vunpack.c.l.b16 %v154
  %v651 = vunpack.c.h.b16 %v154
  %v652 = vunpack.c.l.b16 %v155
  %v653 = vunpack.c.h.b16 %v155
  %v654 = vunpack.c.l.b16 %v156
  %v655 = vunpack.c.h.b16 %v156
  %v656 = vunpack.c.l.b16 %v157
  %v657 = vunpack.c.h.b16 %v157
  %v658 = vunpack.c.l.b16 %v158
  %v659 = vunpack.c.h.b16 %v158
  %v660 = vunpack.c.l.b16 %v159
  %v661 = vunpack.c.h.b16 %v159
  %v662 = vunpack.c.l.b16 %v160
  %v663 = vunpack.c.h.b16 %v160
  %v664 = vunpack.c.l.b16 %v161
  %v665 = vunpack.c.h.b16 %v161
  %v666 = vunpack.c.l.b16 %v162
  %v667 = vunpack.c.h.b16 %v162
  %v668 = vunpack.c.l.b16 %v163
  %v669 = vunpack.c.h.b16 %v163
  %v670 = vpack.c.b16 %v384, %v382
  %v671 = vpack.c.b16 %v385, %v383
  %v672 = vpack.c.b16 %v388, %v386
  %v673 = vpack.c.b16 %v389, %v387
  %v674 = vpack.c.b16 %v392, %v390
  %v675 = vpack.c.b16 %v393, %v391
  %v676 = vpack.c.b16 %v396, %v394
  %v677 = vpack.c.b16 %v397, %v395
  %v678 = vpack.c.b16 %v400, %v398
  %v679 = vpack.c.b16 %v401, %v399
  %v680 = vpack.c.b16 %v404, %v402
  %v681 = vpack.c.b16 %v405, %v403
  %v682 = vpack.c.b16 %v408, %v406
  %v683 = vpack.c.b16 %v409, %v407
  %v684 = vpack.c.b16 %v412, %v410
  %v685 = vpack.c.b16 %v413, %v411
  %v686 = vpack.c.b16 %v416, %v414
  %v687 = vpack.c.b16 %v417, %v415
  %v688 = vpack.c.b16 %v420, %v418
  %v689 = vpack.c.b16 %v421, %v419
  %v690 = vpack.c.b16 %v424, %v422
  %v691 = vpack.c.b16 %v425, %v423
  %v692 = vpack.c.b16 %v428, %v426
  %v693 = vpack.c.b16 %v429, %v427
  %v694 = vpack.c.b16 %v432, %v430
  %v695 = vpack.c.b16 %v433, %v431
  %v696 = vpack.c.b16 %v436, %v434
  %v697 = vpack.c.b16 %v437, %v435
  %v698 = vpack.c.b16 %v440, %v438
  %v699 = vpack.c.b16 %v441, %v439
  %v700 = vpack.c.b16 %v444, %v442
  %v701 = vpack.c.b16 %v445, %v443
  %v702 = vpack.c.b16 %v448, %v446
  %v703 = vpack.c.b16 %v449, %v447
  %v704 = vpack.c.b16 %v452, %v450
  %v705 = vpack.c.b16 %v453, %v451
  %v706 = vpack.c.b16 %v456, %v454
  %v707 = vpack.c.b16 %v457, %v455
  %v708 = vpack.c.b16 %v460, %v458
  %v709 = vpack.c.b16 %v461, %v459
  %v710 = vpack.c.b16 %v464, %v462
  %v711 = vpack.c.b16 %v465, %v463
  %v712 = vpack.c.b16 %v468, %v466
  %v713 = vpack.c.b16 %v469, %v467
  %v714 = vpack.c.b16 %v472, %v470
  %v715 = vpack.c.b16 %v473, %v471
  %v716 = vpack.c.b16 %v476, %v474
  %v717 = vpack.c.b16 %v477, %v475
  %v718 = vpack.c.b16 %v480, %v478
  %v719 = vpack.c.b16 %v481, %v479
  %v720 = vpack.c.b16 %v484, %v482
  %v721 = vpack.c.b16 %v485, %v483
  %v722 = vpack.c.b16 %v488, %v486
  %v723 = vpack.c.b16 %v489, %v487
  %v724 = vpack.c.b16 %v492, %v490
  %v725 = vpack.c.b16 %v493, %v491
  %v726 = vpack.c.b16 %v496, %v494
  %v727 = vpack.c.b16 %v497, %v495
  %v728 = vpack.c.b16 %v500, %v498
  %v729 = vpack.c.b16 %v501, %v499
  %v730 = vpack.c.b16 %v504, %v502
  %v731 = vpack.c.b16 %v505, %v503
  %v732 = vpack.c.b16 %v508, %v506
  %v733 = vpack.c.b16 %v509, %v507
  %v734 = vpack.c.b16 %v512, %v510
  %v735 = vpack.c.b16 %v513, %v511
  %v736 = vpack.c.b16 %v516, %v514
  %v737 = vpack.c.b16 %v517, %v515
  %v738 = vpack.c.b16 %v520, %v518
  %v739 = vpack.c.b16 %v521, %v519
  %v740 = vpack.c.b16 %v524, %v522
  %v741 = vpack.c.b16 %v525, %v523
  %v742 = vpack.c.b16 %v528, %v526
  %v743 = vpack.c.b16 %v529, %v527
  %v744 = vpack.c.b16 %v532, %v530
  %v745 = vpack.c.b16 %v533, %v531
  %v746 = vpack.c.b16 %v536, %v534
  %v747 = vpack.c.b16 %v537, %v535
  %v748 = vpack.c.b16 %v540, %v538
  %v749 = vpack.c.b16 %v541, %v539
  %v750 = vpack.c.b16 %v544, %v542
  %v751 = vpack.c.b16 %v545, %v543
  %v752 = vpack.c.b16 %v548, %v546
  %v753 = vpack.c.b16 %v549, %v547
  %v754 = vpack.c.b16 %v552, %v550
  %v755 = vpack.c.b16 %v553, %v551
  %v756 = vpack.c.b16 %v556, %v554
  %v757 = vpack.c.b16 %v557, %v555
  %v758 = vpack.c.b16 %v560, %v558
  %v759 = vpack.c.b16 %v561, %v559
  %v760 = vpack.c.b16 %v564, %v562
  %v761 = vpack.c.b16 %v565, %v563
  %v762 = vpack.c.b16 %v568, %v566
  %v763 = vpack.c.b16 %v569, %v567
  %v764 = vpack.c.b16 %v572, %v570
  %v765 = vpack.c.b16 %v573, %v571
  %v766 = vpack.c.b16 %v576, %v574
  %v767 = vpack.c.b16 %v577, %v575
  %v768 = vpack.c.b16 %v580, %v578
  %v769 = vpack.c.b16 %v581, %v579
  %v770 = vpack.c.b16 %v584, %v582
  %v771 = vpack.c.b16 %v585, %v583
  %v772 = vpack.c.b16 %v588, %v586
  %v773 = vpack.c.b16 %v589, %v587
  %v774 = vpack.c.b16 %v592, %v590
  %v775 = vpack.c.b16 %v593, %v591
  %v776 = vpack.c.b16 %v596, %v594
  %v777 = vpack.c.b16 %v597, %v595
  %v778 = vpack.c.b16 %v600, %v598
  %v779 = vpack.c.b16 %v601, %v599
  %v780 = vpack.c.b16 %v604, %v602
  %v781 = vpack.c.b16 %v605, %v603
  %v782 = vpack.c.b16 %v608, %v606
  %v783 = vpack.c.b16 %v609, %v607
  %v784 = vpack.c.b16 %v612, %v610
  %v785 = vpack.c.b16 %v613, %v611
  %v786 = vpack.c.b16 %v616, %v614
  %v787 = vpack.c.b16 %v617, %v615
  %v788 = vpack.c.b16 %v620, %v618
  %v789 = vpack.c.b16 %v621, %v619
  %v790 = vpack.c.b16 %v624, %v622
  %v791 = vpack.c.b16 %v625, %v623
  %v792 = vpack.c.b16 %v628, %v626
  %v793 = vpack.c.b16 %v629, %v627
  %v794 = vpack.c.b16 %v632, %v630
  %v795 = vpack.c.b16 %v633, %v631
  %v796 = vpack.c.b16 %v636, %v634
  %v797 = vpack.c.b16 %v637, %v635
  %v798 = vpack.c.b16 %v640, %v638
  %v799 = vpack.c.b16 %v641, %v639
  %v800 = vpack.c.b16 %v644, %v642
  %v801 = vpack.c.b16 %v645, %v643
  %v802 = vpack.c.b16 %v648, %v646
  %v803 = vpack.c.b16 %v649, %v647
  %v804 = vpack.c.b16 %v652, %v650
  %v805 = vpack.c.b16 %v653, %v651
  %v806 = vpack.c.b16 %v656, %v654
  %v807 = vpack.c.b16 %v657, %v655
  %v808 = vpack.c.b16 %v660, %v658
  %v809 = vpack.c.b16 %v661, %v659
  %v810 = vpack.c.b16 %v664, %v662
  %v811 = vpack.c.b16 %v665, %v663
  %v812 = vpack.c.b16 %v668, %v666
  %v813 = vpack.c.b16 %v669, %v667
  %958 = vmatprep.subr.bf16.mxu0 %v671
  %959 = vmatpush1.bf16.msra.mxu0 %v670
  %960 = vmatprep.subr.bf16.mxu0 %v673
  %961 = vmatpush1.bf16.msra.mxu0 %v672
  %962 = vmatprep.subr.bf16.mxu0 %v675
  %963 = vmatpush1.bf16.msra.mxu0 %v674
  %964 = vmatprep.subr.bf16.mxu0 %v677
  %965 = vmatpush1.bf16.msra.mxu0 %v676
  %966 = vmatprep.subr.bf16.mxu0 %v679
  %967 = vmatpush1.bf16.msra.mxu0 %v678
  %968 = vmatprep.subr.bf16.mxu0 %v681
  %969 = vmatpush1.bf16.msra.mxu0 %v680
  %970 = vmatprep.subr.bf16.mxu0 %v683
  %971 = vmatpush1.bf16.msra.mxu0 %v682
  %972 = vmatprep.subr.bf16.mxu0 %v685
  %973 = vmatpush1.bf16.msra.mxu0 %v684
  %974 = vmatprep.subr.bf16.mxu0 %v687
  %975 = vmatpush1.bf16.msra.mxu0 %v686
  %976 = vmatprep.subr.bf16.mxu0 %v689
  %977 = vmatpush1.bf16.msra.mxu0 %v688
  %978 = vmatprep.subr.bf16.mxu0 %v691
  %979 = vmatpush1.bf16.msra.mxu0 %v690
  %980 = vmatprep.subr.bf16.mxu0 %v693
  %981 = vmatpush1.bf16.msra.mxu0 %v692
  %982 = vmatprep.subr.bf16.mxu0 %v695
  %983 = vmatpush1.bf16.msra.mxu0 %v694
  %984 = vmatprep.subr.bf16.mxu0 %v697
  %985 = vmatpush1.bf16.msra.mxu0 %v696
  %986 = vmatprep.subr.bf16.mxu0 %v699
  %987 = vmatpush1.bf16.msra.mxu0 %v698
  %988 = vmatprep.subr.bf16.mxu0 %v701
  %989 = vmatpush1.bf16.msra.mxu0 %v700
  %990 = vmatprep.mubr.bf16.mxu0 %v203
  %991 = vmatmul.mubr.bf16.gmra.mrb[0].mxu0 %v189
  %v992 = vpop.f32.mrb[0].mxu0
  %v993 = vadd.f32 0.0, %v992
  %v994 = vpop.f32.mrb[0].mxu0
  %v995 = vadd.f32 0.0, %v994
  %v996 = vpop.f32.mrb[0].mxu0
  %v997 = vpop.f32.mrb[0].mxu0
  %998 = vdwg.mxu0
  %999 = vmatprep.subr.bf16.mxu0 %v703
  %1000 = vmatpush1.bf16.msra.mxu0 %v702
  %1001 = vmatprep.subr.bf16.mxu0 %v705
  %1002 = vmatpush1.bf16.msra.mxu0 %v704
  %1003 = vmatprep.subr.bf16.mxu0 %v707
  %1004 = vmatpush1.bf16.msra.mxu0 %v706
  %1005 = vmatprep.subr.bf16.mxu0 %v709
  %1006 = vmatpush1.bf16.msra.mxu0 %v708
  %1007 = vmatprep.subr.bf16.mxu0 %v711
  %1008 = vmatpush1.bf16.msra.mxu0 %v710
  %1009 = vmatprep.subr.bf16.mxu0 %v713
  %1010 = vmatpush1.bf16.msra.mxu0 %v712
  %1011 = vmatprep.subr.bf16.mxu0 %v715
  %1012 = vmatpush1.bf16.msra.mxu0 %v714
  %1013 = vmatprep.subr.bf16.mxu0 %v717
  %1014 = vmatpush1.bf16.msra.mxu0 %v716
  %1015 = vmatprep.subr.bf16.mxu0 %v719
  %1016 = vmatpush1.bf16.msra.mxu0 %v718
  %1017 = vmatprep.subr.bf16.mxu0 %v721
  %1018 = vmatpush1.bf16.msra.mxu0 %v720
  %1019 = vmatprep.subr.bf16.mxu0 %v723
  %1020 = vmatpush1.bf16.msra.mxu0 %v722
  %1021 = vmatprep.subr.bf16.mxu0 %v725
  %1022 = vmatpush1.bf16.msra.mxu0 %v724
  %1023 = vmatprep.subr.bf16.mxu0 %v727
  %1024 = vmatpush1.bf16.msra.mxu0 %v726
  %1025 = vmatprep.subr.bf16.mxu0 %v729
  %1026 = vmatpush1.bf16.msra.mxu0 %v728
  %1027 = vmatprep.subr.bf16.mxu0 %v731
  %1028 = vmatpush1.bf16.msra.mxu0 %v730
  %1029 = vmatprep.subr.bf16.mxu0 %v733
  %1030 = vmatpush1.bf16.msra.mxu0 %v732
  %1031 = vmatprep.mubr.bf16.mxu0 %v213
  %1032 = vmatmul.mubr.bf16.gmra.mrb[0].mxu0 %v211
  %v1033 = vpop.f32.mrb[0].mxu0
  %v1034 = vadd.f32 %v993, %v1033
  %v1035 = vpop.f32.mrb[0].mxu0
  %v1036 = vadd.f32 %v995, %v1035
  %v1037 = vpop.f32.mrb[0].mxu0
  %v1038 = vpop.f32.mrb[0].mxu0
  %1039 = vdwg.mxu0
  %1040 = vmatprep.subr.bf16.mxu0 %v735
  %1041 = vmatpush1.bf16.msra.mxu0 %v734
  %1042 = vmatprep.subr.bf16.mxu0 %v737
  %1043 = vmatpush1.bf16.msra.mxu0 %v736
  %1044 = vmatprep.subr.bf16.mxu0 %v739
  %1045 = vmatpush1.bf16.msra.mxu0 %v738
  %1046 = vmatprep.subr.bf16.mxu0 %v741
  %1047 = vmatpush1.bf16.msra.mxu0 %v740
  %1048 = vmatprep.subr.bf16.mxu0 %v743
  %1049 = vmatpush1.bf16.msra.mxu0 %v742
  %1050 = vmatprep.subr.bf16.mxu0 %v745
  %1051 = vmatpush1.bf16.msra.mxu0 %v744
  %1052 = vmatprep.subr.bf16.mxu0 %v747
  %1053 = vmatpush1.bf16.msra.mxu0 %v746
  %1054 = vmatprep.subr.bf16.mxu0 %v749
  %1055 = vmatpush1.bf16.msra.mxu0 %v748
  %1056 = vmatprep.subr.bf16.mxu0 %v751
  %1057 = vmatpush1.bf16.msra.mxu0 %v750
  %1058 = vmatprep.subr.bf16.mxu0 %v753
  %1059 = vmatpush1.bf16.msra.mxu0 %v752
  %1060 = vmatprep.subr.bf16.mxu0 %v755
  %1061 = vmatpush1.bf16.msra.mxu0 %v754
  %1062 = vmatprep.subr.bf16.mxu0 %v757
  %1063 = vmatpush1.bf16.msra.mxu0 %v756
  %1064 = vmatprep.subr.bf16.mxu0 %v759
  %1065 = vmatpush1.bf16.msra.mxu0 %v758
  %1066 = vmatprep.subr.bf16.mxu0 %v761
  %1067 = vmatpush1.bf16.msra.mxu0 %v760
  %1068 = vmatprep.subr.bf16.mxu0 %v763
  %1069 = vmatpush1.bf16.msra.mxu0 %v762
  %1070 = vmatprep.subr.bf16.mxu0 %v765
  %1071 = vmatpush1.bf16.msra.mxu0 %v764
  %1072 = vmatprep.mubr.bf16.mxu0 %v210
  %1073 = vmatmul.mubr.bf16.gmra.mrb[0].mxu0 %v196
  %v1074 = vpop.f32.mrb[0].mxu0
  %v1075 = vadd.f32 %v1034, %v1074
  %v1076 = vpop.f32.mrb[0].mxu0
  %v1077 = vadd.f32 %v1036, %v1076
  %v1078 = vpop.f32.mrb[0].mxu0
  %v1079 = vpop.f32.mrb[0].mxu0
  %1080 = vdwg.mxu0
  %1081 = vmatprep.subr.bf16.mxu0 %v767
  %1082 = vmatpush1.bf16.msra.mxu0 %v766
  %1083 = vmatprep.subr.bf16.mxu0 %v769
  %1084 = vmatpush1.bf16.msra.mxu0 %v768
  %1085 = vmatprep.subr.bf16.mxu0 %v771
  %1086 = vmatpush1.bf16.msra.mxu0 %v770
  %1087 = vmatprep.subr.bf16.mxu0 %v773
  %1088 = vmatpush1.bf16.msra.mxu0 %v772
  %1089 = vmatprep.subr.bf16.mxu0 %v775
  %1090 = vmatpush1.bf16.msra.mxu0 %v774
  %1091 = vmatprep.subr.bf16.mxu0 %v777
  %1092 = vmatpush1.bf16.msra.mxu0 %v776
  %1093 = vmatprep.subr.bf16.mxu0 %v779
  %1094 = vmatpush1.bf16.msra.mxu0 %v778
  %1095 = vmatprep.subr.bf16.mxu0 %v781
  %1096 = vmatpush1.bf16.msra.mxu0 %v780
  %1097 = vmatprep.subr.bf16.mxu0 %v783
  %1098 = vmatpush1.bf16.msra.mxu0 %v782
  %1099 = vmatprep.subr.bf16.mxu0 %v785
  %1100 = vmatpush1.bf16.msra.mxu0 %v784
  %1101 = vmatprep.subr.bf16.mxu0 %v787
  %1102 = vmatpush1.bf16.msra.mxu0 %v786
  %1103 = vmatprep.subr.bf16.mxu0 %v789
  %1104 = vmatpush1.bf16.msra.mxu0 %v788
  %1105 = vmatprep.subr.bf16.mxu0 %v791
  %1106 = vmatpush1.bf16.msra.mxu0 %v790
  %1107 = vmatprep.subr.bf16.mxu0 %v793
  %1108 = vmatpush1.bf16.msra.mxu0 %v792
  %1109 = vmatprep.subr.bf16.mxu0 %v795
  %1110 = vmatpush1.bf16.msra.mxu0 %v794
  %1111 = vmatprep.subr.bf16.mxu0 %v797
  %1112 = vmatpush1.bf16.msra.mxu0 %v796
  %1113 = vmatprep.mubr.bf16.mxu0 %v214
  %1114 = vmatmul.mubr.bf16.gmra.mrb[0].mxu0 %v212
  %v1115 = vpop.f32.mrb[0].mxu0
  %v1116 = vadd.f32 %v1075, %v1115
  %v1117 = vpop.f32.mrb[0].mxu0
  %v1118 = vadd.f32 %v1077, %v1117
  %v1119 = vpop.f32.mrb[0].mxu0
  %v1120 = vpop.f32.mrb[0].mxu0
  %1121 = vdwg.mxu0
  %1122 = vmatprep.subr.bf16.mxu0 %v799
  %1123 = vmatpush1.bf16.msra.mxu0 %v798
  %1124 = vmatprep.subr.bf16.mxu0 %v801
  %1125 = vmatpush1.bf16.msra.mxu0 %v800
  %1126 = vmatprep.subr.bf16.mxu0 %v803
  %1127 = vmatpush1.bf16.msra.mxu0 %v802
  %1128 = vmatprep.subr.bf16.mxu0 %v805
  %1129 = vmatpush1.bf16.msra.mxu0 %v804
  %1130 = vmatprep.subr.bf16.mxu0 %v807
  %1131 = vmatpush1.bf16.msra.mxu0 %v806
  %1132 = vmatprep.subr.bf16.mxu0 %v809
  %1133 = vmatpush1.bf16.msra.mxu0 %v808
  %1134 = vmatprep.subr.bf16.mxu0 %v811
  %1135 = vmatpush1.bf16.msra.mxu0 %v810
  %1136 = vmatprep.subr.bf16.mxu0 %v813
  %1137 = vmatpush1.bf16.msra.mxu0 %v812
  %1138 = vmatprep.subr.bf16.mxu0 0
  %1139 = vmatpush1.bf16.msra.mxu0 0
  %1140 = vmatprep.subr.bf16.mxu0 0
  %1141 = vmatpush1.bf16.msra.mxu0 0
  %1142 = vmatprep.subr.bf16.mxu0 0
  %1143 = vmatpush1.bf16.msra.mxu0 0
  %1144 = vmatprep.subr.bf16.mxu0 0
  %1145 = vmatpush1.bf16.msra.mxu0 0
  %1146 = vmatprep.subr.bf16.mxu0 0
  %1147 = vmatpush1.bf16.msra.mxu0 0
  %1148 = vmatprep.subr.bf16.mxu0 0
  %1149 = vmatpush1.bf16.msra.mxu0 0
  %1150 = vmatprep.subr.bf16.mxu0 0
  %1151 = vmatpush1.bf16.msra.mxu0 0
  %1152 = vmatprep.subr.bf16.mxu0 0
  %1153 = vmatpush1.bf16.msra.mxu0 0
  %1154 = vmatprep.mubr.bf16.mxu0 0
  %1155 = vmatmul.mubr.bf16.gmra.mrb[0].mxu0 %v228
  %v1156 = vpop.f32.mrb[0].mxu0
  %v1157 = vadd.f32 %v1116, %v1156
  %v1158 = vpop.f32.mrb[0].mxu0
  %v1159 = vadd.f32 %v1118, %v1158
  %v1160 = vpop.f32.mrb[0].mxu0
  %v1161 = vpop.f32.mrb[0].mxu0
  %1162 = vdwg.mxu0
  %v1163 = vld [vmem:[%s2] sm:$0x3]
  %v1165 = vlaneseq
  %v1166 = vshrl.u32 %v1165, 7
  %v1167 = vsub.s32 0, %v1166
  %v1168 = vrot.slane %v1163, %v1167
  %v1169 = vlaneseq
  %v1170 = vshrl.u32 %v1169, 7
  %v1171 = vsub.s32 1, %v1170
  %v1172 = vrot.slane %v1163, %v1171
  %v1175 = vmul.f32 %v1157, %v1168
  %v1176 = vmul.f32 %v1159, %v1172
  %v1177 = vld [vmem:[%s3] sm:$0x3]
  %v1179 = vlaneseq
  %v1180 = vshrl.u32 %v1179, 7
  %v1181 = vsub.s32 0, %v1180
  %v1182 = vrot.slane %v1177, %v1181
  %v1183 = vlaneseq
  %v1184 = vshrl.u32 %v1183, 7
  %v1185 = vsub.s32 1, %v1184
  %v1186 = vrot.slane %v1177, %v1185
  %v1189 = vadd.f32 %v1175, %v1182
  %v1190 = vadd.f32 %v1176, %v1186
  %vm1191 = vcmp.gt.f32.partialorder %v1189, 0.0
  %vm1192 = vcmp.gt.f32.partialorder %v1190, 0.0
  %v1193 = vmul.f32 %v1189, 0.1
  %v1194 = vmul.f32 %v1190, 0.1
  %v1195 = vsel %vm1191, %v1189, %v1193
  %v1196 = vsel %vm1192, %v1190, %v1194
  %v1197 = vpack.c.bf16 %v1195, %v1195
  %v1198 = vpack.c.bf16 %v1196, %v1196
  %v1201 = vcombine.low %v1197, %v1198
  %v1203 = vunpack.c.l.s4 1966171168
  %v1204 = vunpack.c.0.s8 %v1203
  %v1205 = vlaneseq
  %v1206 = vshrl.u32 %v1205, 7
  %v1207 = vsub.s32 %v1204, %v1206
  %v1208 = vrot.slane %v1201, %v1207
  %v1210 = vunpack.c.l.s4 1966171168
  %v1211 = vunpack.c.0.s8 %v1210
  %v1212 = vlaneseq
  %v1213 = vshrl.u32 %v1212, 7
  %v1214 = vsub.s32 %v1211, %v1213
  %v1215 = vrot.slane %v1208, %v1214
  %1217 = vst [vmem:[%s4] sm:$0x3] %v1215
  // Predicated region
  $region18: #{darknet_forward.44} parent=0 // pred_check
    _
  $region19: #{darknet_forward.44} parent=0 // pred_check_branch
    %1219 = sbr.rel (0) target = $region21
  $region20: #{darknet_forward.44} parent=0 // pred_region
    _
  $region21: #{darknet_forward.44} parent=0 // pred_fallthru
    _
  // Predicated region
  $region22: #{darknet_forward.44} parent=0 // pred_check
    _
  $region23: #{darknet_forward.44} parent=0 // pred_check_branch
    %1221 = sbr.rel (0) target = $region25
  $region24: #{darknet_forward.44} parent=0 // pred_region
    _
  $region25: #{darknet_forward.44} parent=0 // pred_fallthru
    _

// kernel: darknet_forward.46
$region0: #{darknet_forward.46}
  #allocation0 [shape = 'u32[]', space=smem, size = 0x4, offset = 0x4, fixed_abs, tag = 'smem constant byte address 0x4 - core index']
  #allocation1 [shape = 'u32[144,128]{1,0:T(1,128)}', space=vmem, size = 0x12000, scoped, tag = 'internal scratch']
  %s0 = inlined_call_operand.vmem [shape: bf16[2,128], index: 0, kind: input, shape index: {}]
  %s1 = inlined_call_operand.vmem [shape: bf16[128,256], index: 1, kind: input, shape index: {}]
  %s2 = inlined_call_operand.vmem [shape: f32[1,256], index: 2, kind: input, shape index: {}]
  %s3 = inlined_call_operand.vmem [shape: f32[1,256], index: 3, kind: input, shape index: {}]
  %s4 = inlined_call_operand.vmem [shape: bf16[2,256], index: 4, kind: output, shape index: {}]
  %s5 = sld [smem:[#allocation0]]
  $region26: #{darknet_forward.46} parent=0
    _
  %s7 = ssub.s32 1, %s5
  %s8 = scalar_select 0, %s7, %s5
  // Predicated region
  $region2: #{darknet_forward.46} parent=0 // pred_check
    _
  $region3: #{darknet_forward.46} parent=0 // pred_check_branch
    %10 = sbr.rel (0) target = $region5
  $region4: #{darknet_forward.46} parent=0 // pred_region
    _
  $region5: #{darknet_forward.46} parent=0 // pred_fallthru
    _
  // Predicated region
  $region6: #{darknet_forward.46} parent=0 // pred_check
    _
  $region7: #{darknet_forward.46} parent=0 // pred_check_branch
    %12 = sbr.rel (0) target = $region9
  $region8: #{darknet_forward.46} parent=0 // pred_region
    _
  $region9: #{darknet_forward.46} parent=0 // pred_fallthru
    _
  // Predicated region
  $region10: #{darknet_forward.46} parent=0 // pred_check
    _
  $region11: #{darknet_forward.46} parent=0 // pred_check_branch
    %14 = sbr.rel (0) target = $region13
  $region12: #{darknet_forward.46} parent=0 // pred_region
    _
  $region13: #{darknet_forward.46} parent=0 // pred_fallthru
    _
  // Predicated region
  $region14: #{darknet_forward.46} parent=0 // pred_check
    _
  $region15: #{darknet_forward.46} parent=0 // pred_check_branch
    %16 = sbr.rel (0) target = $region17
  $region16: #{darknet_forward.46} parent=0 // pred_region
    _
  $region17: #{darknet_forward.46} parent=0 // pred_fallthru
    _
  %v18 = vld [vmem:[%s0] sm:$0x1]
  %v19 = vld [vmem:[%s1] sm:$0xff]
  %v20 = vld [vmem:[%s1 + $0x8] sm:$0xff]
  %v21 = vld [vmem:[%s1 + $0x10] sm:$0xff]
  %v22 = vld [vmem:[%s1 + $0x18] sm:$0xff]
  %v23 = vld [vmem:[%s1 + $0x20] sm:$0xff]
  %v24 = vld [vmem:[%s1 + $0x28] sm:$0xff]
  %v25 = vld [vmem:[%s1 + $0x30] sm:$0xff]
  %v26 = vld [vmem:[%s1 + $0x38] sm:$0xff]
  %v27 = vld [vmem:[%s1 + $0x40] sm:$0xff]
  %v28 = vld [vmem:[%s1 + $0x48] sm:$0xff]
  %v29 = vld [vmem:[%s1 + $0x50] sm:$0xff]
  %v30 = vld [vmem:[%s1 + $0x58] sm:$0xff]
  %v31 = vld [vmem:[%s1 + $0x60] sm:$0xff]
  %v32 = vld [vmem:[%s1 + $0x68] sm:$0xff]
  %v33 = vld [vmem:[%s1 + $0x70] sm:$0xff]
  %v34 = vld [vmem:[%s1 + $0x78] sm:$0xff]
  %v51 = vunpack.c.l.b16 %v19
  %v52 = vunpack.c.h.b16 %v19
  %v53 = vunpack.c.l.b16 %v20
  %v54 = vunpack.c.h.b16 %v20
  %v55 = vunpack.c.l.b16 %v21
  %v56 = vunpack.c.h.b16 %v21
  %v57 = vunpack.c.l.b16 %v22
  %v58 = vunpack.c.h.b16 %v22
  %v59 = vunpack.c.l.b16 %v23
  %v60 = vunpack.c.h.b16 %v23
  %v61 = vunpack.c.l.b16 %v24
  %v62 = vunpack.c.h.b16 %v24
  %v63 = vunpack.c.l.b16 %v25
  %v64 = vunpack.c.h.b16 %v25
  %v65 = vunpack.c.l.b16 %v26
  %v66 = vunpack.c.h.b16 %v26
  %v67 = vunpack.c.l.b16 %v27
  %v68 = vunpack.c.h.b16 %v27
  %v69 = vunpack.c.l.b16 %v28
  %v70 = vunpack.c.h.b16 %v28
  %v71 = vunpack.c.l.b16 %v29
  %v72 = vunpack.c.h.b16 %v29
  %v73 = vunpack.c.l.b16 %v30
  %v74 = vunpack.c.h.b16 %v30
  %v75 = vunpack.c.l.b16 %v31
  %v76 = vunpack.c.h.b16 %v31
  %v77 = vunpack.c.l.b16 %v32
  %v78 = vunpack.c.h.b16 %v32
  %v79 = vunpack.c.l.b16 %v33
  %v80 = vunpack.c.h.b16 %v33
  %v81 = vunpack.c.l.b16 %v34
  %v82 = vunpack.c.h.b16 %v34
  %v83 = vpack.c.b16 %v53, %v51
  %v84 = vpack.c.b16 %v54, %v52
  %v85 = vpack.c.b16 %v57, %v55
  %v86 = vpack.c.b16 %v58, %v56
  %v87 = vpack.c.b16 %v61, %v59
  %v88 = vpack.c.b16 %v62, %v60
  %v89 = vpack.c.b16 %v65, %v63
  %v90 = vpack.c.b16 %v66, %v64
  %v91 = vpack.c.b16 %v69, %v67
  %v92 = vpack.c.b16 %v70, %v68
  %v93 = vpack.c.b16 %v73, %v71
  %v94 = vpack.c.b16 %v74, %v72
  %v95 = vpack.c.b16 %v77, %v75
  %v96 = vpack.c.b16 %v78, %v76
  %v97 = vpack.c.b16 %v81, %v79
  %v98 = vpack.c.b16 %v82, %v80
  %115 = vmatprep.subr.bf16.mxu0 %v84
  %116 = vmatpush1.bf16.msra.mxu0 %v83
  %117 = vmatprep.subr.bf16.mxu0 %v86
  %118 = vmatpush1.bf16.msra.mxu0 %v85
  %119 = vmatprep.subr.bf16.mxu0 %v88
  %120 = vmatpush1.bf16.msra.mxu0 %v87
  %121 = vmatprep.subr.bf16.mxu0 %v90
  %122 = vmatpush1.bf16.msra.mxu0 %v89
  %123 = vmatprep.subr.bf16.mxu0 %v92
  %124 = vmatpush1.bf16.msra.mxu0 %v91
  %125 = vmatprep.subr.bf16.mxu0 %v94
  %126 = vmatpush1.bf16.msra.mxu0 %v93
  %127 = vmatprep.subr.bf16.mxu0 %v96
  %128 = vmatpush1.bf16.msra.mxu0 %v95
  %129 = vmatprep.subr.bf16.mxu0 %v98
  %130 = vmatpush1.bf16.msra.mxu0 %v97
  %131 = vmatprep.subr.bf16.mxu0 0
  %132 = vmatpush1.bf16.msra.mxu0 0
  %133 = vmatprep.subr.bf16.mxu0 0
  %134 = vmatpush1.bf16.msra.mxu0 0
  %135 = vmatprep.subr.bf16.mxu0 0
  %136 = vmatpush1.bf16.msra.mxu0 0
  %137 = vmatprep.subr.bf16.mxu0 0
  %138 = vmatpush1.bf16.msra.mxu0 0
  %139 = vmatprep.subr.bf16.mxu0 0
  %140 = vmatpush1.bf16.msra.mxu0 0
  %141 = vmatprep.subr.bf16.mxu0 0
  %142 = vmatpush1.bf16.msra.mxu0 0
  %143 = vmatprep.subr.bf16.mxu0 0
  %144 = vmatpush1.bf16.msra.mxu0 0
  %145 = vmatprep.subr.bf16.mxu0 0
  %146 = vmatpush1.bf16.msra.mxu0 0
  %147 = vmatprep.mubr.bf16.mxu0 0
  %148 = vmatmul.mubr.bf16.gmra.mrb[0].mxu0 %v18
  %v149 = vpop.f32.mrb[0].mxu0
  %v150 = vadd.f32 0.0, %v149
  %v151 = vpop.f32.mrb[0].mxu0
  %v152 = vadd.f32 0.0, %v151
  %v153 = vpop.f32.mrb[0].mxu0
  %v154 = vpop.f32.mrb[0].mxu0
  %155 = vdwg.mxu0
  %v156 = vld [vmem:[%s2] sm:$0x3]
  %v158 = vlaneseq
  %v159 = vshrl.u32 %v158, 7
  %v160 = vsub.s32 0, %v159
  %v161 = vrot.slane %v156, %v160
  %v162 = vlaneseq
  %v163 = vshrl.u32 %v162, 7
  %v164 = vsub.s32 1, %v163
  %v165 = vrot.slane %v156, %v164
  %v168 = vmul.f32 %v150, %v161
  %v169 = vmul.f32 %v152, %v165
  %v170 = vld [vmem:[%s3] sm:$0x3]
  %v172 = vlaneseq
  %v173 = vshrl.u32 %v172, 7
  %v174 = vsub.s32 0, %v173
  %v175 = vrot.slane %v170, %v174
  %v176 = vlaneseq
  %v177 = vshrl.u32 %v176, 7
  %v178 = vsub.s32 1, %v177
  %v179 = vrot.slane %v170, %v178
  %v182 = vadd.f32 %v168, %v175
  %v183 = vadd.f32 %v169, %v179
  %vm184 = vcmp.gt.f32.partialorder %v182, 0.0
  %vm185 = vcmp.gt.f32.partialorder %v183, 0.0
  %v186 = vmul.f32 %v182, 0.1
  %v187 = vmul.f32 %v183, 0.1
  %v188 = vsel %vm184, %v182, %v186
  %v189 = vsel %vm185, %v183, %v187
  %v190 = vpack.c.bf16 %v188, %v188
  %v191 = vpack.c.bf16 %v189, %v189
  %v194 = vcombine.low %v190, %v191
  %v196 = vunpack.c.l.s4 1966171168
  %v197 = vunpack.c.0.s8 %v196
  %v198 = vlaneseq
  %v199 = vshrl.u32 %v198, 7
  %v200 = vsub.s32 %v197, %v199
  %v201 = vrot.slane %v194, %v200
  %v203 = vunpack.c.l.s4 1966171168
  %v204 = vunpack.c.0.s8 %v203
  %v205 = vlaneseq
  %v206 = vshrl.u32 %v205, 7
  %v207 = vsub.s32 %v204, %v206
  %v208 = vrot.slane %v201, %v207
  %210 = vst [vmem:[%s4] sm:$0x3] %v208
  // Predicated region
  $region18: #{darknet_forward.46} parent=0 // pred_check
    _
  $region19: #{darknet_forward.46} parent=0 // pred_check_branch
    %212 = sbr.rel (0) target = $region21
  $region20: #{darknet_forward.46} parent=0 // pred_region
    _
  $region21: #{darknet_forward.46} parent=0 // pred_fallthru
    _
  // Predicated region
  $region22: #{darknet_forward.46} parent=0 // pred_check
    _
  $region23: #{darknet_forward.46} parent=0 // pred_check_branch
    %214 = sbr.rel (0) target = $region25
  $region24: #{darknet_forward.46} parent=0 // pred_region
    _
  $region25: #{darknet_forward.46} parent=0 // pred_fallthru
    _

// kernel: darknet_forward.49
$region0: #{darknet_forward.49}
  #allocation0 [shape = 'u32[]', space=smem, size = 0x4, offset = 0x4, fixed_abs, tag = 'smem constant byte address 0x4 - core index']
  #allocation1 [shape = 'u32[144,128]{1,0:T(1,128)}', space=vmem, size = 0x12000, scoped, tag = 'internal scratch']
  #allocation2 [shape = 'f32[8,256]{1,0:T(8,128)}', space=vmem, size = 0x2000, scoped, tag = 'scratch operand']
  %s0 = inlined_call_operand.vmem [shape: bf16[8,256], index: 0, kind: input, shape index: {}]
  %s1 = inlined_call_operand.vmem [shape: bf16[4,5,256,256], index: 1, kind: input, shape index: {}]
  %s2 = inlined_call_operand.vmem [shape: f32[4,5,1,256], index: 2, kind: input, shape index: {}]
  %s3 = inlined_call_operand.vmem [shape: f32[4,8,256], index: 3, kind: output, shape index: {}]
  %s4 = sld [smem:[#allocation0]]
  $region57: #{darknet_forward.49} parent=0
    _
  %s6 = ssub.s32 1, %s4
  %s7 = scalar_select 0, %s6, %s4
  loop: start=0, step=1, limit=22
  $region2: #{darknet_forward.49} parent=0 // loop_pre_header
    _
  $region3: #{darknet_forward.49} parent=0 // loop_header
    %s9 = sphi 0, %s13
    %p10 = scmp.ge.s32.totalorder %s9, 22
    %s16 = sphi 0, %s28
    %s17 = sphi 0, %s24
    %s18 = sphi 0, %s16
    %s19 = sphi 0, %s17
    %s20 = sphi 0, %s18
    %s21 = sphi 0, %s19
    %s29 = sphi 0, %s29
    %s31 = sphi 0, %s29
    %s32 = sphi 0, %s31
    %s46 = sphi 0, %s32
    %s54 = sphi 0, %s56
    %s57 = sphi 0, %s54
    %s58 = sphi 0, %s57
    %s74 = sphi 0, %s58
    %s82 = sphi 0, %s84
    %s85 = sphi 0, %s82
    %s86 = sphi 0, %s85
    %s102 = sphi 0, %s86
    %s108 = sphi 0, %s110
    %s111 = sphi 0, %s108
    %s112 = sphi 0, %s111
    %s128 = sphi 0, %s112
  $region4: #{darknet_forward.49} parent=0 // loop_header_branch
    %12 = sbr.rel (%p10) target = $region8
  $region5: #{darknet_forward.49} parent=0 // loop_body
    %s14 = ssub.s32 %s9, 1
    %s15 = ssub.s32 %s9, 2
    %s22 = sadd.s32 1, %s17
    %p23 = scmp.ge.s32.totalorder %s22, 5
    %s24 = scalar_select %p23, 0, %s22
    %s25 = sadd.s32 1, %s16
    %s26 = scalar_select %p23, %s25, %s16
    %p27 = scmp.ge.s32.totalorder %s26, 4
    %s28 = scalar_select %p27, 0, %s26
    %s30 = sadd.s32 %s29, 1
    %p33 = scmp.eq.s32.totalorder %s9, 19
    %p34 = scmp.ne.s32.totalorder %s29, %s31
    %p35 = scmp.eq.s32.totalorder %s9, 0
    %p36 = por %p34, %p35
    %p37 = scmp.ne.s32.totalorder %s29, %s31
    %p38 = scmp.eq.s32.totalorder %s14, 19
    %p39 = por %p37, %p38
    %p40 = scmp.ne.s32.totalorder %s31, %s32
    %p41 = scmp.eq.s32.totalorder %s14, 0
    %p42 = por %p40, %p41
    %p43 = scmp.ne.s32.totalorder %s31, %s32
    %p44 = scmp.eq.s32.totalorder %s15, 19
    %p45 = por %p43, %p44
    %p47 = scmp.ne.s32.totalorder %s32, %s46
    %p48 = scmp.eq.s32.totalorder %s15, 0
    %p49 = por %p47, %p48
    %s50 = ssub.s32 %s16, %s28
    %s51 = ssub.s32 %s17, %s24
    %s52 = sor.u32 %s50, %s51
    %p53 = scmp.eq.s32.totalorder %s52, 0
    %s55 = sadd.s32 %s54, 1
    %s56 = scalar_select %p53, %s54, %s55
    %p59 = pneg %p53
    %p60 = scmp.eq.s32.totalorder %s9, 19
    %p61 = por %p59, %p60
    %p62 = scmp.ne.s32.totalorder %s54, %s57
    %p63 = scmp.eq.s32.totalorder %s9, 0
    %p64 = por %p62, %p63
    %p65 = scmp.ne.s32.totalorder %s54, %s57
    %p66 = scmp.eq.s32.totalorder %s14, 19
    %p67 = por %p65, %p66
    %p68 = scmp.ne.s32.totalorder %s57, %s58
    %p69 = scmp.eq.s32.totalorder %s14, 0
    %p70 = por %p68, %p69
    %p71 = scmp.ne.s32.totalorder %s57, %s58
    %p72 = scmp.eq.s32.totalorder %s15, 19
    %p73 = por %p71, %p72
    %p75 = scmp.ne.s32.totalorder %s58, %s74
    %p76 = scmp.eq.s32.totalorder %s15, 0
    %p77 = por %p75, %p76
    %s78 = ssub.s32 %s16, %s28
    %s79 = ssub.s32 %s17, %s24
    %s80 = sor.u32 %s78, %s79
    %p81 = scmp.eq.s32.totalorder %s80, 0
    %s83 = sadd.s32 %s82, 1
    %s84 = scalar_select %p81, %s82, %s83
    %p87 = pneg %p81
    %p88 = scmp.eq.s32.totalorder %s9, 19
    %p89 = por %p87, %p88
    %p90 = scmp.ne.s32.totalorder %s82, %s85
    %p91 = scmp.eq.s32.totalorder %s9, 0
    %p92 = por %p90, %p91
    %p93 = scmp.ne.s32.totalorder %s82, %s85
    %p94 = scmp.eq.s32.totalorder %s14, 19
    %p95 = por %p93, %p94
    %p96 = scmp.ne.s32.totalorder %s85, %s86
    %p97 = scmp.eq.s32.totalorder %s14, 0
    %p98 = por %p96, %p97
    %p99 = scmp.ne.s32.totalorder %s85, %s86
    %p100 = scmp.eq.s32.totalorder %s15, 19
    %p101 = por %p99, %p100
    %p103 = scmp.ne.s32.totalorder %s86, %s102
    %p104 = scmp.eq.s32.totalorder %s15, 0
    %p105 = por %p103, %p104
    %s106 = ssub.s32 %s16, %s28
    %p107 = scmp.eq.s32.totalorder %s106, 0
    %s109 = sadd.s32 %s108, 1
    %s110 = scalar_select %p107, %s108, %s109
    %p113 = pneg %p107
    %p114 = scmp.eq.s32.totalorder %s9, 19
    %p115 = por %p113, %p114
    %p116 = scmp.ne.s32.totalorder %s108, %s111
    %p117 = scmp.eq.s32.totalorder %s9, 0
    %p118 = por %p116, %p117
    %p119 = scmp.ne.s32.totalorder %s108, %s111
    %p120 = scmp.eq.s32.totalorder %s14, 19
    %p121 = por %p119, %p120
    %p122 = scmp.ne.s32.totalorder %s111, %s112
    %p123 = scmp.eq.s32.totalorder %s14, 0
    %p124 = por %p122, %p123
    %p125 = scmp.ne.s32.totalorder %s111, %s112
    %p126 = scmp.eq.s32.totalorder %s15, 19
    %p127 = por %p125, %p126
    %p129 = scmp.ne.s32.totalorder %s112, %s128
    %p130 = scmp.eq.s32.totalorder %s15, 0
    %p131 = por %p129, %p130
    %p132 = scmp.le.s32.totalorder 1, %s9
    %p133 = scmp.lt.s32.totalorder %s9, 21
    %p134 = pnand %p132, %p133
    %p135 = pneg %p134
    // Predicated region
    $region9: #{darknet_forward.49} parent=5 // pred_check
      _
    $region10: #{darknet_forward.49} parent=5 // pred_check_branch
      %137 = sbr.rel (%p134) target = $region12
    $region11: #{darknet_forward.49} parent=5 // pred_region
      %s138 = ssub.s32 %s9, 1
      // Predicated region
      $region13: #{darknet_forward.49} parent=11 // pred_check
        %p139 = pneg %p42
      $region14: #{darknet_forward.49} parent=11 // pred_check_branch
        %141 = sbr.rel (%p139) target = $region16
      $region15: #{darknet_forward.49} parent=11 // pred_region
        _
      $region16: #{darknet_forward.49} parent=11 // pred_fallthru
        _
    $region12: #{darknet_forward.49} parent=5 // pred_fallthru
      _
    %p142 = scmp.lt.s32.totalorder %s9, 20
    // Predicated region
    $region17: #{darknet_forward.49} parent=5 // pred_check
      %p143 = pneg %p142
    $region18: #{darknet_forward.49} parent=5 // pred_check_branch
      %145 = sbr.rel (%p143) target = $region20
    $region19: #{darknet_forward.49} parent=5 // pred_region
      // Predicated region
      $region21: #{darknet_forward.49} parent=19 // pred_check
        %p146 = pneg %p64
      $region22: #{darknet_forward.49} parent=19 // pred_check_branch
        %148 = sbr.rel (%p146) target = $region24
      $region23: #{darknet_forward.49} parent=19 // pred_region
        %p149 = scmp.lt.s32.totalorder %s16, 3
        %s150 = scalar_select %p149, %s16, 3
        %p151 = scmp.lt.s32.totalorder %s17, 4
        %s152 = scalar_select %p151, %s17, 4
        %s153 = smul.addr %s152, 64
        %s154 = smul.addr %s150, 320
        %s155 = sadd.s32 %s153, %s154
        %s156 = smul.addr %s155, 4
        %s157 = scalar_lea.vmem %s1, %s156
      $region24: #{darknet_forward.49} parent=19 // pred_fallthru
        _
      // Predicated region
      $region25: #{darknet_forward.49} parent=19 // pred_check
        %p158 = pneg %p92
      $region26: #{darknet_forward.49} parent=19 // pred_check_branch
        %160 = sbr.rel (%p158) target = $region28
      $region27: #{darknet_forward.49} parent=19 // pred_region
        %p161 = scmp.lt.s32.totalorder %s16, 3
        %s162 = scalar_select %p161, %s16, 3
        %p163 = scmp.lt.s32.totalorder %s17, 4
        %s164 = scalar_select %p163, %s17, 4
        %s165 = smul.addr %s164, 2
        %s166 = smul.addr %s162, 10
        %s167 = sadd.s32 %s165, %s166
        %s168 = scalar_lea.vmem %s2, %s167
      $region28: #{darknet_forward.49} parent=19 // pred_fallthru
        _
    $region20: #{darknet_forward.49} parent=5 // pred_fallthru
      _
    %p169 = scmp.le.s32.totalorder 1, %s9
    %p170 = scmp.lt.s32.totalorder %s9, 21
    %p171 = pnand %p169, %p170
    %p172 = pneg %p171
    // Predicated region
    $region29: #{darknet_forward.49} parent=5 // pred_check
      _
    $region30: #{darknet_forward.49} parent=5 // pred_check_branch
      %174 = sbr.rel (%p171) target = $region32
    $region31: #{darknet_forward.49} parent=5 // pred_region
      %s175 = ssub.s32 %s9, 1
      %p176 = pneg %p42
      %p177 = pneg %p39
      %p178 = scmp.lt.s32.totalorder %s18, 3
      %s179 = scalar_select %p178, %s18, 3
      %p180 = scmp.lt.s32.totalorder %s19, 4
      %s181 = scalar_select %p180, %s19, 4
      %s182 = smul.addr %s181, 64
      %s183 = smul.addr %s179, 320
      %s184 = sadd.s32 %s182, %s183
      %s185 = smul.addr %s184, 4
      %s186 = scalar_lea.vmem %s1, %s185
      %p187 = pneg %p70
      %p188 = pneg %p67
      %p189 = scmp.lt.s32.totalorder %s18, 3
      %s190 = scalar_select %p189, %s18, 3
      %p191 = scmp.lt.s32.totalorder %s19, 4
      %s192 = scalar_select %p191, %s19, 4
      %s193 = smul.addr %s192, 2
      %s194 = smul.addr %s190, 10
      %s195 = sadd.s32 %s193, %s194
      %s196 = scalar_lea.vmem %s2, %s195
      %p197 = pneg %p98
      %p198 = pneg %p95
      %p199 = pneg %p124
      %p200 = pneg %p121
      %p201 = scmp.lt.s32.totalorder %s18, 3
      %s202 = scalar_select %p201, %s18, 3
      %s203 = smul.addr %s202, 2
      %s204 = smul.addr %s203, 8
      %s205 = scalar_lea.vmem %s3, %s204
      %p206 = scmp.lt.s32.totalorder %s18, 3
      %s207 = scalar_select %p206, %s18, 3
      %p208 = scmp.lt.s32.totalorder %s19, 4
      %s209 = scalar_select %p208, %s19, 4
      %s210 = smul.addr %s209, 64
      %s211 = smul.addr %s207, 320
      %s212 = sadd.s32 %s210, %s211
      %s213 = smul.addr %s212, 4
      %s214 = scalar_lea.vmem %s1, %s213
      %p215 = scmp.lt.s32.totalorder %s18, 3
      %s216 = scalar_select %p215, %s18, 3
      %p217 = scmp.lt.s32.totalorder %s19, 4
      %s218 = scalar_select %p217, %s19, 4
      %s219 = smul.addr %s218, 2
      %s220 = smul.addr %s216, 10
      %s221 = sadd.s32 %s219, %s220
      %s222 = scalar_lea.vmem %s2, %s221
      %p223 = scmp.lt.s32.totalorder %s18, 3
      %s224 = scalar_select %p223, %s18, 3
      %s225 = smul.addr %s224, 2
      %s226 = smul.addr %s225, 8
      %s227 = scalar_lea.vmem %s3, %s226
      %p228 = scmp.eq.s32.totalorder %s19, 0
      // Predicated region
      $region33: #{darknet_forward.49} parent=31 // pred_check
        %p229 = pneg %p228
      $region34: #{darknet_forward.49} parent=31 // pred_check_branch
        %231 = sbr.rel (%p229) target = $region36
      $region35: #{darknet_forward.49} parent=31 // pred_region
        %v232 = vld [vmem:[%s0] sm:$0xff]
        %v233 = vunpack.c.l.bf16 %v232
        %v234 = vunpack.c.h.bf16 %v232
        %235 = vst [vmem:[#allocation2] sm:$0xff] %v233
        %236 = vst [vmem:[#allocation2 + $0x8] sm:$0xff] %v234
      $region36: #{darknet_forward.49} parent=31 // pred_fallthru
        _
      %v237 = vld [vmem:[#allocation2] sm:$0xff]
      %v238 = vld [vmem:[#allocation2 + $0x8] sm:$0xff]
      %v239 = vpack.c.bf16 %v237, %v237
      %v240 = vpack.c.bf16 %v238, %v238
      %v241 = vld [vmem:[%s214] sm:$0xff]
      %v242 = vld [vmem:[%s214 + $0x8] sm:$0xff]
      %v243 = vld [vmem:[%s214 + $0x10] sm:$0xff]
      %v244 = vld [vmem:[%s214 + $0x18] sm:$0xff]
      %v245 = vld [vmem:[%s214 + $0x20] sm:$0xff]
      %v246 = vld [vmem:[%s214 + $0x28] sm:$0xff]
      %v247 = vld [vmem:[%s214 + $0x30] sm:$0xff]
      %v248 = vld [vmem:[%s214 + $0x38] sm:$0xff]
      %v249 = vld [vmem:[%s214 + $0x40] sm:$0xff]
      %v250 = vld [vmem:[%s214 + $0x48] sm:$0xff]
      %v251 = vld [vmem:[%s214 + $0x50] sm:$0xff]
      %v252 = vld [vmem:[%s214 + $0x58] sm:$0xff]
      %v253 = vld [vmem:[%s214 + $0x60] sm:$0xff]
      %v254 = vld [vmem:[%s214 + $0x68] sm:$0xff]
      %v255 = vld [vmem:[%s214 + $0x70] sm:$0xff]
      %v256 = vld [vmem:[%s214 + $0x78] sm:$0xff]
      %v257 = vld [vmem:[%s214 + $0x80] sm:$0xff]
      %v258 = vld [vmem:[%s214 + $0x88] sm:$0xff]
      %v259 = vld [vmem:[%s214 + $0x90] sm:$0xff]
      %v260 = vld [vmem:[%s214 + $0x98] sm:$0xff]
      %v261 = vld [vmem:[%s214 + $0xa0] sm:$0xff]
      %v262 = vld [vmem:[%s214 + $0xa8] sm:$0xff]
      %v263 = vld [vmem:[%s214 + $0xb0] sm:$0xff]
      %v264 = vld [vmem:[%s214 + $0xb8] sm:$0xff]
      %v265 = vld [vmem:[%s214 + $0xc0] sm:$0xff]
      %v266 = vld [vmem:[%s214 + $0xc8] sm:$0xff]
      %v267 = vld [vmem:[%s214 + $0xd0] sm:$0xff]
      %v268 = vld [vmem:[%s214 + $0xd8] sm:$0xff]
      %v269 = vld [vmem:[%s214 + $0xe0] sm:$0xff]
      %v270 = vld [vmem:[%s214 + $0xe8] sm:$0xff]
      %v271 = vld [vmem:[%s214 + $0xf0] sm:$0xff]
      %v272 = vld [vmem:[%s214 + $0xf8] sm:$0xff]
      %v273 = vld [vmem:[%s222] sm:$0x3]
      %v275 = vlaneseq
      %v276 = vshrl.u32 %v275, 7
      %v277 = vsub.s32 0, %v276
      %v278 = vrot.slane %v273, %v277
      %v279 = vlaneseq
      %v280 = vshrl.u32 %v279, 7
      %v281 = vsub.s32 1, %v280
      %v282 = vrot.slane %v273, %v281
      %v317 = vunpack.c.l.b16 %v241
      %v318 = vunpack.c.h.b16 %v241
      %v319 = vunpack.c.l.b16 %v242
      %v320 = vunpack.c.h.b16 %v242
      %v321 = vunpack.c.l.b16 %v243
      %v322 = vunpack.c.h.b16 %v243
      %v323 = vunpack.c.l.b16 %v244
      %v324 = vunpack.c.h.b16 %v244
      %v325 = vunpack.c.l.b16 %v245
      %v326 = vunpack.c.h.b16 %v245
      %v327 = vunpack.c.l.b16 %v246
      %v328 = vunpack.c.h.b16 %v246
      %v329 = vunpack.c.l.b16 %v247
      %v330 = vunpack.c.h.b16 %v247
      %v331 = vunpack.c.l.b16 %v248
      %v332 = vunpack.c.h.b16 %v248
      %v333 = vunpack.c.l.b16 %v249
      %v334 = vunpack.c.h.b16 %v249
      %v335 = vunpack.c.l.b16 %v250
      %v336 = vunpack.c.h.b16 %v250
      %v337 = vunpack.c.l.b16 %v251
      %v338 = vunpack.c.h.b16 %v251
      %v339 = vunpack.c.l.b16 %v252
      %v340 = vunpack.c.h.b16 %v252
      %v341 = vunpack.c.l.b16 %v253
      %v342 = vunpack.c.h.b16 %v253
      %v343 = vunpack.c.l.b16 %v254
      %v344 = vunpack.c.h.b16 %v254
      %v345 = vunpack.c.l.b16 %v255
      %v346 = vunpack.c.h.b16 %v255
      %v347 = vunpack.c.l.b16 %v256
      %v348 = vunpack.c.h.b16 %v256
      %v349 = vunpack.c.l.b16 %v257
      %v350 = vunpack.c.h.b16 %v257
      %v351 = vunpack.c.l.b16 %v258
      %v352 = vunpack.c.h.b16 %v258
      %v353 = vunpack.c.l.b16 %v259
      %v354 = vunpack.c.h.b16 %v259
      %v355 = vunpack.c.l.b16 %v260
      %v356 = vunpack.c.h.b16 %v260
      %v357 = vunpack.c.l.b16 %v261
      %v358 = vunpack.c.h.b16 %v261
      %v359 = vunpack.c.l.b16 %v262
      %v360 = vunpack.c.h.b16 %v262
      %v361 = vunpack.c.l.b16 %v263
      %v362 = vunpack.c.h.b16 %v263
      %v363 = vunpack.c.l.b16 %v264
      %v364 = vunpack.c.h.b16 %v264
      %v365 = vunpack.c.l.b16 %v265
      %v366 = vunpack.c.h.b16 %v265
      %v367 = vunpack.c.l.b16 %v266
      %v368 = vunpack.c.h.b16 %v266
      %v369 = vunpack.c.l.b16 %v267
      %v370 = vunpack.c.h.b16 %v267
      %v371 = vunpack.c.l.b16 %v268
      %v372 = vunpack.c.h.b16 %v268
      %v373 = vunpack.c.l.b16 %v269
      %v374 = vunpack.c.h.b16 %v269
      %v375 = vunpack.c.l.b16 %v270
      %v376 = vunpack.c.h.b16 %v270
      %v377 = vunpack.c.l.b16 %v271
      %v378 = vunpack.c.h.b16 %v271
      %v379 = vunpack.c.l.b16 %v272
      %v380 = vunpack.c.h.b16 %v272
      %v381 = vpack.c.b16 %v319, %v317
      %v382 = vpack.c.b16 %v320, %v318
      %v383 = vpack.c.b16 %v323, %v321
      %v384 = vpack.c.b16 %v324, %v322
      %v385 = vpack.c.b16 %v327, %v325
      %v386 = vpack.c.b16 %v328, %v326
      %v387 = vpack.c.b16 %v331, %v329
      %v388 = vpack.c.b16 %v332, %v330
      %v389 = vpack.c.b16 %v335, %v333
      %v390 = vpack.c.b16 %v336, %v334
      %v391 = vpack.c.b16 %v339, %v337
      %v392 = vpack.c.b16 %v340, %v338
      %v393 = vpack.c.b16 %v343, %v341
      %v394 = vpack.c.b16 %v344, %v342
      %v395 = vpack.c.b16 %v347, %v345
      %v396 = vpack.c.b16 %v348, %v346
      %v397 = vpack.c.b16 %v351, %v349
      %v398 = vpack.c.b16 %v352, %v350
      %v399 = vpack.c.b16 %v355, %v353
      %v400 = vpack.c.b16 %v356, %v354
      %v401 = vpack.c.b16 %v359, %v357
      %v402 = vpack.c.b16 %v360, %v358
      %v403 = vpack.c.b16 %v363, %v361
      %v404 = vpack.c.b16 %v364, %v362
      %v405 = vpack.c.b16 %v367, %v365
      %v406 = vpack.c.b16 %v368, %v366
      %v407 = vpack.c.b16 %v371, %v369
      %v408 = vpack.c.b16 %v372, %v370
      %v409 = vpack.c.b16 %v375, %v373
      %v410 = vpack.c.b16 %v376, %v374
      %v411 = vpack.c.b16 %v379, %v377
      %v412 = vpack.c.b16 %v380, %v378
      %445 = vmatprep.subr.bf16.mxu0 %v382
      %446 = vmatpush1.bf16.msra.mxu0 %v381
      %447 = vmatprep.subr.bf16.mxu0 %v384
      %448 = vmatpush1.bf16.msra.mxu0 %v383
      %449 = vmatprep.subr.bf16.mxu0 %v386
      %450 = vmatpush1.bf16.msra.mxu0 %v385
      %451 = vmatprep.subr.bf16.mxu0 %v388
      %452 = vmatpush1.bf16.msra.mxu0 %v387
      %453 = vmatprep.subr.bf16.mxu0 %v390
      %454 = vmatpush1.bf16.msra.mxu0 %v389
      %455 = vmatprep.subr.bf16.mxu0 %v392
      %456 = vmatpush1.bf16.msra.mxu0 %v391
      %457 = vmatprep.subr.bf16.mxu0 %v394
      %458 = vmatpush1.bf16.msra.mxu0 %v393
      %459 = vmatprep.subr.bf16.mxu0 %v396
      %460 = vmatpush1.bf16.msra.mxu0 %v395
      %461 = vmatprep.subr.bf16.mxu0 %v398
      %462 = vmatpush1.bf16.msra.mxu0 %v397
      %463 = vmatprep.subr.bf16.mxu0 %v400
      %464 = vmatpush1.bf16.msra.mxu0 %v399
      %465 = vmatprep.subr.bf16.mxu0 %v402
      %466 = vmatpush1.bf16.msra.mxu0 %v401
      %467 = vmatprep.subr.bf16.mxu0 %v404
      %468 = vmatpush1.bf16.msra.mxu0 %v403
      %469 = vmatprep.subr.bf16.mxu0 %v406
      %470 = vmatpush1.bf16.msra.mxu0 %v405
      %471 = vmatprep.subr.bf16.mxu0 %v408
      %472 = vmatpush1.bf16.msra.mxu0 %v407
      %473 = vmatprep.subr.bf16.mxu0 %v410
      %474 = vmatpush1.bf16.msra.mxu0 %v409
      %475 = vmatprep.subr.bf16.mxu0 %v412
      %476 = vmatpush1.bf16.msra.mxu0 %v411
      %477 = vmatprep.mubr.bf16.mxu0 %v240
      %478 = vmatmul.mubr.bf16.gmra.mrb[0].mxu0 %v239
      %v479 = vpop.f32.mrb[0].mxu0
      %v480 = vadd.f32 %v278, %v479
      %v481 = vpop.f32.mrb[0].mxu0
      %v482 = vadd.f32 %v282, %v481
      %v483 = vpop.f32.mrb[0].mxu0
      %v484 = vpop.f32.mrb[0].mxu0
      %485 = vdwg.mxu0
      %p486 = scmp.lt.s32.totalorder %s19, 4
      // Predicated region
      $region37: #{darknet_forward.49} parent=31 // pred_check
        %p487 = pneg %p486
      $region38: #{darknet_forward.49} parent=31 // pred_check_branch
        %489 = sbr.rel (%p487) target = $region40
      $region39: #{darknet_forward.49} parent=31 // pred_region
        %vm490 = vcmp.gt.f32.partialorder %v480, 0.0
        %vm491 = vcmp.gt.f32.partialorder %v482, 0.0
        %v492 = vmul.f32 %v480, 0.1
        %v493 = vmul.f32 %v482, 0.1
        %v494 = vsel %vm490, %v480, %v492
        %v495 = vsel %vm491, %v482, %v493
        %496 = vst [vmem:[#allocation2] sm:$0xff] %v494
        %497 = vst [vmem:[#allocation2 + $0x8] sm:$0xff] %v495
      $region40: #{darknet_forward.49} parent=31 // pred_fallthru
        _
      %p498 = scmp.eq.s32.totalorder %s19, 4
      // Predicated region
      $region41: #{darknet_forward.49} parent=31 // pred_check
        %p499 = pneg %p498
      $region42: #{darknet_forward.49} parent=31 // pred_check_branch
        %501 = sbr.rel (%p499) target = $region44
      $region43: #{darknet_forward.49} parent=31 // pred_region
        %v502 = vxor.u32 %v480, 2147483648
        %v503 = vxor.u32 %v482, 2147483648
        %v504 = vmul.f32 %v502, 1.442695
        %v505 = vpow.pop %v504
        %v506 = vmul.f32 %v503, 1.442695
        %v507 = vpow.pop %v506
        %v508 = vadd.f32 %v505, 1.0
        %v509 = vadd.f32 %v507, 1.0
        %v510 = vrcp.pop %v508
        %v511 = vmul.f32 1.0, %v510
        %v512 = vrcp.pop %v509
        %v513 = vmul.f32 1.0, %v512
        %514 = vst [vmem:[%s227] sm:$0xff] %v511
        %515 = vst [vmem:[%s227 + $0x8] sm:$0xff] %v513
      $region44: #{darknet_forward.49} parent=31 // pred_fallthru
        _
      %p516 = scmp.lt.s32.totalorder %s18, 3
      %s517 = scalar_select %p516, %s18, 3
      %s518 = smul.addr %s517, 2
      %s519 = smul.addr %s518, 8
      %s520 = scalar_lea.vmem %s3, %s519
      // Predicated region
      $region45: #{darknet_forward.49} parent=31 // pred_check
        %p521 = pneg %p121
      $region46: #{darknet_forward.49} parent=31 // pred_check_branch
        %523 = sbr.rel (%p521) target = $region48
      $region47: #{darknet_forward.49} parent=31 // pred_region
        _
      $region48: #{darknet_forward.49} parent=31 // pred_fallthru
        _
    $region32: #{darknet_forward.49} parent=5 // pred_fallthru
      _
    %p524 = scmp.le.s32.totalorder 2, %s9
    // Predicated region
    $region49: #{darknet_forward.49} parent=5 // pred_check
      %p525 = pneg %p524
    $region50: #{darknet_forward.49} parent=5 // pred_check_branch
      %527 = sbr.rel (%p525) target = $region52
    $region51: #{darknet_forward.49} parent=5 // pred_region
      %s528 = ssub.s32 %s9, 2
      // Predicated region
      $region53: #{darknet_forward.49} parent=51 // pred_check
        %p529 = pneg %p127
      $region54: #{darknet_forward.49} parent=51 // pred_check_branch
        %531 = sbr.rel (%p529) target = $region56
      $region55: #{darknet_forward.49} parent=51 // pred_region
        %p532 = scmp.lt.s32.totalorder %s20, 3
        %s533 = scalar_select %p532, %s20, 3
        %s534 = smul.addr %s533, 2
        %s535 = smul.addr %s534, 8
        %s536 = scalar_lea.vmem %s3, %s535
      $region56: #{darknet_forward.49} parent=51 // pred_fallthru
        _
    $region52: #{darknet_forward.49} parent=5 // pred_fallthru
      _
  $region6: #{darknet_forward.49} parent=0 // loop_footer
    %s13 = sadd.s32 1, %s9
  $region7: #{darknet_forward.49} parent=0 // loop_footer_branch
    %8 = sbr.rel target = $region3
  $region8: #{darknet_forward.49} parent=0 // loop_exit
    _

</llo_original>
